<compile_context>
chip_gen: v7x
topology: tpu7x:2x2x1
jax: 0.10.0
libtpu: 0.0.40
codegen_flags: <defaults>
</compile_context>

<pallas_src>
import functools

import jax
import jax.numpy as jnp
from jax.experimental import pallas as pl
from jax.experimental.pallas import tpu as pltpu

HIDDEN = 768
CAT = 3 * HIDDEN            # 2304
NUM_CLASSES = 2
OUT_PAD = 128               # lane-dense padded output width (logits in lanes 0..1)
MIB = 1024 * 1024


def _round_up(x, m):
    return ((x + m - 1) // m) * m


def _vmem_capacity_bytes():
    """Physical per-core VMEM; conservative (v7x: 64 MiB) if the query fails."""
    try:
        cap = getattr(pltpu.get_tpu_info(), "vmem_capacity_bytes", None)
        if cap:
            return int(cap)
    except Exception:
        pass
    return 64 * MIB


def _tile_plan(B, S, itemsize):
    """Pick (b_tile, b_pad, s_tile, vmem_limit) for this chip generation."""
    vmem_cap = _vmem_capacity_bytes()
    big_vmem = vmem_cap >= 100 * MIB                 # v5e / v6e: 128 MiB VMEM
    vmem_limit = min(int(vmem_cap * 3 // 4), 96 * MIB)

    # Batch tile: full batch for tiny B (no batch pad at all); otherwise keep
    # >= 2 batch blocks so the "parallel" axis can land on both v7x cores,
    # growing the tile for large B to amortize per-grid-step overhead.
    if B <= 8:
        b_tile = B
    elif B <= 256:
        b_tile = 8
    else:
        b_tile = 64 if big_vmem else 32
    b_pad = _round_up(B, b_tile)

    # Token tile: per-input activation block budget (the pipeline double-
    # buffers each input). ~12 MiB on 128 MiB chips, ~6 MiB on 64 MiB v7x.
    blk_budget = min(12 * MIB, max(4 * MIB, vmem_cap // 10))
    s_cap = blk_budget // max(1, b_tile * HIDDEN * itemsize)
    s_cap = max(8, min(2048, (s_cap // 8) * 8))
    s_tile = min(s_cap, _round_up(S, 8))
    return b_tile, b_pad, s_tile, vmem_limit


def _rch_kernel(code_ref, text_ref, w1_ref, b1_ref, w2_ref, b2_ref, out_ref,
                sum_code, sum_text, *, inv_s, s_tile, s_valid_last):
    s = pl.program_id(1)
    last = pl.num_programs(1) - 1

    @pl.when(s == 0)
    def _():
        sum_code[...] = jnp.zeros_like(sum_code)
        sum_text[...] = jnp.zeros_like(sum_text)

    def _accumulate(mask_tail):
        # Inputs arrive in their native dtype (no wrapper cast); accumulate f32.
        code = code_ref[...].astype(jnp.float32)
        text = text_ref[...].astype(jnp.float32)
        if mask_tail:
            tok = jax.lax.broadcasted_iota(jnp.int32, code.shape, 1)
            keep = tok < s_valid_last
            code = jnp.where(keep, code, 0.0)
            text = jnp.where(keep, text, 0.0)
        # TODO(synk): if a v7x bundle profile shows convert+add binding the VALU
        # with bf16 inputs, move this reduction onto the MXU via a resident
        # block-diagonal ones matrix.
        sum_code[...] += jnp.sum(code, axis=1)
        sum_text[...] += jnp.sum(text, axis=1)

    if s_valid_last == s_tile:       # token axis divides evenly: never mask
        _accumulate(False)
    else:                            # mask ONLY the (static) last token block
        @pl.when(s < last)
        def _():
            _accumulate(False)

        @pl.when(s == last)
        def _():
            _accumulate(True)

    @pl.when(s == last)
    def _():
        # Finalize: divide by the TRUE token count, fuse the three 768-wide
        # dense blocks into ONE (b_tile, 2304) @ (2304, 768) MXU matmul.
        pool_code = sum_code[...] * inv_s
        pool_text = sum_text[...] * inv_s
        diff = jnp.abs(pool_code - pool_text)
        cat = jnp.concatenate([pool_code, pool_text, diff], axis=1)
        h = jnp.tanh(jnp.dot(cat, w1_ref[...],
                             preferred_element_type=jnp.float32) + b1_ref[...])
        # TODO(synk): Dropout(p=0.1) is identity here (inference/eval semantics).
        out = jnp.dot(h, w2_ref[...],
                      preferred_element_type=jnp.float32) + b2_ref[...]
        out_ref[...] = out.astype(out_ref.dtype)


def relation_classify_header(code_hidden, text_hidden, params):
    """code_hidden, text_hidden: (B, S, 768). Returns (B, 2) float32 logits."""
    B, S, H = code_hidden.shape
    assert H == HIDDEN
    assert text_hidden.shape == (B, S, H)

    itemsize = jnp.dtype(code_hidden.dtype).itemsize
    b_tile, b_pad, s_tile, vmem_limit = _tile_plan(B, S, itemsize)

    # Pad ONLY the batch axis, and only when needed.  The token axis stays
    # ragged (masked in-kernel) and the dtype stays whatever the encoder emits,
    # so the hot HBM-bound pooling loop reads each activation byte exactly once.
    if b_pad != B:
        code_hidden = jnp.pad(code_hidden, ((0, b_pad - B), (0, 0), (0, 0)))
        text_hidden = jnp.pad(text_hidden, ((0, b_pad - B), (0, 0), (0, 0)))

    # Resident f32 weights (cold path; restores f32-module numerical parity).
    w1 = params["w1t"].astype(jnp.float32)                            # (2304, 768)
    b1 = params["b1"].reshape(1, HIDDEN).astype(jnp.float32)
    # Pad the tiny 2-class output layer to a lane-dense 128-wide slab.
    w2 = jnp.zeros((HIDDEN, OUT_PAD), jnp.float32).at[:, :NUM_CLASSES].set(
        params["w2t"].astype(jnp.float32))
    b2 = jnp.zeros((1, OUT_PAD), jnp.float32).at[:, :NUM_CLASSES].set(
        params["b2"].astype(jnp.float32))

    num_s = pl.cdiv(S, s_tile)
    s_valid_last = S - (num_s - 1) * s_tile          # valid tokens in last block
    grid = (b_pad // b_tile, num_s)

    kernel = functools.partial(_rch_kernel, inv_s=1.0 / S,
                               s_tile=s_tile, s_valid_last=s_valid_last)

    flops = (4 * b_pad * S * HIDDEN                    # token sums + mean/diff
             + 2 * b_pad * CAT * HIDDEN                # fused dense
             + 2 * b_pad * HIDDEN * OUT_PAD)           # output layer
    bytes_accessed = (2 * b_pad * S * HIDDEN * itemsize            # activations
                      + (CAT * HIDDEN + HIDDEN * OUT_PAD
                         + HIDDEN + OUT_PAD) * 4                    # f32 weights
                      + b_pad * OUT_PAD * 4)                        # output

    def _call(single_buffer_weights):
        def wspec(shape):
            if single_buffer_weights:
                # Constant index maps -> resident; single-buffer to save VMEM
                # (double-buffering a never-changing 7 MiB W1 buys nothing).
                return pl.BlockSpec(shape, lambda b, s: (0, 0),
                                    pipeline_mode=pl.Buffered(1))
            return pl.BlockSpec(shape, lambda b, s: (0, 0))

        grid_spec = pltpu.PrefetchScalarGridSpec(
            num_scalar_prefetch=0,
            grid=grid,
            in_specs=[
                pl.BlockSpec((b_tile, s_tile, HIDDEN), lambda b, s: (b, s, 0)),
                pl.BlockSpec((b_tile, s_tile, HIDDEN), lambda b, s: (b, s, 0)),
                wspec((CAT, HIDDEN)),
                wspec((1, HIDDEN)),
                wspec((HIDDEN, OUT_PAD)),
                wspec((1, OUT_PAD)),
            ],
            out_specs=pl.BlockSpec((b_tile, OUT_PAD), lambda b, s: (b, 0)),
            scratch_shapes=[pltpu.VMEM((b_tile, HIDDEN), jnp.float32),
                            pltpu.VMEM((b_tile, HIDDEN), jnp.float32)],
        )
        return pl.pallas_call(
            kernel,
            out_shape=jax.ShapeDtypeStruct((b_pad, OUT_PAD), jnp.float32),
            grid_spec=grid_spec,
            compiler_params=pltpu.CompilerParams(
                dimension_semantics=("parallel", "arbitrary"),
                vmem_limit_bytes=vmem_limit,
            ),
            cost_estimate=pl.CostEstimate(
                flops=flops,
                transcendentals=b_pad * HIDDEN,
                bytes_accessed=bytes_accessed,
            ),
        )(code_hidden, text_hidden, w1, b1, w2, b2)

    try:
        out_pad = _call(True)
    except Exception:
        # Fallback if single-buffered pipeline_mode is unsupported on this jax;
        # only costs extra resident VMEM for the (constant) weight blocks.
        out_pad = _call(False)

    return out_pad[:B, :NUM_CLASSES]


def reference(code_hidden, text_hidden, params):
    pool_code = jnp.mean(code_hidden.astype(jnp.float32), axis=1)
    pool_text = jnp.mean(text_hidden.astype(jnp.float32), axis=1)
    diff = jnp.abs(pool_code - pool_text)
    cat = jnp.concatenate([pool_code, pool_text, diff], axis=1)
    x = jnp.tanh(cat @ params["w1t"] + params["b1"])
    return x @ params["w2t"] + params["b2"]


def init_params(key):
    k1, k2, k3, k4 = jax.random.split(key, 4)
    # Deterministic synthetic init; weights stored pre-transposed: (in, out).
    return {
        "w1t": jax.random.normal(k1, (CAT, HIDDEN), jnp.float32) * 0.02,
        "b1": jax.random.normal(k2, (HIDDEN,), jnp.float32) * 0.02,
        "w2t": jax.random.normal(k3, (HIDDEN, NUM_CLASSES), jnp.float32) * 0.02,
        "b2": jax.random.normal(k4, (NUM_CLASSES,), jnp.float32) * 0.02,
    }


if __name__ == "__main__":
    key = jax.random.PRNGKey(0)
    kc, kt, kp = jax.random.split(key, 3)
    B, S = 2, 8
    code_hidden = jax.random.normal(kc, (B, S, HIDDEN), jnp.float32)
    text_hidden = jax.random.normal(kt, (B, S, HIDDEN), jnp.float32)
    params = init_params(kp)

    out = relation_classify_header(code_hidden, text_hidden, params)
    out = jax.block_until_ready(out)

    ref = reference(code_hidden, text_hidden, params)
    assert out.shape == (B, NUM_CLASSES), out.shape
    assert jnp.allclose(out, ref, atol=1e-2, rtol=1e-2), (out, ref)
    print("KERNEL_OK")
</pallas_src>

<mosaic_0001>
module attributes {stable_mosaic.version = 11 : i64} {
  func.func @_rch_kernel(%arg0: i32, %arg1: i32, %arg2: memref<2x8x768xf32, #tpu.memory_space<vmem>>, %arg3: memref<2x8x768xf32, #tpu.memory_space<vmem>>, %arg4: memref<2304x768xf32, #tpu.memory_space<vmem>>, %arg5: memref<1x768xf32, #tpu.memory_space<vmem>>, %arg6: memref<768x128xf32, #tpu.memory_space<vmem>>, %arg7: memref<1x128xf32, #tpu.memory_space<vmem>>, %arg8: memref<2x128xf32, #tpu.memory_space<vmem>>, %arg9: memref<2x768xf32, #tpu.memory_space<vmem>>, %arg10: memref<2x768xf32, #tpu.memory_space<vmem>>) attributes {dimension_semantics = [#tpu.dimension_semantics<parallel>, #tpu.dimension_semantics<arbitrary>], iteration_bounds = array<i64: 1, 1>, scalar_prefetch = 0 : i64, scratch_operands = 2 : i64, tpu.core_type = #tpu.core_type<tc>, window_params = [{transform_indices = @transform_0, window_bounds = array<i64: 2, 8, 768>}, {transform_indices = @transform_1, window_bounds = array<i64: 2, 8, 768>}, {pipeline_mode = #tpu.pipeline_mode<synchronous>, transform_indices = @transform_2, window_bounds = array<i64: 2304, 768>}, {pipeline_mode = #tpu.pipeline_mode<synchronous>, transform_indices = @transform_3, window_bounds = array<i64: 1, 768>}, {pipeline_mode = #tpu.pipeline_mode<synchronous>, transform_indices = @transform_4, window_bounds = array<i64: 768, 128>}, {pipeline_mode = #tpu.pipeline_mode<synchronous>, transform_indices = @transform_5, window_bounds = array<i64: 1, 128>}, {transform_indices = @transform_6, window_bounds = array<i64: 2, 128>}]} {
    %c0_i32 = arith.constant 0 : i32
    %0 = arith.cmpi eq, %arg1, %c0_i32 : i32
    %1 = arith.extui %0 : i1 to i32
    %c0_i32_0 = arith.constant 0 : i32
    %2 = arith.cmpi ne, %1, %c0_i32_0 : i32
    scf.if %2 {
      %cst_17 = arith.constant 0.000000e+00 : f32
      %16 = vector.broadcast %cst_17 : f32 to vector<2x768xf32>
      %c0_18 = arith.constant 0 : index
      %c0_19 = arith.constant 0 : index
      %17 = vector.load %arg9[%c0_18, %c0_19] : memref<2x768xf32, #tpu.memory_space<vmem>>, vector<2x768xf32>
      tpu.vector_store %arg9[%c0_18, %c0_19], %16 {strides = array<i32>} : memref<2x768xf32, #tpu.memory_space<vmem>>, vector<2x768xf32>,
      %cst_20 = arith.constant 0.000000e+00 : f32
      %18 = vector.broadcast %cst_20 : f32 to vector<2x768xf32>
      %c0_21 = arith.constant 0 : index
      %c0_22 = arith.constant 0 : index
      %19 = vector.load %arg10[%c0_21, %c0_22] : memref<2x768xf32, #tpu.memory_space<vmem>>, vector<2x768xf32>
      tpu.vector_store %arg10[%c0_21, %c0_22], %18 {strides = array<i32>} : memref<2x768xf32, #tpu.memory_space<vmem>>, vector<2x768xf32>,
    } else {
    }
    %c0 = arith.constant 0 : index
    %c0_1 = arith.constant 0 : index
    %c0_2 = arith.constant 0 : index
    %3 = vector.load %arg2[%c0, %c0_1, %c0_2] : memref<2x8x768xf32, #tpu.memory_space<vmem>>, vector<2x8x768xf32>
    %c0_3 = arith.constant 0 : index
    %c0_4 = arith.constant 0 : index
    %c0_5 = arith.constant 0 : index
    %4 = vector.load %arg3[%c0_3, %c0_4, %c0_5] : memref<2x8x768xf32, #tpu.memory_space<vmem>>, vector<2x8x768xf32>
    %c0_6 = arith.constant 0 : index
    %c0_7 = arith.constant 0 : index
    %5 = vector.load %arg9[%c0_6, %c0_7] : memref<2x768xf32, #tpu.memory_space<vmem>>, vector<2x768xf32>
    %cst = arith.constant dense<0.000000e+00> : vector<2x768xf32>
    %6 = vector.multi_reduction <add>, %3, %cst [1] : vector<2x8x768xf32> to vector<2x768xf32>
    %7 = arith.addf %5, %6 : vector<2x768xf32>
    %c0_8 = arith.constant 0 : index
    %c0_9 = arith.constant 0 : index
    %8 = vector.load %arg9[%c0_8, %c0_9] : memref<2x768xf32, #tpu.memory_space<vmem>>, vector<2x768xf32>
    tpu.vector_store %arg9[%c0_8, %c0_9], %7 {strides = array<i32>} : memref<2x768xf32, #tpu.memory_space<vmem>>, vector<2x768xf32>,
    %c0_10 = arith.constant 0 : index
    %c0_11 = arith.constant 0 : index
    %9 = vector.load %arg10[%c0_10, %c0_11] : memref<2x768xf32, #tpu.memory_space<vmem>>, vector<2x768xf32>
    %cst_12 = arith.constant dense<0.000000e+00> : vector<2x768xf32>
    %10 = vector.multi_reduction <add>, %4, %cst_12 [1] : vector<2x8x768xf32> to vector<2x768xf32>
    %11 = arith.addf %9, %10 : vector<2x768xf32>
    %c0_13 = arith.constant 0 : index
    %c0_14 = arith.constant 0 : index
    %12 = vector.load %arg10[%c0_13, %c0_14] : memref<2x768xf32, #tpu.memory_space<vmem>>, vector<2x768xf32>
    tpu.vector_store %arg10[%c0_13, %c0_14], %11 {strides = array<i32>} : memref<2x768xf32, #tpu.memory_space<vmem>>, vector<2x768xf32>,
    %c0_i32_15 = arith.constant 0 : i32
    %13 = arith.cmpi eq, %arg1, %c0_i32_15 : i32
    %14 = arith.extui %13 : i1 to i32
    %c0_i32_16 = arith.constant 0 : i32
    %15 = arith.cmpi ne, %14, %c0_i32_16 : i32
    scf.if %15 {
      %c0_17 = arith.constant 0 : index
      %c0_18 = arith.constant 0 : index
      %16 = vector.load %arg9[%c0_17, %c0_18] : memref<2x768xf32, #tpu.memory_space<vmem>>, vector<2x768xf32>
      %cst_19 = arith.constant 1.250000e-01 : f32
      %17 = vector.broadcast %cst_19 : f32 to vector<2x768xf32>
      %18 = arith.mulf %16, %17 : vector<2x768xf32>
      %c0_20 = arith.constant 0 : index
      %c0_21 = arith.constant 0 : index
      %19 = vector.load %arg10[%c0_20, %c0_21] : memref<2x768xf32, #tpu.memory_space<vmem>>, vector<2x768xf32>
      %cst_22 = arith.constant 1.250000e-01 : f32
      %20 = vector.broadcast %cst_22 : f32 to vector<2x768xf32>
      %21 = arith.mulf %19, %20 : vector<2x768xf32>
      %22 = arith.subf %18, %21 : vector<2x768xf32>
      %23 = math.absf %22 : vector<2x768xf32>
      %24 = tpu.concatenate %18, %21, %23 in 1 : vector<2x768xf32>, vector<2x768xf32>, vector<2x768xf32> -> vector<2x2304xf32>
      %c0_23 = arith.constant 0 : index
      %c0_24 = arith.constant 0 : index
      %25 = vector.load %arg4[%c0_23, %c0_24] : memref<2304x768xf32, #tpu.memory_space<vmem>>, vector<2304x768xf32>
      %cst_25 = arith.constant dense<0.000000e+00> : vector<2x768xf32>
      %26 = tpu.matmul %24, %25, %cst_25 {dimension_numbers = #tpu.dot_dimension_numbers<[1], [0], [0], [1], [0, 0, 1, 1], [], []>} : vector<2x2304xf32>, vector<2304x768xf32>, vector<2x768xf32> -> vector<2x768xf32>
      %c0_26 = arith.constant 0 : index
      %c0_27 = arith.constant 0 : index
      %27 = vector.load %arg5[%c0_26, %c0_27] : memref<1x768xf32, #tpu.memory_space<vmem>>, vector<1x768xf32>
      %28 = vector.broadcast %27 : vector<1x768xf32> to vector<2x768xf32>
      %29 = arith.addf %26, %28 : vector<2x768xf32>
      %30 = math.tanh %29 : vector<2x768xf32>
      %c0_28 = arith.constant 0 : index
      %c0_29 = arith.constant 0 : index
      %31 = vector.load %arg6[%c0_28, %c0_29] : memref<768x128xf32, #tpu.memory_space<vmem>>, vector<768x128xf32>
      %cst_30 = arith.constant dense<0.000000e+00> : vector<2x128xf32>
      %32 = tpu.matmul %30, %31, %cst_30 {dimension_numbers = #tpu.dot_dimension_numbers<[1], [0], [0], [1], [0, 0, 1, 1], [], []>} : vector<2x768xf32>, vector<768x128xf32>, vector<2x128xf32> -> vector<2x128xf32>
      %c0_31 = arith.constant 0 : index
      %c0_32 = arith.constant 0 : index
      %33 = vector.load %arg7[%c0_31, %c0_32] : memref<1x128xf32, #tpu.memory_space<vmem>>, vector<1x128xf32>
      %34 = vector.broadcast %33 : vector<1x128xf32> to vector<2x128xf32>
      %35 = arith.addf %32, %34 : vector<2x128xf32>
      %c0_33 = arith.constant 0 : index
      %c0_34 = arith.constant 0 : index
      %36 = vector.load %arg8[%c0_33, %c0_34] : memref<2x128xf32, #tpu.memory_space<vmem>>, vector<2x128xf32>
      tpu.vector_store %arg8[%c0_33, %c0_34], %35 {strides = array<i32>} : memref<2x128xf32, #tpu.memory_space<vmem>>, vector<2x128xf32>,
    } else {
    }
    return
  }
  func.func @transform_0(%arg0: i32, %arg1: i32) -> (i32, i32, i32) {
    %c0_i32 = arith.constant 0 : i32
    %c0_i32_0 = arith.constant 0 : i32
    return %arg0, %arg1, %c0_i32 : i32, i32, i32
  }
  func.func @transform_1(%arg0: i32, %arg1: i32) -> (i32, i32, i32) {
    %c0_i32 = arith.constant 0 : i32
    %c0_i32_0 = arith.constant 0 : i32
    return %arg0, %arg1, %c0_i32 : i32, i32, i32
  }
  func.func @transform_2(%arg0: i32, %arg1: i32) -> (i32, i32) {
    %c0_i32 = arith.constant 0 : i32
    %c0_i32_0 = arith.constant 0 : i32
    %c0_i32_1 = arith.constant 0 : i32
    return %c0_i32, %c0_i32_0 : i32, i32
  }
  func.func @transform_3(%arg0: i32, %arg1: i32) -> (i32, i32) {
    %c0_i32 = arith.constant 0 : i32
    %c0_i32_0 = arith.constant 0 : i32
    %c0_i32_1 = arith.constant 0 : i32
    return %c0_i32, %c0_i32_0 : i32, i32
  }
  func.func @transform_4(%arg0: i32, %arg1: i32) -> (i32, i32) {
    %c0_i32 = arith.constant 0 : i32
    %c0_i32_0 = arith.constant 0 : i32
    %c0_i32_1 = arith.constant 0 : i32
    return %c0_i32, %c0_i32_0 : i32, i32
  }
  func.func @transform_5(%arg0: i32, %arg1: i32) -> (i32, i32) {
    %c0_i32 = arith.constant 0 : i32
    %c0_i32_0 = arith.constant 0 : i32
    %c0_i32_1 = arith.constant 0 : i32
    return %c0_i32, %c0_i32_0 : i32, i32
  }
  func.func @transform_6(%arg0: i32, %arg1: i32) -> (i32, i32) {
    %c0_i32 = arith.constant 0 : i32
    %c0_i32_0 = arith.constant 0 : i32
    return %arg0, %c0_i32 : i32, i32
  }
}

module attributes {stable_mosaic.version = 11 : i64} {
  func.func @_rch_kernel(%arg0: i32, %arg1: i32, %arg2: memref<2x8x768xf32, #tpu.memory_space<vmem>>, %arg3: memref<2x8x768xf32, #tpu.memory_space<vmem>>, %arg4: memref<2304x768xf32, #tpu.memory_space<vmem>>, %arg5: memref<1x768xf32, #tpu.memory_space<vmem>>, %arg6: memref<768x128xf32, #tpu.memory_space<vmem>>, %arg7: memref<1x128xf32, #tpu.memory_space<vmem>>, %arg8: memref<2x128xf32, #tpu.memory_space<vmem>>, %arg9: memref<2x768xf32, #tpu.memory_space<vmem>>, %arg10: memref<2x768xf32, #tpu.memory_space<vmem>>) attributes {dimension_semantics = [#tpu.dimension_semantics<parallel>, #tpu.dimension_semantics<arbitrary>], iteration_bounds = array<i64: 1, 1>, scalar_prefetch = 0 : i64, scratch_operands = 2 : i64, tpu.core_type = #tpu.core_type<tc>, window_params = [{transform_indices = @transform_0, window_bounds = array<i64: 2, 8, 768>}, {transform_indices = @transform_1, window_bounds = array<i64: 2, 8, 768>}, {pipeline_mode = #tpu.pipeline_mode<synchronous>, transform_indices = @transform_2, window_bounds = array<i64: 2304, 768>}, {pipeline_mode = #tpu.pipeline_mode<synchronous>, transform_indices = @transform_3, window_bounds = array<i64: 1, 768>}, {pipeline_mode = #tpu.pipeline_mode<synchronous>, transform_indices = @transform_4, window_bounds = array<i64: 768, 128>}, {pipeline_mode = #tpu.pipeline_mode<synchronous>, transform_indices = @transform_5, window_bounds = array<i64: 1, 128>}, {transform_indices = @transform_6, window_bounds = array<i64: 2, 128>}]} {
    %c0_i32 = arith.constant 0 : i32
    %0 = arith.cmpi eq, %arg1, %c0_i32 : i32
    %1 = arith.extui %0 : i1 to i32
    %c0_i32_0 = arith.constant 0 : i32
    %2 = arith.cmpi ne, %1, %c0_i32_0 : i32
    scf.if %2 {
      %cst_17 = arith.constant 0.000000e+00 : f32
      %16 = vector.broadcast %cst_17 : f32 to vector<2x768xf32>
      %c0_18 = arith.constant 0 : index
      %c0_19 = arith.constant 0 : index
      %17 = vector.load %arg9[%c0_18, %c0_19] : memref<2x768xf32, #tpu.memory_space<vmem>>, vector<2x768xf32>
      tpu.vector_store %arg9[%c0_18, %c0_19], %16 {strides = array<i32>} : memref<2x768xf32, #tpu.memory_space<vmem>>, vector<2x768xf32>,
      %cst_20 = arith.constant 0.000000e+00 : f32
      %18 = vector.broadcast %cst_20 : f32 to vector<2x768xf32>
      %c0_21 = arith.constant 0 : index
      %c0_22 = arith.constant 0 : index
      %19 = vector.load %arg10[%c0_21, %c0_22] : memref<2x768xf32, #tpu.memory_space<vmem>>, vector<2x768xf32>
      tpu.vector_store %arg10[%c0_21, %c0_22], %18 {strides = array<i32>} : memref<2x768xf32, #tpu.memory_space<vmem>>, vector<2x768xf32>,
    } else {
    }
    %c0 = arith.constant 0 : index
    %c0_1 = arith.constant 0 : index
    %c0_2 = arith.constant 0 : index
    %3 = vector.load %arg2[%c0, %c0_1, %c0_2] : memref<2x8x768xf32, #tpu.memory_space<vmem>>, vector<2x8x768xf32>
    %c0_3 = arith.constant 0 : index
    %c0_4 = arith.constant 0 : index
    %c0_5 = arith.constant 0 : index
    %4 = vector.load %arg3[%c0_3, %c0_4, %c0_5] : memref<2x8x768xf32, #tpu.memory_space<vmem>>, vector<2x8x768xf32>
    %c0_6 = arith.constant 0 : index
    %c0_7 = arith.constant 0 : index
    %5 = vector.load %arg9[%c0_6, %c0_7] : memref<2x768xf32, #tpu.memory_space<vmem>>, vector<2x768xf32>
    %cst = arith.constant dense<0.000000e+00> : vector<2x768xf32>
    %6 = vector.multi_reduction <add>, %3, %cst [1] : vector<2x8x768xf32> to vector<2x768xf32>
    %7 = arith.addf %5, %6 : vector<2x768xf32>
    %c0_8 = arith.constant 0 : index
    %c0_9 = arith.constant 0 : index
    %8 = vector.load %arg9[%c0_8, %c0_9] : memref<2x768xf32, #tpu.memory_space<vmem>>, vector<2x768xf32>
    tpu.vector_store %arg9[%c0_8, %c0_9], %7 {strides = array<i32>} : memref<2x768xf32, #tpu.memory_space<vmem>>, vector<2x768xf32>,
    %c0_10 = arith.constant 0 : index
    %c0_11 = arith.constant 0 : index
    %9 = vector.load %arg10[%c0_10, %c0_11] : memref<2x768xf32, #tpu.memory_space<vmem>>, vector<2x768xf32>
    %cst_12 = arith.constant dense<0.000000e+00> : vector<2x768xf32>
    %10 = vector.multi_reduction <add>, %4, %cst_12 [1] : vector<2x8x768xf32> to vector<2x768xf32>
    %11 = arith.addf %9, %10 : vector<2x768xf32>
    %c0_13 = arith.constant 0 : index
    %c0_14 = arith.constant 0 : index
    %12 = vector.load %arg10[%c0_13, %c0_14] : memref<2x768xf32, #tpu.memory_space<vmem>>, vector<2x768xf32>
    tpu.vector_store %arg10[%c0_13, %c0_14], %11 {strides = array<i32>} : memref<2x768xf32, #tpu.memory_space<vmem>>, vector<2x768xf32>,
    %c0_i32_15 = arith.constant 0 : i32
    %13 = arith.cmpi eq, %arg1, %c0_i32_15 : i32
    %14 = arith.extui %13 : i1 to i32
    %c0_i32_16 = arith.constant 0 : i32
    %15 = arith.cmpi ne, %14, %c0_i32_16 : i32
    scf.if %15 {
      %c0_17 = arith.constant 0 : index
      %c0_18 = arith.constant 0 : index
      %16 = vector.load %arg9[%c0_17, %c0_18] : memref<2x768xf32, #tpu.memory_space<vmem>>, vector<2x768xf32>
      %cst_19 = arith.constant 1.250000e-01 : f32
      %17 = vector.broadcast %cst_19 : f32 to vector<2x768xf32>
      %18 = arith.mulf %16, %17 : vector<2x768xf32>
      %c0_20 = arith.constant 0 : index
      %c0_21 = arith.constant 0 : index
      %19 = vector.load %arg10[%c0_20, %c0_21] : memref<2x768xf32, #tpu.memory_space<vmem>>, vector<2x768xf32>
      %cst_22 = arith.constant 1.250000e-01 : f32
      %20 = vector.broadcast %cst_22 : f32 to vector<2x768xf32>
      %21 = arith.mulf %19, %20 : vector<2x768xf32>
      %22 = arith.subf %18, %21 : vector<2x768xf32>
      %23 = math.absf %22 : vector<2x768xf32>
      %24 = tpu.concatenate %18, %21, %23 in 1 : vector<2x768xf32>, vector<2x768xf32>, vector<2x768xf32> -> vector<2x2304xf32>
      %c0_23 = arith.constant 0 : index
      %c0_24 = arith.constant 0 : index
      %25 = vector.load %arg4[%c0_23, %c0_24] : memref<2304x768xf32, #tpu.memory_space<vmem>>, vector<2304x768xf32>
      %cst_25 = arith.constant dense<0.000000e+00> : vector<2x768xf32>
      %26 = tpu.matmul %24, %25, %cst_25 {dimension_numbers = #tpu.dot_dimension_numbers<[1], [0], [0], [1], [0, 0, 1, 1], [], []>} : vector<2x2304xf32>, vector<2304x768xf32>, vector<2x768xf32> -> vector<2x768xf32>
      %c0_26 = arith.constant 0 : index
      %c0_27 = arith.constant 0 : index
      %27 = vector.load %arg5[%c0_26, %c0_27] : memref<1x768xf32, #tpu.memory_space<vmem>>, vector<1x768xf32>
      %28 = vector.broadcast %27 : vector<1x768xf32> to vector<2x768xf32>
      %29 = arith.addf %26, %28 : vector<2x768xf32>
      %30 = math.tanh %29 : vector<2x768xf32>
      %c0_28 = arith.constant 0 : index
      %c0_29 = arith.constant 0 : index
      %31 = vector.load %arg6[%c0_28, %c0_29] : memref<768x128xf32, #tpu.memory_space<vmem>>, vector<768x128xf32>
      %cst_30 = arith.constant dense<0.000000e+00> : vector<2x128xf32>
      %32 = tpu.matmul %30, %31, %cst_30 {dimension_numbers = #tpu.dot_dimension_numbers<[1], [0], [0], [1], [0, 0, 1, 1], [], []>} : vector<2x768xf32>, vector<768x128xf32>, vector<2x128xf32> -> vector<2x128xf32>
      %c0_31 = arith.constant 0 : index
      %c0_32 = arith.constant 0 : index
      %33 = vector.load %arg7[%c0_31, %c0_32] : memref<1x128xf32, #tpu.memory_space<vmem>>, vector<1x128xf32>
      %34 = vector.broadcast %33 : vector<1x128xf32> to vector<2x128xf32>
      %35 = arith.addf %32, %34 : vector<2x128xf32>
      %c0_33 = arith.constant 0 : index
      %c0_34 = arith.constant 0 : index
      %36 = vector.load %arg8[%c0_33, %c0_34] : memref<2x128xf32, #tpu.memory_space<vmem>>, vector<2x128xf32>
      tpu.vector_store %arg8[%c0_33, %c0_34], %35 {strides = array<i32>} : memref<2x128xf32, #tpu.memory_space<vmem>>, vector<2x128xf32>,
    } else {
    }
    return
  }
  func.func @transform_0(%arg0: i32, %arg1: i32) -> (i32, i32, i32) {
    %c0_i32 = arith.constant 0 : i32
    %c0_i32_0 = arith.constant 0 : i32
    return %arg0, %arg1, %c0_i32 : i32, i32, i32
  }
  func.func @transform_1(%arg0: i32, %arg1: i32) -> (i32, i32, i32) {
    %c0_i32 = arith.constant 0 : i32
    %c0_i32_0 = arith.constant 0 : i32
    return %arg0, %arg1, %c0_i32 : i32, i32, i32
  }
  func.func @transform_2(%arg0: i32, %arg1: i32) -> (i32, i32) {
    %c0_i32 = arith.constant 0 : i32
    %c0_i32_0 = arith.constant 0 : i32
    %c0_i32_1 = arith.constant 0 : i32
    return %c0_i32, %c0_i32_0 : i32, i32
  }
  func.func @transform_3(%arg0: i32, %arg1: i32) -> (i32, i32) {
    %c0_i32 = arith.constant 0 : i32
    %c0_i32_0 = arith.constant 0 : i32
    %c0_i32_1 = arith.constant 0 : i32
    return %c0_i32, %c0_i32_0 : i32, i32
  }
  func.func @transform_4(%arg0: i32, %arg1: i32) -> (i32, i32) {
    %c0_i32 = arith.constant 0 : i32
    %c0_i32_0 = arith.constant 0 : i32
    %c0_i32_1 = arith.constant 0 : i32
    return %c0_i32, %c0_i32_0 : i32, i32
  }
  func.func @transform_5(%arg0: i32, %arg1: i32) -> (i32, i32) {
    %c0_i32 = arith.constant 0 : i32
    %c0_i32_0 = arith.constant 0 : i32
    %c0_i32_1 = arith.constant 0 : i32
    return %c0_i32, %c0_i32_0 : i32, i32
  }
  func.func @transform_6(%arg0: i32, %arg1: i32) -> (i32, i32) {
    %c0_i32 = arith.constant 0 : i32
    %c0_i32_0 = arith.constant 0 : i32
    return %arg0, %c0_i32 : i32, i32
  }
}

</mosaic_0001>

<llo_original>
// kernel: tpu_custom_call.1
$region0: #{tpu_custom_call.1}
  #allocation0 [shape = 'u32[]', space=smem, size = 0x4, offset = 0x4, fixed_abs, tag = 'smem constant byte address 0x4 - core index']
  #allocation1 [shape = 'u32[144,128]{1,0:T(1,128)}', space=vmem, size = 0x12000, scoped, tag = 'internal scratch']
  #allocation2 [shape = 'f32[2,768]{1,0:T(2,128)}', space=vmem, size = 0x1800, scoped, tag = 'scratch operand']
  #allocation3 [shape = 'f32[2,768]{1,0:T(2,128)}', space=vmem, size = 0x1800, scoped, tag = 'scratch operand']
  %s0 = inlined_call_operand.hbm [shape: f32[2,8,768], index: 0, kind: input, shape index: {}]
  %s1 = inlined_call_operand.hbm [shape: f32[2,8,768], index: 1, kind: input, shape index: {}]
  %s2 = inlined_call_operand.hbm [shape: f32[2304,768], index: 2, kind: input, shape index: {}]
  %s3 = inlined_call_operand.hbm [shape: f32[1,768], index: 3, kind: input, shape index: {}]
  %s4 = inlined_call_operand.hbm [shape: f32[768,128], index: 4, kind: input, shape index: {}]
  %s5 = inlined_call_operand.hbm [shape: f32[1,128], index: 5, kind: input, shape index: {}]
  %s6 = inlined_call_operand.hbm [shape: f32[2,128], index: 6, kind: output, shape index: {}]
  %s7 = sld [smem:[#allocation0]]
  $region66: #{tpu_custom_call.1} parent=0
    _
  %s9 = ssub.s32 1, %s7
  %s10 = scalar_select 0, %s9, %s7
  $region1: #{tpu_custom_call.1} parent=0
    #allocation4 [shape = 'u8[49152]{0}', space=vmem, size = 0xc000, scoped, tag = 'input window, operand 0, single buffered']
    #allocation5 [shape = 's32[1]{0}', space=sflag, size = 0x4, scoped, tag = 'scoped memory for tpu_custom_call.1']
    #allocation6 [shape = 's32[1]{0}', space=sflag, size = 0x4, scoped, tag = 'scoped memory for tpu_custom_call.1']
    #allocation7 [shape = 'u8[49152]{0}', space=vmem, size = 0xc000, scoped, tag = 'input window, operand 1, single buffered']
    #allocation8 [shape = 's32[1]{0}', space=sflag, size = 0x4, scoped, tag = 'scoped memory for tpu_custom_call.1']
    #allocation9 [shape = 'u8[7077888]{0}', space=vmem, size = 0x6c0000, scoped, tag = 'input window, operand 2, single buffered']
    #allocation10 [shape = 'u8[3072]{0}', space=vmem, size = 0xc00, scoped, tag = 'input window, operand 3, single buffered']
    #allocation11 [shape = 's32[1]{0}', space=sflag, size = 0x4, scoped, tag = 'scoped memory for tpu_custom_call.1']
    #allocation12 [shape = 'u8[393216]{0}', space=vmem, size = 0x60000, scoped, tag = 'input window, operand 4, single buffered']
    #allocation13 [shape = 'u8[512]{0}', space=vmem, size = 0x400, scoped, tag = 'input window, operand 5, single buffered']
    #allocation14 [shape = 's32[1]{0}', space=sflag, size = 0x4, scoped, tag = 'scoped memory for tpu_custom_call.1']
    #allocation15 [shape = 'u8[1024]{0}', space=vmem, size = 0x400, scoped, tag = 'output window, operand 0, single buffered']
    %11 = vsyncpa [#allocation5], 0
    %12 = vsyncpa [#allocation8], 0
    %13 = vsyncpa [#allocation11], 0
    %14 = vsyncpa [#allocation14], 0
    %15 = vsyncpa [#allocation6], 0
    // Predicated region
    $region2: #{tpu_custom_call.1} parent=1 // pred_check
      _
    $region3: #{tpu_custom_call.1} parent=1 // pred_check_branch
      %17 = sbr.rel (0) target = $region5
    $region4: #{tpu_custom_call.1} parent=1 // pred_region
      %s19 = ssub.s32 1536, 1536
      %20 = vsyncadd [#allocation5], %s19
      %s21 = sshll.u32 [#allocation4], 4
      %s22 = int_to_ptr.vmem [resolvable:$true] %s21
      %27 = dma.hbm_to_vmem [thread:$0]  %s0, 1536, %s22, [#allocation5], 768, 768, 48
    $region5: #{tpu_custom_call.1} parent=1 // pred_fallthru
      _
    // Predicated region
    $region6: #{tpu_custom_call.1} parent=1 // pred_check
      _
    $region7: #{tpu_custom_call.1} parent=1 // pred_check_branch
      %29 = sbr.rel (0) target = $region9
    $region8: #{tpu_custom_call.1} parent=1 // pred_region
      %s31 = ssub.s32 1536, 1536
      %32 = vsyncadd [#allocation8], %s31
      %s33 = sshll.u32 [#allocation7], 4
      %s34 = int_to_ptr.vmem [resolvable:$true] %s33
      %39 = dma.hbm_to_vmem [thread:$0]  %s1, 1536, %s34, [#allocation8], 768, 768, 48
    $region9: #{tpu_custom_call.1} parent=1 // pred_fallthru
      _
    // Predicated region
    $region10: #{tpu_custom_call.1} parent=1 // pred_check
      _
    $region11: #{tpu_custom_call.1} parent=1 // pred_check_branch
      %41 = sbr.rel (0) target = $region13
    $region12: #{tpu_custom_call.1} parent=1 // pred_region
      %s43 = ssub.s32 221184, 221184
      %44 = vsyncadd [#allocation8], %s43
      %s45 = sshll.u32 [#allocation9], 4
      %s46 = int_to_ptr.vmem [resolvable:$true] %s45
      %51 = dma.hbm_to_vmem [thread:$0]  %s2, 221184, %s46, [#allocation8], 768, 768, 48
    $region13: #{tpu_custom_call.1} parent=1 // pred_fallthru
      _
    // Predicated region
    $region14: #{tpu_custom_call.1} parent=1 // pred_check
      _
    $region15: #{tpu_custom_call.1} parent=1 // pred_check_branch
      %53 = sbr.rel (0) target = $region17
    $region16: #{tpu_custom_call.1} parent=1 // pred_region
      %s55 = ssub.s32 96, 96
      %56 = vsyncadd [#allocation11], %s55
      %s58 = sshll.u32 [#allocation10], 4
      %s59 = int_to_ptr.vmem [resolvable:$true] %s58
      %61 = dma.hbm_to_vmem [thread:$0]  %s3, 96, %s59, [#allocation11]
    $region17: #{tpu_custom_call.1} parent=1 // pred_fallthru
      _
    // Predicated region
    $region18: #{tpu_custom_call.1} parent=1 // pred_check
      _
    $region19: #{tpu_custom_call.1} parent=1 // pred_check_branch
      %63 = sbr.rel (0) target = $region21
    $region20: #{tpu_custom_call.1} parent=1 // pred_region
      %s65 = ssub.s32 12288, 12288
      %66 = vsyncadd [#allocation11], %s65
      %s67 = sshll.u32 [#allocation12], 4
      %s68 = int_to_ptr.vmem [resolvable:$true] %s67
      %73 = dma.hbm_to_vmem [thread:$0]  %s4, 12288, %s68, [#allocation11], 128, 128, 8
    $region21: #{tpu_custom_call.1} parent=1 // pred_fallthru
      _
    // Predicated region
    $region22: #{tpu_custom_call.1} parent=1 // pred_check
      _
    $region23: #{tpu_custom_call.1} parent=1 // pred_check_branch
      %75 = sbr.rel (0) target = $region25
    $region24: #{tpu_custom_call.1} parent=1 // pred_region
      %s77 = ssub.s32 16, 16
      %78 = vsyncadd [#allocation14], %s77
      %s80 = sshll.u32 [#allocation13], 4
      %s81 = int_to_ptr.vmem [resolvable:$true] %s80
      %83 = dma.hbm_to_vmem [thread:$0]  %s5, 16, %s81, [#allocation14]
    $region25: #{tpu_custom_call.1} parent=1 // pred_fallthru
      _
    // Predicated region
    $region26: #{tpu_custom_call.1} parent=1 // pred_check
      _
    $region27: #{tpu_custom_call.1} parent=1 // pred_check_branch
      %85 = sbr.rel (0) target = $region29
    $region28: #{tpu_custom_call.1} parent=1 // pred_region
      %86 = dma.done [#allocation5], 1536
    $region29: #{tpu_custom_call.1} parent=1 // pred_fallthru
      _
    // Predicated region
    $region30: #{tpu_custom_call.1} parent=1 // pred_check
      _
    $region31: #{tpu_custom_call.1} parent=1 // pred_check_branch
      %88 = sbr.rel (0) target = $region33
    $region32: #{tpu_custom_call.1} parent=1 // pred_region
      %89 = dma.done [#allocation8], 1536
    $region33: #{tpu_custom_call.1} parent=1 // pred_fallthru
      _
    // Predicated region
    $region34: #{tpu_custom_call.1} parent=1 // pred_check
      _
    $region35: #{tpu_custom_call.1} parent=1 // pred_check_branch
      %91 = sbr.rel (0) target = $region37
    $region36: #{tpu_custom_call.1} parent=1 // pred_region
      %92 = dma.done [#allocation8], 221184
    $region37: #{tpu_custom_call.1} parent=1 // pred_fallthru
      _
    // Predicated region
    $region38: #{tpu_custom_call.1} parent=1 // pred_check
      _
    $region39: #{tpu_custom_call.1} parent=1 // pred_check_branch
      %94 = sbr.rel (0) target = $region41
    $region40: #{tpu_custom_call.1} parent=1 // pred_region
      %95 = dma.done [#allocation11], 96
    $region41: #{tpu_custom_call.1} parent=1 // pred_fallthru
      _
    // Predicated region
    $region42: #{tpu_custom_call.1} parent=1 // pred_check
      _
    $region43: #{tpu_custom_call.1} parent=1 // pred_check_branch
      %97 = sbr.rel (0) target = $region45
    $region44: #{tpu_custom_call.1} parent=1 // pred_region
      %98 = dma.done [#allocation11], 12288
    $region45: #{tpu_custom_call.1} parent=1 // pred_fallthru
      _
    // Predicated region
    $region46: #{tpu_custom_call.1} parent=1 // pred_check
      _
    $region47: #{tpu_custom_call.1} parent=1 // pred_check_branch
      %100 = sbr.rel (0) target = $region49
    $region48: #{tpu_custom_call.1} parent=1 // pred_region
      %101 = dma.done [#allocation14], 16
    $region49: #{tpu_custom_call.1} parent=1 // pred_fallthru
      _
    %p102 = scmp.eq.s32.totalorder 0, 0
    // Predicated region
    $region50: #{tpu_custom_call.1} parent=1 // pred_check
      %p103 = pneg %p102
    $region51: #{tpu_custom_call.1} parent=1 // pred_check_branch
      %105 = sbr.rel (%p103) target = $region53
    $region52: #{tpu_custom_call.1} parent=1 // pred_region
      %106 = vst [vmem:[#allocation2] sm:$0xff] 0.0
      %107 = vst [vmem:[#allocation2 + $0x8] sm:$0xf] 0.0
      %108 = vst [vmem:[#allocation3] sm:$0xff] 0.0
      %109 = vst [vmem:[#allocation3 + $0x8] sm:$0xf] 0.0
    $region53: #{tpu_custom_call.1} parent=1 // pred_fallthru
      _
    %v110 = vld [vmem:[#allocation4] sm:$0xff]
    %v111 = vld [vmem:[#allocation4 + $0x8] sm:$0xff]
    %v112 = vld [vmem:[#allocation4 + $0x10] sm:$0xff]
    %v113 = vld [vmem:[#allocation4 + $0x18] sm:$0xff]
    %v114 = vld [vmem:[#allocation4 + $0x20] sm:$0xff]
    %v115 = vld [vmem:[#allocation4 + $0x28] sm:$0xff]
    %v116 = vld [vmem:[#allocation4 + $0x30] sm:$0xff]
    %v117 = vld [vmem:[#allocation4 + $0x38] sm:$0xff]
    %v118 = vld [vmem:[#allocation4 + $0x40] sm:$0xff]
    %v119 = vld [vmem:[#allocation4 + $0x48] sm:$0xff]
    %v120 = vld [vmem:[#allocation4 + $0x50] sm:$0xff]
    %v121 = vld [vmem:[#allocation4 + $0x58] sm:$0xff]
    %v122 = vld [vmem:[#allocation7] sm:$0xff]
    %v123 = vld [vmem:[#allocation7 + $0x8] sm:$0xff]
    %v124 = vld [vmem:[#allocation7 + $0x10] sm:$0xff]
    %v125 = vld [vmem:[#allocation7 + $0x18] sm:$0xff]
    %v126 = vld [vmem:[#allocation7 + $0x20] sm:$0xff]
    %v127 = vld [vmem:[#allocation7 + $0x28] sm:$0xff]
    %v128 = vld [vmem:[#allocation7 + $0x30] sm:$0xff]
    %v129 = vld [vmem:[#allocation7 + $0x38] sm:$0xff]
    %v130 = vld [vmem:[#allocation7 + $0x40] sm:$0xff]
    %v131 = vld [vmem:[#allocation7 + $0x48] sm:$0xff]
    %v132 = vld [vmem:[#allocation7 + $0x50] sm:$0xff]
    %v133 = vld [vmem:[#allocation7 + $0x58] sm:$0xff]
    %v134 = vld [vmem:[#allocation2] sm:$0xff]
    %v135 = vld [vmem:[#allocation2 + $0x8] sm:$0xf]
    %v136 = vrot.slane %v110, 4
    %v137 = vadd.f32 %v110, %v136
    %v138 = vrot.slane %v137, 2
    %v139 = vadd.f32 %v137, %v138
    %v140 = vrot.slane %v139, 1
    %v141 = vadd.f32 %v139, %v140
    %v142 = vrot.slane %v111, 4
    %v143 = vadd.f32 %v111, %v142
    %v144 = vrot.slane %v143, 2
    %v145 = vadd.f32 %v143, %v144
    %v146 = vrot.slane %v145, 1
    %v147 = vadd.f32 %v145, %v146
    %v148 = vrot.slane %v112, 4
    %v149 = vadd.f32 %v112, %v148
    %v150 = vrot.slane %v149, 2
    %v151 = vadd.f32 %v149, %v150
    %v152 = vrot.slane %v151, 1
    %v153 = vadd.f32 %v151, %v152
    %v154 = vrot.slane %v113, 4
    %v155 = vadd.f32 %v113, %v154
    %v156 = vrot.slane %v155, 2
    %v157 = vadd.f32 %v155, %v156
    %v158 = vrot.slane %v157, 1
    %v159 = vadd.f32 %v157, %v158
    %v160 = vrot.slane %v114, 4
    %v161 = vadd.f32 %v114, %v160
    %v162 = vrot.slane %v161, 2
    %v163 = vadd.f32 %v161, %v162
    %v164 = vrot.slane %v163, 1
    %v165 = vadd.f32 %v163, %v164
    %v166 = vrot.slane %v115, 4
    %v167 = vadd.f32 %v115, %v166
    %v168 = vrot.slane %v167, 2
    %v169 = vadd.f32 %v167, %v168
    %v170 = vrot.slane %v169, 1
    %v171 = vadd.f32 %v169, %v170
    %v172 = vrot.slane %v116, 4
    %v173 = vadd.f32 %v116, %v172
    %v174 = vrot.slane %v173, 2
    %v175 = vadd.f32 %v173, %v174
    %v176 = vrot.slane %v175, 1
    %v177 = vadd.f32 %v175, %v176
    %v178 = vrot.slane %v117, 4
    %v179 = vadd.f32 %v117, %v178
    %v180 = vrot.slane %v179, 2
    %v181 = vadd.f32 %v179, %v180
    %v182 = vrot.slane %v181, 1
    %v183 = vadd.f32 %v181, %v182
    %v184 = vrot.slane %v118, 4
    %v185 = vadd.f32 %v118, %v184
    %v186 = vrot.slane %v185, 2
    %v187 = vadd.f32 %v185, %v186
    %v188 = vrot.slane %v187, 1
    %v189 = vadd.f32 %v187, %v188
    %v190 = vrot.slane %v119, 4
    %v191 = vadd.f32 %v119, %v190
    %v192 = vrot.slane %v191, 2
    %v193 = vadd.f32 %v191, %v192
    %v194 = vrot.slane %v193, 1
    %v195 = vadd.f32 %v193, %v194
    %v196 = vrot.slane %v120, 4
    %v197 = vadd.f32 %v120, %v196
    %v198 = vrot.slane %v197, 2
    %v199 = vadd.f32 %v197, %v198
    %v200 = vrot.slane %v199, 1
    %v201 = vadd.f32 %v199, %v200
    %v202 = vrot.slane %v121, 4
    %v203 = vadd.f32 %v121, %v202
    %v204 = vrot.slane %v203, 2
    %v205 = vadd.f32 %v203, %v204
    %v206 = vrot.slane %v205, 1
    %v207 = vadd.f32 %v205, %v206
    %v220 = vcombine.low %v141, %v147
    %v221 = vcombine.low %v153, %v159
    %v223 = vunpack.c.l.s4 1983009808
    %v224 = vunpack.c.0.s8 %v223
    %v225 = vlaneseq
    %v226 = vshrl.u32 %v225, 7
    %v227 = vsub.s32 %v224, %v226
    %v228 = vrot.slane %v220, %v227
    %v230 = vunpack.c.l.s4 1983009808
    %v231 = vunpack.c.0.s8 %v230
    %v232 = vlaneseq
    %v233 = vshrl.u32 %v232, 7
    %v234 = vsub.s32 %v231, %v233
    %v235 = vrot.slane %v221, %v234
    %v236 = vcombine.low %v228, %v235
    %v237 = vcombine.low %v165, %v171
    %v239 = vunpack.c.l.s4 1983009808
    %v240 = vunpack.c.0.s8 %v239
    %v241 = vlaneseq
    %v242 = vshrl.u32 %v241, 7
    %v243 = vsub.s32 %v240, %v242
    %v244 = vrot.slane %v237, %v243
    %v245 = vcombine.low %v177, %v183
    %v246 = vcombine.low %v189, %v195
    %v248 = vunpack.c.l.s4 1983009808
    %v249 = vunpack.c.0.s8 %v248
    %v250 = vlaneseq
    %v251 = vshrl.u32 %v250, 7
    %v252 = vsub.s32 %v249, %v251
    %v253 = vrot.slane %v245, %v252
    %v255 = vunpack.c.l.s4 1983009808
    %v256 = vunpack.c.0.s8 %v255
    %v257 = vlaneseq
    %v258 = vshrl.u32 %v257, 7
    %v259 = vsub.s32 %v256, %v258
    %v260 = vrot.slane %v246, %v259
    %v261 = vcombine.low %v253, %v260
    %v262 = vcombine.low %v201, %v207
    %v264 = vunpack.c.l.s4 1983009808
    %v265 = vunpack.c.0.s8 %v264
    %v266 = vlaneseq
    %v267 = vshrl.u32 %v266, 7
    %v268 = vsub.s32 %v265, %v267
    %v269 = vrot.slane %v262, %v268
    %vm270 = vcmask 1044484
    %v271 = vsel %vm270, %v236, %v236
    %vm272 = vcmask 1046534
    %v273 = vsel %vm272, %v236, %v271
    %v274 = vrot.slane %v261, 7
    %vm275 = vcmask 1041409
    %v276 = vsel %vm275, %v274, %v273
    %vm277 = vcmask 1043459
    %v278 = vsel %vm277, %v274, %v276
    %vm279 = vcmask 1045509
    %v280 = vsel %vm279, %v274, %v278
    %vm281 = vcmask 1047559
    %v282 = vsel %vm281, %v274, %v280
    %v283 = vsel %vm270, %v244, %v244
    %v284 = vsel %vm272, %v244, %v283
    %v285 = vrot.slane %v269, 7
    %v286 = vsel %vm275, %v285, %v284
    %v287 = vsel %vm277, %v285, %v286
    %v288 = vsel %vm279, %v285, %v287
    %v289 = vsel %vm281, %v285, %v288
    %v292 = vadd.f32 %v134, %v282
    %v293 = vadd.f32 %v135, %v289
    %294 = vst [vmem:[#allocation2] sm:$0xff] %v292
    %295 = vst [vmem:[#allocation2 + $0x8] sm:$0xf] %v293
    %v296 = vld [vmem:[#allocation3] sm:$0xff]
    %v297 = vld [vmem:[#allocation3 + $0x8] sm:$0xf]
    %v298 = vrot.slane %v122, 4
    %v299 = vadd.f32 %v122, %v298
    %v300 = vrot.slane %v299, 2
    %v301 = vadd.f32 %v299, %v300
    %v302 = vrot.slane %v301, 1
    %v303 = vadd.f32 %v301, %v302
    %v304 = vrot.slane %v123, 4
    %v305 = vadd.f32 %v123, %v304
    %v306 = vrot.slane %v305, 2
    %v307 = vadd.f32 %v305, %v306
    %v308 = vrot.slane %v307, 1
    %v309 = vadd.f32 %v307, %v308
    %v310 = vrot.slane %v124, 4
    %v311 = vadd.f32 %v124, %v310
    %v312 = vrot.slane %v311, 2
    %v313 = vadd.f32 %v311, %v312
    %v314 = vrot.slane %v313, 1
    %v315 = vadd.f32 %v313, %v314
    %v316 = vrot.slane %v125, 4
    %v317 = vadd.f32 %v125, %v316
    %v318 = vrot.slane %v317, 2
    %v319 = vadd.f32 %v317, %v318
    %v320 = vrot.slane %v319, 1
    %v321 = vadd.f32 %v319, %v320
    %v322 = vrot.slane %v126, 4
    %v323 = vadd.f32 %v126, %v322
    %v324 = vrot.slane %v323, 2
    %v325 = vadd.f32 %v323, %v324
    %v326 = vrot.slane %v325, 1
    %v327 = vadd.f32 %v325, %v326
    %v328 = vrot.slane %v127, 4
    %v329 = vadd.f32 %v127, %v328
    %v330 = vrot.slane %v329, 2
    %v331 = vadd.f32 %v329, %v330
    %v332 = vrot.slane %v331, 1
    %v333 = vadd.f32 %v331, %v332
    %v334 = vrot.slane %v128, 4
    %v335 = vadd.f32 %v128, %v334
    %v336 = vrot.slane %v335, 2
    %v337 = vadd.f32 %v335, %v336
    %v338 = vrot.slane %v337, 1
    %v339 = vadd.f32 %v337, %v338
    %v340 = vrot.slane %v129, 4
    %v341 = vadd.f32 %v129, %v340
    %v342 = vrot.slane %v341, 2
    %v343 = vadd.f32 %v341, %v342
    %v344 = vrot.slane %v343, 1
    %v345 = vadd.f32 %v343, %v344
    %v346 = vrot.slane %v130, 4
    %v347 = vadd.f32 %v130, %v346
    %v348 = vrot.slane %v347, 2
    %v349 = vadd.f32 %v347, %v348
    %v350 = vrot.slane %v349, 1
    %v351 = vadd.f32 %v349, %v350
    %v352 = vrot.slane %v131, 4
    %v353 = vadd.f32 %v131, %v352
    %v354 = vrot.slane %v353, 2
    %v355 = vadd.f32 %v353, %v354
    %v356 = vrot.slane %v355, 1
    %v357 = vadd.f32 %v355, %v356
    %v358 = vrot.slane %v132, 4
    %v359 = vadd.f32 %v132, %v358
    %v360 = vrot.slane %v359, 2
    %v361 = vadd.f32 %v359, %v360
    %v362 = vrot.slane %v361, 1
    %v363 = vadd.f32 %v361, %v362
    %v364 = vrot.slane %v133, 4
    %v365 = vadd.f32 %v133, %v364
    %v366 = vrot.slane %v365, 2
    %v367 = vadd.f32 %v365, %v366
    %v368 = vrot.slane %v367, 1
    %v369 = vadd.f32 %v367, %v368
    %v382 = vcombine.low %v303, %v309
    %v383 = vcombine.low %v315, %v321
    %v385 = vunpack.c.l.s4 1983009808
    %v386 = vunpack.c.0.s8 %v385
    %v387 = vlaneseq
    %v388 = vshrl.u32 %v387, 7
    %v389 = vsub.s32 %v386, %v388
    %v390 = vrot.slane %v382, %v389
    %v392 = vunpack.c.l.s4 1983009808
    %v393 = vunpack.c.0.s8 %v392
    %v394 = vlaneseq
    %v395 = vshrl.u32 %v394, 7
    %v396 = vsub.s32 %v393, %v395
    %v397 = vrot.slane %v383, %v396
    %v398 = vcombine.low %v390, %v397
    %v399 = vcombine.low %v327, %v333
    %v401 = vunpack.c.l.s4 1983009808
    %v402 = vunpack.c.0.s8 %v401
    %v403 = vlaneseq
    %v404 = vshrl.u32 %v403, 7
    %v405 = vsub.s32 %v402, %v404
    %v406 = vrot.slane %v399, %v405
    %v407 = vcombine.low %v339, %v345
    %v408 = vcombine.low %v351, %v357
    %v410 = vunpack.c.l.s4 1983009808
    %v411 = vunpack.c.0.s8 %v410
    %v412 = vlaneseq
    %v413 = vshrl.u32 %v412, 7
    %v414 = vsub.s32 %v411, %v413
    %v415 = vrot.slane %v407, %v414
    %v417 = vunpack.c.l.s4 1983009808
    %v418 = vunpack.c.0.s8 %v417
    %v419 = vlaneseq
    %v420 = vshrl.u32 %v419, 7
    %v421 = vsub.s32 %v418, %v420
    %v422 = vrot.slane %v408, %v421
    %v423 = vcombine.low %v415, %v422
    %v424 = vcombine.low %v363, %v369
    %v426 = vunpack.c.l.s4 1983009808
    %v427 = vunpack.c.0.s8 %v426
    %v428 = vlaneseq
    %v429 = vshrl.u32 %v428, 7
    %v430 = vsub.s32 %v427, %v429
    %v431 = vrot.slane %v424, %v430
    %v432 = vsel %vm270, %v398, %v398
    %v433 = vsel %vm272, %v398, %v432
    %v434 = vrot.slane %v423, 7
    %v435 = vsel %vm275, %v434, %v433
    %v436 = vsel %vm277, %v434, %v435
    %v437 = vsel %vm279, %v434, %v436
    %v438 = vsel %vm281, %v434, %v437
    %v439 = vsel %vm270, %v406, %v406
    %v440 = vsel %vm272, %v406, %v439
    %v441 = vrot.slane %v431, 7
    %v442 = vsel %vm275, %v441, %v440
    %v443 = vsel %vm277, %v441, %v442
    %v444 = vsel %vm279, %v441, %v443
    %v445 = vsel %vm281, %v441, %v444
    %v448 = vadd.f32 %v296, %v438
    %v449 = vadd.f32 %v297, %v445
    %450 = vst [vmem:[#allocation3] sm:$0xff] %v448
    %451 = vst [vmem:[#allocation3 + $0x8] sm:$0xf] %v449
    // Predicated region
    $region54: #{tpu_custom_call.1} parent=1 // pred_check
      %p452 = pneg %p102
    $region55: #{tpu_custom_call.1} parent=1 // pred_check_branch
      %454 = sbr.rel (%p452) target = $region57
    $region56: #{tpu_custom_call.1} parent=1 // pred_region
      %v455 = vld [vmem:[#allocation2] sm:$0xff]
      %v456 = vld [vmem:[#allocation2 + $0x8] sm:$0xf]
      %v457 = vmul.f32 %v455, 0.125
      %v458 = vmul.f32 %v456, 0.125
      %v459 = vld [vmem:[#allocation3] sm:$0xff]
      %v460 = vld [vmem:[#allocation3 + $0x8] sm:$0xf]
      %v461 = vmul.f32 %v459, 0.125
      %v462 = vmul.f32 %v460, 0.125
      %v463 = vsub.f32 %v457, %v461
      %v464 = vsub.f32 %v458, %v462
      %v465 = vand.u32 2147483647, %v463
      %v466 = vand.u32 2147483647, %v464
      %v469 = vcombine.high %v457, %v457
      %v471 = vunpack.c.l.s4 1983009808
      %v472 = vunpack.c.0.s8 %v471
      %v473 = vlaneseq
      %v474 = vshrl.u32 %v473, 7
      %v475 = vsub.s32 %v472, %v474
      %v476 = vrot.slane %v457, %v475
      %v478 = vunpack.c.l.s4 1983009808
      %v479 = vunpack.c.0.s8 %v478
      %v480 = vlaneseq
      %v481 = vshrl.u32 %v480, 7
      %v482 = vsub.s32 %v479, %v481
      %v483 = vrot.slane %v469, %v482
      %v484 = vcombine.high %v476, %v476
      %v485 = vcombine.high %v483, %v483
      %v487 = vunpack.c.l.s4 1983009808
      %v488 = vunpack.c.0.s8 %v487
      %v489 = vlaneseq
      %v490 = vshrl.u32 %v489, 7
      %v491 = vsub.s32 %v488, %v490
      %v492 = vrot.slane %v458, %v491
      %v493 = vcombine.high %v492, %v492
      %v502 = vcombine.high %v461, %v461
      %v504 = vunpack.c.l.s4 1983009808
      %v505 = vunpack.c.0.s8 %v504
      %v506 = vlaneseq
      %v507 = vshrl.u32 %v506, 7
      %v508 = vsub.s32 %v505, %v507
      %v509 = vrot.slane %v461, %v508
      %v511 = vunpack.c.l.s4 1983009808
      %v512 = vunpack.c.0.s8 %v511
      %v513 = vlaneseq
      %v514 = vshrl.u32 %v513, 7
      %v515 = vsub.s32 %v512, %v514
      %v516 = vrot.slane %v502, %v515
      %v517 = vcombine.high %v509, %v509
      %v518 = vcombine.high %v516, %v516
      %v520 = vunpack.c.l.s4 1983009808
      %v521 = vunpack.c.0.s8 %v520
      %v522 = vlaneseq
      %v523 = vshrl.u32 %v522, 7
      %v524 = vsub.s32 %v521, %v523
      %v525 = vrot.slane %v462, %v524
      %v526 = vcombine.high %v525, %v525
      %v535 = vcombine.high %v465, %v465
      %v537 = vunpack.c.l.s4 1983009808
      %v538 = vunpack.c.0.s8 %v537
      %v539 = vlaneseq
      %v540 = vshrl.u32 %v539, 7
      %v541 = vsub.s32 %v538, %v540
      %v542 = vrot.slane %v465, %v541
      %v544 = vunpack.c.l.s4 1983009808
      %v545 = vunpack.c.0.s8 %v544
      %v546 = vlaneseq
      %v547 = vshrl.u32 %v546, 7
      %v548 = vsub.s32 %v545, %v547
      %v549 = vrot.slane %v535, %v548
      %v550 = vcombine.high %v542, %v542
      %v551 = vcombine.high %v549, %v549
      %v553 = vunpack.c.l.s4 1983009808
      %v554 = vunpack.c.0.s8 %v553
      %v555 = vlaneseq
      %v556 = vshrl.u32 %v555, 7
      %v557 = vsub.s32 %v554, %v556
      %v558 = vrot.slane %v466, %v557
      %v559 = vcombine.high %v558, %v558
      %v566 = vld [vmem:[#allocation9] sm:$0xff]
      %v567 = vld [vmem:[#allocation9 + $0x8] sm:$0xff]
      %v568 = vld [vmem:[#allocation9 + $0x10] sm:$0xff]
      %v569 = vld [vmem:[#allocation9 + $0x18] sm:$0xff]
      %v570 = vld [vmem:[#allocation9 + $0x20] sm:$0xff]
      %v571 = vld [vmem:[#allocation9 + $0x28] sm:$0xff]
      %v572 = vld [vmem:[#allocation9 + $0x30] sm:$0xff]
      %v573 = vld [vmem:[#allocation9 + $0x38] sm:$0xff]
      %v574 = vld [vmem:[#allocation9 + $0x40] sm:$0xff]
      %v575 = vld [vmem:[#allocation9 + $0x48] sm:$0xff]
      %v576 = vld [vmem:[#allocation9 + $0x50] sm:$0xff]
      %v577 = vld [vmem:[#allocation9 + $0x58] sm:$0xff]
      %v578 = vld [vmem:[#allocation9 + $0x60] sm:$0xff]
      %v579 = vld [vmem:[#allocation9 + $0x68] sm:$0xff]
      %v580 = vld [vmem:[#allocation9 + $0x70] sm:$0xff]
      %v581 = vld [vmem:[#allocation9 + $0x78] sm:$0xff]
      %v582 = vld [vmem:[#allocation9 + $0x80] sm:$0xff]
      %v583 = vld [vmem:[#allocation9 + $0x88] sm:$0xff]
      %v584 = vld [vmem:[#allocation9 + $0x90] sm:$0xff]
      %v585 = vld [vmem:[#allocation9 + $0x98] sm:$0xff]
      %v586 = vld [vmem:[#allocation9 + $0xa0] sm:$0xff]
      %v587 = vld [vmem:[#allocation9 + $0xa8] sm:$0xff]
      %v588 = vld [vmem:[#allocation9 + $0xb0] sm:$0xff]
      %v589 = vld [vmem:[#allocation9 + $0xb8] sm:$0xff]
      %v590 = vld [vmem:[#allocation9 + $0xc0] sm:$0xff]
      %v591 = vld [vmem:[#allocation9 + $0xc8] sm:$0xff]
      %v592 = vld [vmem:[#allocation9 + $0xd0] sm:$0xff]
      %v593 = vld [vmem:[#allocation9 + $0xd8] sm:$0xff]
      %v594 = vld [vmem:[#allocation9 + $0xe0] sm:$0xff]
      %v595 = vld [vmem:[#allocation9 + $0xe8] sm:$0xff]
      %v596 = vld [vmem:[#allocation9 + $0xf0] sm:$0xff]
      %v597 = vld [vmem:[#allocation9 + $0xf8] sm:$0xff]
      %v598 = vld [vmem:[#allocation9 + $0x100] sm:$0xff]
      %v599 = vld [vmem:[#allocation9 + $0x108] sm:$0xff]
      %v600 = vld [vmem:[#allocation9 + $0x110] sm:$0xff]
      %v601 = vld [vmem:[#allocation9 + $0x118] sm:$0xff]
      %v602 = vld [vmem:[#allocation9 + $0x120] sm:$0xff]
      %v603 = vld [vmem:[#allocation9 + $0x128] sm:$0xff]
      %v604 = vld [vmem:[#allocation9 + $0x130] sm:$0xff]
      %v605 = vld [vmem:[#allocation9 + $0x138] sm:$0xff]
      %v606 = vld [vmem:[#allocation9 + $0x140] sm:$0xff]
      %v607 = vld [vmem:[#allocation9 + $0x148] sm:$0xff]
      %v608 = vld [vmem:[#allocation9 + $0x150] sm:$0xff]
      %v609 = vld [vmem:[#allocation9 + $0x158] sm:$0xff]
      %v610 = vld [vmem:[#allocation9 + $0x160] sm:$0xff]
      %v611 = vld [vmem:[#allocation9 + $0x168] sm:$0xff]
      %v612 = vld [vmem:[#allocation9 + $0x170] sm:$0xff]
      %v613 = vld [vmem:[#allocation9 + $0x178] sm:$0xff]
      %v614 = vld [vmem:[#allocation9 + $0x180] sm:$0xff]
      %v615 = vld [vmem:[#allocation9 + $0x188] sm:$0xff]
      %v616 = vld [vmem:[#allocation9 + $0x190] sm:$0xff]
      %v617 = vld [vmem:[#allocation9 + $0x198] sm:$0xff]
      %v618 = vld [vmem:[#allocation9 + $0x1a0] sm:$0xff]
      %v619 = vld [vmem:[#allocation9 + $0x1a8] sm:$0xff]
      %v620 = vld [vmem:[#allocation9 + $0x1b0] sm:$0xff]
      %v621 = vld [vmem:[#allocation9 + $0x1b8] sm:$0xff]
      %v622 = vld [vmem:[#allocation9 + $0x1c0] sm:$0xff]
      %v623 = vld [vmem:[#allocation9 + $0x1c8] sm:$0xff]
      %v624 = vld [vmem:[#allocation9 + $0x1d0] sm:$0xff]
      %v625 = vld [vmem:[#allocation9 + $0x1d8] sm:$0xff]
      %v626 = vld [vmem:[#allocation9 + $0x1e0] sm:$0xff]
      %v627 = vld [vmem:[#allocation9 + $0x1e8] sm:$0xff]
      %v628 = vld [vmem:[#allocation9 + $0x1f0] sm:$0xff]
      %v629 = vld [vmem:[#allocation9 + $0x1f8] sm:$0xff]
      %v630 = vld [vmem:[#allocation9 + $0x200] sm:$0xff]
      %v631 = vld [vmem:[#allocation9 + $0x208] sm:$0xff]
      %v632 = vld [vmem:[#allocation9 + $0x210] sm:$0xff]
      %v633 = vld [vmem:[#allocation9 + $0x218] sm:$0xff]
      %v634 = vld [vmem:[#allocation9 + $0x220] sm:$0xff]
      %v635 = vld [vmem:[#allocation9 + $0x228] sm:$0xff]
      %v636 = vld [vmem:[#allocation9 + $0x230] sm:$0xff]
      %v637 = vld [vmem:[#allocation9 + $0x238] sm:$0xff]
      %v638 = vld [vmem:[#allocation9 + $0x240] sm:$0xff]
      %v639 = vld [vmem:[#allocation9 + $0x248] sm:$0xff]
      %v640 = vld [vmem:[#allocation9 + $0x250] sm:$0xff]
      %v641 = vld [vmem:[#allocation9 + $0x258] sm:$0xff]
      %v642 = vld [vmem:[#allocation9 + $0x260] sm:$0xff]
      %v643 = vld [vmem:[#allocation9 + $0x268] sm:$0xff]
      %v644 = vld [vmem:[#allocation9 + $0x270] sm:$0xff]
      %v645 = vld [vmem:[#allocation9 + $0x278] sm:$0xff]
      %v646 = vld [vmem:[#allocation9 + $0x280] sm:$0xff]
      %v647 = vld [vmem:[#allocation9 + $0x288] sm:$0xff]
      %v648 = vld [vmem:[#allocation9 + $0x290] sm:$0xff]
      %v649 = vld [vmem:[#allocation9 + $0x298] sm:$0xff]
      %v650 = vld [vmem:[#allocation9 + $0x2a0] sm:$0xff]
      %v651 = vld [vmem:[#allocation9 + $0x2a8] sm:$0xff]
      %v652 = vld [vmem:[#allocation9 + $0x2b0] sm:$0xff]
      %v653 = vld [vmem:[#allocation9 + $0x2b8] sm:$0xff]
      %v654 = vld [vmem:[#allocation9 + $0x2c0] sm:$0xff]
      %v655 = vld [vmem:[#allocation9 + $0x2c8] sm:$0xff]
      %v656 = vld [vmem:[#allocation9 + $0x2d0] sm:$0xff]
      %v657 = vld [vmem:[#allocation9 + $0x2d8] sm:$0xff]
      %v658 = vld [vmem:[#allocation9 + $0x2e0] sm:$0xff]
      %v659 = vld [vmem:[#allocation9 + $0x2e8] sm:$0xff]
      %v660 = vld [vmem:[#allocation9 + $0x2f0] sm:$0xff]
      %v661 = vld [vmem:[#allocation9 + $0x2f8] sm:$0xff]
      %v662 = vld [vmem:[#allocation9 + $0x300] sm:$0xff]
      %v663 = vld [vmem:[#allocation9 + $0x308] sm:$0xff]
      %v664 = vld [vmem:[#allocation9 + $0x310] sm:$0xff]
      %v665 = vld [vmem:[#allocation9 + $0x318] sm:$0xff]
      %v666 = vld [vmem:[#allocation9 + $0x320] sm:$0xff]
      %v667 = vld [vmem:[#allocation9 + $0x328] sm:$0xff]
      %v668 = vld [vmem:[#allocation9 + $0x330] sm:$0xff]
      %v669 = vld [vmem:[#allocation9 + $0x338] sm:$0xff]
      %v670 = vld [vmem:[#allocation9 + $0x340] sm:$0xff]
      %v671 = vld [vmem:[#allocation9 + $0x348] sm:$0xff]
      %v672 = vld [vmem:[#allocation9 + $0x350] sm:$0xff]
      %v673 = vld [vmem:[#allocation9 + $0x358] sm:$0xff]
      %v674 = vld [vmem:[#allocation9 + $0x360] sm:$0xff]
      %v675 = vld [vmem:[#allocation9 + $0x368] sm:$0xff]
      %v676 = vld [vmem:[#allocation9 + $0x370] sm:$0xff]
      %v677 = vld [vmem:[#allocation9 + $0x378] sm:$0xff]
      %v678 = vld [vmem:[#allocation9 + $0x380] sm:$0xff]
      %v679 = vld [vmem:[#allocation9 + $0x388] sm:$0xff]
      %v680 = vld [vmem:[#allocation9 + $0x390] sm:$0xff]
      %v681 = vld [vmem:[#allocation9 + $0x398] sm:$0xff]
      %v682 = vld [vmem:[#allocation9 + $0x3a0] sm:$0xff]
      %v683 = vld [vmem:[#allocation9 + $0x3a8] sm:$0xff]
      %v684 = vld [vmem:[#allocation9 + $0x3b0] sm:$0xff]
      %v685 = vld [vmem:[#allocation9 + $0x3b8] sm:$0xff]
      %v686 = vld [vmem:[#allocation9 + $0x3c0] sm:$0xff]
      %v687 = vld [vmem:[#allocation9 + $0x3c8] sm:$0xff]
      %v688 = vld [vmem:[#allocation9 + $0x3d0] sm:$0xff]
      %v689 = vld [vmem:[#allocation9 + $0x3d8] sm:$0xff]
      %v690 = vld [vmem:[#allocation9 + $0x3e0] sm:$0xff]
      %v691 = vld [vmem:[#allocation9 + $0x3e8] sm:$0xff]
      %v692 = vld [vmem:[#allocation9 + $0x3f0] sm:$0xff]
      %v693 = vld [vmem:[#allocation9 + $0x3f8] sm:$0xff]
      %v694 = vld [vmem:[#allocation9 + $0x400] sm:$0xff]
      %v695 = vld [vmem:[#allocation9 + $0x408] sm:$0xff]
      %v696 = vld [vmem:[#allocation9 + $0x410] sm:$0xff]
      %v697 = vld [vmem:[#allocation9 + $0x418] sm:$0xff]
      %v698 = vld [vmem:[#allocation9 + $0x420] sm:$0xff]
      %v699 = vld [vmem:[#allocation9 + $0x428] sm:$0xff]
      %v700 = vld [vmem:[#allocation9 + $0x430] sm:$0xff]
      %v701 = vld [vmem:[#allocation9 + $0x438] sm:$0xff]
      %v702 = vld [vmem:[#allocation9 + $0x440] sm:$0xff]
      %v703 = vld [vmem:[#allocation9 + $0x448] sm:$0xff]
      %v704 = vld [vmem:[#allocation9 + $0x450] sm:$0xff]
      %v705 = vld [vmem:[#allocation9 + $0x458] sm:$0xff]
      %v706 = vld [vmem:[#allocation9 + $0x460] sm:$0xff]
      %v707 = vld [vmem:[#allocation9 + $0x468] sm:$0xff]
      %v708 = vld [vmem:[#allocation9 + $0x470] sm:$0xff]
      %v709 = vld [vmem:[#allocation9 + $0x478] sm:$0xff]
      %v710 = vld [vmem:[#allocation9 + $0x480] sm:$0xff]
      %v711 = vld [vmem:[#allocation9 + $0x488] sm:$0xff]
      %v712 = vld [vmem:[#allocation9 + $0x490] sm:$0xff]
      %v713 = vld [vmem:[#allocation9 + $0x498] sm:$0xff]
      %v714 = vld [vmem:[#allocation9 + $0x4a0] sm:$0xff]
      %v715 = vld [vmem:[#allocation9 + $0x4a8] sm:$0xff]
      %v716 = vld [vmem:[#allocation9 + $0x4b0] sm:$0xff]
      %v717 = vld [vmem:[#allocation9 + $0x4b8] sm:$0xff]
      %v718 = vld [vmem:[#allocation9 + $0x4c0] sm:$0xff]
      %v719 = vld [vmem:[#allocation9 + $0x4c8] sm:$0xff]
      %v720 = vld [vmem:[#allocation9 + $0x4d0] sm:$0xff]
      %v721 = vld [vmem:[#allocation9 + $0x4d8] sm:$0xff]
      %v722 = vld [vmem:[#allocation9 + $0x4e0] sm:$0xff]
      %v723 = vld [vmem:[#allocation9 + $0x4e8] sm:$0xff]
      %v724 = vld [vmem:[#allocation9 + $0x4f0] sm:$0xff]
      %v725 = vld [vmem:[#allocation9 + $0x4f8] sm:$0xff]
      %v726 = vld [vmem:[#allocation9 + $0x500] sm:$0xff]
      %v727 = vld [vmem:[#allocation9 + $0x508] sm:$0xff]
      %v728 = vld [vmem:[#allocation9 + $0x510] sm:$0xff]
      %v729 = vld [vmem:[#allocation9 + $0x518] sm:$0xff]
      %v730 = vld [vmem:[#allocation9 + $0x520] sm:$0xff]
      %v731 = vld [vmem:[#allocation9 + $0x528] sm:$0xff]
      %v732 = vld [vmem:[#allocation9 + $0x530] sm:$0xff]
      %v733 = vld [vmem:[#allocation9 + $0x538] sm:$0xff]
      %v734 = vld [vmem:[#allocation9 + $0x540] sm:$0xff]
      %v735 = vld [vmem:[#allocation9 + $0x548] sm:$0xff]
      %v736 = vld [vmem:[#allocation9 + $0x550] sm:$0xff]
      %v737 = vld [vmem:[#allocation9 + $0x558] sm:$0xff]
      %v738 = vld [vmem:[#allocation9 + $0x560] sm:$0xff]
      %v739 = vld [vmem:[#allocation9 + $0x568] sm:$0xff]
      %v740 = vld [vmem:[#allocation9 + $0x570] sm:$0xff]
      %v741 = vld [vmem:[#allocation9 + $0x578] sm:$0xff]
      %v742 = vld [vmem:[#allocation9 + $0x580] sm:$0xff]
      %v743 = vld [vmem:[#allocation9 + $0x588] sm:$0xff]
      %v744 = vld [vmem:[#allocation9 + $0x590] sm:$0xff]
      %v745 = vld [vmem:[#allocation9 + $0x598] sm:$0xff]
      %v746 = vld [vmem:[#allocation9 + $0x5a0] sm:$0xff]
      %v747 = vld [vmem:[#allocation9 + $0x5a8] sm:$0xff]
      %v748 = vld [vmem:[#allocation9 + $0x5b0] sm:$0xff]
      %v749 = vld [vmem:[#allocation9 + $0x5b8] sm:$0xff]
      %v750 = vld [vmem:[#allocation9 + $0x5c0] sm:$0xff]
      %v751 = vld [vmem:[#allocation9 + $0x5c8] sm:$0xff]
      %v752 = vld [vmem:[#allocation9 + $0x5d0] sm:$0xff]
      %v753 = vld [vmem:[#allocation9 + $0x5d8] sm:$0xff]
      %v754 = vld [vmem:[#allocation9 + $0x5e0] sm:$0xff]
      %v755 = vld [vmem:[#allocation9 + $0x5e8] sm:$0xff]
      %v756 = vld [vmem:[#allocation9 + $0x5f0] sm:$0xff]
      %v757 = vld [vmem:[#allocation9 + $0x5f8] sm:$0xff]
      %v758 = vld [vmem:[#allocation9 + $0x600] sm:$0xff]
      %v759 = vld [vmem:[#allocation9 + $0x608] sm:$0xff]
      %v760 = vld [vmem:[#allocation9 + $0x610] sm:$0xff]
      %v761 = vld [vmem:[#allocation9 + $0x618] sm:$0xff]
      %v762 = vld [vmem:[#allocation9 + $0x620] sm:$0xff]
      %v763 = vld [vmem:[#allocation9 + $0x628] sm:$0xff]
      %v764 = vld [vmem:[#allocation9 + $0x630] sm:$0xff]
      %v765 = vld [vmem:[#allocation9 + $0x638] sm:$0xff]
      %v766 = vld [vmem:[#allocation9 + $0x640] sm:$0xff]
      %v767 = vld [vmem:[#allocation9 + $0x648] sm:$0xff]
      %v768 = vld [vmem:[#allocation9 + $0x650] sm:$0xff]
      %v769 = vld [vmem:[#allocation9 + $0x658] sm:$0xff]
      %v770 = vld [vmem:[#allocation9 + $0x660] sm:$0xff]
      %v771 = vld [vmem:[#allocation9 + $0x668] sm:$0xff]
      %v772 = vld [vmem:[#allocation9 + $0x670] sm:$0xff]
      %v773 = vld [vmem:[#allocation9 + $0x678] sm:$0xff]
      %v774 = vld [vmem:[#allocation9 + $0x680] sm:$0xff]
      %v775 = vld [vmem:[#allocation9 + $0x688] sm:$0xff]
      %v776 = vld [vmem:[#allocation9 + $0x690] sm:$0xff]
      %v777 = vld [vmem:[#allocation9 + $0x698] sm:$0xff]
      %v778 = vld [vmem:[#allocation9 + $0x6a0] sm:$0xff]
      %v779 = vld [vmem:[#allocation9 + $0x6a8] sm:$0xff]
      %v780 = vld [vmem:[#allocation9 + $0x6b0] sm:$0xff]
      %v781 = vld [vmem:[#allocation9 + $0x6b8] sm:$0xff]
      %v782 = vld [vmem:[#allocation9 + $0x6c0] sm:$0xff]
      %v783 = vld [vmem:[#allocation9 + $0x6c8] sm:$0xff]
      %v784 = vld [vmem:[#allocation9 + $0x6d0] sm:$0xff]
      %v785 = vld [vmem:[#allocation9 + $0x6d8] sm:$0xff]
      %v786 = vld [vmem:[#allocation9 + $0x6e0] sm:$0xff]
      %v787 = vld [vmem:[#allocation9 + $0x6e8] sm:$0xff]
      %v788 = vld [vmem:[#allocation9 + $0x6f0] sm:$0xff]
      %v789 = vld [vmem:[#allocation9 + $0x6f8] sm:$0xff]
      %v790 = vld [vmem:[#allocation9 + $0x700] sm:$0xff]
      %v791 = vld [vmem:[#allocation9 + $0x708] sm:$0xff]
      %v792 = vld [vmem:[#allocation9 + $0x710] sm:$0xff]
      %v793 = vld [vmem:[#allocation9 + $0x718] sm:$0xff]
      %v794 = vld [vmem:[#allocation9 + $0x720] sm:$0xff]
      %v795 = vld [vmem:[#allocation9 + $0x728] sm:$0xff]
      %v796 = vld [vmem:[#allocation9 + $0x730] sm:$0xff]
      %v797 = vld [vmem:[#allocation9 + $0x738] sm:$0xff]
      %v798 = vld [vmem:[#allocation9 + $0x740] sm:$0xff]
      %v799 = vld [vmem:[#allocation9 + $0x748] sm:$0xff]
      %v800 = vld [vmem:[#allocation9 + $0x750] sm:$0xff]
      %v801 = vld [vmem:[#allocation9 + $0x758] sm:$0xff]
      %v802 = vld [vmem:[#allocation9 + $0x760] sm:$0xff]
      %v803 = vld [vmem:[#allocation9 + $0x768] sm:$0xff]
      %v804 = vld [vmem:[#allocation9 + $0x770] sm:$0xff]
      %v805 = vld [vmem:[#allocation9 + $0x778] sm:$0xff]
      %v806 = vld [vmem:[#allocation9 + $0x780] sm:$0xff]
      %v807 = vld [vmem:[#allocation9 + $0x788] sm:$0xff]
      %v808 = vld [vmem:[#allocation9 + $0x790] sm:$0xff]
      %v809 = vld [vmem:[#allocation9 + $0x798] sm:$0xff]
      %v810 = vld [vmem:[#allocation9 + $0x7a0] sm:$0xff]
      %v811 = vld [vmem:[#allocation9 + $0x7a8] sm:$0xff]
      %v812 = vld [vmem:[#allocation9 + $0x7b0] sm:$0xff]
      %v813 = vld [vmem:[#allocation9 + $0x7b8] sm:$0xff]
      %v814 = vld [vmem:[#allocation9 + $0x7c0] sm:$0xff]
      %v815 = vld [vmem:[#allocation9 + $0x7c8] sm:$0xff]
      %v816 = vld [vmem:[#allocation9 + $0x7d0] sm:$0xff]
      %v817 = vld [vmem:[#allocation9 + $0x7d8] sm:$0xff]
      %v818 = vld [vmem:[#allocation9 + $0x7e0] sm:$0xff]
      %v819 = vld [vmem:[#allocation9 + $0x7e8] sm:$0xff]
      %v820 = vld [vmem:[#allocation9 + $0x7f0] sm:$0xff]
      %v821 = vld [vmem:[#allocation9 + $0x7f8] sm:$0xff]
      %v822 = vld [vmem:[#allocation9 + $0x800] sm:$0xff]
      %v823 = vld [vmem:[#allocation9 + $0x808] sm:$0xff]
      %v824 = vld [vmem:[#allocation9 + $0x810] sm:$0xff]
      %v825 = vld [vmem:[#allocation9 + $0x818] sm:$0xff]
      %v826 = vld [vmem:[#allocation9 + $0x820] sm:$0xff]
      %v827 = vld [vmem:[#allocation9 + $0x828] sm:$0xff]
      %v828 = vld [vmem:[#allocation9 + $0x830] sm:$0xff]
      %v829 = vld [vmem:[#allocation9 + $0x838] sm:$0xff]
      %v830 = vld [vmem:[#allocation9 + $0x840] sm:$0xff]
      %v831 = vld [vmem:[#allocation9 + $0x848] sm:$0xff]
      %v832 = vld [vmem:[#allocation9 + $0x850] sm:$0xff]
      %v833 = vld [vmem:[#allocation9 + $0x858] sm:$0xff]
      %v834 = vld [vmem:[#allocation9 + $0x860] sm:$0xff]
      %v835 = vld [vmem:[#allocation9 + $0x868] sm:$0xff]
      %v836 = vld [vmem:[#allocation9 + $0x870] sm:$0xff]
      %v837 = vld [vmem:[#allocation9 + $0x878] sm:$0xff]
      %v838 = vld [vmem:[#allocation9 + $0x880] sm:$0xff]
      %v839 = vld [vmem:[#allocation9 + $0x888] sm:$0xff]
      %v840 = vld [vmem:[#allocation9 + $0x890] sm:$0xff]
      %v841 = vld [vmem:[#allocation9 + $0x898] sm:$0xff]
      %v842 = vld [vmem:[#allocation9 + $0x8a0] sm:$0xff]
      %v843 = vld [vmem:[#allocation9 + $0x8a8] sm:$0xff]
      %v844 = vld [vmem:[#allocation9 + $0x8b0] sm:$0xff]
      %v845 = vld [vmem:[#allocation9 + $0x8b8] sm:$0xff]
      %v846 = vld [vmem:[#allocation9 + $0x8c0] sm:$0xff]
      %v847 = vld [vmem:[#allocation9 + $0x8c8] sm:$0xff]
      %v848 = vld [vmem:[#allocation9 + $0x8d0] sm:$0xff]
      %v849 = vld [vmem:[#allocation9 + $0x8d8] sm:$0xff]
      %v850 = vld [vmem:[#allocation9 + $0x8e0] sm:$0xff]
      %v851 = vld [vmem:[#allocation9 + $0x8e8] sm:$0xff]
      %v852 = vld [vmem:[#allocation9 + $0x8f0] sm:$0xff]
      %v853 = vld [vmem:[#allocation9 + $0x8f8] sm:$0xff]
      %v854 = vld [vmem:[#allocation9 + $0x900] sm:$0xff]
      %v855 = vld [vmem:[#allocation9 + $0x908] sm:$0xff]
      %v856 = vld [vmem:[#allocation9 + $0x910] sm:$0xff]
      %v857 = vld [vmem:[#allocation9 + $0x918] sm:$0xff]
      %v858 = vld [vmem:[#allocation9 + $0x920] sm:$0xff]
      %v859 = vld [vmem:[#allocation9 + $0x928] sm:$0xff]
      %v860 = vld [vmem:[#allocation9 + $0x930] sm:$0xff]
      %v861 = vld [vmem:[#allocation9 + $0x938] sm:$0xff]
      %v862 = vld [vmem:[#allocation9 + $0x940] sm:$0xff]
      %v863 = vld [vmem:[#allocation9 + $0x948] sm:$0xff]
      %v864 = vld [vmem:[#allocation9 + $0x950] sm:$0xff]
      %v865 = vld [vmem:[#allocation9 + $0x958] sm:$0xff]
      %v866 = vld [vmem:[#allocation9 + $0x960] sm:$0xff]
      %v867 = vld [vmem:[#allocation9 + $0x968] sm:$0xff]
      %v868 = vld [vmem:[#allocation9 + $0x970] sm:$0xff]
      %v869 = vld [vmem:[#allocation9 + $0x978] sm:$0xff]
      %v870 = vld [vmem:[#allocation9 + $0x980] sm:$0xff]
      %v871 = vld [vmem:[#allocation9 + $0x988] sm:$0xff]
      %v872 = vld [vmem:[#allocation9 + $0x990] sm:$0xff]
      %v873 = vld [vmem:[#allocation9 + $0x998] sm:$0xff]
      %v874 = vld [vmem:[#allocation9 + $0x9a0] sm:$0xff]
      %v875 = vld [vmem:[#allocation9 + $0x9a8] sm:$0xff]
      %v876 = vld [vmem:[#allocation9 + $0x9b0] sm:$0xff]
      %v877 = vld [vmem:[#allocation9 + $0x9b8] sm:$0xff]
      %v878 = vld [vmem:[#allocation9 + $0x9c0] sm:$0xff]
      %v879 = vld [vmem:[#allocation9 + $0x9c8] sm:$0xff]
      %v880 = vld [vmem:[#allocation9 + $0x9d0] sm:$0xff]
      %v881 = vld [vmem:[#allocation9 + $0x9d8] sm:$0xff]
      %v882 = vld [vmem:[#allocation9 + $0x9e0] sm:$0xff]
      %v883 = vld [vmem:[#allocation9 + $0x9e8] sm:$0xff]
      %v884 = vld [vmem:[#allocation9 + $0x9f0] sm:$0xff]
      %v885 = vld [vmem:[#allocation9 + $0x9f8] sm:$0xff]
      %v886 = vld [vmem:[#allocation9 + $0xa00] sm:$0xff]
      %v887 = vld [vmem:[#allocation9 + $0xa08] sm:$0xff]
      %v888 = vld [vmem:[#allocation9 + $0xa10] sm:$0xff]
      %v889 = vld [vmem:[#allocation9 + $0xa18] sm:$0xff]
      %v890 = vld [vmem:[#allocation9 + $0xa20] sm:$0xff]
      %v891 = vld [vmem:[#allocation9 + $0xa28] sm:$0xff]
      %v892 = vld [vmem:[#allocation9 + $0xa30] sm:$0xff]
      %v893 = vld [vmem:[#allocation9 + $0xa38] sm:$0xff]
      %v894 = vld [vmem:[#allocation9 + $0xa40] sm:$0xff]
      %v895 = vld [vmem:[#allocation9 + $0xa48] sm:$0xff]
      %v896 = vld [vmem:[#allocation9 + $0xa50] sm:$0xff]
      %v897 = vld [vmem:[#allocation9 + $0xa58] sm:$0xff]
      %v898 = vld [vmem:[#allocation9 + $0xa60] sm:$0xff]
      %v899 = vld [vmem:[#allocation9 + $0xa68] sm:$0xff]
      %v900 = vld [vmem:[#allocation9 + $0xa70] sm:$0xff]
      %v901 = vld [vmem:[#allocation9 + $0xa78] sm:$0xff]
      %v902 = vld [vmem:[#allocation9 + $0xa80] sm:$0xff]
      %v903 = vld [vmem:[#allocation9 + $0xa88] sm:$0xff]
      %v904 = vld [vmem:[#allocation9 + $0xa90] sm:$0xff]
      %v905 = vld [vmem:[#allocation9 + $0xa98] sm:$0xff]
      %v906 = vld [vmem:[#allocation9 + $0xaa0] sm:$0xff]
      %v907 = vld [vmem:[#allocation9 + $0xaa8] sm:$0xff]
      %v908 = vld [vmem:[#allocation9 + $0xab0] sm:$0xff]
      %v909 = vld [vmem:[#allocation9 + $0xab8] sm:$0xff]
      %v910 = vld [vmem:[#allocation9 + $0xac0] sm:$0xff]
      %v911 = vld [vmem:[#allocation9 + $0xac8] sm:$0xff]
      %v912 = vld [vmem:[#allocation9 + $0xad0] sm:$0xff]
      %v913 = vld [vmem:[#allocation9 + $0xad8] sm:$0xff]
      %v914 = vld [vmem:[#allocation9 + $0xae0] sm:$0xff]
      %v915 = vld [vmem:[#allocation9 + $0xae8] sm:$0xff]
      %v916 = vld [vmem:[#allocation9 + $0xaf0] sm:$0xff]
      %v917 = vld [vmem:[#allocation9 + $0xaf8] sm:$0xff]
      %v918 = vld [vmem:[#allocation9 + $0xb00] sm:$0xff]
      %v919 = vld [vmem:[#allocation9 + $0xb08] sm:$0xff]
      %v920 = vld [vmem:[#allocation9 + $0xb10] sm:$0xff]
      %v921 = vld [vmem:[#allocation9 + $0xb18] sm:$0xff]
      %v922 = vld [vmem:[#allocation9 + $0xb20] sm:$0xff]
      %v923 = vld [vmem:[#allocation9 + $0xb28] sm:$0xff]
      %v924 = vld [vmem:[#allocation9 + $0xb30] sm:$0xff]
      %v925 = vld [vmem:[#allocation9 + $0xb38] sm:$0xff]
      %v926 = vld [vmem:[#allocation9 + $0xb40] sm:$0xff]
      %v927 = vld [vmem:[#allocation9 + $0xb48] sm:$0xff]
      %v928 = vld [vmem:[#allocation9 + $0xb50] sm:$0xff]
      %v929 = vld [vmem:[#allocation9 + $0xb58] sm:$0xff]
      %v930 = vld [vmem:[#allocation9 + $0xb60] sm:$0xff]
      %v931 = vld [vmem:[#allocation9 + $0xb68] sm:$0xff]
      %v932 = vld [vmem:[#allocation9 + $0xb70] sm:$0xff]
      %v933 = vld [vmem:[#allocation9 + $0xb78] sm:$0xff]
      %v934 = vld [vmem:[#allocation9 + $0xb80] sm:$0xff]
      %v935 = vld [vmem:[#allocation9 + $0xb88] sm:$0xff]
      %v936 = vld [vmem:[#allocation9 + $0xb90] sm:$0xff]
      %v937 = vld [vmem:[#allocation9 + $0xb98] sm:$0xff]
      %v938 = vld [vmem:[#allocation9 + $0xba0] sm:$0xff]
      %v939 = vld [vmem:[#allocation9 + $0xba8] sm:$0xff]
      %v940 = vld [vmem:[#allocation9 + $0xbb0] sm:$0xff]
      %v941 = vld [vmem:[#allocation9 + $0xbb8] sm:$0xff]
      %v942 = vld [vmem:[#allocation9 + $0xbc0] sm:$0xff]
      %v943 = vld [vmem:[#allocation9 + $0xbc8] sm:$0xff]
      %v944 = vld [vmem:[#allocation9 + $0xbd0] sm:$0xff]
      %v945 = vld [vmem:[#allocation9 + $0xbd8] sm:$0xff]
      %v946 = vld [vmem:[#allocation9 + $0xbe0] sm:$0xff]
      %v947 = vld [vmem:[#allocation9 + $0xbe8] sm:$0xff]
      %v948 = vld [vmem:[#allocation9 + $0xbf0] sm:$0xff]
      %v949 = vld [vmem:[#allocation9 + $0xbf8] sm:$0xff]
      %v950 = vld [vmem:[#allocation9 + $0xc00] sm:$0xff]
      %v951 = vld [vmem:[#allocation9 + $0xc08] sm:$0xff]
      %v952 = vld [vmem:[#allocation9 + $0xc10] sm:$0xff]
      %v953 = vld [vmem:[#allocation9 + $0xc18] sm:$0xff]
      %v954 = vld [vmem:[#allocation9 + $0xc20] sm:$0xff]
      %v955 = vld [vmem:[#allocation9 + $0xc28] sm:$0xff]
      %v956 = vld [vmem:[#allocation9 + $0xc30] sm:$0xff]
      %v957 = vld [vmem:[#allocation9 + $0xc38] sm:$0xff]
      %v958 = vld [vmem:[#allocation9 + $0xc40] sm:$0xff]
      %v959 = vld [vmem:[#allocation9 + $0xc48] sm:$0xff]
      %v960 = vld [vmem:[#allocation9 + $0xc50] sm:$0xff]
      %v961 = vld [vmem:[#allocation9 + $0xc58] sm:$0xff]
      %v962 = vld [vmem:[#allocation9 + $0xc60] sm:$0xff]
      %v963 = vld [vmem:[#allocation9 + $0xc68] sm:$0xff]
      %v964 = vld [vmem:[#allocation9 + $0xc70] sm:$0xff]
      %v965 = vld [vmem:[#allocation9 + $0xc78] sm:$0xff]
      %v966 = vld [vmem:[#allocation9 + $0xc80] sm:$0xff]
      %v967 = vld [vmem:[#allocation9 + $0xc88] sm:$0xff]
      %v968 = vld [vmem:[#allocation9 + $0xc90] sm:$0xff]
      %v969 = vld [vmem:[#allocation9 + $0xc98] sm:$0xff]
      %v970 = vld [vmem:[#allocation9 + $0xca0] sm:$0xff]
      %v971 = vld [vmem:[#allocation9 + $0xca8] sm:$0xff]
      %v972 = vld [vmem:[#allocation9 + $0xcb0] sm:$0xff]
      %v973 = vld [vmem:[#allocation9 + $0xcb8] sm:$0xff]
      %v974 = vld [vmem:[#allocation9 + $0xcc0] sm:$0xff]
      %v975 = vld [vmem:[#allocation9 + $0xcc8] sm:$0xff]
      %v976 = vld [vmem:[#allocation9 + $0xcd0] sm:$0xff]
      %v977 = vld [vmem:[#allocation9 + $0xcd8] sm:$0xff]
      %v978 = vld [vmem:[#allocation9 + $0xce0] sm:$0xff]
      %v979 = vld [vmem:[#allocation9 + $0xce8] sm:$0xff]
      %v980 = vld [vmem:[#allocation9 + $0xcf0] sm:$0xff]
      %v981 = vld [vmem:[#allocation9 + $0xcf8] sm:$0xff]
      %v982 = vld [vmem:[#allocation9 + $0xd00] sm:$0xff]
      %v983 = vld [vmem:[#allocation9 + $0xd08] sm:$0xff]
      %v984 = vld [vmem:[#allocation9 + $0xd10] sm:$0xff]
      %v985 = vld [vmem:[#allocation9 + $0xd18] sm:$0xff]
      %v986 = vld [vmem:[#allocation9 + $0xd20] sm:$0xff]
      %v987 = vld [vmem:[#allocation9 + $0xd28] sm:$0xff]
      %v988 = vld [vmem:[#allocation9 + $0xd30] sm:$0xff]
      %v989 = vld [vmem:[#allocation9 + $0xd38] sm:$0xff]
      %v990 = vld [vmem:[#allocation9 + $0xd40] sm:$0xff]
      %v991 = vld [vmem:[#allocation9 + $0xd48] sm:$0xff]
      %v992 = vld [vmem:[#allocation9 + $0xd50] sm:$0xff]
      %v993 = vld [vmem:[#allocation9 + $0xd58] sm:$0xff]
      %v994 = vld [vmem:[#allocation9 + $0xd60] sm:$0xff]
      %v995 = vld [vmem:[#allocation9 + $0xd68] sm:$0xff]
      %v996 = vld [vmem:[#allocation9 + $0xd70] sm:$0xff]
      %v997 = vld [vmem:[#allocation9 + $0xd78] sm:$0xff]
      %v998 = vld [vmem:[#allocation9 + $0xd80] sm:$0xff]
      %v999 = vld [vmem:[#allocation9 + $0xd88] sm:$0xff]
      %v1000 = vld [vmem:[#allocation9 + $0xd90] sm:$0xff]
      %v1001 = vld [vmem:[#allocation9 + $0xd98] sm:$0xff]
      %v1002 = vld [vmem:[#allocation9 + $0xda0] sm:$0xff]
      %v1003 = vld [vmem:[#allocation9 + $0xda8] sm:$0xff]
      %v1004 = vld [vmem:[#allocation9 + $0xdb0] sm:$0xff]
      %v1005 = vld [vmem:[#allocation9 + $0xdb8] sm:$0xff]
      %v1006 = vld [vmem:[#allocation9 + $0xdc0] sm:$0xff]
      %v1007 = vld [vmem:[#allocation9 + $0xdc8] sm:$0xff]
      %v1008 = vld [vmem:[#allocation9 + $0xdd0] sm:$0xff]
      %v1009 = vld [vmem:[#allocation9 + $0xdd8] sm:$0xff]
      %v1010 = vld [vmem:[#allocation9 + $0xde0] sm:$0xff]
      %v1011 = vld [vmem:[#allocation9 + $0xde8] sm:$0xff]
      %v1012 = vld [vmem:[#allocation9 + $0xdf0] sm:$0xff]
      %v1013 = vld [vmem:[#allocation9 + $0xdf8] sm:$0xff]
      %v1014 = vld [vmem:[#allocation9 + $0xe00] sm:$0xff]
      %v1015 = vld [vmem:[#allocation9 + $0xe08] sm:$0xff]
      %v1016 = vld [vmem:[#allocation9 + $0xe10] sm:$0xff]
      %v1017 = vld [vmem:[#allocation9 + $0xe18] sm:$0xff]
      %v1018 = vld [vmem:[#allocation9 + $0xe20] sm:$0xff]
      %v1019 = vld [vmem:[#allocation9 + $0xe28] sm:$0xff]
      %v1020 = vld [vmem:[#allocation9 + $0xe30] sm:$0xff]
      %v1021 = vld [vmem:[#allocation9 + $0xe38] sm:$0xff]
      %v1022 = vld [vmem:[#allocation9 + $0xe40] sm:$0xff]
      %v1023 = vld [vmem:[#allocation9 + $0xe48] sm:$0xff]
      %v1024 = vld [vmem:[#allocation9 + $0xe50] sm:$0xff]
      %v1025 = vld [vmem:[#allocation9 + $0xe58] sm:$0xff]
      %v1026 = vld [vmem:[#allocation9 + $0xe60] sm:$0xff]
      %v1027 = vld [vmem:[#allocation9 + $0xe68] sm:$0xff]
      %v1028 = vld [vmem:[#allocation9 + $0xe70] sm:$0xff]
      %v1029 = vld [vmem:[#allocation9 + $0xe78] sm:$0xff]
      %v1030 = vld [vmem:[#allocation9 + $0xe80] sm:$0xff]
      %v1031 = vld [vmem:[#allocation9 + $0xe88] sm:$0xff]
      %v1032 = vld [vmem:[#allocation9 + $0xe90] sm:$0xff]
      %v1033 = vld [vmem:[#allocation9 + $0xe98] sm:$0xff]
      %v1034 = vld [vmem:[#allocation9 + $0xea0] sm:$0xff]
      %v1035 = vld [vmem:[#allocation9 + $0xea8] sm:$0xff]
      %v1036 = vld [vmem:[#allocation9 + $0xeb0] sm:$0xff]
      %v1037 = vld [vmem:[#allocation9 + $0xeb8] sm:$0xff]
      %v1038 = vld [vmem:[#allocation9 + $0xec0] sm:$0xff]
      %v1039 = vld [vmem:[#allocation9 + $0xec8] sm:$0xff]
      %v1040 = vld [vmem:[#allocation9 + $0xed0] sm:$0xff]
      %v1041 = vld [vmem:[#allocation9 + $0xed8] sm:$0xff]
      %v1042 = vld [vmem:[#allocation9 + $0xee0] sm:$0xff]
      %v1043 = vld [vmem:[#allocation9 + $0xee8] sm:$0xff]
      %v1044 = vld [vmem:[#allocation9 + $0xef0] sm:$0xff]
      %v1045 = vld [vmem:[#allocation9 + $0xef8] sm:$0xff]
      %v1046 = vld [vmem:[#allocation9 + $0xf00] sm:$0xff]
      %v1047 = vld [vmem:[#allocation9 + $0xf08] sm:$0xff]
      %v1048 = vld [vmem:[#allocation9 + $0xf10] sm:$0xff]
      %v1049 = vld [vmem:[#allocation9 + $0xf18] sm:$0xff]
      %v1050 = vld [vmem:[#allocation9 + $0xf20] sm:$0xff]
      %v1051 = vld [vmem:[#allocation9 + $0xf28] sm:$0xff]
      %v1052 = vld [vmem:[#allocation9 + $0xf30] sm:$0xff]
      %v1053 = vld [vmem:[#allocation9 + $0xf38] sm:$0xff]
      %v1054 = vld [vmem:[#allocation9 + $0xf40] sm:$0xff]
      %v1055 = vld [vmem:[#allocation9 + $0xf48] sm:$0xff]
      %v1056 = vld [vmem:[#allocation9 + $0xf50] sm:$0xff]
      %v1057 = vld [vmem:[#allocation9 + $0xf58] sm:$0xff]
      %v1058 = vld [vmem:[#allocation9 + $0xf60] sm:$0xff]
      %v1059 = vld [vmem:[#allocation9 + $0xf68] sm:$0xff]
      %v1060 = vld [vmem:[#allocation9 + $0xf70] sm:$0xff]
      %v1061 = vld [vmem:[#allocation9 + $0xf78] sm:$0xff]
      %v1062 = vld [vmem:[#allocation9 + $0xf80] sm:$0xff]
      %v1063 = vld [vmem:[#allocation9 + $0xf88] sm:$0xff]
      %v1064 = vld [vmem:[#allocation9 + $0xf90] sm:$0xff]
      %v1065 = vld [vmem:[#allocation9 + $0xf98] sm:$0xff]
      %v1066 = vld [vmem:[#allocation9 + $0xfa0] sm:$0xff]
      %v1067 = vld [vmem:[#allocation9 + $0xfa8] sm:$0xff]
      %v1068 = vld [vmem:[#allocation9 + $0xfb0] sm:$0xff]
      %v1069 = vld [vmem:[#allocation9 + $0xfb8] sm:$0xff]
      %v1070 = vld [vmem:[#allocation9 + $0xfc0] sm:$0xff]
      %v1071 = vld [vmem:[#allocation9 + $0xfc8] sm:$0xff]
      %v1072 = vld [vmem:[#allocation9 + $0xfd0] sm:$0xff]
      %v1073 = vld [vmem:[#allocation9 + $0xfd8] sm:$0xff]
      %v1074 = vld [vmem:[#allocation9 + $0xfe0] sm:$0xff]
      %v1075 = vld [vmem:[#allocation9 + $0xfe8] sm:$0xff]
      %v1076 = vld [vmem:[#allocation9 + $0xff0] sm:$0xff]
      %v1077 = vld [vmem:[#allocation9 + $0xff8] sm:$0xff]
      %v1078 = vld [vmem:[#allocation9 + $0x1000] sm:$0xff]
      %v1079 = vld [vmem:[#allocation9 + $0x1008] sm:$0xff]
      %v1080 = vld [vmem:[#allocation9 + $0x1010] sm:$0xff]
      %v1081 = vld [vmem:[#allocation9 + $0x1018] sm:$0xff]
      %v1082 = vld [vmem:[#allocation9 + $0x1020] sm:$0xff]
      %v1083 = vld [vmem:[#allocation9 + $0x1028] sm:$0xff]
      %v1084 = vld [vmem:[#allocation9 + $0x1030] sm:$0xff]
      %v1085 = vld [vmem:[#allocation9 + $0x1038] sm:$0xff]
      %v1086 = vld [vmem:[#allocation9 + $0x1040] sm:$0xff]
      %v1087 = vld [vmem:[#allocation9 + $0x1048] sm:$0xff]
      %v1088 = vld [vmem:[#allocation9 + $0x1050] sm:$0xff]
      %v1089 = vld [vmem:[#allocation9 + $0x1058] sm:$0xff]
      %v1090 = vld [vmem:[#allocation9 + $0x1060] sm:$0xff]
      %v1091 = vld [vmem:[#allocation9 + $0x1068] sm:$0xff]
      %v1092 = vld [vmem:[#allocation9 + $0x1070] sm:$0xff]
      %v1093 = vld [vmem:[#allocation9 + $0x1078] sm:$0xff]
      %v1094 = vld [vmem:[#allocation9 + $0x1080] sm:$0xff]
      %v1095 = vld [vmem:[#allocation9 + $0x1088] sm:$0xff]
      %v1096 = vld [vmem:[#allocation9 + $0x1090] sm:$0xff]
      %v1097 = vld [vmem:[#allocation9 + $0x1098] sm:$0xff]
      %v1098 = vld [vmem:[#allocation9 + $0x10a0] sm:$0xff]
      %v1099 = vld [vmem:[#allocation9 + $0x10a8] sm:$0xff]
      %v1100 = vld [vmem:[#allocation9 + $0x10b0] sm:$0xff]
      %v1101 = vld [vmem:[#allocation9 + $0x10b8] sm:$0xff]
      %v1102 = vld [vmem:[#allocation9 + $0x10c0] sm:$0xff]
      %v1103 = vld [vmem:[#allocation9 + $0x10c8] sm:$0xff]
      %v1104 = vld [vmem:[#allocation9 + $0x10d0] sm:$0xff]
      %v1105 = vld [vmem:[#allocation9 + $0x10d8] sm:$0xff]
      %v1106 = vld [vmem:[#allocation9 + $0x10e0] sm:$0xff]
      %v1107 = vld [vmem:[#allocation9 + $0x10e8] sm:$0xff]
      %v1108 = vld [vmem:[#allocation9 + $0x10f0] sm:$0xff]
      %v1109 = vld [vmem:[#allocation9 + $0x10f8] sm:$0xff]
      %v1110 = vld [vmem:[#allocation9 + $0x1100] sm:$0xff]
      %v1111 = vld [vmem:[#allocation9 + $0x1108] sm:$0xff]
      %v1112 = vld [vmem:[#allocation9 + $0x1110] sm:$0xff]
      %v1113 = vld [vmem:[#allocation9 + $0x1118] sm:$0xff]
      %v1114 = vld [vmem:[#allocation9 + $0x1120] sm:$0xff]
      %v1115 = vld [vmem:[#allocation9 + $0x1128] sm:$0xff]
      %v1116 = vld [vmem:[#allocation9 + $0x1130] sm:$0xff]
      %v1117 = vld [vmem:[#allocation9 + $0x1138] sm:$0xff]
      %v1118 = vld [vmem:[#allocation9 + $0x1140] sm:$0xff]
      %v1119 = vld [vmem:[#allocation9 + $0x1148] sm:$0xff]
      %v1120 = vld [vmem:[#allocation9 + $0x1150] sm:$0xff]
      %v1121 = vld [vmem:[#allocation9 + $0x1158] sm:$0xff]
      %v1122 = vld [vmem:[#allocation9 + $0x1160] sm:$0xff]
      %v1123 = vld [vmem:[#allocation9 + $0x1168] sm:$0xff]
      %v1124 = vld [vmem:[#allocation9 + $0x1170] sm:$0xff]
      %v1125 = vld [vmem:[#allocation9 + $0x1178] sm:$0xff]
      %v1126 = vld [vmem:[#allocation9 + $0x1180] sm:$0xff]
      %v1127 = vld [vmem:[#allocation9 + $0x1188] sm:$0xff]
      %v1128 = vld [vmem:[#allocation9 + $0x1190] sm:$0xff]
      %v1129 = vld [vmem:[#allocation9 + $0x1198] sm:$0xff]
      %v1130 = vld [vmem:[#allocation9 + $0x11a0] sm:$0xff]
      %v1131 = vld [vmem:[#allocation9 + $0x11a8] sm:$0xff]
      %v1132 = vld [vmem:[#allocation9 + $0x11b0] sm:$0xff]
      %v1133 = vld [vmem:[#allocation9 + $0x11b8] sm:$0xff]
      %v1134 = vld [vmem:[#allocation9 + $0x11c0] sm:$0xff]
      %v1135 = vld [vmem:[#allocation9 + $0x11c8] sm:$0xff]
      %v1136 = vld [vmem:[#allocation9 + $0x11d0] sm:$0xff]
      %v1137 = vld [vmem:[#allocation9 + $0x11d8] sm:$0xff]
      %v1138 = vld [vmem:[#allocation9 + $0x11e0] sm:$0xff]
      %v1139 = vld [vmem:[#allocation9 + $0x11e8] sm:$0xff]
      %v1140 = vld [vmem:[#allocation9 + $0x11f0] sm:$0xff]
      %v1141 = vld [vmem:[#allocation9 + $0x11f8] sm:$0xff]
      %v1142 = vld [vmem:[#allocation9 + $0x1200] sm:$0xff]
      %v1143 = vld [vmem:[#allocation9 + $0x1208] sm:$0xff]
      %v1144 = vld [vmem:[#allocation9 + $0x1210] sm:$0xff]
      %v1145 = vld [vmem:[#allocation9 + $0x1218] sm:$0xff]
      %v1146 = vld [vmem:[#allocation9 + $0x1220] sm:$0xff]
      %v1147 = vld [vmem:[#allocation9 + $0x1228] sm:$0xff]
      %v1148 = vld [vmem:[#allocation9 + $0x1230] sm:$0xff]
      %v1149 = vld [vmem:[#allocation9 + $0x1238] sm:$0xff]
      %v1150 = vld [vmem:[#allocation9 + $0x1240] sm:$0xff]
      %v1151 = vld [vmem:[#allocation9 + $0x1248] sm:$0xff]
      %v1152 = vld [vmem:[#allocation9 + $0x1250] sm:$0xff]
      %v1153 = vld [vmem:[#allocation9 + $0x1258] sm:$0xff]
      %v1154 = vld [vmem:[#allocation9 + $0x1260] sm:$0xff]
      %v1155 = vld [vmem:[#allocation9 + $0x1268] sm:$0xff]
      %v1156 = vld [vmem:[#allocation9 + $0x1270] sm:$0xff]
      %v1157 = vld [vmem:[#allocation9 + $0x1278] sm:$0xff]
      %v1158 = vld [vmem:[#allocation9 + $0x1280] sm:$0xff]
      %v1159 = vld [vmem:[#allocation9 + $0x1288] sm:$0xff]
      %v1160 = vld [vmem:[#allocation9 + $0x1290] sm:$0xff]
      %v1161 = vld [vmem:[#allocation9 + $0x1298] sm:$0xff]
      %v1162 = vld [vmem:[#allocation9 + $0x12a0] sm:$0xff]
      %v1163 = vld [vmem:[#allocation9 + $0x12a8] sm:$0xff]
      %v1164 = vld [vmem:[#allocation9 + $0x12b0] sm:$0xff]
      %v1165 = vld [vmem:[#allocation9 + $0x12b8] sm:$0xff]
      %v1166 = vld [vmem:[#allocation9 + $0x12c0] sm:$0xff]
      %v1167 = vld [vmem:[#allocation9 + $0x12c8] sm:$0xff]
      %v1168 = vld [vmem:[#allocation9 + $0x12d0] sm:$0xff]
      %v1169 = vld [vmem:[#allocation9 + $0x12d8] sm:$0xff]
      %v1170 = vld [vmem:[#allocation9 + $0x12e0] sm:$0xff]
      %v1171 = vld [vmem:[#allocation9 + $0x12e8] sm:$0xff]
      %v1172 = vld [vmem:[#allocation9 + $0x12f0] sm:$0xff]
      %v1173 = vld [vmem:[#allocation9 + $0x12f8] sm:$0xff]
      %v1174 = vld [vmem:[#allocation9 + $0x1300] sm:$0xff]
      %v1175 = vld [vmem:[#allocation9 + $0x1308] sm:$0xff]
      %v1176 = vld [vmem:[#allocation9 + $0x1310] sm:$0xff]
      %v1177 = vld [vmem:[#allocation9 + $0x1318] sm:$0xff]
      %v1178 = vld [vmem:[#allocation9 + $0x1320] sm:$0xff]
      %v1179 = vld [vmem:[#allocation9 + $0x1328] sm:$0xff]
      %v1180 = vld [vmem:[#allocation9 + $0x1330] sm:$0xff]
      %v1181 = vld [vmem:[#allocation9 + $0x1338] sm:$0xff]
      %v1182 = vld [vmem:[#allocation9 + $0x1340] sm:$0xff]
      %v1183 = vld [vmem:[#allocation9 + $0x1348] sm:$0xff]
      %v1184 = vld [vmem:[#allocation9 + $0x1350] sm:$0xff]
      %v1185 = vld [vmem:[#allocation9 + $0x1358] sm:$0xff]
      %v1186 = vld [vmem:[#allocation9 + $0x1360] sm:$0xff]
      %v1187 = vld [vmem:[#allocation9 + $0x1368] sm:$0xff]
      %v1188 = vld [vmem:[#allocation9 + $0x1370] sm:$0xff]
      %v1189 = vld [vmem:[#allocation9 + $0x1378] sm:$0xff]
      %v1190 = vld [vmem:[#allocation9 + $0x1380] sm:$0xff]
      %v1191 = vld [vmem:[#allocation9 + $0x1388] sm:$0xff]
      %v1192 = vld [vmem:[#allocation9 + $0x1390] sm:$0xff]
      %v1193 = vld [vmem:[#allocation9 + $0x1398] sm:$0xff]
      %v1194 = vld [vmem:[#allocation9 + $0x13a0] sm:$0xff]
      %v1195 = vld [vmem:[#allocation9 + $0x13a8] sm:$0xff]
      %v1196 = vld [vmem:[#allocation9 + $0x13b0] sm:$0xff]
      %v1197 = vld [vmem:[#allocation9 + $0x13b8] sm:$0xff]
      %v1198 = vld [vmem:[#allocation9 + $0x13c0] sm:$0xff]
      %v1199 = vld [vmem:[#allocation9 + $0x13c8] sm:$0xff]
      %v1200 = vld [vmem:[#allocation9 + $0x13d0] sm:$0xff]
      %v1201 = vld [vmem:[#allocation9 + $0x13d8] sm:$0xff]
      %v1202 = vld [vmem:[#allocation9 + $0x13e0] sm:$0xff]
      %v1203 = vld [vmem:[#allocation9 + $0x13e8] sm:$0xff]
      %v1204 = vld [vmem:[#allocation9 + $0x13f0] sm:$0xff]
      %v1205 = vld [vmem:[#allocation9 + $0x13f8] sm:$0xff]
      %v1206 = vld [vmem:[#allocation9 + $0x1400] sm:$0xff]
      %v1207 = vld [vmem:[#allocation9 + $0x1408] sm:$0xff]
      %v1208 = vld [vmem:[#allocation9 + $0x1410] sm:$0xff]
      %v1209 = vld [vmem:[#allocation9 + $0x1418] sm:$0xff]
      %v1210 = vld [vmem:[#allocation9 + $0x1420] sm:$0xff]
      %v1211 = vld [vmem:[#allocation9 + $0x1428] sm:$0xff]
      %v1212 = vld [vmem:[#allocation9 + $0x1430] sm:$0xff]
      %v1213 = vld [vmem:[#allocation9 + $0x1438] sm:$0xff]
      %v1214 = vld [vmem:[#allocation9 + $0x1440] sm:$0xff]
      %v1215 = vld [vmem:[#allocation9 + $0x1448] sm:$0xff]
      %v1216 = vld [vmem:[#allocation9 + $0x1450] sm:$0xff]
      %v1217 = vld [vmem:[#allocation9 + $0x1458] sm:$0xff]
      %v1218 = vld [vmem:[#allocation9 + $0x1460] sm:$0xff]
      %v1219 = vld [vmem:[#allocation9 + $0x1468] sm:$0xff]
      %v1220 = vld [vmem:[#allocation9 + $0x1470] sm:$0xff]
      %v1221 = vld [vmem:[#allocation9 + $0x1478] sm:$0xff]
      %v1222 = vld [vmem:[#allocation9 + $0x1480] sm:$0xff]
      %v1223 = vld [vmem:[#allocation9 + $0x1488] sm:$0xff]
      %v1224 = vld [vmem:[#allocation9 + $0x1490] sm:$0xff]
      %v1225 = vld [vmem:[#allocation9 + $0x1498] sm:$0xff]
      %v1226 = vld [vmem:[#allocation9 + $0x14a0] sm:$0xff]
      %v1227 = vld [vmem:[#allocation9 + $0x14a8] sm:$0xff]
      %v1228 = vld [vmem:[#allocation9 + $0x14b0] sm:$0xff]
      %v1229 = vld [vmem:[#allocation9 + $0x14b8] sm:$0xff]
      %v1230 = vld [vmem:[#allocation9 + $0x14c0] sm:$0xff]
      %v1231 = vld [vmem:[#allocation9 + $0x14c8] sm:$0xff]
      %v1232 = vld [vmem:[#allocation9 + $0x14d0] sm:$0xff]
      %v1233 = vld [vmem:[#allocation9 + $0x14d8] sm:$0xff]
      %v1234 = vld [vmem:[#allocation9 + $0x14e0] sm:$0xff]
      %v1235 = vld [vmem:[#allocation9 + $0x14e8] sm:$0xff]
      %v1236 = vld [vmem:[#allocation9 + $0x14f0] sm:$0xff]
      %v1237 = vld [vmem:[#allocation9 + $0x14f8] sm:$0xff]
      %v1238 = vld [vmem:[#allocation9 + $0x1500] sm:$0xff]
      %v1239 = vld [vmem:[#allocation9 + $0x1508] sm:$0xff]
      %v1240 = vld [vmem:[#allocation9 + $0x1510] sm:$0xff]
      %v1241 = vld [vmem:[#allocation9 + $0x1518] sm:$0xff]
      %v1242 = vld [vmem:[#allocation9 + $0x1520] sm:$0xff]
      %v1243 = vld [vmem:[#allocation9 + $0x1528] sm:$0xff]
      %v1244 = vld [vmem:[#allocation9 + $0x1530] sm:$0xff]
      %v1245 = vld [vmem:[#allocation9 + $0x1538] sm:$0xff]
      %v1246 = vld [vmem:[#allocation9 + $0x1540] sm:$0xff]
      %v1247 = vld [vmem:[#allocation9 + $0x1548] sm:$0xff]
      %v1248 = vld [vmem:[#allocation9 + $0x1550] sm:$0xff]
      %v1249 = vld [vmem:[#allocation9 + $0x1558] sm:$0xff]
      %v1250 = vld [vmem:[#allocation9 + $0x1560] sm:$0xff]
      %v1251 = vld [vmem:[#allocation9 + $0x1568] sm:$0xff]
      %v1252 = vld [vmem:[#allocation9 + $0x1570] sm:$0xff]
      %v1253 = vld [vmem:[#allocation9 + $0x1578] sm:$0xff]
      %v1254 = vld [vmem:[#allocation9 + $0x1580] sm:$0xff]
      %v1255 = vld [vmem:[#allocation9 + $0x1588] sm:$0xff]
      %v1256 = vld [vmem:[#allocation9 + $0x1590] sm:$0xff]
      %v1257 = vld [vmem:[#allocation9 + $0x1598] sm:$0xff]
      %v1258 = vld [vmem:[#allocation9 + $0x15a0] sm:$0xff]
      %v1259 = vld [vmem:[#allocation9 + $0x15a8] sm:$0xff]
      %v1260 = vld [vmem:[#allocation9 + $0x15b0] sm:$0xff]
      %v1261 = vld [vmem:[#allocation9 + $0x15b8] sm:$0xff]
      %v1262 = vld [vmem:[#allocation9 + $0x15c0] sm:$0xff]
      %v1263 = vld [vmem:[#allocation9 + $0x15c8] sm:$0xff]
      %v1264 = vld [vmem:[#allocation9 + $0x15d0] sm:$0xff]
      %v1265 = vld [vmem:[#allocation9 + $0x15d8] sm:$0xff]
      %v1266 = vld [vmem:[#allocation9 + $0x15e0] sm:$0xff]
      %v1267 = vld [vmem:[#allocation9 + $0x15e8] sm:$0xff]
      %v1268 = vld [vmem:[#allocation9 + $0x15f0] sm:$0xff]
      %v1269 = vld [vmem:[#allocation9 + $0x15f8] sm:$0xff]
      %v1270 = vld [vmem:[#allocation9 + $0x1600] sm:$0xff]
      %v1271 = vld [vmem:[#allocation9 + $0x1608] sm:$0xff]
      %v1272 = vld [vmem:[#allocation9 + $0x1610] sm:$0xff]
      %v1273 = vld [vmem:[#allocation9 + $0x1618] sm:$0xff]
      %v1274 = vld [vmem:[#allocation9 + $0x1620] sm:$0xff]
      %v1275 = vld [vmem:[#allocation9 + $0x1628] sm:$0xff]
      %v1276 = vld [vmem:[#allocation9 + $0x1630] sm:$0xff]
      %v1277 = vld [vmem:[#allocation9 + $0x1638] sm:$0xff]
      %v1278 = vld [vmem:[#allocation9 + $0x1640] sm:$0xff]
      %v1279 = vld [vmem:[#allocation9 + $0x1648] sm:$0xff]
      %v1280 = vld [vmem:[#allocation9 + $0x1650] sm:$0xff]
      %v1281 = vld [vmem:[#allocation9 + $0x1658] sm:$0xff]
      %v1282 = vld [vmem:[#allocation9 + $0x1660] sm:$0xff]
      %v1283 = vld [vmem:[#allocation9 + $0x1668] sm:$0xff]
      %v1284 = vld [vmem:[#allocation9 + $0x1670] sm:$0xff]
      %v1285 = vld [vmem:[#allocation9 + $0x1678] sm:$0xff]
      %v1286 = vld [vmem:[#allocation9 + $0x1680] sm:$0xff]
      %v1287 = vld [vmem:[#allocation9 + $0x1688] sm:$0xff]
      %v1288 = vld [vmem:[#allocation9 + $0x1690] sm:$0xff]
      %v1289 = vld [vmem:[#allocation9 + $0x1698] sm:$0xff]
      %v1290 = vld [vmem:[#allocation9 + $0x16a0] sm:$0xff]
      %v1291 = vld [vmem:[#allocation9 + $0x16a8] sm:$0xff]
      %v1292 = vld [vmem:[#allocation9 + $0x16b0] sm:$0xff]
      %v1293 = vld [vmem:[#allocation9 + $0x16b8] sm:$0xff]
      %v1294 = vld [vmem:[#allocation9 + $0x16c0] sm:$0xff]
      %v1295 = vld [vmem:[#allocation9 + $0x16c8] sm:$0xff]
      %v1296 = vld [vmem:[#allocation9 + $0x16d0] sm:$0xff]
      %v1297 = vld [vmem:[#allocation9 + $0x16d8] sm:$0xff]
      %v1298 = vld [vmem:[#allocation9 + $0x16e0] sm:$0xff]
      %v1299 = vld [vmem:[#allocation9 + $0x16e8] sm:$0xff]
      %v1300 = vld [vmem:[#allocation9 + $0x16f0] sm:$0xff]
      %v1301 = vld [vmem:[#allocation9 + $0x16f8] sm:$0xff]
      %v1302 = vld [vmem:[#allocation9 + $0x1700] sm:$0xff]
      %v1303 = vld [vmem:[#allocation9 + $0x1708] sm:$0xff]
      %v1304 = vld [vmem:[#allocation9 + $0x1710] sm:$0xff]
      %v1305 = vld [vmem:[#allocation9 + $0x1718] sm:$0xff]
      %v1306 = vld [vmem:[#allocation9 + $0x1720] sm:$0xff]
      %v1307 = vld [vmem:[#allocation9 + $0x1728] sm:$0xff]
      %v1308 = vld [vmem:[#allocation9 + $0x1730] sm:$0xff]
      %v1309 = vld [vmem:[#allocation9 + $0x1738] sm:$0xff]
      %v1310 = vld [vmem:[#allocation9 + $0x1740] sm:$0xff]
      %v1311 = vld [vmem:[#allocation9 + $0x1748] sm:$0xff]
      %v1312 = vld [vmem:[#allocation9 + $0x1750] sm:$0xff]
      %v1313 = vld [vmem:[#allocation9 + $0x1758] sm:$0xff]
      %v1314 = vld [vmem:[#allocation9 + $0x1760] sm:$0xff]
      %v1315 = vld [vmem:[#allocation9 + $0x1768] sm:$0xff]
      %v1316 = vld [vmem:[#allocation9 + $0x1770] sm:$0xff]
      %v1317 = vld [vmem:[#allocation9 + $0x1778] sm:$0xff]
      %v1318 = vld [vmem:[#allocation9 + $0x1780] sm:$0xff]
      %v1319 = vld [vmem:[#allocation9 + $0x1788] sm:$0xff]
      %v1320 = vld [vmem:[#allocation9 + $0x1790] sm:$0xff]
      %v1321 = vld [vmem:[#allocation9 + $0x1798] sm:$0xff]
      %v1322 = vld [vmem:[#allocation9 + $0x17a0] sm:$0xff]
      %v1323 = vld [vmem:[#allocation9 + $0x17a8] sm:$0xff]
      %v1324 = vld [vmem:[#allocation9 + $0x17b0] sm:$0xff]
      %v1325 = vld [vmem:[#allocation9 + $0x17b8] sm:$0xff]
      %v1326 = vld [vmem:[#allocation9 + $0x17c0] sm:$0xff]
      %v1327 = vld [vmem:[#allocation9 + $0x17c8] sm:$0xff]
      %v1328 = vld [vmem:[#allocation9 + $0x17d0] sm:$0xff]
      %v1329 = vld [vmem:[#allocation9 + $0x17d8] sm:$0xff]
      %v1330 = vld [vmem:[#allocation9 + $0x17e0] sm:$0xff]
      %v1331 = vld [vmem:[#allocation9 + $0x17e8] sm:$0xff]
      %v1332 = vld [vmem:[#allocation9 + $0x17f0] sm:$0xff]
      %v1333 = vld [vmem:[#allocation9 + $0x17f8] sm:$0xff]
      %v1334 = vld [vmem:[#allocation9 + $0x1800] sm:$0xff]
      %v1335 = vld [vmem:[#allocation9 + $0x1808] sm:$0xff]
      %v1336 = vld [vmem:[#allocation9 + $0x1810] sm:$0xff]
      %v1337 = vld [vmem:[#allocation9 + $0x1818] sm:$0xff]
      %v1338 = vld [vmem:[#allocation9 + $0x1820] sm:$0xff]
      %v1339 = vld [vmem:[#allocation9 + $0x1828] sm:$0xff]
      %v1340 = vld [vmem:[#allocation9 + $0x1830] sm:$0xff]
      %v1341 = vld [vmem:[#allocation9 + $0x1838] sm:$0xff]
      %v1342 = vld [vmem:[#allocation9 + $0x1840] sm:$0xff]
      %v1343 = vld [vmem:[#allocation9 + $0x1848] sm:$0xff]
      %v1344 = vld [vmem:[#allocation9 + $0x1850] sm:$0xff]
      %v1345 = vld [vmem:[#allocation9 + $0x1858] sm:$0xff]
      %v1346 = vld [vmem:[#allocation9 + $0x1860] sm:$0xff]
      %v1347 = vld [vmem:[#allocation9 + $0x1868] sm:$0xff]
      %v1348 = vld [vmem:[#allocation9 + $0x1870] sm:$0xff]
      %v1349 = vld [vmem:[#allocation9 + $0x1878] sm:$0xff]
      %v1350 = vld [vmem:[#allocation9 + $0x1880] sm:$0xff]
      %v1351 = vld [vmem:[#allocation9 + $0x1888] sm:$0xff]
      %v1352 = vld [vmem:[#allocation9 + $0x1890] sm:$0xff]
      %v1353 = vld [vmem:[#allocation9 + $0x1898] sm:$0xff]
      %v1354 = vld [vmem:[#allocation9 + $0x18a0] sm:$0xff]
      %v1355 = vld [vmem:[#allocation9 + $0x18a8] sm:$0xff]
      %v1356 = vld [vmem:[#allocation9 + $0x18b0] sm:$0xff]
      %v1357 = vld [vmem:[#allocation9 + $0x18b8] sm:$0xff]
      %v1358 = vld [vmem:[#allocation9 + $0x18c0] sm:$0xff]
      %v1359 = vld [vmem:[#allocation9 + $0x18c8] sm:$0xff]
      %v1360 = vld [vmem:[#allocation9 + $0x18d0] sm:$0xff]
      %v1361 = vld [vmem:[#allocation9 + $0x18d8] sm:$0xff]
      %v1362 = vld [vmem:[#allocation9 + $0x18e0] sm:$0xff]
      %v1363 = vld [vmem:[#allocation9 + $0x18e8] sm:$0xff]
      %v1364 = vld [vmem:[#allocation9 + $0x18f0] sm:$0xff]
      %v1365 = vld [vmem:[#allocation9 + $0x18f8] sm:$0xff]
      %v1366 = vld [vmem:[#allocation9 + $0x1900] sm:$0xff]
      %v1367 = vld [vmem:[#allocation9 + $0x1908] sm:$0xff]
      %v1368 = vld [vmem:[#allocation9 + $0x1910] sm:$0xff]
      %v1369 = vld [vmem:[#allocation9 + $0x1918] sm:$0xff]
      %v1370 = vld [vmem:[#allocation9 + $0x1920] sm:$0xff]
      %v1371 = vld [vmem:[#allocation9 + $0x1928] sm:$0xff]
      %v1372 = vld [vmem:[#allocation9 + $0x1930] sm:$0xff]
      %v1373 = vld [vmem:[#allocation9 + $0x1938] sm:$0xff]
      %v1374 = vld [vmem:[#allocation9 + $0x1940] sm:$0xff]
      %v1375 = vld [vmem:[#allocation9 + $0x1948] sm:$0xff]
      %v1376 = vld [vmem:[#allocation9 + $0x1950] sm:$0xff]
      %v1377 = vld [vmem:[#allocation9 + $0x1958] sm:$0xff]
      %v1378 = vld [vmem:[#allocation9 + $0x1960] sm:$0xff]
      %v1379 = vld [vmem:[#allocation9 + $0x1968] sm:$0xff]
      %v1380 = vld [vmem:[#allocation9 + $0x1970] sm:$0xff]
      %v1381 = vld [vmem:[#allocation9 + $0x1978] sm:$0xff]
      %v1382 = vld [vmem:[#allocation9 + $0x1980] sm:$0xff]
      %v1383 = vld [vmem:[#allocation9 + $0x1988] sm:$0xff]
      %v1384 = vld [vmem:[#allocation9 + $0x1990] sm:$0xff]
      %v1385 = vld [vmem:[#allocation9 + $0x1998] sm:$0xff]
      %v1386 = vld [vmem:[#allocation9 + $0x19a0] sm:$0xff]
      %v1387 = vld [vmem:[#allocation9 + $0x19a8] sm:$0xff]
      %v1388 = vld [vmem:[#allocation9 + $0x19b0] sm:$0xff]
      %v1389 = vld [vmem:[#allocation9 + $0x19b8] sm:$0xff]
      %v1390 = vld [vmem:[#allocation9 + $0x19c0] sm:$0xff]
      %v1391 = vld [vmem:[#allocation9 + $0x19c8] sm:$0xff]
      %v1392 = vld [vmem:[#allocation9 + $0x19d0] sm:$0xff]
      %v1393 = vld [vmem:[#allocation9 + $0x19d8] sm:$0xff]
      %v1394 = vld [vmem:[#allocation9 + $0x19e0] sm:$0xff]
      %v1395 = vld [vmem:[#allocation9 + $0x19e8] sm:$0xff]
      %v1396 = vld [vmem:[#allocation9 + $0x19f0] sm:$0xff]
      %v1397 = vld [vmem:[#allocation9 + $0x19f8] sm:$0xff]
      %v1398 = vld [vmem:[#allocation9 + $0x1a00] sm:$0xff]
      %v1399 = vld [vmem:[#allocation9 + $0x1a08] sm:$0xff]
      %v1400 = vld [vmem:[#allocation9 + $0x1a10] sm:$0xff]
      %v1401 = vld [vmem:[#allocation9 + $0x1a18] sm:$0xff]
      %v1402 = vld [vmem:[#allocation9 + $0x1a20] sm:$0xff]
      %v1403 = vld [vmem:[#allocation9 + $0x1a28] sm:$0xff]
      %v1404 = vld [vmem:[#allocation9 + $0x1a30] sm:$0xff]
      %v1405 = vld [vmem:[#allocation9 + $0x1a38] sm:$0xff]
      %v1406 = vld [vmem:[#allocation9 + $0x1a40] sm:$0xff]
      %v1407 = vld [vmem:[#allocation9 + $0x1a48] sm:$0xff]
      %v1408 = vld [vmem:[#allocation9 + $0x1a50] sm:$0xff]
      %v1409 = vld [vmem:[#allocation9 + $0x1a58] sm:$0xff]
      %v1410 = vld [vmem:[#allocation9 + $0x1a60] sm:$0xff]
      %v1411 = vld [vmem:[#allocation9 + $0x1a68] sm:$0xff]
      %v1412 = vld [vmem:[#allocation9 + $0x1a70] sm:$0xff]
      %v1413 = vld [vmem:[#allocation9 + $0x1a78] sm:$0xff]
      %v1414 = vld [vmem:[#allocation9 + $0x1a80] sm:$0xff]
      %v1415 = vld [vmem:[#allocation9 + $0x1a88] sm:$0xff]
      %v1416 = vld [vmem:[#allocation9 + $0x1a90] sm:$0xff]
      %v1417 = vld [vmem:[#allocation9 + $0x1a98] sm:$0xff]
      %v1418 = vld [vmem:[#allocation9 + $0x1aa0] sm:$0xff]
      %v1419 = vld [vmem:[#allocation9 + $0x1aa8] sm:$0xff]
      %v1420 = vld [vmem:[#allocation9 + $0x1ab0] sm:$0xff]
      %v1421 = vld [vmem:[#allocation9 + $0x1ab8] sm:$0xff]
      %v1422 = vld [vmem:[#allocation9 + $0x1ac0] sm:$0xff]
      %v1423 = vld [vmem:[#allocation9 + $0x1ac8] sm:$0xff]
      %v1424 = vld [vmem:[#allocation9 + $0x1ad0] sm:$0xff]
      %v1425 = vld [vmem:[#allocation9 + $0x1ad8] sm:$0xff]
      %v1426 = vld [vmem:[#allocation9 + $0x1ae0] sm:$0xff]
      %v1427 = vld [vmem:[#allocation9 + $0x1ae8] sm:$0xff]
      %v1428 = vld [vmem:[#allocation9 + $0x1af0] sm:$0xff]
      %v1429 = vld [vmem:[#allocation9 + $0x1af8] sm:$0xff]
      %v1430 = vld [vmem:[#allocation9 + $0x1b00] sm:$0xff]
      %v1431 = vld [vmem:[#allocation9 + $0x1b08] sm:$0xff]
      %v1432 = vld [vmem:[#allocation9 + $0x1b10] sm:$0xff]
      %v1433 = vld [vmem:[#allocation9 + $0x1b18] sm:$0xff]
      %v1434 = vld [vmem:[#allocation9 + $0x1b20] sm:$0xff]
      %v1435 = vld [vmem:[#allocation9 + $0x1b28] sm:$0xff]
      %v1436 = vld [vmem:[#allocation9 + $0x1b30] sm:$0xff]
      %v1437 = vld [vmem:[#allocation9 + $0x1b38] sm:$0xff]
      %v1438 = vld [vmem:[#allocation9 + $0x1b40] sm:$0xff]
      %v1439 = vld [vmem:[#allocation9 + $0x1b48] sm:$0xff]
      %v1440 = vld [vmem:[#allocation9 + $0x1b50] sm:$0xff]
      %v1441 = vld [vmem:[#allocation9 + $0x1b58] sm:$0xff]
      %v1442 = vld [vmem:[#allocation9 + $0x1b60] sm:$0xff]
      %v1443 = vld [vmem:[#allocation9 + $0x1b68] sm:$0xff]
      %v1444 = vld [vmem:[#allocation9 + $0x1b70] sm:$0xff]
      %v1445 = vld [vmem:[#allocation9 + $0x1b78] sm:$0xff]
      %v1446 = vld [vmem:[#allocation9 + $0x1b80] sm:$0xff]
      %v1447 = vld [vmem:[#allocation9 + $0x1b88] sm:$0xff]
      %v1448 = vld [vmem:[#allocation9 + $0x1b90] sm:$0xff]
      %v1449 = vld [vmem:[#allocation9 + $0x1b98] sm:$0xff]
      %v1450 = vld [vmem:[#allocation9 + $0x1ba0] sm:$0xff]
      %v1451 = vld [vmem:[#allocation9 + $0x1ba8] sm:$0xff]
      %v1452 = vld [vmem:[#allocation9 + $0x1bb0] sm:$0xff]
      %v1453 = vld [vmem:[#allocation9 + $0x1bb8] sm:$0xff]
      %v1454 = vld [vmem:[#allocation9 + $0x1bc0] sm:$0xff]
      %v1455 = vld [vmem:[#allocation9 + $0x1bc8] sm:$0xff]
      %v1456 = vld [vmem:[#allocation9 + $0x1bd0] sm:$0xff]
      %v1457 = vld [vmem:[#allocation9 + $0x1bd8] sm:$0xff]
      %v1458 = vld [vmem:[#allocation9 + $0x1be0] sm:$0xff]
      %v1459 = vld [vmem:[#allocation9 + $0x1be8] sm:$0xff]
      %v1460 = vld [vmem:[#allocation9 + $0x1bf0] sm:$0xff]
      %v1461 = vld [vmem:[#allocation9 + $0x1bf8] sm:$0xff]
      %v1462 = vld [vmem:[#allocation9 + $0x1c00] sm:$0xff]
      %v1463 = vld [vmem:[#allocation9 + $0x1c08] sm:$0xff]
      %v1464 = vld [vmem:[#allocation9 + $0x1c10] sm:$0xff]
      %v1465 = vld [vmem:[#allocation9 + $0x1c18] sm:$0xff]
      %v1466 = vld [vmem:[#allocation9 + $0x1c20] sm:$0xff]
      %v1467 = vld [vmem:[#allocation9 + $0x1c28] sm:$0xff]
      %v1468 = vld [vmem:[#allocation9 + $0x1c30] sm:$0xff]
      %v1469 = vld [vmem:[#allocation9 + $0x1c38] sm:$0xff]
      %v1470 = vld [vmem:[#allocation9 + $0x1c40] sm:$0xff]
      %v1471 = vld [vmem:[#allocation9 + $0x1c48] sm:$0xff]
      %v1472 = vld [vmem:[#allocation9 + $0x1c50] sm:$0xff]
      %v1473 = vld [vmem:[#allocation9 + $0x1c58] sm:$0xff]
      %v1474 = vld [vmem:[#allocation9 + $0x1c60] sm:$0xff]
      %v1475 = vld [vmem:[#allocation9 + $0x1c68] sm:$0xff]
      %v1476 = vld [vmem:[#allocation9 + $0x1c70] sm:$0xff]
      %v1477 = vld [vmem:[#allocation9 + $0x1c78] sm:$0xff]
      %v1478 = vld [vmem:[#allocation9 + $0x1c80] sm:$0xff]
      %v1479 = vld [vmem:[#allocation9 + $0x1c88] sm:$0xff]
      %v1480 = vld [vmem:[#allocation9 + $0x1c90] sm:$0xff]
      %v1481 = vld [vmem:[#allocation9 + $0x1c98] sm:$0xff]
      %v1482 = vld [vmem:[#allocation9 + $0x1ca0] sm:$0xff]
      %v1483 = vld [vmem:[#allocation9 + $0x1ca8] sm:$0xff]
      %v1484 = vld [vmem:[#allocation9 + $0x1cb0] sm:$0xff]
      %v1485 = vld [vmem:[#allocation9 + $0x1cb8] sm:$0xff]
      %v1486 = vld [vmem:[#allocation9 + $0x1cc0] sm:$0xff]
      %v1487 = vld [vmem:[#allocation9 + $0x1cc8] sm:$0xff]
      %v1488 = vld [vmem:[#allocation9 + $0x1cd0] sm:$0xff]
      %v1489 = vld [vmem:[#allocation9 + $0x1cd8] sm:$0xff]
      %v1490 = vld [vmem:[#allocation9 + $0x1ce0] sm:$0xff]
      %v1491 = vld [vmem:[#allocation9 + $0x1ce8] sm:$0xff]
      %v1492 = vld [vmem:[#allocation9 + $0x1cf0] sm:$0xff]
      %v1493 = vld [vmem:[#allocation9 + $0x1cf8] sm:$0xff]
      %v1494 = vld [vmem:[#allocation9 + $0x1d00] sm:$0xff]
      %v1495 = vld [vmem:[#allocation9 + $0x1d08] sm:$0xff]
      %v1496 = vld [vmem:[#allocation9 + $0x1d10] sm:$0xff]
      %v1497 = vld [vmem:[#allocation9 + $0x1d18] sm:$0xff]
      %v1498 = vld [vmem:[#allocation9 + $0x1d20] sm:$0xff]
      %v1499 = vld [vmem:[#allocation9 + $0x1d28] sm:$0xff]
      %v1500 = vld [vmem:[#allocation9 + $0x1d30] sm:$0xff]
      %v1501 = vld [vmem:[#allocation9 + $0x1d38] sm:$0xff]
      %v1502 = vld [vmem:[#allocation9 + $0x1d40] sm:$0xff]
      %v1503 = vld [vmem:[#allocation9 + $0x1d48] sm:$0xff]
      %v1504 = vld [vmem:[#allocation9 + $0x1d50] sm:$0xff]
      %v1505 = vld [vmem:[#allocation9 + $0x1d58] sm:$0xff]
      %v1506 = vld [vmem:[#allocation9 + $0x1d60] sm:$0xff]
      %v1507 = vld [vmem:[#allocation9 + $0x1d68] sm:$0xff]
      %v1508 = vld [vmem:[#allocation9 + $0x1d70] sm:$0xff]
      %v1509 = vld [vmem:[#allocation9 + $0x1d78] sm:$0xff]
      %v1510 = vld [vmem:[#allocation9 + $0x1d80] sm:$0xff]
      %v1511 = vld [vmem:[#allocation9 + $0x1d88] sm:$0xff]
      %v1512 = vld [vmem:[#allocation9 + $0x1d90] sm:$0xff]
      %v1513 = vld [vmem:[#allocation9 + $0x1d98] sm:$0xff]
      %v1514 = vld [vmem:[#allocation9 + $0x1da0] sm:$0xff]
      %v1515 = vld [vmem:[#allocation9 + $0x1da8] sm:$0xff]
      %v1516 = vld [vmem:[#allocation9 + $0x1db0] sm:$0xff]
      %v1517 = vld [vmem:[#allocation9 + $0x1db8] sm:$0xff]
      %v1518 = vld [vmem:[#allocation9 + $0x1dc0] sm:$0xff]
      %v1519 = vld [vmem:[#allocation9 + $0x1dc8] sm:$0xff]
      %v1520 = vld [vmem:[#allocation9 + $0x1dd0] sm:$0xff]
      %v1521 = vld [vmem:[#allocation9 + $0x1dd8] sm:$0xff]
      %v1522 = vld [vmem:[#allocation9 + $0x1de0] sm:$0xff]
      %v1523 = vld [vmem:[#allocation9 + $0x1de8] sm:$0xff]
      %v1524 = vld [vmem:[#allocation9 + $0x1df0] sm:$0xff]
      %v1525 = vld [vmem:[#allocation9 + $0x1df8] sm:$0xff]
      %v1526 = vld [vmem:[#allocation9 + $0x1e00] sm:$0xff]
      %v1527 = vld [vmem:[#allocation9 + $0x1e08] sm:$0xff]
      %v1528 = vld [vmem:[#allocation9 + $0x1e10] sm:$0xff]
      %v1529 = vld [vmem:[#allocation9 + $0x1e18] sm:$0xff]
      %v1530 = vld [vmem:[#allocation9 + $0x1e20] sm:$0xff]
      %v1531 = vld [vmem:[#allocation9 + $0x1e28] sm:$0xff]
      %v1532 = vld [vmem:[#allocation9 + $0x1e30] sm:$0xff]
      %v1533 = vld [vmem:[#allocation9 + $0x1e38] sm:$0xff]
      %v1534 = vld [vmem:[#allocation9 + $0x1e40] sm:$0xff]
      %v1535 = vld [vmem:[#allocation9 + $0x1e48] sm:$0xff]
      %v1536 = vld [vmem:[#allocation9 + $0x1e50] sm:$0xff]
      %v1537 = vld [vmem:[#allocation9 + $0x1e58] sm:$0xff]
      %v1538 = vld [vmem:[#allocation9 + $0x1e60] sm:$0xff]
      %v1539 = vld [vmem:[#allocation9 + $0x1e68] sm:$0xff]
      %v1540 = vld [vmem:[#allocation9 + $0x1e70] sm:$0xff]
      %v1541 = vld [vmem:[#allocation9 + $0x1e78] sm:$0xff]
      %v1542 = vld [vmem:[#allocation9 + $0x1e80] sm:$0xff]
      %v1543 = vld [vmem:[#allocation9 + $0x1e88] sm:$0xff]
      %v1544 = vld [vmem:[#allocation9 + $0x1e90] sm:$0xff]
      %v1545 = vld [vmem:[#allocation9 + $0x1e98] sm:$0xff]
      %v1546 = vld [vmem:[#allocation9 + $0x1ea0] sm:$0xff]
      %v1547 = vld [vmem:[#allocation9 + $0x1ea8] sm:$0xff]
      %v1548 = vld [vmem:[#allocation9 + $0x1eb0] sm:$0xff]
      %v1549 = vld [vmem:[#allocation9 + $0x1eb8] sm:$0xff]
      %v1550 = vld [vmem:[#allocation9 + $0x1ec0] sm:$0xff]
      %v1551 = vld [vmem:[#allocation9 + $0x1ec8] sm:$0xff]
      %v1552 = vld [vmem:[#allocation9 + $0x1ed0] sm:$0xff]
      %v1553 = vld [vmem:[#allocation9 + $0x1ed8] sm:$0xff]
      %v1554 = vld [vmem:[#allocation9 + $0x1ee0] sm:$0xff]
      %v1555 = vld [vmem:[#allocation9 + $0x1ee8] sm:$0xff]
      %v1556 = vld [vmem:[#allocation9 + $0x1ef0] sm:$0xff]
      %v1557 = vld [vmem:[#allocation9 + $0x1ef8] sm:$0xff]
      %v1558 = vld [vmem:[#allocation9 + $0x1f00] sm:$0xff]
      %v1559 = vld [vmem:[#allocation9 + $0x1f08] sm:$0xff]
      %v1560 = vld [vmem:[#allocation9 + $0x1f10] sm:$0xff]
      %v1561 = vld [vmem:[#allocation9 + $0x1f18] sm:$0xff]
      %v1562 = vld [vmem:[#allocation9 + $0x1f20] sm:$0xff]
      %v1563 = vld [vmem:[#allocation9 + $0x1f28] sm:$0xff]
      %v1564 = vld [vmem:[#allocation9 + $0x1f30] sm:$0xff]
      %v1565 = vld [vmem:[#allocation9 + $0x1f38] sm:$0xff]
      %v1566 = vld [vmem:[#allocation9 + $0x1f40] sm:$0xff]
      %v1567 = vld [vmem:[#allocation9 + $0x1f48] sm:$0xff]
      %v1568 = vld [vmem:[#allocation9 + $0x1f50] sm:$0xff]
      %v1569 = vld [vmem:[#allocation9 + $0x1f58] sm:$0xff]
      %v1570 = vld [vmem:[#allocation9 + $0x1f60] sm:$0xff]
      %v1571 = vld [vmem:[#allocation9 + $0x1f68] sm:$0xff]
      %v1572 = vld [vmem:[#allocation9 + $0x1f70] sm:$0xff]
      %v1573 = vld [vmem:[#allocation9 + $0x1f78] sm:$0xff]
      %v1574 = vld [vmem:[#allocation9 + $0x1f80] sm:$0xff]
      %v1575 = vld [vmem:[#allocation9 + $0x1f88] sm:$0xff]
      %v1576 = vld [vmem:[#allocation9 + $0x1f90] sm:$0xff]
      %v1577 = vld [vmem:[#allocation9 + $0x1f98] sm:$0xff]
      %v1578 = vld [vmem:[#allocation9 + $0x1fa0] sm:$0xff]
      %v1579 = vld [vmem:[#allocation9 + $0x1fa8] sm:$0xff]
      %v1580 = vld [vmem:[#allocation9 + $0x1fb0] sm:$0xff]
      %v1581 = vld [vmem:[#allocation9 + $0x1fb8] sm:$0xff]
      %v1582 = vld [vmem:[#allocation9 + $0x1fc0] sm:$0xff]
      %v1583 = vld [vmem:[#allocation9 + $0x1fc8] sm:$0xff]
      %v1584 = vld [vmem:[#allocation9 + $0x1fd0] sm:$0xff]
      %v1585 = vld [vmem:[#allocation9 + $0x1fd8] sm:$0xff]
      %v1586 = vld [vmem:[#allocation9 + $0x1fe0] sm:$0xff]
      %v1587 = vld [vmem:[#allocation9 + $0x1fe8] sm:$0xff]
      %v1588 = vld [vmem:[#allocation9 + $0x1ff0] sm:$0xff]
      %v1589 = vld [vmem:[#allocation9 + $0x1ff8] sm:$0xff]
      %v1590 = vld [vmem:[#allocation9 + $0x2000] sm:$0xff]
      %v1591 = vld [vmem:[#allocation9 + $0x2008] sm:$0xff]
      %v1592 = vld [vmem:[#allocation9 + $0x2010] sm:$0xff]
      %v1593 = vld [vmem:[#allocation9 + $0x2018] sm:$0xff]
      %v1594 = vld [vmem:[#allocation9 + $0x2020] sm:$0xff]
      %v1595 = vld [vmem:[#allocation9 + $0x2028] sm:$0xff]
      %v1596 = vld [vmem:[#allocation9 + $0x2030] sm:$0xff]
      %v1597 = vld [vmem:[#allocation9 + $0x2038] sm:$0xff]
      %v1598 = vld [vmem:[#allocation9 + $0x2040] sm:$0xff]
      %v1599 = vld [vmem:[#allocation9 + $0x2048] sm:$0xff]
      %v1600 = vld [vmem:[#allocation9 + $0x2050] sm:$0xff]
      %v1601 = vld [vmem:[#allocation9 + $0x2058] sm:$0xff]
      %v1602 = vld [vmem:[#allocation9 + $0x2060] sm:$0xff]
      %v1603 = vld [vmem:[#allocation9 + $0x2068] sm:$0xff]
      %v1604 = vld [vmem:[#allocation9 + $0x2070] sm:$0xff]
      %v1605 = vld [vmem:[#allocation9 + $0x2078] sm:$0xff]
      %v1606 = vld [vmem:[#allocation9 + $0x2080] sm:$0xff]
      %v1607 = vld [vmem:[#allocation9 + $0x2088] sm:$0xff]
      %v1608 = vld [vmem:[#allocation9 + $0x2090] sm:$0xff]
      %v1609 = vld [vmem:[#allocation9 + $0x2098] sm:$0xff]
      %v1610 = vld [vmem:[#allocation9 + $0x20a0] sm:$0xff]
      %v1611 = vld [vmem:[#allocation9 + $0x20a8] sm:$0xff]
      %v1612 = vld [vmem:[#allocation9 + $0x20b0] sm:$0xff]
      %v1613 = vld [vmem:[#allocation9 + $0x20b8] sm:$0xff]
      %v1614 = vld [vmem:[#allocation9 + $0x20c0] sm:$0xff]
      %v1615 = vld [vmem:[#allocation9 + $0x20c8] sm:$0xff]
      %v1616 = vld [vmem:[#allocation9 + $0x20d0] sm:$0xff]
      %v1617 = vld [vmem:[#allocation9 + $0x20d8] sm:$0xff]
      %v1618 = vld [vmem:[#allocation9 + $0x20e0] sm:$0xff]
      %v1619 = vld [vmem:[#allocation9 + $0x20e8] sm:$0xff]
      %v1620 = vld [vmem:[#allocation9 + $0x20f0] sm:$0xff]
      %v1621 = vld [vmem:[#allocation9 + $0x20f8] sm:$0xff]
      %v1622 = vld [vmem:[#allocation9 + $0x2100] sm:$0xff]
      %v1623 = vld [vmem:[#allocation9 + $0x2108] sm:$0xff]
      %v1624 = vld [vmem:[#allocation9 + $0x2110] sm:$0xff]
      %v1625 = vld [vmem:[#allocation9 + $0x2118] sm:$0xff]
      %v1626 = vld [vmem:[#allocation9 + $0x2120] sm:$0xff]
      %v1627 = vld [vmem:[#allocation9 + $0x2128] sm:$0xff]
      %v1628 = vld [vmem:[#allocation9 + $0x2130] sm:$0xff]
      %v1629 = vld [vmem:[#allocation9 + $0x2138] sm:$0xff]
      %v1630 = vld [vmem:[#allocation9 + $0x2140] sm:$0xff]
      %v1631 = vld [vmem:[#allocation9 + $0x2148] sm:$0xff]
      %v1632 = vld [vmem:[#allocation9 + $0x2150] sm:$0xff]
      %v1633 = vld [vmem:[#allocation9 + $0x2158] sm:$0xff]
      %v1634 = vld [vmem:[#allocation9 + $0x2160] sm:$0xff]
      %v1635 = vld [vmem:[#allocation9 + $0x2168] sm:$0xff]
      %v1636 = vld [vmem:[#allocation9 + $0x2170] sm:$0xff]
      %v1637 = vld [vmem:[#allocation9 + $0x2178] sm:$0xff]
      %v1638 = vld [vmem:[#allocation9 + $0x2180] sm:$0xff]
      %v1639 = vld [vmem:[#allocation9 + $0x2188] sm:$0xff]
      %v1640 = vld [vmem:[#allocation9 + $0x2190] sm:$0xff]
      %v1641 = vld [vmem:[#allocation9 + $0x2198] sm:$0xff]
      %v1642 = vld [vmem:[#allocation9 + $0x21a0] sm:$0xff]
      %v1643 = vld [vmem:[#allocation9 + $0x21a8] sm:$0xff]
      %v1644 = vld [vmem:[#allocation9 + $0x21b0] sm:$0xff]
      %v1645 = vld [vmem:[#allocation9 + $0x21b8] sm:$0xff]
      %v1646 = vld [vmem:[#allocation9 + $0x21c0] sm:$0xff]
      %v1647 = vld [vmem:[#allocation9 + $0x21c8] sm:$0xff]
      %v1648 = vld [vmem:[#allocation9 + $0x21d0] sm:$0xff]
      %v1649 = vld [vmem:[#allocation9 + $0x21d8] sm:$0xff]
      %v1650 = vld [vmem:[#allocation9 + $0x21e0] sm:$0xff]
      %v1651 = vld [vmem:[#allocation9 + $0x21e8] sm:$0xff]
      %v1652 = vld [vmem:[#allocation9 + $0x21f0] sm:$0xff]
      %v1653 = vld [vmem:[#allocation9 + $0x21f8] sm:$0xff]
      %v1654 = vld [vmem:[#allocation9 + $0x2200] sm:$0xff]
      %v1655 = vld [vmem:[#allocation9 + $0x2208] sm:$0xff]
      %v1656 = vld [vmem:[#allocation9 + $0x2210] sm:$0xff]
      %v1657 = vld [vmem:[#allocation9 + $0x2218] sm:$0xff]
      %v1658 = vld [vmem:[#allocation9 + $0x2220] sm:$0xff]
      %v1659 = vld [vmem:[#allocation9 + $0x2228] sm:$0xff]
      %v1660 = vld [vmem:[#allocation9 + $0x2230] sm:$0xff]
      %v1661 = vld [vmem:[#allocation9 + $0x2238] sm:$0xff]
      %v1662 = vld [vmem:[#allocation9 + $0x2240] sm:$0xff]
      %v1663 = vld [vmem:[#allocation9 + $0x2248] sm:$0xff]
      %v1664 = vld [vmem:[#allocation9 + $0x2250] sm:$0xff]
      %v1665 = vld [vmem:[#allocation9 + $0x2258] sm:$0xff]
      %v1666 = vld [vmem:[#allocation9 + $0x2260] sm:$0xff]
      %v1667 = vld [vmem:[#allocation9 + $0x2268] sm:$0xff]
      %v1668 = vld [vmem:[#allocation9 + $0x2270] sm:$0xff]
      %v1669 = vld [vmem:[#allocation9 + $0x2278] sm:$0xff]
      %v1670 = vld [vmem:[#allocation9 + $0x2280] sm:$0xff]
      %v1671 = vld [vmem:[#allocation9 + $0x2288] sm:$0xff]
      %v1672 = vld [vmem:[#allocation9 + $0x2290] sm:$0xff]
      %v1673 = vld [vmem:[#allocation9 + $0x2298] sm:$0xff]
      %v1674 = vld [vmem:[#allocation9 + $0x22a0] sm:$0xff]
      %v1675 = vld [vmem:[#allocation9 + $0x22a8] sm:$0xff]
      %v1676 = vld [vmem:[#allocation9 + $0x22b0] sm:$0xff]
      %v1677 = vld [vmem:[#allocation9 + $0x22b8] sm:$0xff]
      %v1678 = vld [vmem:[#allocation9 + $0x22c0] sm:$0xff]
      %v1679 = vld [vmem:[#allocation9 + $0x22c8] sm:$0xff]
      %v1680 = vld [vmem:[#allocation9 + $0x22d0] sm:$0xff]
      %v1681 = vld [vmem:[#allocation9 + $0x22d8] sm:$0xff]
      %v1682 = vld [vmem:[#allocation9 + $0x22e0] sm:$0xff]
      %v1683 = vld [vmem:[#allocation9 + $0x22e8] sm:$0xff]
      %v1684 = vld [vmem:[#allocation9 + $0x22f0] sm:$0xff]
      %v1685 = vld [vmem:[#allocation9 + $0x22f8] sm:$0xff]
      %v1686 = vld [vmem:[#allocation9 + $0x2300] sm:$0xff]
      %v1687 = vld [vmem:[#allocation9 + $0x2308] sm:$0xff]
      %v1688 = vld [vmem:[#allocation9 + $0x2310] sm:$0xff]
      %v1689 = vld [vmem:[#allocation9 + $0x2318] sm:$0xff]
      %v1690 = vld [vmem:[#allocation9 + $0x2320] sm:$0xff]
      %v1691 = vld [vmem:[#allocation9 + $0x2328] sm:$0xff]
      %v1692 = vld [vmem:[#allocation9 + $0x2330] sm:$0xff]
      %v1693 = vld [vmem:[#allocation9 + $0x2338] sm:$0xff]
      %v1694 = vld [vmem:[#allocation9 + $0x2340] sm:$0xff]
      %v1695 = vld [vmem:[#allocation9 + $0x2348] sm:$0xff]
      %v1696 = vld [vmem:[#allocation9 + $0x2350] sm:$0xff]
      %v1697 = vld [vmem:[#allocation9 + $0x2358] sm:$0xff]
      %v1698 = vld [vmem:[#allocation9 + $0x2360] sm:$0xff]
      %v1699 = vld [vmem:[#allocation9 + $0x2368] sm:$0xff]
      %v1700 = vld [vmem:[#allocation9 + $0x2370] sm:$0xff]
      %v1701 = vld [vmem:[#allocation9 + $0x2378] sm:$0xff]
      %v1702 = vld [vmem:[#allocation9 + $0x2380] sm:$0xff]
      %v1703 = vld [vmem:[#allocation9 + $0x2388] sm:$0xff]
      %v1704 = vld [vmem:[#allocation9 + $0x2390] sm:$0xff]
      %v1705 = vld [vmem:[#allocation9 + $0x2398] sm:$0xff]
      %v1706 = vld [vmem:[#allocation9 + $0x23a0] sm:$0xff]
      %v1707 = vld [vmem:[#allocation9 + $0x23a8] sm:$0xff]
      %v1708 = vld [vmem:[#allocation9 + $0x23b0] sm:$0xff]
      %v1709 = vld [vmem:[#allocation9 + $0x23b8] sm:$0xff]
      %v1710 = vld [vmem:[#allocation9 + $0x23c0] sm:$0xff]
      %v1711 = vld [vmem:[#allocation9 + $0x23c8] sm:$0xff]
      %v1712 = vld [vmem:[#allocation9 + $0x23d0] sm:$0xff]
      %v1713 = vld [vmem:[#allocation9 + $0x23d8] sm:$0xff]
      %v1714 = vld [vmem:[#allocation9 + $0x23e0] sm:$0xff]
      %v1715 = vld [vmem:[#allocation9 + $0x23e8] sm:$0xff]
      %v1716 = vld [vmem:[#allocation9 + $0x23f0] sm:$0xff]
      %v1717 = vld [vmem:[#allocation9 + $0x23f8] sm:$0xff]
      %v1718 = vld [vmem:[#allocation9 + $0x2400] sm:$0xff]
      %v1719 = vld [vmem:[#allocation9 + $0x2408] sm:$0xff]
      %v1720 = vld [vmem:[#allocation9 + $0x2410] sm:$0xff]
      %v1721 = vld [vmem:[#allocation9 + $0x2418] sm:$0xff]
      %v1722 = vld [vmem:[#allocation9 + $0x2420] sm:$0xff]
      %v1723 = vld [vmem:[#allocation9 + $0x2428] sm:$0xff]
      %v1724 = vld [vmem:[#allocation9 + $0x2430] sm:$0xff]
      %v1725 = vld [vmem:[#allocation9 + $0x2438] sm:$0xff]
      %v1726 = vld [vmem:[#allocation9 + $0x2440] sm:$0xff]
      %v1727 = vld [vmem:[#allocation9 + $0x2448] sm:$0xff]
      %v1728 = vld [vmem:[#allocation9 + $0x2450] sm:$0xff]
      %v1729 = vld [vmem:[#allocation9 + $0x2458] sm:$0xff]
      %v1730 = vld [vmem:[#allocation9 + $0x2460] sm:$0xff]
      %v1731 = vld [vmem:[#allocation9 + $0x2468] sm:$0xff]
      %v1732 = vld [vmem:[#allocation9 + $0x2470] sm:$0xff]
      %v1733 = vld [vmem:[#allocation9 + $0x2478] sm:$0xff]
      %v1734 = vld [vmem:[#allocation9 + $0x2480] sm:$0xff]
      %v1735 = vld [vmem:[#allocation9 + $0x2488] sm:$0xff]
      %v1736 = vld [vmem:[#allocation9 + $0x2490] sm:$0xff]
      %v1737 = vld [vmem:[#allocation9 + $0x2498] sm:$0xff]
      %v1738 = vld [vmem:[#allocation9 + $0x24a0] sm:$0xff]
      %v1739 = vld [vmem:[#allocation9 + $0x24a8] sm:$0xff]
      %v1740 = vld [vmem:[#allocation9 + $0x24b0] sm:$0xff]
      %v1741 = vld [vmem:[#allocation9 + $0x24b8] sm:$0xff]
      %v1742 = vld [vmem:[#allocation9 + $0x24c0] sm:$0xff]
      %v1743 = vld [vmem:[#allocation9 + $0x24c8] sm:$0xff]
      %v1744 = vld [vmem:[#allocation9 + $0x24d0] sm:$0xff]
      %v1745 = vld [vmem:[#allocation9 + $0x24d8] sm:$0xff]
      %v1746 = vld [vmem:[#allocation9 + $0x24e0] sm:$0xff]
      %v1747 = vld [vmem:[#allocation9 + $0x24e8] sm:$0xff]
      %v1748 = vld [vmem:[#allocation9 + $0x24f0] sm:$0xff]
      %v1749 = vld [vmem:[#allocation9 + $0x24f8] sm:$0xff]
      %v1750 = vld [vmem:[#allocation9 + $0x2500] sm:$0xff]
      %v1751 = vld [vmem:[#allocation9 + $0x2508] sm:$0xff]
      %v1752 = vld [vmem:[#allocation9 + $0x2510] sm:$0xff]
      %v1753 = vld [vmem:[#allocation9 + $0x2518] sm:$0xff]
      %v1754 = vld [vmem:[#allocation9 + $0x2520] sm:$0xff]
      %v1755 = vld [vmem:[#allocation9 + $0x2528] sm:$0xff]
      %v1756 = vld [vmem:[#allocation9 + $0x2530] sm:$0xff]
      %v1757 = vld [vmem:[#allocation9 + $0x2538] sm:$0xff]
      %v1758 = vld [vmem:[#allocation9 + $0x2540] sm:$0xff]
      %v1759 = vld [vmem:[#allocation9 + $0x2548] sm:$0xff]
      %v1760 = vld [vmem:[#allocation9 + $0x2550] sm:$0xff]
      %v1761 = vld [vmem:[#allocation9 + $0x2558] sm:$0xff]
      %v1762 = vld [vmem:[#allocation9 + $0x2560] sm:$0xff]
      %v1763 = vld [vmem:[#allocation9 + $0x2568] sm:$0xff]
      %v1764 = vld [vmem:[#allocation9 + $0x2570] sm:$0xff]
      %v1765 = vld [vmem:[#allocation9 + $0x2578] sm:$0xff]
      %v1766 = vld [vmem:[#allocation9 + $0x2580] sm:$0xff]
      %v1767 = vld [vmem:[#allocation9 + $0x2588] sm:$0xff]
      %v1768 = vld [vmem:[#allocation9 + $0x2590] sm:$0xff]
      %v1769 = vld [vmem:[#allocation9 + $0x2598] sm:$0xff]
      %v1770 = vld [vmem:[#allocation9 + $0x25a0] sm:$0xff]
      %v1771 = vld [vmem:[#allocation9 + $0x25a8] sm:$0xff]
      %v1772 = vld [vmem:[#allocation9 + $0x25b0] sm:$0xff]
      %v1773 = vld [vmem:[#allocation9 + $0x25b8] sm:$0xff]
      %v1774 = vld [vmem:[#allocation9 + $0x25c0] sm:$0xff]
      %v1775 = vld [vmem:[#allocation9 + $0x25c8] sm:$0xff]
      %v1776 = vld [vmem:[#allocation9 + $0x25d0] sm:$0xff]
      %v1777 = vld [vmem:[#allocation9 + $0x25d8] sm:$0xff]
      %v1778 = vld [vmem:[#allocation9 + $0x25e0] sm:$0xff]
      %v1779 = vld [vmem:[#allocation9 + $0x25e8] sm:$0xff]
      %v1780 = vld [vmem:[#allocation9 + $0x25f0] sm:$0xff]
      %v1781 = vld [vmem:[#allocation9 + $0x25f8] sm:$0xff]
      %v1782 = vld [vmem:[#allocation9 + $0x2600] sm:$0xff]
      %v1783 = vld [vmem:[#allocation9 + $0x2608] sm:$0xff]
      %v1784 = vld [vmem:[#allocation9 + $0x2610] sm:$0xff]
      %v1785 = vld [vmem:[#allocation9 + $0x2618] sm:$0xff]
      %v1786 = vld [vmem:[#allocation9 + $0x2620] sm:$0xff]
      %v1787 = vld [vmem:[#allocation9 + $0x2628] sm:$0xff]
      %v1788 = vld [vmem:[#allocation9 + $0x2630] sm:$0xff]
      %v1789 = vld [vmem:[#allocation9 + $0x2638] sm:$0xff]
      %v1790 = vld [vmem:[#allocation9 + $0x2640] sm:$0xff]
      %v1791 = vld [vmem:[#allocation9 + $0x2648] sm:$0xff]
      %v1792 = vld [vmem:[#allocation9 + $0x2650] sm:$0xff]
      %v1793 = vld [vmem:[#allocation9 + $0x2658] sm:$0xff]
      %v1794 = vld [vmem:[#allocation9 + $0x2660] sm:$0xff]
      %v1795 = vld [vmem:[#allocation9 + $0x2668] sm:$0xff]
      %v1796 = vld [vmem:[#allocation9 + $0x2670] sm:$0xff]
      %v1797 = vld [vmem:[#allocation9 + $0x2678] sm:$0xff]
      %v1798 = vld [vmem:[#allocation9 + $0x2680] sm:$0xff]
      %v1799 = vld [vmem:[#allocation9 + $0x2688] sm:$0xff]
      %v1800 = vld [vmem:[#allocation9 + $0x2690] sm:$0xff]
      %v1801 = vld [vmem:[#allocation9 + $0x2698] sm:$0xff]
      %v1802 = vld [vmem:[#allocation9 + $0x26a0] sm:$0xff]
      %v1803 = vld [vmem:[#allocation9 + $0x26a8] sm:$0xff]
      %v1804 = vld [vmem:[#allocation9 + $0x26b0] sm:$0xff]
      %v1805 = vld [vmem:[#allocation9 + $0x26b8] sm:$0xff]
      %v1806 = vld [vmem:[#allocation9 + $0x26c0] sm:$0xff]
      %v1807 = vld [vmem:[#allocation9 + $0x26c8] sm:$0xff]
      %v1808 = vld [vmem:[#allocation9 + $0x26d0] sm:$0xff]
      %v1809 = vld [vmem:[#allocation9 + $0x26d8] sm:$0xff]
      %v1810 = vld [vmem:[#allocation9 + $0x26e0] sm:$0xff]
      %v1811 = vld [vmem:[#allocation9 + $0x26e8] sm:$0xff]
      %v1812 = vld [vmem:[#allocation9 + $0x26f0] sm:$0xff]
      %v1813 = vld [vmem:[#allocation9 + $0x26f8] sm:$0xff]
      %v1814 = vld [vmem:[#allocation9 + $0x2700] sm:$0xff]
      %v1815 = vld [vmem:[#allocation9 + $0x2708] sm:$0xff]
      %v1816 = vld [vmem:[#allocation9 + $0x2710] sm:$0xff]
      %v1817 = vld [vmem:[#allocation9 + $0x2718] sm:$0xff]
      %v1818 = vld [vmem:[#allocation9 + $0x2720] sm:$0xff]
      %v1819 = vld [vmem:[#allocation9 + $0x2728] sm:$0xff]
      %v1820 = vld [vmem:[#allocation9 + $0x2730] sm:$0xff]
      %v1821 = vld [vmem:[#allocation9 + $0x2738] sm:$0xff]
      %v1822 = vld [vmem:[#allocation9 + $0x2740] sm:$0xff]
      %v1823 = vld [vmem:[#allocation9 + $0x2748] sm:$0xff]
      %v1824 = vld [vmem:[#allocation9 + $0x2750] sm:$0xff]
      %v1825 = vld [vmem:[#allocation9 + $0x2758] sm:$0xff]
      %v1826 = vld [vmem:[#allocation9 + $0x2760] sm:$0xff]
      %v1827 = vld [vmem:[#allocation9 + $0x2768] sm:$0xff]
      %v1828 = vld [vmem:[#allocation9 + $0x2770] sm:$0xff]
      %v1829 = vld [vmem:[#allocation9 + $0x2778] sm:$0xff]
      %v1830 = vld [vmem:[#allocation9 + $0x2780] sm:$0xff]
      %v1831 = vld [vmem:[#allocation9 + $0x2788] sm:$0xff]
      %v1832 = vld [vmem:[#allocation9 + $0x2790] sm:$0xff]
      %v1833 = vld [vmem:[#allocation9 + $0x2798] sm:$0xff]
      %v1834 = vld [vmem:[#allocation9 + $0x27a0] sm:$0xff]
      %v1835 = vld [vmem:[#allocation9 + $0x27a8] sm:$0xff]
      %v1836 = vld [vmem:[#allocation9 + $0x27b0] sm:$0xff]
      %v1837 = vld [vmem:[#allocation9 + $0x27b8] sm:$0xff]
      %v1838 = vld [vmem:[#allocation9 + $0x27c0] sm:$0xff]
      %v1839 = vld [vmem:[#allocation9 + $0x27c8] sm:$0xff]
      %v1840 = vld [vmem:[#allocation9 + $0x27d0] sm:$0xff]
      %v1841 = vld [vmem:[#allocation9 + $0x27d8] sm:$0xff]
      %v1842 = vld [vmem:[#allocation9 + $0x27e0] sm:$0xff]
      %v1843 = vld [vmem:[#allocation9 + $0x27e8] sm:$0xff]
      %v1844 = vld [vmem:[#allocation9 + $0x27f0] sm:$0xff]
      %v1845 = vld [vmem:[#allocation9 + $0x27f8] sm:$0xff]
      %v1846 = vld [vmem:[#allocation9 + $0x2800] sm:$0xff]
      %v1847 = vld [vmem:[#allocation9 + $0x2808] sm:$0xff]
      %v1848 = vld [vmem:[#allocation9 + $0x2810] sm:$0xff]
      %v1849 = vld [vmem:[#allocation9 + $0x2818] sm:$0xff]
      %v1850 = vld [vmem:[#allocation9 + $0x2820] sm:$0xff]
      %v1851 = vld [vmem:[#allocation9 + $0x2828] sm:$0xff]
      %v1852 = vld [vmem:[#allocation9 + $0x2830] sm:$0xff]
      %v1853 = vld [vmem:[#allocation9 + $0x2838] sm:$0xff]
      %v1854 = vld [vmem:[#allocation9 + $0x2840] sm:$0xff]
      %v1855 = vld [vmem:[#allocation9 + $0x2848] sm:$0xff]
      %v1856 = vld [vmem:[#allocation9 + $0x2850] sm:$0xff]
      %v1857 = vld [vmem:[#allocation9 + $0x2858] sm:$0xff]
      %v1858 = vld [vmem:[#allocation9 + $0x2860] sm:$0xff]
      %v1859 = vld [vmem:[#allocation9 + $0x2868] sm:$0xff]
      %v1860 = vld [vmem:[#allocation9 + $0x2870] sm:$0xff]
      %v1861 = vld [vmem:[#allocation9 + $0x2878] sm:$0xff]
      %v1862 = vld [vmem:[#allocation9 + $0x2880] sm:$0xff]
      %v1863 = vld [vmem:[#allocation9 + $0x2888] sm:$0xff]
      %v1864 = vld [vmem:[#allocation9 + $0x2890] sm:$0xff]
      %v1865 = vld [vmem:[#allocation9 + $0x2898] sm:$0xff]
      %v1866 = vld [vmem:[#allocation9 + $0x28a0] sm:$0xff]
      %v1867 = vld [vmem:[#allocation9 + $0x28a8] sm:$0xff]
      %v1868 = vld [vmem:[#allocation9 + $0x28b0] sm:$0xff]
      %v1869 = vld [vmem:[#allocation9 + $0x28b8] sm:$0xff]
      %v1870 = vld [vmem:[#allocation9 + $0x28c0] sm:$0xff]
      %v1871 = vld [vmem:[#allocation9 + $0x28c8] sm:$0xff]
      %v1872 = vld [vmem:[#allocation9 + $0x28d0] sm:$0xff]
      %v1873 = vld [vmem:[#allocation9 + $0x28d8] sm:$0xff]
      %v1874 = vld [vmem:[#allocation9 + $0x28e0] sm:$0xff]
      %v1875 = vld [vmem:[#allocation9 + $0x28e8] sm:$0xff]
      %v1876 = vld [vmem:[#allocation9 + $0x28f0] sm:$0xff]
      %v1877 = vld [vmem:[#allocation9 + $0x28f8] sm:$0xff]
      %v1878 = vld [vmem:[#allocation9 + $0x2900] sm:$0xff]
      %v1879 = vld [vmem:[#allocation9 + $0x2908] sm:$0xff]
      %v1880 = vld [vmem:[#allocation9 + $0x2910] sm:$0xff]
      %v1881 = vld [vmem:[#allocation9 + $0x2918] sm:$0xff]
      %v1882 = vld [vmem:[#allocation9 + $0x2920] sm:$0xff]
      %v1883 = vld [vmem:[#allocation9 + $0x2928] sm:$0xff]
      %v1884 = vld [vmem:[#allocation9 + $0x2930] sm:$0xff]
      %v1885 = vld [vmem:[#allocation9 + $0x2938] sm:$0xff]
      %v1886 = vld [vmem:[#allocation9 + $0x2940] sm:$0xff]
      %v1887 = vld [vmem:[#allocation9 + $0x2948] sm:$0xff]
      %v1888 = vld [vmem:[#allocation9 + $0x2950] sm:$0xff]
      %v1889 = vld [vmem:[#allocation9 + $0x2958] sm:$0xff]
      %v1890 = vld [vmem:[#allocation9 + $0x2960] sm:$0xff]
      %v1891 = vld [vmem:[#allocation9 + $0x2968] sm:$0xff]
      %v1892 = vld [vmem:[#allocation9 + $0x2970] sm:$0xff]
      %v1893 = vld [vmem:[#allocation9 + $0x2978] sm:$0xff]
      %v1894 = vld [vmem:[#allocation9 + $0x2980] sm:$0xff]
      %v1895 = vld [vmem:[#allocation9 + $0x2988] sm:$0xff]
      %v1896 = vld [vmem:[#allocation9 + $0x2990] sm:$0xff]
      %v1897 = vld [vmem:[#allocation9 + $0x2998] sm:$0xff]
      %v1898 = vld [vmem:[#allocation9 + $0x29a0] sm:$0xff]
      %v1899 = vld [vmem:[#allocation9 + $0x29a8] sm:$0xff]
      %v1900 = vld [vmem:[#allocation9 + $0x29b0] sm:$0xff]
      %v1901 = vld [vmem:[#allocation9 + $0x29b8] sm:$0xff]
      %v1902 = vld [vmem:[#allocation9 + $0x29c0] sm:$0xff]
      %v1903 = vld [vmem:[#allocation9 + $0x29c8] sm:$0xff]
      %v1904 = vld [vmem:[#allocation9 + $0x29d0] sm:$0xff]
      %v1905 = vld [vmem:[#allocation9 + $0x29d8] sm:$0xff]
      %v1906 = vld [vmem:[#allocation9 + $0x29e0] sm:$0xff]
      %v1907 = vld [vmem:[#allocation9 + $0x29e8] sm:$0xff]
      %v1908 = vld [vmem:[#allocation9 + $0x29f0] sm:$0xff]
      %v1909 = vld [vmem:[#allocation9 + $0x29f8] sm:$0xff]
      %v1910 = vld [vmem:[#allocation9 + $0x2a00] sm:$0xff]
      %v1911 = vld [vmem:[#allocation9 + $0x2a08] sm:$0xff]
      %v1912 = vld [vmem:[#allocation9 + $0x2a10] sm:$0xff]
      %v1913 = vld [vmem:[#allocation9 + $0x2a18] sm:$0xff]
      %v1914 = vld [vmem:[#allocation9 + $0x2a20] sm:$0xff]
      %v1915 = vld [vmem:[#allocation9 + $0x2a28] sm:$0xff]
      %v1916 = vld [vmem:[#allocation9 + $0x2a30] sm:$0xff]
      %v1917 = vld [vmem:[#allocation9 + $0x2a38] sm:$0xff]
      %v1918 = vld [vmem:[#allocation9 + $0x2a40] sm:$0xff]
      %v1919 = vld [vmem:[#allocation9 + $0x2a48] sm:$0xff]
      %v1920 = vld [vmem:[#allocation9 + $0x2a50] sm:$0xff]
      %v1921 = vld [vmem:[#allocation9 + $0x2a58] sm:$0xff]
      %v1922 = vld [vmem:[#allocation9 + $0x2a60] sm:$0xff]
      %v1923 = vld [vmem:[#allocation9 + $0x2a68] sm:$0xff]
      %v1924 = vld [vmem:[#allocation9 + $0x2a70] sm:$0xff]
      %v1925 = vld [vmem:[#allocation9 + $0x2a78] sm:$0xff]
      %v1926 = vld [vmem:[#allocation9 + $0x2a80] sm:$0xff]
      %v1927 = vld [vmem:[#allocation9 + $0x2a88] sm:$0xff]
      %v1928 = vld [vmem:[#allocation9 + $0x2a90] sm:$0xff]
      %v1929 = vld [vmem:[#allocation9 + $0x2a98] sm:$0xff]
      %v1930 = vld [vmem:[#allocation9 + $0x2aa0] sm:$0xff]
      %v1931 = vld [vmem:[#allocation9 + $0x2aa8] sm:$0xff]
      %v1932 = vld [vmem:[#allocation9 + $0x2ab0] sm:$0xff]
      %v1933 = vld [vmem:[#allocation9 + $0x2ab8] sm:$0xff]
      %v1934 = vld [vmem:[#allocation9 + $0x2ac0] sm:$0xff]
      %v1935 = vld [vmem:[#allocation9 + $0x2ac8] sm:$0xff]
      %v1936 = vld [vmem:[#allocation9 + $0x2ad0] sm:$0xff]
      %v1937 = vld [vmem:[#allocation9 + $0x2ad8] sm:$0xff]
      %v1938 = vld [vmem:[#allocation9 + $0x2ae0] sm:$0xff]
      %v1939 = vld [vmem:[#allocation9 + $0x2ae8] sm:$0xff]
      %v1940 = vld [vmem:[#allocation9 + $0x2af0] sm:$0xff]
      %v1941 = vld [vmem:[#allocation9 + $0x2af8] sm:$0xff]
      %v1942 = vld [vmem:[#allocation9 + $0x2b00] sm:$0xff]
      %v1943 = vld [vmem:[#allocation9 + $0x2b08] sm:$0xff]
      %v1944 = vld [vmem:[#allocation9 + $0x2b10] sm:$0xff]
      %v1945 = vld [vmem:[#allocation9 + $0x2b18] sm:$0xff]
      %v1946 = vld [vmem:[#allocation9 + $0x2b20] sm:$0xff]
      %v1947 = vld [vmem:[#allocation9 + $0x2b28] sm:$0xff]
      %v1948 = vld [vmem:[#allocation9 + $0x2b30] sm:$0xff]
      %v1949 = vld [vmem:[#allocation9 + $0x2b38] sm:$0xff]
      %v1950 = vld [vmem:[#allocation9 + $0x2b40] sm:$0xff]
      %v1951 = vld [vmem:[#allocation9 + $0x2b48] sm:$0xff]
      %v1952 = vld [vmem:[#allocation9 + $0x2b50] sm:$0xff]
      %v1953 = vld [vmem:[#allocation9 + $0x2b58] sm:$0xff]
      %v1954 = vld [vmem:[#allocation9 + $0x2b60] sm:$0xff]
      %v1955 = vld [vmem:[#allocation9 + $0x2b68] sm:$0xff]
      %v1956 = vld [vmem:[#allocation9 + $0x2b70] sm:$0xff]
      %v1957 = vld [vmem:[#allocation9 + $0x2b78] sm:$0xff]
      %v1958 = vld [vmem:[#allocation9 + $0x2b80] sm:$0xff]
      %v1959 = vld [vmem:[#allocation9 + $0x2b88] sm:$0xff]
      %v1960 = vld [vmem:[#allocation9 + $0x2b90] sm:$0xff]
      %v1961 = vld [vmem:[#allocation9 + $0x2b98] sm:$0xff]
      %v1962 = vld [vmem:[#allocation9 + $0x2ba0] sm:$0xff]
      %v1963 = vld [vmem:[#allocation9 + $0x2ba8] sm:$0xff]
      %v1964 = vld [vmem:[#allocation9 + $0x2bb0] sm:$0xff]
      %v1965 = vld [vmem:[#allocation9 + $0x2bb8] sm:$0xff]
      %v1966 = vld [vmem:[#allocation9 + $0x2bc0] sm:$0xff]
      %v1967 = vld [vmem:[#allocation9 + $0x2bc8] sm:$0xff]
      %v1968 = vld [vmem:[#allocation9 + $0x2bd0] sm:$0xff]
      %v1969 = vld [vmem:[#allocation9 + $0x2bd8] sm:$0xff]
      %v1970 = vld [vmem:[#allocation9 + $0x2be0] sm:$0xff]
      %v1971 = vld [vmem:[#allocation9 + $0x2be8] sm:$0xff]
      %v1972 = vld [vmem:[#allocation9 + $0x2bf0] sm:$0xff]
      %v1973 = vld [vmem:[#allocation9 + $0x2bf8] sm:$0xff]
      %v1974 = vld [vmem:[#allocation9 + $0x2c00] sm:$0xff]
      %v1975 = vld [vmem:[#allocation9 + $0x2c08] sm:$0xff]
      %v1976 = vld [vmem:[#allocation9 + $0x2c10] sm:$0xff]
      %v1977 = vld [vmem:[#allocation9 + $0x2c18] sm:$0xff]
      %v1978 = vld [vmem:[#allocation9 + $0x2c20] sm:$0xff]
      %v1979 = vld [vmem:[#allocation9 + $0x2c28] sm:$0xff]
      %v1980 = vld [vmem:[#allocation9 + $0x2c30] sm:$0xff]
      %v1981 = vld [vmem:[#allocation9 + $0x2c38] sm:$0xff]
      %v1982 = vld [vmem:[#allocation9 + $0x2c40] sm:$0xff]
      %v1983 = vld [vmem:[#allocation9 + $0x2c48] sm:$0xff]
      %v1984 = vld [vmem:[#allocation9 + $0x2c50] sm:$0xff]
      %v1985 = vld [vmem:[#allocation9 + $0x2c58] sm:$0xff]
      %v1986 = vld [vmem:[#allocation9 + $0x2c60] sm:$0xff]
      %v1987 = vld [vmem:[#allocation9 + $0x2c68] sm:$0xff]
      %v1988 = vld [vmem:[#allocation9 + $0x2c70] sm:$0xff]
      %v1989 = vld [vmem:[#allocation9 + $0x2c78] sm:$0xff]
      %v1990 = vld [vmem:[#allocation9 + $0x2c80] sm:$0xff]
      %v1991 = vld [vmem:[#allocation9 + $0x2c88] sm:$0xff]
      %v1992 = vld [vmem:[#allocation9 + $0x2c90] sm:$0xff]
      %v1993 = vld [vmem:[#allocation9 + $0x2c98] sm:$0xff]
      %v1994 = vld [vmem:[#allocation9 + $0x2ca0] sm:$0xff]
      %v1995 = vld [vmem:[#allocation9 + $0x2ca8] sm:$0xff]
      %v1996 = vld [vmem:[#allocation9 + $0x2cb0] sm:$0xff]
      %v1997 = vld [vmem:[#allocation9 + $0x2cb8] sm:$0xff]
      %v1998 = vld [vmem:[#allocation9 + $0x2cc0] sm:$0xff]
      %v1999 = vld [vmem:[#allocation9 + $0x2cc8] sm:$0xff]
      %v2000 = vld [vmem:[#allocation9 + $0x2cd0] sm:$0xff]
      %v2001 = vld [vmem:[#allocation9 + $0x2cd8] sm:$0xff]
      %v2002 = vld [vmem:[#allocation9 + $0x2ce0] sm:$0xff]
      %v2003 = vld [vmem:[#allocation9 + $0x2ce8] sm:$0xff]
      %v2004 = vld [vmem:[#allocation9 + $0x2cf0] sm:$0xff]
      %v2005 = vld [vmem:[#allocation9 + $0x2cf8] sm:$0xff]
      %v2006 = vld [vmem:[#allocation9 + $0x2d00] sm:$0xff]
      %v2007 = vld [vmem:[#allocation9 + $0x2d08] sm:$0xff]
      %v2008 = vld [vmem:[#allocation9 + $0x2d10] sm:$0xff]
      %v2009 = vld [vmem:[#allocation9 + $0x2d18] sm:$0xff]
      %v2010 = vld [vmem:[#allocation9 + $0x2d20] sm:$0xff]
      %v2011 = vld [vmem:[#allocation9 + $0x2d28] sm:$0xff]
      %v2012 = vld [vmem:[#allocation9 + $0x2d30] sm:$0xff]
      %v2013 = vld [vmem:[#allocation9 + $0x2d38] sm:$0xff]
      %v2014 = vld [vmem:[#allocation9 + $0x2d40] sm:$0xff]
      %v2015 = vld [vmem:[#allocation9 + $0x2d48] sm:$0xff]
      %v2016 = vld [vmem:[#allocation9 + $0x2d50] sm:$0xff]
      %v2017 = vld [vmem:[#allocation9 + $0x2d58] sm:$0xff]
      %v2018 = vld [vmem:[#allocation9 + $0x2d60] sm:$0xff]
      %v2019 = vld [vmem:[#allocation9 + $0x2d68] sm:$0xff]
      %v2020 = vld [vmem:[#allocation9 + $0x2d70] sm:$0xff]
      %v2021 = vld [vmem:[#allocation9 + $0x2d78] sm:$0xff]
      %v2022 = vld [vmem:[#allocation9 + $0x2d80] sm:$0xff]
      %v2023 = vld [vmem:[#allocation9 + $0x2d88] sm:$0xff]
      %v2024 = vld [vmem:[#allocation9 + $0x2d90] sm:$0xff]
      %v2025 = vld [vmem:[#allocation9 + $0x2d98] sm:$0xff]
      %v2026 = vld [vmem:[#allocation9 + $0x2da0] sm:$0xff]
      %v2027 = vld [vmem:[#allocation9 + $0x2da8] sm:$0xff]
      %v2028 = vld [vmem:[#allocation9 + $0x2db0] sm:$0xff]
      %v2029 = vld [vmem:[#allocation9 + $0x2db8] sm:$0xff]
      %v2030 = vld [vmem:[#allocation9 + $0x2dc0] sm:$0xff]
      %v2031 = vld [vmem:[#allocation9 + $0x2dc8] sm:$0xff]
      %v2032 = vld [vmem:[#allocation9 + $0x2dd0] sm:$0xff]
      %v2033 = vld [vmem:[#allocation9 + $0x2dd8] sm:$0xff]
      %v2034 = vld [vmem:[#allocation9 + $0x2de0] sm:$0xff]
      %v2035 = vld [vmem:[#allocation9 + $0x2de8] sm:$0xff]
      %v2036 = vld [vmem:[#allocation9 + $0x2df0] sm:$0xff]
      %v2037 = vld [vmem:[#allocation9 + $0x2df8] sm:$0xff]
      %v2038 = vld [vmem:[#allocation9 + $0x2e00] sm:$0xff]
      %v2039 = vld [vmem:[#allocation9 + $0x2e08] sm:$0xff]
      %v2040 = vld [vmem:[#allocation9 + $0x2e10] sm:$0xff]
      %v2041 = vld [vmem:[#allocation9 + $0x2e18] sm:$0xff]
      %v2042 = vld [vmem:[#allocation9 + $0x2e20] sm:$0xff]
      %v2043 = vld [vmem:[#allocation9 + $0x2e28] sm:$0xff]
      %v2044 = vld [vmem:[#allocation9 + $0x2e30] sm:$0xff]
      %v2045 = vld [vmem:[#allocation9 + $0x2e38] sm:$0xff]
      %v2046 = vld [vmem:[#allocation9 + $0x2e40] sm:$0xff]
      %v2047 = vld [vmem:[#allocation9 + $0x2e48] sm:$0xff]
      %v2048 = vld [vmem:[#allocation9 + $0x2e50] sm:$0xff]
      %v2049 = vld [vmem:[#allocation9 + $0x2e58] sm:$0xff]
      %v2050 = vld [vmem:[#allocation9 + $0x2e60] sm:$0xff]
      %v2051 = vld [vmem:[#allocation9 + $0x2e68] sm:$0xff]
      %v2052 = vld [vmem:[#allocation9 + $0x2e70] sm:$0xff]
      %v2053 = vld [vmem:[#allocation9 + $0x2e78] sm:$0xff]
      %v2054 = vld [vmem:[#allocation9 + $0x2e80] sm:$0xff]
      %v2055 = vld [vmem:[#allocation9 + $0x2e88] sm:$0xff]
      %v2056 = vld [vmem:[#allocation9 + $0x2e90] sm:$0xff]
      %v2057 = vld [vmem:[#allocation9 + $0x2e98] sm:$0xff]
      %v2058 = vld [vmem:[#allocation9 + $0x2ea0] sm:$0xff]
      %v2059 = vld [vmem:[#allocation9 + $0x2ea8] sm:$0xff]
      %v2060 = vld [vmem:[#allocation9 + $0x2eb0] sm:$0xff]
      %v2061 = vld [vmem:[#allocation9 + $0x2eb8] sm:$0xff]
      %v2062 = vld [vmem:[#allocation9 + $0x2ec0] sm:$0xff]
      %v2063 = vld [vmem:[#allocation9 + $0x2ec8] sm:$0xff]
      %v2064 = vld [vmem:[#allocation9 + $0x2ed0] sm:$0xff]
      %v2065 = vld [vmem:[#allocation9 + $0x2ed8] sm:$0xff]
      %v2066 = vld [vmem:[#allocation9 + $0x2ee0] sm:$0xff]
      %v2067 = vld [vmem:[#allocation9 + $0x2ee8] sm:$0xff]
      %v2068 = vld [vmem:[#allocation9 + $0x2ef0] sm:$0xff]
      %v2069 = vld [vmem:[#allocation9 + $0x2ef8] sm:$0xff]
      %v2070 = vld [vmem:[#allocation9 + $0x2f00] sm:$0xff]
      %v2071 = vld [vmem:[#allocation9 + $0x2f08] sm:$0xff]
      %v2072 = vld [vmem:[#allocation9 + $0x2f10] sm:$0xff]
      %v2073 = vld [vmem:[#allocation9 + $0x2f18] sm:$0xff]
      %v2074 = vld [vmem:[#allocation9 + $0x2f20] sm:$0xff]
      %v2075 = vld [vmem:[#allocation9 + $0x2f28] sm:$0xff]
      %v2076 = vld [vmem:[#allocation9 + $0x2f30] sm:$0xff]
      %v2077 = vld [vmem:[#allocation9 + $0x2f38] sm:$0xff]
      %v2078 = vld [vmem:[#allocation9 + $0x2f40] sm:$0xff]
      %v2079 = vld [vmem:[#allocation9 + $0x2f48] sm:$0xff]
      %v2080 = vld [vmem:[#allocation9 + $0x2f50] sm:$0xff]
      %v2081 = vld [vmem:[#allocation9 + $0x2f58] sm:$0xff]
      %v2082 = vld [vmem:[#allocation9 + $0x2f60] sm:$0xff]
      %v2083 = vld [vmem:[#allocation9 + $0x2f68] sm:$0xff]
      %v2084 = vld [vmem:[#allocation9 + $0x2f70] sm:$0xff]
      %v2085 = vld [vmem:[#allocation9 + $0x2f78] sm:$0xff]
      %v2086 = vld [vmem:[#allocation9 + $0x2f80] sm:$0xff]
      %v2087 = vld [vmem:[#allocation9 + $0x2f88] sm:$0xff]
      %v2088 = vld [vmem:[#allocation9 + $0x2f90] sm:$0xff]
      %v2089 = vld [vmem:[#allocation9 + $0x2f98] sm:$0xff]
      %v2090 = vld [vmem:[#allocation9 + $0x2fa0] sm:$0xff]
      %v2091 = vld [vmem:[#allocation9 + $0x2fa8] sm:$0xff]
      %v2092 = vld [vmem:[#allocation9 + $0x2fb0] sm:$0xff]
      %v2093 = vld [vmem:[#allocation9 + $0x2fb8] sm:$0xff]
      %v2094 = vld [vmem:[#allocation9 + $0x2fc0] sm:$0xff]
      %v2095 = vld [vmem:[#allocation9 + $0x2fc8] sm:$0xff]
      %v2096 = vld [vmem:[#allocation9 + $0x2fd0] sm:$0xff]
      %v2097 = vld [vmem:[#allocation9 + $0x2fd8] sm:$0xff]
      %v2098 = vld [vmem:[#allocation9 + $0x2fe0] sm:$0xff]
      %v2099 = vld [vmem:[#allocation9 + $0x2fe8] sm:$0xff]
      %v2100 = vld [vmem:[#allocation9 + $0x2ff0] sm:$0xff]
      %v2101 = vld [vmem:[#allocation9 + $0x2ff8] sm:$0xff]
      %v2102 = vld [vmem:[#allocation9 + $0x3000] sm:$0xff]
      %v2103 = vld [vmem:[#allocation9 + $0x3008] sm:$0xff]
      %v2104 = vld [vmem:[#allocation9 + $0x3010] sm:$0xff]
      %v2105 = vld [vmem:[#allocation9 + $0x3018] sm:$0xff]
      %v2106 = vld [vmem:[#allocation9 + $0x3020] sm:$0xff]
      %v2107 = vld [vmem:[#allocation9 + $0x3028] sm:$0xff]
      %v2108 = vld [vmem:[#allocation9 + $0x3030] sm:$0xff]
      %v2109 = vld [vmem:[#allocation9 + $0x3038] sm:$0xff]
      %v2110 = vld [vmem:[#allocation9 + $0x3040] sm:$0xff]
      %v2111 = vld [vmem:[#allocation9 + $0x3048] sm:$0xff]
      %v2112 = vld [vmem:[#allocation9 + $0x3050] sm:$0xff]
      %v2113 = vld [vmem:[#allocation9 + $0x3058] sm:$0xff]
      %v2114 = vld [vmem:[#allocation9 + $0x3060] sm:$0xff]
      %v2115 = vld [vmem:[#allocation9 + $0x3068] sm:$0xff]
      %v2116 = vld [vmem:[#allocation9 + $0x3070] sm:$0xff]
      %v2117 = vld [vmem:[#allocation9 + $0x3078] sm:$0xff]
      %v2118 = vld [vmem:[#allocation9 + $0x3080] sm:$0xff]
      %v2119 = vld [vmem:[#allocation9 + $0x3088] sm:$0xff]
      %v2120 = vld [vmem:[#allocation9 + $0x3090] sm:$0xff]
      %v2121 = vld [vmem:[#allocation9 + $0x3098] sm:$0xff]
      %v2122 = vld [vmem:[#allocation9 + $0x30a0] sm:$0xff]
      %v2123 = vld [vmem:[#allocation9 + $0x30a8] sm:$0xff]
      %v2124 = vld [vmem:[#allocation9 + $0x30b0] sm:$0xff]
      %v2125 = vld [vmem:[#allocation9 + $0x30b8] sm:$0xff]
      %v2126 = vld [vmem:[#allocation9 + $0x30c0] sm:$0xff]
      %v2127 = vld [vmem:[#allocation9 + $0x30c8] sm:$0xff]
      %v2128 = vld [vmem:[#allocation9 + $0x30d0] sm:$0xff]
      %v2129 = vld [vmem:[#allocation9 + $0x30d8] sm:$0xff]
      %v2130 = vld [vmem:[#allocation9 + $0x30e0] sm:$0xff]
      %v2131 = vld [vmem:[#allocation9 + $0x30e8] sm:$0xff]
      %v2132 = vld [vmem:[#allocation9 + $0x30f0] sm:$0xff]
      %v2133 = vld [vmem:[#allocation9 + $0x30f8] sm:$0xff]
      %v2134 = vld [vmem:[#allocation9 + $0x3100] sm:$0xff]
      %v2135 = vld [vmem:[#allocation9 + $0x3108] sm:$0xff]
      %v2136 = vld [vmem:[#allocation9 + $0x3110] sm:$0xff]
      %v2137 = vld [vmem:[#allocation9 + $0x3118] sm:$0xff]
      %v2138 = vld [vmem:[#allocation9 + $0x3120] sm:$0xff]
      %v2139 = vld [vmem:[#allocation9 + $0x3128] sm:$0xff]
      %v2140 = vld [vmem:[#allocation9 + $0x3130] sm:$0xff]
      %v2141 = vld [vmem:[#allocation9 + $0x3138] sm:$0xff]
      %v2142 = vld [vmem:[#allocation9 + $0x3140] sm:$0xff]
      %v2143 = vld [vmem:[#allocation9 + $0x3148] sm:$0xff]
      %v2144 = vld [vmem:[#allocation9 + $0x3150] sm:$0xff]
      %v2145 = vld [vmem:[#allocation9 + $0x3158] sm:$0xff]
      %v2146 = vld [vmem:[#allocation9 + $0x3160] sm:$0xff]
      %v2147 = vld [vmem:[#allocation9 + $0x3168] sm:$0xff]
      %v2148 = vld [vmem:[#allocation9 + $0x3170] sm:$0xff]
      %v2149 = vld [vmem:[#allocation9 + $0x3178] sm:$0xff]
      %v2150 = vld [vmem:[#allocation9 + $0x3180] sm:$0xff]
      %v2151 = vld [vmem:[#allocation9 + $0x3188] sm:$0xff]
      %v2152 = vld [vmem:[#allocation9 + $0x3190] sm:$0xff]
      %v2153 = vld [vmem:[#allocation9 + $0x3198] sm:$0xff]
      %v2154 = vld [vmem:[#allocation9 + $0x31a0] sm:$0xff]
      %v2155 = vld [vmem:[#allocation9 + $0x31a8] sm:$0xff]
      %v2156 = vld [vmem:[#allocation9 + $0x31b0] sm:$0xff]
      %v2157 = vld [vmem:[#allocation9 + $0x31b8] sm:$0xff]
      %v2158 = vld [vmem:[#allocation9 + $0x31c0] sm:$0xff]
      %v2159 = vld [vmem:[#allocation9 + $0x31c8] sm:$0xff]
      %v2160 = vld [vmem:[#allocation9 + $0x31d0] sm:$0xff]
      %v2161 = vld [vmem:[#allocation9 + $0x31d8] sm:$0xff]
      %v2162 = vld [vmem:[#allocation9 + $0x31e0] sm:$0xff]
      %v2163 = vld [vmem:[#allocation9 + $0x31e8] sm:$0xff]
      %v2164 = vld [vmem:[#allocation9 + $0x31f0] sm:$0xff]
      %v2165 = vld [vmem:[#allocation9 + $0x31f8] sm:$0xff]
      %v2166 = vld [vmem:[#allocation9 + $0x3200] sm:$0xff]
      %v2167 = vld [vmem:[#allocation9 + $0x3208] sm:$0xff]
      %v2168 = vld [vmem:[#allocation9 + $0x3210] sm:$0xff]
      %v2169 = vld [vmem:[#allocation9 + $0x3218] sm:$0xff]
      %v2170 = vld [vmem:[#allocation9 + $0x3220] sm:$0xff]
      %v2171 = vld [vmem:[#allocation9 + $0x3228] sm:$0xff]
      %v2172 = vld [vmem:[#allocation9 + $0x3230] sm:$0xff]
      %v2173 = vld [vmem:[#allocation9 + $0x3238] sm:$0xff]
      %v2174 = vld [vmem:[#allocation9 + $0x3240] sm:$0xff]
      %v2175 = vld [vmem:[#allocation9 + $0x3248] sm:$0xff]
      %v2176 = vld [vmem:[#allocation9 + $0x3250] sm:$0xff]
      %v2177 = vld [vmem:[#allocation9 + $0x3258] sm:$0xff]
      %v2178 = vld [vmem:[#allocation9 + $0x3260] sm:$0xff]
      %v2179 = vld [vmem:[#allocation9 + $0x3268] sm:$0xff]
      %v2180 = vld [vmem:[#allocation9 + $0x3270] sm:$0xff]
      %v2181 = vld [vmem:[#allocation9 + $0x3278] sm:$0xff]
      %v2182 = vld [vmem:[#allocation9 + $0x3280] sm:$0xff]
      %v2183 = vld [vmem:[#allocation9 + $0x3288] sm:$0xff]
      %v2184 = vld [vmem:[#allocation9 + $0x3290] sm:$0xff]
      %v2185 = vld [vmem:[#allocation9 + $0x3298] sm:$0xff]
      %v2186 = vld [vmem:[#allocation9 + $0x32a0] sm:$0xff]
      %v2187 = vld [vmem:[#allocation9 + $0x32a8] sm:$0xff]
      %v2188 = vld [vmem:[#allocation9 + $0x32b0] sm:$0xff]
      %v2189 = vld [vmem:[#allocation9 + $0x32b8] sm:$0xff]
      %v2190 = vld [vmem:[#allocation9 + $0x32c0] sm:$0xff]
      %v2191 = vld [vmem:[#allocation9 + $0x32c8] sm:$0xff]
      %v2192 = vld [vmem:[#allocation9 + $0x32d0] sm:$0xff]
      %v2193 = vld [vmem:[#allocation9 + $0x32d8] sm:$0xff]
      %v2194 = vld [vmem:[#allocation9 + $0x32e0] sm:$0xff]
      %v2195 = vld [vmem:[#allocation9 + $0x32e8] sm:$0xff]
      %v2196 = vld [vmem:[#allocation9 + $0x32f0] sm:$0xff]
      %v2197 = vld [vmem:[#allocation9 + $0x32f8] sm:$0xff]
      %v2198 = vld [vmem:[#allocation9 + $0x3300] sm:$0xff]
      %v2199 = vld [vmem:[#allocation9 + $0x3308] sm:$0xff]
      %v2200 = vld [vmem:[#allocation9 + $0x3310] sm:$0xff]
      %v2201 = vld [vmem:[#allocation9 + $0x3318] sm:$0xff]
      %v2202 = vld [vmem:[#allocation9 + $0x3320] sm:$0xff]
      %v2203 = vld [vmem:[#allocation9 + $0x3328] sm:$0xff]
      %v2204 = vld [vmem:[#allocation9 + $0x3330] sm:$0xff]
      %v2205 = vld [vmem:[#allocation9 + $0x3338] sm:$0xff]
      %v2206 = vld [vmem:[#allocation9 + $0x3340] sm:$0xff]
      %v2207 = vld [vmem:[#allocation9 + $0x3348] sm:$0xff]
      %v2208 = vld [vmem:[#allocation9 + $0x3350] sm:$0xff]
      %v2209 = vld [vmem:[#allocation9 + $0x3358] sm:$0xff]
      %v2210 = vld [vmem:[#allocation9 + $0x3360] sm:$0xff]
      %v2211 = vld [vmem:[#allocation9 + $0x3368] sm:$0xff]
      %v2212 = vld [vmem:[#allocation9 + $0x3370] sm:$0xff]
      %v2213 = vld [vmem:[#allocation9 + $0x3378] sm:$0xff]
      %v2214 = vld [vmem:[#allocation9 + $0x3380] sm:$0xff]
      %v2215 = vld [vmem:[#allocation9 + $0x3388] sm:$0xff]
      %v2216 = vld [vmem:[#allocation9 + $0x3390] sm:$0xff]
      %v2217 = vld [vmem:[#allocation9 + $0x3398] sm:$0xff]
      %v2218 = vld [vmem:[#allocation9 + $0x33a0] sm:$0xff]
      %v2219 = vld [vmem:[#allocation9 + $0x33a8] sm:$0xff]
      %v2220 = vld [vmem:[#allocation9 + $0x33b0] sm:$0xff]
      %v2221 = vld [vmem:[#allocation9 + $0x33b8] sm:$0xff]
      %v2222 = vld [vmem:[#allocation9 + $0x33c0] sm:$0xff]
      %v2223 = vld [vmem:[#allocation9 + $0x33c8] sm:$0xff]
      %v2224 = vld [vmem:[#allocation9 + $0x33d0] sm:$0xff]
      %v2225 = vld [vmem:[#allocation9 + $0x33d8] sm:$0xff]
      %v2226 = vld [vmem:[#allocation9 + $0x33e0] sm:$0xff]
      %v2227 = vld [vmem:[#allocation9 + $0x33e8] sm:$0xff]
      %v2228 = vld [vmem:[#allocation9 + $0x33f0] sm:$0xff]
      %v2229 = vld [vmem:[#allocation9 + $0x33f8] sm:$0xff]
      %v2230 = vld [vmem:[#allocation9 + $0x3400] sm:$0xff]
      %v2231 = vld [vmem:[#allocation9 + $0x3408] sm:$0xff]
      %v2232 = vld [vmem:[#allocation9 + $0x3410] sm:$0xff]
      %v2233 = vld [vmem:[#allocation9 + $0x3418] sm:$0xff]
      %v2234 = vld [vmem:[#allocation9 + $0x3420] sm:$0xff]
      %v2235 = vld [vmem:[#allocation9 + $0x3428] sm:$0xff]
      %v2236 = vld [vmem:[#allocation9 + $0x3430] sm:$0xff]
      %v2237 = vld [vmem:[#allocation9 + $0x3438] sm:$0xff]
      %v2238 = vld [vmem:[#allocation9 + $0x3440] sm:$0xff]
      %v2239 = vld [vmem:[#allocation9 + $0x3448] sm:$0xff]
      %v2240 = vld [vmem:[#allocation9 + $0x3450] sm:$0xff]
      %v2241 = vld [vmem:[#allocation9 + $0x3458] sm:$0xff]
      %v2242 = vld [vmem:[#allocation9 + $0x3460] sm:$0xff]
      %v2243 = vld [vmem:[#allocation9 + $0x3468] sm:$0xff]
      %v2244 = vld [vmem:[#allocation9 + $0x3470] sm:$0xff]
      %v2245 = vld [vmem:[#allocation9 + $0x3478] sm:$0xff]
      %v2246 = vld [vmem:[#allocation9 + $0x3480] sm:$0xff]
      %v2247 = vld [vmem:[#allocation9 + $0x3488] sm:$0xff]
      %v2248 = vld [vmem:[#allocation9 + $0x3490] sm:$0xff]
      %v2249 = vld [vmem:[#allocation9 + $0x3498] sm:$0xff]
      %v2250 = vld [vmem:[#allocation9 + $0x34a0] sm:$0xff]
      %v2251 = vld [vmem:[#allocation9 + $0x34a8] sm:$0xff]
      %v2252 = vld [vmem:[#allocation9 + $0x34b0] sm:$0xff]
      %v2253 = vld [vmem:[#allocation9 + $0x34b8] sm:$0xff]
      %v2254 = vld [vmem:[#allocation9 + $0x34c0] sm:$0xff]
      %v2255 = vld [vmem:[#allocation9 + $0x34c8] sm:$0xff]
      %v2256 = vld [vmem:[#allocation9 + $0x34d0] sm:$0xff]
      %v2257 = vld [vmem:[#allocation9 + $0x34d8] sm:$0xff]
      %v2258 = vld [vmem:[#allocation9 + $0x34e0] sm:$0xff]
      %v2259 = vld [vmem:[#allocation9 + $0x34e8] sm:$0xff]
      %v2260 = vld [vmem:[#allocation9 + $0x34f0] sm:$0xff]
      %v2261 = vld [vmem:[#allocation9 + $0x34f8] sm:$0xff]
      %v2262 = vld [vmem:[#allocation9 + $0x3500] sm:$0xff]
      %v2263 = vld [vmem:[#allocation9 + $0x3508] sm:$0xff]
      %v2264 = vld [vmem:[#allocation9 + $0x3510] sm:$0xff]
      %v2265 = vld [vmem:[#allocation9 + $0x3518] sm:$0xff]
      %v2266 = vld [vmem:[#allocation9 + $0x3520] sm:$0xff]
      %v2267 = vld [vmem:[#allocation9 + $0x3528] sm:$0xff]
      %v2268 = vld [vmem:[#allocation9 + $0x3530] sm:$0xff]
      %v2269 = vld [vmem:[#allocation9 + $0x3538] sm:$0xff]
      %v2270 = vld [vmem:[#allocation9 + $0x3540] sm:$0xff]
      %v2271 = vld [vmem:[#allocation9 + $0x3548] sm:$0xff]
      %v2272 = vld [vmem:[#allocation9 + $0x3550] sm:$0xff]
      %v2273 = vld [vmem:[#allocation9 + $0x3558] sm:$0xff]
      %v2274 = vld [vmem:[#allocation9 + $0x3560] sm:$0xff]
      %v2275 = vld [vmem:[#allocation9 + $0x3568] sm:$0xff]
      %v2276 = vld [vmem:[#allocation9 + $0x3570] sm:$0xff]
      %v2277 = vld [vmem:[#allocation9 + $0x3578] sm:$0xff]
      %v2278 = vld [vmem:[#allocation9 + $0x3580] sm:$0xff]
      %v2279 = vld [vmem:[#allocation9 + $0x3588] sm:$0xff]
      %v2280 = vld [vmem:[#allocation9 + $0x3590] sm:$0xff]
      %v2281 = vld [vmem:[#allocation9 + $0x3598] sm:$0xff]
      %v2282 = vld [vmem:[#allocation9 + $0x35a0] sm:$0xff]
      %v2283 = vld [vmem:[#allocation9 + $0x35a8] sm:$0xff]
      %v2284 = vld [vmem:[#allocation9 + $0x35b0] sm:$0xff]
      %v2285 = vld [vmem:[#allocation9 + $0x35b8] sm:$0xff]
      %v2286 = vld [vmem:[#allocation9 + $0x35c0] sm:$0xff]
      %v2287 = vld [vmem:[#allocation9 + $0x35c8] sm:$0xff]
      %v2288 = vld [vmem:[#allocation9 + $0x35d0] sm:$0xff]
      %v2289 = vld [vmem:[#allocation9 + $0x35d8] sm:$0xff]
      %v2290 = vld [vmem:[#allocation9 + $0x35e0] sm:$0xff]
      %v2291 = vld [vmem:[#allocation9 + $0x35e8] sm:$0xff]
      %v2292 = vld [vmem:[#allocation9 + $0x35f0] sm:$0xff]
      %v2293 = vld [vmem:[#allocation9 + $0x35f8] sm:$0xff]
      %v2294 = vld [vmem:[#allocation10] sm:$0x3f]
      %v2296 = vlaneseq
      %v2297 = vshrl.u32 %v2296, 7
      %v2298 = vsub.s32 0, %v2297
      %v2299 = vrot.slane %v2294, %v2298
      %v2300 = vlaneseq
      %v2301 = vshrl.u32 %v2300, 7
      %v2302 = vsub.s32 1, %v2301
      %v2303 = vrot.slane %v2294, %v2302
      %v2304 = vlaneseq
      %v2305 = vshrl.u32 %v2304, 7
      %v2306 = vsub.s32 2, %v2305
      %v2307 = vrot.slane %v2294, %v2306
      %v2308 = vlaneseq
      %v2309 = vshrl.u32 %v2308, 7
      %v2310 = vsub.s32 3, %v2309
      %v2311 = vrot.slane %v2294, %v2310
      %v2312 = vlaneseq
      %v2313 = vshrl.u32 %v2312, 7
      %v2314 = vsub.s32 4, %v2313
      %v2315 = vrot.slane %v2294, %v2314
      %v2316 = vlaneseq
      %v2317 = vshrl.u32 %v2316, 7
      %v2318 = vsub.s32 5, %v2317
      %v2319 = vrot.slane %v2294, %v2318
      %2326 = vmatprep.subr.mxu0 %v567
      %2327 = vmatpush1.msra.mxu0 %v566
      %2328 = vmatprep.subr.mxu0 %v573
      %2329 = vmatpush1.msra.mxu0 %v572
      %2330 = vmatprep.subr.mxu0 %v579
      %2331 = vmatpush1.msra.mxu0 %v578
      %2332 = vmatprep.subr.mxu0 %v585
      %2333 = vmatpush1.msra.mxu0 %v584
      %2334 = vmatprep.subr.mxu0 %v591
      %2335 = vmatpush1.msra.mxu0 %v590
      %2336 = vmatprep.subr.mxu0 %v597
      %2337 = vmatpush1.msra.mxu0 %v596
      %2338 = vmatprep.subr.mxu0 %v603
      %2339 = vmatpush1.msra.mxu0 %v602
      %2340 = vmatprep.subr.mxu0 %v609
      %2341 = vmatpush1.msra.mxu0 %v608
      %2342 = vmatprep.subr.mxu0 %v615
      %2343 = vmatpush1.msra.mxu0 %v614
      %2344 = vmatprep.subr.mxu0 %v621
      %2345 = vmatpush1.msra.mxu0 %v620
      %2346 = vmatprep.subr.mxu0 %v627
      %2347 = vmatpush1.msra.mxu0 %v626
      %2348 = vmatprep.subr.mxu0 %v633
      %2349 = vmatpush1.msra.mxu0 %v632
      %2350 = vmatprep.subr.mxu0 %v639
      %2351 = vmatpush1.msra.mxu0 %v638
      %2352 = vmatprep.subr.mxu0 %v645
      %2353 = vmatpush1.msra.mxu0 %v644
      %2354 = vmatprep.subr.mxu0 %v651
      %2355 = vmatpush1.msra.mxu0 %v650
      %2356 = vmatprep.subr.mxu0 %v657
      %2357 = vmatpush1.msra.mxu0 %v656
      %2358 = vmatprep.subr.mxu0 %v663
      %2359 = vmatpush1.msra.mxu0 %v662
      %2360 = vmatprep.subr.mxu0 %v669
      %2361 = vmatpush1.msra.mxu0 %v668
      %2362 = vmatprep.subr.mxu0 %v675
      %2363 = vmatpush1.msra.mxu0 %v674
      %2364 = vmatprep.subr.mxu0 %v681
      %2365 = vmatpush1.msra.mxu0 %v680
      %2366 = vmatprep.subr.mxu0 %v687
      %2367 = vmatpush1.msra.mxu0 %v686
      %2368 = vmatprep.subr.mxu0 %v693
      %2369 = vmatpush1.msra.mxu0 %v692
      %2370 = vmatprep.subr.mxu0 %v699
      %2371 = vmatpush1.msra.mxu0 %v698
      %2372 = vmatprep.subr.mxu0 %v705
      %2373 = vmatpush1.msra.mxu0 %v704
      %2374 = vmatprep.subr.mxu0 %v711
      %2375 = vmatpush1.msra.mxu0 %v710
      %2376 = vmatprep.subr.mxu0 %v717
      %2377 = vmatpush1.msra.mxu0 %v716
      %2378 = vmatprep.subr.mxu0 %v723
      %2379 = vmatpush1.msra.mxu0 %v722
      %2380 = vmatprep.subr.mxu0 %v729
      %2381 = vmatpush1.msra.mxu0 %v728
      %2382 = vmatprep.subr.mxu0 %v735
      %2383 = vmatpush1.msra.mxu0 %v734
      %2384 = vmatprep.subr.mxu0 %v741
      %2385 = vmatpush1.msra.mxu0 %v740
      %2386 = vmatprep.subr.mxu0 %v747
      %2387 = vmatpush1.msra.mxu0 %v746
      %2388 = vmatprep.subr.mxu0 %v753
      %2389 = vmatpush1.msra.mxu0 %v752
      %2390 = vmatprep.mubr.f32.mxu0 %v484
      %2391 = vmatmul.mubr.f32.gmra.mrb[0].mxu0 %v476
      %v2392 = vpop.f32.mrb[0].mxu0
      %v2393 = vadd.f32 %v2299, %v2392
      %v2394 = vpop.f32.mrb[0].mxu0
      %v2395 = vadd.f32 %v2303, %v2394
      %2396 = vdwg.mxu0
      %2397 = vmatprep.subr.mxu0 %v759
      %2398 = vmatpush1.msra.mxu0 %v758
      %2399 = vmatprep.subr.mxu0 %v765
      %2400 = vmatpush1.msra.mxu0 %v764
      %2401 = vmatprep.subr.mxu0 %v771
      %2402 = vmatpush1.msra.mxu0 %v770
      %2403 = vmatprep.subr.mxu0 %v777
      %2404 = vmatpush1.msra.mxu0 %v776
      %2405 = vmatprep.subr.mxu0 %v783
      %2406 = vmatpush1.msra.mxu0 %v782
      %2407 = vmatprep.subr.mxu0 %v789
      %2408 = vmatpush1.msra.mxu0 %v788
      %2409 = vmatprep.subr.mxu0 %v795
      %2410 = vmatpush1.msra.mxu0 %v794
      %2411 = vmatprep.subr.mxu0 %v801
      %2412 = vmatpush1.msra.mxu0 %v800
      %2413 = vmatprep.subr.mxu0 %v807
      %2414 = vmatpush1.msra.mxu0 %v806
      %2415 = vmatprep.subr.mxu0 %v813
      %2416 = vmatpush1.msra.mxu0 %v812
      %2417 = vmatprep.subr.mxu0 %v819
      %2418 = vmatpush1.msra.mxu0 %v818
      %2419 = vmatprep.subr.mxu0 %v825
      %2420 = vmatpush1.msra.mxu0 %v824
      %2421 = vmatprep.subr.mxu0 %v831
      %2422 = vmatpush1.msra.mxu0 %v830
      %2423 = vmatprep.subr.mxu0 %v837
      %2424 = vmatpush1.msra.mxu0 %v836
      %2425 = vmatprep.subr.mxu0 %v843
      %2426 = vmatpush1.msra.mxu0 %v842
      %2427 = vmatprep.subr.mxu0 %v849
      %2428 = vmatpush1.msra.mxu0 %v848
      %2429 = vmatprep.subr.mxu0 %v855
      %2430 = vmatpush1.msra.mxu0 %v854
      %2431 = vmatprep.subr.mxu0 %v861
      %2432 = vmatpush1.msra.mxu0 %v860
      %2433 = vmatprep.subr.mxu0 %v867
      %2434 = vmatpush1.msra.mxu0 %v866
      %2435 = vmatprep.subr.mxu0 %v873
      %2436 = vmatpush1.msra.mxu0 %v872
      %2437 = vmatprep.subr.mxu0 %v879
      %2438 = vmatpush1.msra.mxu0 %v878
      %2439 = vmatprep.subr.mxu0 %v885
      %2440 = vmatpush1.msra.mxu0 %v884
      %2441 = vmatprep.subr.mxu0 %v891
      %2442 = vmatpush1.msra.mxu0 %v890
      %2443 = vmatprep.subr.mxu0 %v897
      %2444 = vmatpush1.msra.mxu0 %v896
      %2445 = vmatprep.subr.mxu0 %v903
      %2446 = vmatpush1.msra.mxu0 %v902
      %2447 = vmatprep.subr.mxu0 %v909
      %2448 = vmatpush1.msra.mxu0 %v908
      %2449 = vmatprep.subr.mxu0 %v915
      %2450 = vmatpush1.msra.mxu0 %v914
      %2451 = vmatprep.subr.mxu0 %v921
      %2452 = vmatpush1.msra.mxu0 %v920
      %2453 = vmatprep.subr.mxu0 %v927
      %2454 = vmatpush1.msra.mxu0 %v926
      %2455 = vmatprep.subr.mxu0 %v933
      %2456 = vmatpush1.msra.mxu0 %v932
      %2457 = vmatprep.subr.mxu0 %v939
      %2458 = vmatpush1.msra.mxu0 %v938
      %2459 = vmatprep.subr.mxu0 %v945
      %2460 = vmatpush1.msra.mxu0 %v944
      %2461 = vmatprep.mubr.f32.mxu0 %v485
      %2462 = vmatmul.mubr.f32.gmra.mrb[0].mxu0 %v483
      %v2463 = vpop.f32.mrb[0].mxu0
      %v2464 = vadd.f32 %v2393, %v2463
      %v2465 = vpop.f32.mrb[0].mxu0
      %v2466 = vadd.f32 %v2395, %v2465
      %2467 = vdwg.mxu0
      %2468 = vmatprep.subr.mxu0 %v951
      %2469 = vmatpush1.msra.mxu0 %v950
      %2470 = vmatprep.subr.mxu0 %v957
      %2471 = vmatpush1.msra.mxu0 %v956
      %2472 = vmatprep.subr.mxu0 %v963
      %2473 = vmatpush1.msra.mxu0 %v962
      %2474 = vmatprep.subr.mxu0 %v969
      %2475 = vmatpush1.msra.mxu0 %v968
      %2476 = vmatprep.subr.mxu0 %v975
      %2477 = vmatpush1.msra.mxu0 %v974
      %2478 = vmatprep.subr.mxu0 %v981
      %2479 = vmatpush1.msra.mxu0 %v980
      %2480 = vmatprep.subr.mxu0 %v987
      %2481 = vmatpush1.msra.mxu0 %v986
      %2482 = vmatprep.subr.mxu0 %v993
      %2483 = vmatpush1.msra.mxu0 %v992
      %2484 = vmatprep.subr.mxu0 %v999
      %2485 = vmatpush1.msra.mxu0 %v998
      %2486 = vmatprep.subr.mxu0 %v1005
      %2487 = vmatpush1.msra.mxu0 %v1004
      %2488 = vmatprep.subr.mxu0 %v1011
      %2489 = vmatpush1.msra.mxu0 %v1010
      %2490 = vmatprep.subr.mxu0 %v1017
      %2491 = vmatpush1.msra.mxu0 %v1016
      %2492 = vmatprep.subr.mxu0 %v1023
      %2493 = vmatpush1.msra.mxu0 %v1022
      %2494 = vmatprep.subr.mxu0 %v1029
      %2495 = vmatpush1.msra.mxu0 %v1028
      %2496 = vmatprep.subr.mxu0 %v1035
      %2497 = vmatpush1.msra.mxu0 %v1034
      %2498 = vmatprep.subr.mxu0 %v1041
      %2499 = vmatpush1.msra.mxu0 %v1040
      %2500 = vmatprep.subr.mxu0 %v1047
      %2501 = vmatpush1.msra.mxu0 %v1046
      %2502 = vmatprep.subr.mxu0 %v1053
      %2503 = vmatpush1.msra.mxu0 %v1052
      %2504 = vmatprep.subr.mxu0 %v1059
      %2505 = vmatpush1.msra.mxu0 %v1058
      %2506 = vmatprep.subr.mxu0 %v1065
      %2507 = vmatpush1.msra.mxu0 %v1064
      %2508 = vmatprep.subr.mxu0 %v1071
      %2509 = vmatpush1.msra.mxu0 %v1070
      %2510 = vmatprep.subr.mxu0 %v1077
      %2511 = vmatpush1.msra.mxu0 %v1076
      %2512 = vmatprep.subr.mxu0 %v1083
      %2513 = vmatpush1.msra.mxu0 %v1082
      %2514 = vmatprep.subr.mxu0 %v1089
      %2515 = vmatpush1.msra.mxu0 %v1088
      %2516 = vmatprep.subr.mxu0 %v1095
      %2517 = vmatpush1.msra.mxu0 %v1094
      %2518 = vmatprep.subr.mxu0 %v1101
      %2519 = vmatpush1.msra.mxu0 %v1100
      %2520 = vmatprep.subr.mxu0 %v1107
      %2521 = vmatpush1.msra.mxu0 %v1106
      %2522 = vmatprep.subr.mxu0 %v1113
      %2523 = vmatpush1.msra.mxu0 %v1112
      %2524 = vmatprep.subr.mxu0 %v1119
      %2525 = vmatpush1.msra.mxu0 %v1118
      %2526 = vmatprep.subr.mxu0 %v1125
      %2527 = vmatpush1.msra.mxu0 %v1124
      %2528 = vmatprep.subr.mxu0 %v1131
      %2529 = vmatpush1.msra.mxu0 %v1130
      %2530 = vmatprep.subr.mxu0 %v1137
      %2531 = vmatpush1.msra.mxu0 %v1136
      %2532 = vmatprep.mubr.f32.mxu0 %v493
      %2533 = vmatmul.mubr.f32.gmra.mrb[0].mxu0 %v492
      %v2534 = vpop.f32.mrb[0].mxu0
      %v2535 = vadd.f32 %v2464, %v2534
      %v2536 = vpop.f32.mrb[0].mxu0
      %v2537 = vadd.f32 %v2466, %v2536
      %2538 = vdwg.mxu0
      %2539 = vmatprep.subr.mxu0 %v1143
      %2540 = vmatpush1.msra.mxu0 %v1142
      %2541 = vmatprep.subr.mxu0 %v1149
      %2542 = vmatpush1.msra.mxu0 %v1148
      %2543 = vmatprep.subr.mxu0 %v1155
      %2544 = vmatpush1.msra.mxu0 %v1154
      %2545 = vmatprep.subr.mxu0 %v1161
      %2546 = vmatpush1.msra.mxu0 %v1160
      %2547 = vmatprep.subr.mxu0 %v1167
      %2548 = vmatpush1.msra.mxu0 %v1166
      %2549 = vmatprep.subr.mxu0 %v1173
      %2550 = vmatpush1.msra.mxu0 %v1172
      %2551 = vmatprep.subr.mxu0 %v1179
      %2552 = vmatpush1.msra.mxu0 %v1178
      %2553 = vmatprep.subr.mxu0 %v1185
      %2554 = vmatpush1.msra.mxu0 %v1184
      %2555 = vmatprep.subr.mxu0 %v1191
      %2556 = vmatpush1.msra.mxu0 %v1190
      %2557 = vmatprep.subr.mxu0 %v1197
      %2558 = vmatpush1.msra.mxu0 %v1196
      %2559 = vmatprep.subr.mxu0 %v1203
      %2560 = vmatpush1.msra.mxu0 %v1202
      %2561 = vmatprep.subr.mxu0 %v1209
      %2562 = vmatpush1.msra.mxu0 %v1208
      %2563 = vmatprep.subr.mxu0 %v1215
      %2564 = vmatpush1.msra.mxu0 %v1214
      %2565 = vmatprep.subr.mxu0 %v1221
      %2566 = vmatpush1.msra.mxu0 %v1220
      %2567 = vmatprep.subr.mxu0 %v1227
      %2568 = vmatpush1.msra.mxu0 %v1226
      %2569 = vmatprep.subr.mxu0 %v1233
      %2570 = vmatpush1.msra.mxu0 %v1232
      %2571 = vmatprep.subr.mxu0 %v1239
      %2572 = vmatpush1.msra.mxu0 %v1238
      %2573 = vmatprep.subr.mxu0 %v1245
      %2574 = vmatpush1.msra.mxu0 %v1244
      %2575 = vmatprep.subr.mxu0 %v1251
      %2576 = vmatpush1.msra.mxu0 %v1250
      %2577 = vmatprep.subr.mxu0 %v1257
      %2578 = vmatpush1.msra.mxu0 %v1256
      %2579 = vmatprep.subr.mxu0 %v1263
      %2580 = vmatpush1.msra.mxu0 %v1262
      %2581 = vmatprep.subr.mxu0 %v1269
      %2582 = vmatpush1.msra.mxu0 %v1268
      %2583 = vmatprep.subr.mxu0 %v1275
      %2584 = vmatpush1.msra.mxu0 %v1274
      %2585 = vmatprep.subr.mxu0 %v1281
      %2586 = vmatpush1.msra.mxu0 %v1280
      %2587 = vmatprep.subr.mxu0 %v1287
      %2588 = vmatpush1.msra.mxu0 %v1286
      %2589 = vmatprep.subr.mxu0 %v1293
      %2590 = vmatpush1.msra.mxu0 %v1292
      %2591 = vmatprep.subr.mxu0 %v1299
      %2592 = vmatpush1.msra.mxu0 %v1298
      %2593 = vmatprep.subr.mxu0 %v1305
      %2594 = vmatpush1.msra.mxu0 %v1304
      %2595 = vmatprep.subr.mxu0 %v1311
      %2596 = vmatpush1.msra.mxu0 %v1310
      %2597 = vmatprep.subr.mxu0 %v1317
      %2598 = vmatpush1.msra.mxu0 %v1316
      %2599 = vmatprep.subr.mxu0 %v1323
      %2600 = vmatpush1.msra.mxu0 %v1322
      %2601 = vmatprep.subr.mxu0 %v1329
      %2602 = vmatpush1.msra.mxu0 %v1328
      %2603 = vmatprep.mubr.f32.mxu0 %v517
      %2604 = vmatmul.mubr.f32.gmra.mrb[0].mxu0 %v509
      %v2605 = vpop.f32.mrb[0].mxu0
      %v2606 = vadd.f32 %v2535, %v2605
      %v2607 = vpop.f32.mrb[0].mxu0
      %v2608 = vadd.f32 %v2537, %v2607
      %2609 = vdwg.mxu0
      %2610 = vmatprep.subr.mxu0 %v1335
      %2611 = vmatpush1.msra.mxu0 %v1334
      %2612 = vmatprep.subr.mxu0 %v1341
      %2613 = vmatpush1.msra.mxu0 %v1340
      %2614 = vmatprep.subr.mxu0 %v1347
      %2615 = vmatpush1.msra.mxu0 %v1346
      %2616 = vmatprep.subr.mxu0 %v1353
      %2617 = vmatpush1.msra.mxu0 %v1352
      %2618 = vmatprep.subr.mxu0 %v1359
      %2619 = vmatpush1.msra.mxu0 %v1358
      %2620 = vmatprep.subr.mxu0 %v1365
      %2621 = vmatpush1.msra.mxu0 %v1364
      %2622 = vmatprep.subr.mxu0 %v1371
      %2623 = vmatpush1.msra.mxu0 %v1370
      %2624 = vmatprep.subr.mxu0 %v1377
      %2625 = vmatpush1.msra.mxu0 %v1376
      %2626 = vmatprep.subr.mxu0 %v1383
      %2627 = vmatpush1.msra.mxu0 %v1382
      %2628 = vmatprep.subr.mxu0 %v1389
      %2629 = vmatpush1.msra.mxu0 %v1388
      %2630 = vmatprep.subr.mxu0 %v1395
      %2631 = vmatpush1.msra.mxu0 %v1394
      %2632 = vmatprep.subr.mxu0 %v1401
      %2633 = vmatpush1.msra.mxu0 %v1400
      %2634 = vmatprep.subr.mxu0 %v1407
      %2635 = vmatpush1.msra.mxu0 %v1406
      %2636 = vmatprep.subr.mxu0 %v1413
      %2637 = vmatpush1.msra.mxu0 %v1412
      %2638 = vmatprep.subr.mxu0 %v1419
      %2639 = vmatpush1.msra.mxu0 %v1418
      %2640 = vmatprep.subr.mxu0 %v1425
      %2641 = vmatpush1.msra.mxu0 %v1424
      %2642 = vmatprep.subr.mxu0 %v1431
      %2643 = vmatpush1.msra.mxu0 %v1430
      %2644 = vmatprep.subr.mxu0 %v1437
      %2645 = vmatpush1.msra.mxu0 %v1436
      %2646 = vmatprep.subr.mxu0 %v1443
      %2647 = vmatpush1.msra.mxu0 %v1442
      %2648 = vmatprep.subr.mxu0 %v1449
      %2649 = vmatpush1.msra.mxu0 %v1448
      %2650 = vmatprep.subr.mxu0 %v1455
      %2651 = vmatpush1.msra.mxu0 %v1454
      %2652 = vmatprep.subr.mxu0 %v1461
      %2653 = vmatpush1.msra.mxu0 %v1460
      %2654 = vmatprep.subr.mxu0 %v1467
      %2655 = vmatpush1.msra.mxu0 %v1466
      %2656 = vmatprep.subr.mxu0 %v1473
      %2657 = vmatpush1.msra.mxu0 %v1472
      %2658 = vmatprep.subr.mxu0 %v1479
      %2659 = vmatpush1.msra.mxu0 %v1478
      %2660 = vmatprep.subr.mxu0 %v1485
      %2661 = vmatpush1.msra.mxu0 %v1484
      %2662 = vmatprep.subr.mxu0 %v1491
      %2663 = vmatpush1.msra.mxu0 %v1490
      %2664 = vmatprep.subr.mxu0 %v1497
      %2665 = vmatpush1.msra.mxu0 %v1496
      %2666 = vmatprep.subr.mxu0 %v1503
      %2667 = vmatpush1.msra.mxu0 %v1502
      %2668 = vmatprep.subr.mxu0 %v1509
      %2669 = vmatpush1.msra.mxu0 %v1508
      %2670 = vmatprep.subr.mxu0 %v1515
      %2671 = vmatpush1.msra.mxu0 %v1514
      %2672 = vmatprep.subr.mxu0 %v1521
      %2673 = vmatpush1.msra.mxu0 %v1520
      %2674 = vmatprep.mubr.f32.mxu0 %v518
      %2675 = vmatmul.mubr.f32.gmra.mrb[0].mxu0 %v516
      %v2676 = vpop.f32.mrb[0].mxu0
      %v2677 = vadd.f32 %v2606, %v2676
      %v2678 = vpop.f32.mrb[0].mxu0
      %v2679 = vadd.f32 %v2608, %v2678
      %2680 = vdwg.mxu0
      %2681 = vmatprep.subr.mxu0 %v1527
      %2682 = vmatpush1.msra.mxu0 %v1526
      %2683 = vmatprep.subr.mxu0 %v1533
      %2684 = vmatpush1.msra.mxu0 %v1532
      %2685 = vmatprep.subr.mxu0 %v1539
      %2686 = vmatpush1.msra.mxu0 %v1538
      %2687 = vmatprep.subr.mxu0 %v1545
      %2688 = vmatpush1.msra.mxu0 %v1544
      %2689 = vmatprep.subr.mxu0 %v1551
      %2690 = vmatpush1.msra.mxu0 %v1550
      %2691 = vmatprep.subr.mxu0 %v1557
      %2692 = vmatpush1.msra.mxu0 %v1556
      %2693 = vmatprep.subr.mxu0 %v1563
      %2694 = vmatpush1.msra.mxu0 %v1562
      %2695 = vmatprep.subr.mxu0 %v1569
      %2696 = vmatpush1.msra.mxu0 %v1568
      %2697 = vmatprep.subr.mxu0 %v1575
      %2698 = vmatpush1.msra.mxu0 %v1574
      %2699 = vmatprep.subr.mxu0 %v1581
      %2700 = vmatpush1.msra.mxu0 %v1580
      %2701 = vmatprep.subr.mxu0 %v1587
      %2702 = vmatpush1.msra.mxu0 %v1586
      %2703 = vmatprep.subr.mxu0 %v1593
      %2704 = vmatpush1.msra.mxu0 %v1592
      %2705 = vmatprep.subr.mxu0 %v1599
      %2706 = vmatpush1.msra.mxu0 %v1598
      %2707 = vmatprep.subr.mxu0 %v1605
      %2708 = vmatpush1.msra.mxu0 %v1604
      %2709 = vmatprep.subr.mxu0 %v1611
      %2710 = vmatpush1.msra.mxu0 %v1610
      %2711 = vmatprep.subr.mxu0 %v1617
      %2712 = vmatpush1.msra.mxu0 %v1616
      %2713 = vmatprep.subr.mxu0 %v1623
      %2714 = vmatpush1.msra.mxu0 %v1622
      %2715 = vmatprep.subr.mxu0 %v1629
      %2716 = vmatpush1.msra.mxu0 %v1628
      %2717 = vmatprep.subr.mxu0 %v1635
      %2718 = vmatpush1.msra.mxu0 %v1634
      %2719 = vmatprep.subr.mxu0 %v1641
      %2720 = vmatpush1.msra.mxu0 %v1640
      %2721 = vmatprep.subr.mxu0 %v1647
      %2722 = vmatpush1.msra.mxu0 %v1646
      %2723 = vmatprep.subr.mxu0 %v1653
      %2724 = vmatpush1.msra.mxu0 %v1652
      %2725 = vmatprep.subr.mxu0 %v1659
      %2726 = vmatpush1.msra.mxu0 %v1658
      %2727 = vmatprep.subr.mxu0 %v1665
      %2728 = vmatpush1.msra.mxu0 %v1664
      %2729 = vmatprep.subr.mxu0 %v1671
      %2730 = vmatpush1.msra.mxu0 %v1670
      %2731 = vmatprep.subr.mxu0 %v1677
      %2732 = vmatpush1.msra.mxu0 %v1676
      %2733 = vmatprep.subr.mxu0 %v1683
      %2734 = vmatpush1.msra.mxu0 %v1682
      %2735 = vmatprep.subr.mxu0 %v1689
      %2736 = vmatpush1.msra.mxu0 %v1688
      %2737 = vmatprep.subr.mxu0 %v1695
      %2738 = vmatpush1.msra.mxu0 %v1694
      %2739 = vmatprep.subr.mxu0 %v1701
      %2740 = vmatpush1.msra.mxu0 %v1700
      %2741 = vmatprep.subr.mxu0 %v1707
      %2742 = vmatpush1.msra.mxu0 %v1706
      %2743 = vmatprep.subr.mxu0 %v1713
      %2744 = vmatpush1.msra.mxu0 %v1712
      %2745 = vmatprep.mubr.f32.mxu0 %v526
      %2746 = vmatmul.mubr.f32.gmra.mrb[0].mxu0 %v525
      %v2747 = vpop.f32.mrb[0].mxu0
      %v2748 = vadd.f32 %v2677, %v2747
      %v2749 = vpop.f32.mrb[0].mxu0
      %v2750 = vadd.f32 %v2679, %v2749
      %2751 = vdwg.mxu0
      %2752 = vmatprep.subr.mxu0 %v1719
      %2753 = vmatpush1.msra.mxu0 %v1718
      %2754 = vmatprep.subr.mxu0 %v1725
      %2755 = vmatpush1.msra.mxu0 %v1724
      %2756 = vmatprep.subr.mxu0 %v1731
      %2757 = vmatpush1.msra.mxu0 %v1730
      %2758 = vmatprep.subr.mxu0 %v1737
      %2759 = vmatpush1.msra.mxu0 %v1736
      %2760 = vmatprep.subr.mxu0 %v1743
      %2761 = vmatpush1.msra.mxu0 %v1742
      %2762 = vmatprep.subr.mxu0 %v1749
      %2763 = vmatpush1.msra.mxu0 %v1748
      %2764 = vmatprep.subr.mxu0 %v1755
      %2765 = vmatpush1.msra.mxu0 %v1754
      %2766 = vmatprep.subr.mxu0 %v1761
      %2767 = vmatpush1.msra.mxu0 %v1760
      %2768 = vmatprep.subr.mxu0 %v1767
      %2769 = vmatpush1.msra.mxu0 %v1766
      %2770 = vmatprep.subr.mxu0 %v1773
      %2771 = vmatpush1.msra.mxu0 %v1772
      %2772 = vmatprep.subr.mxu0 %v1779
      %2773 = vmatpush1.msra.mxu0 %v1778
      %2774 = vmatprep.subr.mxu0 %v1785
      %2775 = vmatpush1.msra.mxu0 %v1784
      %2776 = vmatprep.subr.mxu0 %v1791
      %2777 = vmatpush1.msra.mxu0 %v1790
      %2778 = vmatprep.subr.mxu0 %v1797
      %2779 = vmatpush1.msra.mxu0 %v1796
      %2780 = vmatprep.subr.mxu0 %v1803
      %2781 = vmatpush1.msra.mxu0 %v1802
      %2782 = vmatprep.subr.mxu0 %v1809
      %2783 = vmatpush1.msra.mxu0 %v1808
      %2784 = vmatprep.subr.mxu0 %v1815
      %2785 = vmatpush1.msra.mxu0 %v1814
      %2786 = vmatprep.subr.mxu0 %v1821
      %2787 = vmatpush1.msra.mxu0 %v1820
      %2788 = vmatprep.subr.mxu0 %v1827
      %2789 = vmatpush1.msra.mxu0 %v1826
      %2790 = vmatprep.subr.mxu0 %v1833
      %2791 = vmatpush1.msra.mxu0 %v1832
      %2792 = vmatprep.subr.mxu0 %v1839
      %2793 = vmatpush1.msra.mxu0 %v1838
      %2794 = vmatprep.subr.mxu0 %v1845
      %2795 = vmatpush1.msra.mxu0 %v1844
      %2796 = vmatprep.subr.mxu0 %v1851
      %2797 = vmatpush1.msra.mxu0 %v1850
      %2798 = vmatprep.subr.mxu0 %v1857
      %2799 = vmatpush1.msra.mxu0 %v1856
      %2800 = vmatprep.subr.mxu0 %v1863
      %2801 = vmatpush1.msra.mxu0 %v1862
      %2802 = vmatprep.subr.mxu0 %v1869
      %2803 = vmatpush1.msra.mxu0 %v1868
      %2804 = vmatprep.subr.mxu0 %v1875
      %2805 = vmatpush1.msra.mxu0 %v1874
      %2806 = vmatprep.subr.mxu0 %v1881
      %2807 = vmatpush1.msra.mxu0 %v1880
      %2808 = vmatprep.subr.mxu0 %v1887
      %2809 = vmatpush1.msra.mxu0 %v1886
      %2810 = vmatprep.subr.mxu0 %v1893
      %2811 = vmatpush1.msra.mxu0 %v1892
      %2812 = vmatprep.subr.mxu0 %v1899
      %2813 = vmatpush1.msra.mxu0 %v1898
      %2814 = vmatprep.subr.mxu0 %v1905
      %2815 = vmatpush1.msra.mxu0 %v1904
      %2816 = vmatprep.mubr.f32.mxu0 %v550
      %2817 = vmatmul.mubr.f32.gmra.mrb[0].mxu0 %v542
      %v2818 = vpop.f32.mrb[0].mxu0
      %v2819 = vadd.f32 %v2748, %v2818
      %v2820 = vpop.f32.mrb[0].mxu0
      %v2821 = vadd.f32 %v2750, %v2820
      %2822 = vdwg.mxu0
      %2823 = vmatprep.subr.mxu0 %v1911
      %2824 = vmatpush1.msra.mxu0 %v1910
      %2825 = vmatprep.subr.mxu0 %v1917
      %2826 = vmatpush1.msra.mxu0 %v1916
      %2827 = vmatprep.subr.mxu0 %v1923
      %2828 = vmatpush1.msra.mxu0 %v1922
      %2829 = vmatprep.subr.mxu0 %v1929
      %2830 = vmatpush1.msra.mxu0 %v1928
      %2831 = vmatprep.subr.mxu0 %v1935
      %2832 = vmatpush1.msra.mxu0 %v1934
      %2833 = vmatprep.subr.mxu0 %v1941
      %2834 = vmatpush1.msra.mxu0 %v1940
      %2835 = vmatprep.subr.mxu0 %v1947
      %2836 = vmatpush1.msra.mxu0 %v1946
      %2837 = vmatprep.subr.mxu0 %v1953
      %2838 = vmatpush1.msra.mxu0 %v1952
      %2839 = vmatprep.subr.mxu0 %v1959
      %2840 = vmatpush1.msra.mxu0 %v1958
      %2841 = vmatprep.subr.mxu0 %v1965
      %2842 = vmatpush1.msra.mxu0 %v1964
      %2843 = vmatprep.subr.mxu0 %v1971
      %2844 = vmatpush1.msra.mxu0 %v1970
      %2845 = vmatprep.subr.mxu0 %v1977
      %2846 = vmatpush1.msra.mxu0 %v1976
      %2847 = vmatprep.subr.mxu0 %v1983
      %2848 = vmatpush1.msra.mxu0 %v1982
      %2849 = vmatprep.subr.mxu0 %v1989
      %2850 = vmatpush1.msra.mxu0 %v1988
      %2851 = vmatprep.subr.mxu0 %v1995
      %2852 = vmatpush1.msra.mxu0 %v1994
      %2853 = vmatprep.subr.mxu0 %v2001
      %2854 = vmatpush1.msra.mxu0 %v2000
      %2855 = vmatprep.subr.mxu0 %v2007
      %2856 = vmatpush1.msra.mxu0 %v2006
      %2857 = vmatprep.subr.mxu0 %v2013
      %2858 = vmatpush1.msra.mxu0 %v2012
      %2859 = vmatprep.subr.mxu0 %v2019
      %2860 = vmatpush1.msra.mxu0 %v2018
      %2861 = vmatprep.subr.mxu0 %v2025
      %2862 = vmatpush1.msra.mxu0 %v2024
      %2863 = vmatprep.subr.mxu0 %v2031
      %2864 = vmatpush1.msra.mxu0 %v2030
      %2865 = vmatprep.subr.mxu0 %v2037
      %2866 = vmatpush1.msra.mxu0 %v2036
      %2867 = vmatprep.subr.mxu0 %v2043
      %2868 = vmatpush1.msra.mxu0 %v2042
      %2869 = vmatprep.subr.mxu0 %v2049
      %2870 = vmatpush1.msra.mxu0 %v2048
      %2871 = vmatprep.subr.mxu0 %v2055
      %2872 = vmatpush1.msra.mxu0 %v2054
      %2873 = vmatprep.subr.mxu0 %v2061
      %2874 = vmatpush1.msra.mxu0 %v2060
      %2875 = vmatprep.subr.mxu0 %v2067
      %2876 = vmatpush1.msra.mxu0 %v2066
      %2877 = vmatprep.subr.mxu0 %v2073
      %2878 = vmatpush1.msra.mxu0 %v2072
      %2879 = vmatprep.subr.mxu0 %v2079
      %2880 = vmatpush1.msra.mxu0 %v2078
      %2881 = vmatprep.subr.mxu0 %v2085
      %2882 = vmatpush1.msra.mxu0 %v2084
      %2883 = vmatprep.subr.mxu0 %v2091
      %2884 = vmatpush1.msra.mxu0 %v2090
      %2885 = vmatprep.subr.mxu0 %v2097
      %2886 = vmatpush1.msra.mxu0 %v2096
      %2887 = vmatprep.mubr.f32.mxu0 %v551
      %2888 = vmatmul.mubr.f32.gmra.mrb[0].mxu0 %v549
      %v2889 = vpop.f32.mrb[0].mxu0
      %v2890 = vadd.f32 %v2819, %v2889
      %v2891 = vpop.f32.mrb[0].mxu0
      %v2892 = vadd.f32 %v2821, %v2891
      %2893 = vdwg.mxu0
      %2894 = vmatprep.subr.mxu0 %v2103
      %2895 = vmatpush1.msra.mxu0 %v2102
      %2896 = vmatprep.subr.mxu0 %v2109
      %2897 = vmatpush1.msra.mxu0 %v2108
      %2898 = vmatprep.subr.mxu0 %v2115
      %2899 = vmatpush1.msra.mxu0 %v2114
      %2900 = vmatprep.subr.mxu0 %v2121
      %2901 = vmatpush1.msra.mxu0 %v2120
      %2902 = vmatprep.subr.mxu0 %v2127
      %2903 = vmatpush1.msra.mxu0 %v2126
      %2904 = vmatprep.subr.mxu0 %v2133
      %2905 = vmatpush1.msra.mxu0 %v2132
      %2906 = vmatprep.subr.mxu0 %v2139
      %2907 = vmatpush1.msra.mxu0 %v2138
      %2908 = vmatprep.subr.mxu0 %v2145
      %2909 = vmatpush1.msra.mxu0 %v2144
      %2910 = vmatprep.subr.mxu0 %v2151
      %2911 = vmatpush1.msra.mxu0 %v2150
      %2912 = vmatprep.subr.mxu0 %v2157
      %2913 = vmatpush1.msra.mxu0 %v2156
      %2914 = vmatprep.subr.mxu0 %v2163
      %2915 = vmatpush1.msra.mxu0 %v2162
      %2916 = vmatprep.subr.mxu0 %v2169
      %2917 = vmatpush1.msra.mxu0 %v2168
      %2918 = vmatprep.subr.mxu0 %v2175
      %2919 = vmatpush1.msra.mxu0 %v2174
      %2920 = vmatprep.subr.mxu0 %v2181
      %2921 = vmatpush1.msra.mxu0 %v2180
      %2922 = vmatprep.subr.mxu0 %v2187
      %2923 = vmatpush1.msra.mxu0 %v2186
      %2924 = vmatprep.subr.mxu0 %v2193
      %2925 = vmatpush1.msra.mxu0 %v2192
      %2926 = vmatprep.subr.mxu0 %v2199
      %2927 = vmatpush1.msra.mxu0 %v2198
      %2928 = vmatprep.subr.mxu0 %v2205
      %2929 = vmatpush1.msra.mxu0 %v2204
      %2930 = vmatprep.subr.mxu0 %v2211
      %2931 = vmatpush1.msra.mxu0 %v2210
      %2932 = vmatprep.subr.mxu0 %v2217
      %2933 = vmatpush1.msra.mxu0 %v2216
      %2934 = vmatprep.subr.mxu0 %v2223
      %2935 = vmatpush1.msra.mxu0 %v2222
      %2936 = vmatprep.subr.mxu0 %v2229
      %2937 = vmatpush1.msra.mxu0 %v2228
      %2938 = vmatprep.subr.mxu0 %v2235
      %2939 = vmatpush1.msra.mxu0 %v2234
      %2940 = vmatprep.subr.mxu0 %v2241
      %2941 = vmatpush1.msra.mxu0 %v2240
      %2942 = vmatprep.subr.mxu0 %v2247
      %2943 = vmatpush1.msra.mxu0 %v2246
      %2944 = vmatprep.subr.mxu0 %v2253
      %2945 = vmatpush1.msra.mxu0 %v2252
      %2946 = vmatprep.subr.mxu0 %v2259
      %2947 = vmatpush1.msra.mxu0 %v2258
      %2948 = vmatprep.subr.mxu0 %v2265
      %2949 = vmatpush1.msra.mxu0 %v2264
      %2950 = vmatprep.subr.mxu0 %v2271
      %2951 = vmatpush1.msra.mxu0 %v2270
      %2952 = vmatprep.subr.mxu0 %v2277
      %2953 = vmatpush1.msra.mxu0 %v2276
      %2954 = vmatprep.subr.mxu0 %v2283
      %2955 = vmatpush1.msra.mxu0 %v2282
      %2956 = vmatprep.subr.mxu0 %v2289
      %2957 = vmatpush1.msra.mxu0 %v2288
      %2958 = vmatprep.mubr.f32.mxu0 %v559
      %2959 = vmatmul.mubr.f32.gmra.mrb[0].mxu0 %v558
      %v2960 = vpop.f32.mrb[0].mxu0
      %v2961 = vadd.f32 %v2890, %v2960
      %v2962 = vpop.f32.mrb[0].mxu0
      %v2963 = vadd.f32 %v2892, %v2962
      %2964 = vdwg.mxu0
      %2965 = vmatprep.subr.mxu0 %v569
      %2966 = vmatpush1.msra.mxu0 %v568
      %2967 = vmatprep.subr.mxu0 %v575
      %2968 = vmatpush1.msra.mxu0 %v574
      %2969 = vmatprep.subr.mxu0 %v581
      %2970 = vmatpush1.msra.mxu0 %v580
      %2971 = vmatprep.subr.mxu0 %v587
      %2972 = vmatpush1.msra.mxu0 %v586
      %2973 = vmatprep.subr.mxu0 %v593
      %2974 = vmatpush1.msra.mxu0 %v592
      %2975 = vmatprep.subr.mxu0 %v599
      %2976 = vmatpush1.msra.mxu0 %v598
      %2977 = vmatprep.subr.mxu0 %v605
      %2978 = vmatpush1.msra.mxu0 %v604
      %2979 = vmatprep.subr.mxu0 %v611
      %2980 = vmatpush1.msra.mxu0 %v610
      %2981 = vmatprep.subr.mxu0 %v617
      %2982 = vmatpush1.msra.mxu0 %v616
      %2983 = vmatprep.subr.mxu0 %v623
      %2984 = vmatpush1.msra.mxu0 %v622
      %2985 = vmatprep.subr.mxu0 %v629
      %2986 = vmatpush1.msra.mxu0 %v628
      %2987 = vmatprep.subr.mxu0 %v635
      %2988 = vmatpush1.msra.mxu0 %v634
      %2989 = vmatprep.subr.mxu0 %v641
      %2990 = vmatpush1.msra.mxu0 %v640
      %2991 = vmatprep.subr.mxu0 %v647
      %2992 = vmatpush1.msra.mxu0 %v646
      %2993 = vmatprep.subr.mxu0 %v653
      %2994 = vmatpush1.msra.mxu0 %v652
      %2995 = vmatprep.subr.mxu0 %v659
      %2996 = vmatpush1.msra.mxu0 %v658
      %2997 = vmatprep.subr.mxu0 %v665
      %2998 = vmatpush1.msra.mxu0 %v664
      %2999 = vmatprep.subr.mxu0 %v671
      %3000 = vmatpush1.msra.mxu0 %v670
      %3001 = vmatprep.subr.mxu0 %v677
      %3002 = vmatpush1.msra.mxu0 %v676
      %3003 = vmatprep.subr.mxu0 %v683
      %3004 = vmatpush1.msra.mxu0 %v682
      %3005 = vmatprep.subr.mxu0 %v689
      %3006 = vmatpush1.msra.mxu0 %v688
      %3007 = vmatprep.subr.mxu0 %v695
      %3008 = vmatpush1.msra.mxu0 %v694
      %3009 = vmatprep.subr.mxu0 %v701
      %3010 = vmatpush1.msra.mxu0 %v700
      %3011 = vmatprep.subr.mxu0 %v707
      %3012 = vmatpush1.msra.mxu0 %v706
      %3013 = vmatprep.subr.mxu0 %v713
      %3014 = vmatpush1.msra.mxu0 %v712
      %3015 = vmatprep.subr.mxu0 %v719
      %3016 = vmatpush1.msra.mxu0 %v718
      %3017 = vmatprep.subr.mxu0 %v725
      %3018 = vmatpush1.msra.mxu0 %v724
      %3019 = vmatprep.subr.mxu0 %v731
      %3020 = vmatpush1.msra.mxu0 %v730
      %3021 = vmatprep.subr.mxu0 %v737
      %3022 = vmatpush1.msra.mxu0 %v736
      %3023 = vmatprep.subr.mxu0 %v743
      %3024 = vmatpush1.msra.mxu0 %v742
      %3025 = vmatprep.subr.mxu0 %v749
      %3026 = vmatpush1.msra.mxu0 %v748
      %3027 = vmatprep.subr.mxu0 %v755
      %3028 = vmatpush1.msra.mxu0 %v754
      %3029 = vmatprep.mubr.f32.mxu0 %v484
      %3030 = vmatmul.mubr.f32.gmra.mrb[0].mxu0 %v476
      %v3031 = vpop.f32.mrb[0].mxu0
      %v3032 = vadd.f32 %v2307, %v3031
      %v3033 = vpop.f32.mrb[0].mxu0
      %v3034 = vadd.f32 %v2311, %v3033
      %3035 = vdwg.mxu0
      %3036 = vmatprep.subr.mxu0 %v761
      %3037 = vmatpush1.msra.mxu0 %v760
      %3038 = vmatprep.subr.mxu0 %v767
      %3039 = vmatpush1.msra.mxu0 %v766
      %3040 = vmatprep.subr.mxu0 %v773
      %3041 = vmatpush1.msra.mxu0 %v772
      %3042 = vmatprep.subr.mxu0 %v779
      %3043 = vmatpush1.msra.mxu0 %v778
      %3044 = vmatprep.subr.mxu0 %v785
      %3045 = vmatpush1.msra.mxu0 %v784
      %3046 = vmatprep.subr.mxu0 %v791
      %3047 = vmatpush1.msra.mxu0 %v790
      %3048 = vmatprep.subr.mxu0 %v797
      %3049 = vmatpush1.msra.mxu0 %v796
      %3050 = vmatprep.subr.mxu0 %v803
      %3051 = vmatpush1.msra.mxu0 %v802
      %3052 = vmatprep.subr.mxu0 %v809
      %3053 = vmatpush1.msra.mxu0 %v808
      %3054 = vmatprep.subr.mxu0 %v815
      %3055 = vmatpush1.msra.mxu0 %v814
      %3056 = vmatprep.subr.mxu0 %v821
      %3057 = vmatpush1.msra.mxu0 %v820
      %3058 = vmatprep.subr.mxu0 %v827
      %3059 = vmatpush1.msra.mxu0 %v826
      %3060 = vmatprep.subr.mxu0 %v833
      %3061 = vmatpush1.msra.mxu0 %v832
      %3062 = vmatprep.subr.mxu0 %v839
      %3063 = vmatpush1.msra.mxu0 %v838
      %3064 = vmatprep.subr.mxu0 %v845
      %3065 = vmatpush1.msra.mxu0 %v844
      %3066 = vmatprep.subr.mxu0 %v851
      %3067 = vmatpush1.msra.mxu0 %v850
      %3068 = vmatprep.subr.mxu0 %v857
      %3069 = vmatpush1.msra.mxu0 %v856
      %3070 = vmatprep.subr.mxu0 %v863
      %3071 = vmatpush1.msra.mxu0 %v862
      %3072 = vmatprep.subr.mxu0 %v869
      %3073 = vmatpush1.msra.mxu0 %v868
      %3074 = vmatprep.subr.mxu0 %v875
      %3075 = vmatpush1.msra.mxu0 %v874
      %3076 = vmatprep.subr.mxu0 %v881
      %3077 = vmatpush1.msra.mxu0 %v880
      %3078 = vmatprep.subr.mxu0 %v887
      %3079 = vmatpush1.msra.mxu0 %v886
      %3080 = vmatprep.subr.mxu0 %v893
      %3081 = vmatpush1.msra.mxu0 %v892
      %3082 = vmatprep.subr.mxu0 %v899
      %3083 = vmatpush1.msra.mxu0 %v898
      %3084 = vmatprep.subr.mxu0 %v905
      %3085 = vmatpush1.msra.mxu0 %v904
      %3086 = vmatprep.subr.mxu0 %v911
      %3087 = vmatpush1.msra.mxu0 %v910
      %3088 = vmatprep.subr.mxu0 %v917
      %3089 = vmatpush1.msra.mxu0 %v916
      %3090 = vmatprep.subr.mxu0 %v923
      %3091 = vmatpush1.msra.mxu0 %v922
      %3092 = vmatprep.subr.mxu0 %v929
      %3093 = vmatpush1.msra.mxu0 %v928
      %3094 = vmatprep.subr.mxu0 %v935
      %3095 = vmatpush1.msra.mxu0 %v934
      %3096 = vmatprep.subr.mxu0 %v941
      %3097 = vmatpush1.msra.mxu0 %v940
      %3098 = vmatprep.subr.mxu0 %v947
      %3099 = vmatpush1.msra.mxu0 %v946
      %3100 = vmatprep.mubr.f32.mxu0 %v485
      %3101 = vmatmul.mubr.f32.gmra.mrb[0].mxu0 %v483
      %v3102 = vpop.f32.mrb[0].mxu0
      %v3103 = vadd.f32 %v3032, %v3102
      %v3104 = vpop.f32.mrb[0].mxu0
      %v3105 = vadd.f32 %v3034, %v3104
      %3106 = vdwg.mxu0
      %3107 = vmatprep.subr.mxu0 %v953
      %3108 = vmatpush1.msra.mxu0 %v952
      %3109 = vmatprep.subr.mxu0 %v959
      %3110 = vmatpush1.msra.mxu0 %v958
      %3111 = vmatprep.subr.mxu0 %v965
      %3112 = vmatpush1.msra.mxu0 %v964
      %3113 = vmatprep.subr.mxu0 %v971
      %3114 = vmatpush1.msra.mxu0 %v970
      %3115 = vmatprep.subr.mxu0 %v977
      %3116 = vmatpush1.msra.mxu0 %v976
      %3117 = vmatprep.subr.mxu0 %v983
      %3118 = vmatpush1.msra.mxu0 %v982
      %3119 = vmatprep.subr.mxu0 %v989
      %3120 = vmatpush1.msra.mxu0 %v988
      %3121 = vmatprep.subr.mxu0 %v995
      %3122 = vmatpush1.msra.mxu0 %v994
      %3123 = vmatprep.subr.mxu0 %v1001
      %3124 = vmatpush1.msra.mxu0 %v1000
      %3125 = vmatprep.subr.mxu0 %v1007
      %3126 = vmatpush1.msra.mxu0 %v1006
      %3127 = vmatprep.subr.mxu0 %v1013
      %3128 = vmatpush1.msra.mxu0 %v1012
      %3129 = vmatprep.subr.mxu0 %v1019
      %3130 = vmatpush1.msra.mxu0 %v1018
      %3131 = vmatprep.subr.mxu0 %v1025
      %3132 = vmatpush1.msra.mxu0 %v1024
      %3133 = vmatprep.subr.mxu0 %v1031
      %3134 = vmatpush1.msra.mxu0 %v1030
      %3135 = vmatprep.subr.mxu0 %v1037
      %3136 = vmatpush1.msra.mxu0 %v1036
      %3137 = vmatprep.subr.mxu0 %v1043
      %3138 = vmatpush1.msra.mxu0 %v1042
      %3139 = vmatprep.subr.mxu0 %v1049
      %3140 = vmatpush1.msra.mxu0 %v1048
      %3141 = vmatprep.subr.mxu0 %v1055
      %3142 = vmatpush1.msra.mxu0 %v1054
      %3143 = vmatprep.subr.mxu0 %v1061
      %3144 = vmatpush1.msra.mxu0 %v1060
      %3145 = vmatprep.subr.mxu0 %v1067
      %3146 = vmatpush1.msra.mxu0 %v1066
      %3147 = vmatprep.subr.mxu0 %v1073
      %3148 = vmatpush1.msra.mxu0 %v1072
      %3149 = vmatprep.subr.mxu0 %v1079
      %3150 = vmatpush1.msra.mxu0 %v1078
      %3151 = vmatprep.subr.mxu0 %v1085
      %3152 = vmatpush1.msra.mxu0 %v1084
      %3153 = vmatprep.subr.mxu0 %v1091
      %3154 = vmatpush1.msra.mxu0 %v1090
      %3155 = vmatprep.subr.mxu0 %v1097
      %3156 = vmatpush1.msra.mxu0 %v1096
      %3157 = vmatprep.subr.mxu0 %v1103
      %3158 = vmatpush1.msra.mxu0 %v1102
      %3159 = vmatprep.subr.mxu0 %v1109
      %3160 = vmatpush1.msra.mxu0 %v1108
      %3161 = vmatprep.subr.mxu0 %v1115
      %3162 = vmatpush1.msra.mxu0 %v1114
      %3163 = vmatprep.subr.mxu0 %v1121
      %3164 = vmatpush1.msra.mxu0 %v1120
      %3165 = vmatprep.subr.mxu0 %v1127
      %3166 = vmatpush1.msra.mxu0 %v1126
      %3167 = vmatprep.subr.mxu0 %v1133
      %3168 = vmatpush1.msra.mxu0 %v1132
      %3169 = vmatprep.subr.mxu0 %v1139
      %3170 = vmatpush1.msra.mxu0 %v1138
      %3171 = vmatprep.mubr.f32.mxu0 %v493
      %3172 = vmatmul.mubr.f32.gmra.mrb[0].mxu0 %v492
      %v3173 = vpop.f32.mrb[0].mxu0
      %v3174 = vadd.f32 %v3103, %v3173
      %v3175 = vpop.f32.mrb[0].mxu0
      %v3176 = vadd.f32 %v3105, %v3175
      %3177 = vdwg.mxu0
      %3178 = vmatprep.subr.mxu0 %v1145
      %3179 = vmatpush1.msra.mxu0 %v1144
      %3180 = vmatprep.subr.mxu0 %v1151
      %3181 = vmatpush1.msra.mxu0 %v1150
      %3182 = vmatprep.subr.mxu0 %v1157
      %3183 = vmatpush1.msra.mxu0 %v1156
      %3184 = vmatprep.subr.mxu0 %v1163
      %3185 = vmatpush1.msra.mxu0 %v1162
      %3186 = vmatprep.subr.mxu0 %v1169
      %3187 = vmatpush1.msra.mxu0 %v1168
      %3188 = vmatprep.subr.mxu0 %v1175
      %3189 = vmatpush1.msra.mxu0 %v1174
      %3190 = vmatprep.subr.mxu0 %v1181
      %3191 = vmatpush1.msra.mxu0 %v1180
      %3192 = vmatprep.subr.mxu0 %v1187
      %3193 = vmatpush1.msra.mxu0 %v1186
      %3194 = vmatprep.subr.mxu0 %v1193
      %3195 = vmatpush1.msra.mxu0 %v1192
      %3196 = vmatprep.subr.mxu0 %v1199
      %3197 = vmatpush1.msra.mxu0 %v1198
      %3198 = vmatprep.subr.mxu0 %v1205
      %3199 = vmatpush1.msra.mxu0 %v1204
      %3200 = vmatprep.subr.mxu0 %v1211
      %3201 = vmatpush1.msra.mxu0 %v1210
      %3202 = vmatprep.subr.mxu0 %v1217
      %3203 = vmatpush1.msra.mxu0 %v1216
      %3204 = vmatprep.subr.mxu0 %v1223
      %3205 = vmatpush1.msra.mxu0 %v1222
      %3206 = vmatprep.subr.mxu0 %v1229
      %3207 = vmatpush1.msra.mxu0 %v1228
      %3208 = vmatprep.subr.mxu0 %v1235
      %3209 = vmatpush1.msra.mxu0 %v1234
      %3210 = vmatprep.subr.mxu0 %v1241
      %3211 = vmatpush1.msra.mxu0 %v1240
      %3212 = vmatprep.subr.mxu0 %v1247
      %3213 = vmatpush1.msra.mxu0 %v1246
      %3214 = vmatprep.subr.mxu0 %v1253
      %3215 = vmatpush1.msra.mxu0 %v1252
      %3216 = vmatprep.subr.mxu0 %v1259
      %3217 = vmatpush1.msra.mxu0 %v1258
      %3218 = vmatprep.subr.mxu0 %v1265
      %3219 = vmatpush1.msra.mxu0 %v1264
      %3220 = vmatprep.subr.mxu0 %v1271
      %3221 = vmatpush1.msra.mxu0 %v1270
      %3222 = vmatprep.subr.mxu0 %v1277
      %3223 = vmatpush1.msra.mxu0 %v1276
      %3224 = vmatprep.subr.mxu0 %v1283
      %3225 = vmatpush1.msra.mxu0 %v1282
      %3226 = vmatprep.subr.mxu0 %v1289
      %3227 = vmatpush1.msra.mxu0 %v1288
      %3228 = vmatprep.subr.mxu0 %v1295
      %3229 = vmatpush1.msra.mxu0 %v1294
      %3230 = vmatprep.subr.mxu0 %v1301
      %3231 = vmatpush1.msra.mxu0 %v1300
      %3232 = vmatprep.subr.mxu0 %v1307
      %3233 = vmatpush1.msra.mxu0 %v1306
      %3234 = vmatprep.subr.mxu0 %v1313
      %3235 = vmatpush1.msra.mxu0 %v1312
      %3236 = vmatprep.subr.mxu0 %v1319
      %3237 = vmatpush1.msra.mxu0 %v1318
      %3238 = vmatprep.subr.mxu0 %v1325
      %3239 = vmatpush1.msra.mxu0 %v1324
      %3240 = vmatprep.subr.mxu0 %v1331
      %3241 = vmatpush1.msra.mxu0 %v1330
      %3242 = vmatprep.mubr.f32.mxu0 %v517
      %3243 = vmatmul.mubr.f32.gmra.mrb[0].mxu0 %v509
      %v3244 = vpop.f32.mrb[0].mxu0
      %v3245 = vadd.f32 %v3174, %v3244
      %v3246 = vpop.f32.mrb[0].mxu0
      %v3247 = vadd.f32 %v3176, %v3246
      %3248 = vdwg.mxu0
      %3249 = vmatprep.subr.mxu0 %v1337
      %3250 = vmatpush1.msra.mxu0 %v1336
      %3251 = vmatprep.subr.mxu0 %v1343
      %3252 = vmatpush1.msra.mxu0 %v1342
      %3253 = vmatprep.subr.mxu0 %v1349
      %3254 = vmatpush1.msra.mxu0 %v1348
      %3255 = vmatprep.subr.mxu0 %v1355
      %3256 = vmatpush1.msra.mxu0 %v1354
      %3257 = vmatprep.subr.mxu0 %v1361
      %3258 = vmatpush1.msra.mxu0 %v1360
      %3259 = vmatprep.subr.mxu0 %v1367
      %3260 = vmatpush1.msra.mxu0 %v1366
      %3261 = vmatprep.subr.mxu0 %v1373
      %3262 = vmatpush1.msra.mxu0 %v1372
      %3263 = vmatprep.subr.mxu0 %v1379
      %3264 = vmatpush1.msra.mxu0 %v1378
      %3265 = vmatprep.subr.mxu0 %v1385
      %3266 = vmatpush1.msra.mxu0 %v1384
      %3267 = vmatprep.subr.mxu0 %v1391
      %3268 = vmatpush1.msra.mxu0 %v1390
      %3269 = vmatprep.subr.mxu0 %v1397
      %3270 = vmatpush1.msra.mxu0 %v1396
      %3271 = vmatprep.subr.mxu0 %v1403
      %3272 = vmatpush1.msra.mxu0 %v1402
      %3273 = vmatprep.subr.mxu0 %v1409
      %3274 = vmatpush1.msra.mxu0 %v1408
      %3275 = vmatprep.subr.mxu0 %v1415
      %3276 = vmatpush1.msra.mxu0 %v1414
      %3277 = vmatprep.subr.mxu0 %v1421
      %3278 = vmatpush1.msra.mxu0 %v1420
      %3279 = vmatprep.subr.mxu0 %v1427
      %3280 = vmatpush1.msra.mxu0 %v1426
      %3281 = vmatprep.subr.mxu0 %v1433
      %3282 = vmatpush1.msra.mxu0 %v1432
      %3283 = vmatprep.subr.mxu0 %v1439
      %3284 = vmatpush1.msra.mxu0 %v1438
      %3285 = vmatprep.subr.mxu0 %v1445
      %3286 = vmatpush1.msra.mxu0 %v1444
      %3287 = vmatprep.subr.mxu0 %v1451
      %3288 = vmatpush1.msra.mxu0 %v1450
      %3289 = vmatprep.subr.mxu0 %v1457
      %3290 = vmatpush1.msra.mxu0 %v1456
      %3291 = vmatprep.subr.mxu0 %v1463
      %3292 = vmatpush1.msra.mxu0 %v1462
      %3293 = vmatprep.subr.mxu0 %v1469
      %3294 = vmatpush1.msra.mxu0 %v1468
      %3295 = vmatprep.subr.mxu0 %v1475
      %3296 = vmatpush1.msra.mxu0 %v1474
      %3297 = vmatprep.subr.mxu0 %v1481
      %3298 = vmatpush1.msra.mxu0 %v1480
      %3299 = vmatprep.subr.mxu0 %v1487
      %3300 = vmatpush1.msra.mxu0 %v1486
      %3301 = vmatprep.subr.mxu0 %v1493
      %3302 = vmatpush1.msra.mxu0 %v1492
      %3303 = vmatprep.subr.mxu0 %v1499
      %3304 = vmatpush1.msra.mxu0 %v1498
      %3305 = vmatprep.subr.mxu0 %v1505
      %3306 = vmatpush1.msra.mxu0 %v1504
      %3307 = vmatprep.subr.mxu0 %v1511
      %3308 = vmatpush1.msra.mxu0 %v1510
      %3309 = vmatprep.subr.mxu0 %v1517
      %3310 = vmatpush1.msra.mxu0 %v1516
      %3311 = vmatprep.subr.mxu0 %v1523
      %3312 = vmatpush1.msra.mxu0 %v1522
      %3313 = vmatprep.mubr.f32.mxu0 %v518
      %3314 = vmatmul.mubr.f32.gmra.mrb[0].mxu0 %v516
      %v3315 = vpop.f32.mrb[0].mxu0
      %v3316 = vadd.f32 %v3245, %v3315
      %v3317 = vpop.f32.mrb[0].mxu0
      %v3318 = vadd.f32 %v3247, %v3317
      %3319 = vdwg.mxu0
      %3320 = vmatprep.subr.mxu0 %v1529
      %3321 = vmatpush1.msra.mxu0 %v1528
      %3322 = vmatprep.subr.mxu0 %v1535
      %3323 = vmatpush1.msra.mxu0 %v1534
      %3324 = vmatprep.subr.mxu0 %v1541
      %3325 = vmatpush1.msra.mxu0 %v1540
      %3326 = vmatprep.subr.mxu0 %v1547
      %3327 = vmatpush1.msra.mxu0 %v1546
      %3328 = vmatprep.subr.mxu0 %v1553
      %3329 = vmatpush1.msra.mxu0 %v1552
      %3330 = vmatprep.subr.mxu0 %v1559
      %3331 = vmatpush1.msra.mxu0 %v1558
      %3332 = vmatprep.subr.mxu0 %v1565
      %3333 = vmatpush1.msra.mxu0 %v1564
      %3334 = vmatprep.subr.mxu0 %v1571
      %3335 = vmatpush1.msra.mxu0 %v1570
      %3336 = vmatprep.subr.mxu0 %v1577
      %3337 = vmatpush1.msra.mxu0 %v1576
      %3338 = vmatprep.subr.mxu0 %v1583
      %3339 = vmatpush1.msra.mxu0 %v1582
      %3340 = vmatprep.subr.mxu0 %v1589
      %3341 = vmatpush1.msra.mxu0 %v1588
      %3342 = vmatprep.subr.mxu0 %v1595
      %3343 = vmatpush1.msra.mxu0 %v1594
      %3344 = vmatprep.subr.mxu0 %v1601
      %3345 = vmatpush1.msra.mxu0 %v1600
      %3346 = vmatprep.subr.mxu0 %v1607
      %3347 = vmatpush1.msra.mxu0 %v1606
      %3348 = vmatprep.subr.mxu0 %v1613
      %3349 = vmatpush1.msra.mxu0 %v1612
      %3350 = vmatprep.subr.mxu0 %v1619
      %3351 = vmatpush1.msra.mxu0 %v1618
      %3352 = vmatprep.subr.mxu0 %v1625
      %3353 = vmatpush1.msra.mxu0 %v1624
      %3354 = vmatprep.subr.mxu0 %v1631
      %3355 = vmatpush1.msra.mxu0 %v1630
      %3356 = vmatprep.subr.mxu0 %v1637
      %3357 = vmatpush1.msra.mxu0 %v1636
      %3358 = vmatprep.subr.mxu0 %v1643
      %3359 = vmatpush1.msra.mxu0 %v1642
      %3360 = vmatprep.subr.mxu0 %v1649
      %3361 = vmatpush1.msra.mxu0 %v1648
      %3362 = vmatprep.subr.mxu0 %v1655
      %3363 = vmatpush1.msra.mxu0 %v1654
      %3364 = vmatprep.subr.mxu0 %v1661
      %3365 = vmatpush1.msra.mxu0 %v1660
      %3366 = vmatprep.subr.mxu0 %v1667
      %3367 = vmatpush1.msra.mxu0 %v1666
      %3368 = vmatprep.subr.mxu0 %v1673
      %3369 = vmatpush1.msra.mxu0 %v1672
      %3370 = vmatprep.subr.mxu0 %v1679
      %3371 = vmatpush1.msra.mxu0 %v1678
      %3372 = vmatprep.subr.mxu0 %v1685
      %3373 = vmatpush1.msra.mxu0 %v1684
      %3374 = vmatprep.subr.mxu0 %v1691
      %3375 = vmatpush1.msra.mxu0 %v1690
      %3376 = vmatprep.subr.mxu0 %v1697
      %3377 = vmatpush1.msra.mxu0 %v1696
      %3378 = vmatprep.subr.mxu0 %v1703
      %3379 = vmatpush1.msra.mxu0 %v1702
      %3380 = vmatprep.subr.mxu0 %v1709
      %3381 = vmatpush1.msra.mxu0 %v1708
      %3382 = vmatprep.subr.mxu0 %v1715
      %3383 = vmatpush1.msra.mxu0 %v1714
      %3384 = vmatprep.mubr.f32.mxu0 %v526
      %3385 = vmatmul.mubr.f32.gmra.mrb[0].mxu0 %v525
      %v3386 = vpop.f32.mrb[0].mxu0
      %v3387 = vadd.f32 %v3316, %v3386
      %v3388 = vpop.f32.mrb[0].mxu0
      %v3389 = vadd.f32 %v3318, %v3388
      %3390 = vdwg.mxu0
      %3391 = vmatprep.subr.mxu0 %v1721
      %3392 = vmatpush1.msra.mxu0 %v1720
      %3393 = vmatprep.subr.mxu0 %v1727
      %3394 = vmatpush1.msra.mxu0 %v1726
      %3395 = vmatprep.subr.mxu0 %v1733
      %3396 = vmatpush1.msra.mxu0 %v1732
      %3397 = vmatprep.subr.mxu0 %v1739
      %3398 = vmatpush1.msra.mxu0 %v1738
      %3399 = vmatprep.subr.mxu0 %v1745
      %3400 = vmatpush1.msra.mxu0 %v1744
      %3401 = vmatprep.subr.mxu0 %v1751
      %3402 = vmatpush1.msra.mxu0 %v1750
      %3403 = vmatprep.subr.mxu0 %v1757
      %3404 = vmatpush1.msra.mxu0 %v1756
      %3405 = vmatprep.subr.mxu0 %v1763
      %3406 = vmatpush1.msra.mxu0 %v1762
      %3407 = vmatprep.subr.mxu0 %v1769
      %3408 = vmatpush1.msra.mxu0 %v1768
      %3409 = vmatprep.subr.mxu0 %v1775
      %3410 = vmatpush1.msra.mxu0 %v1774
      %3411 = vmatprep.subr.mxu0 %v1781
      %3412 = vmatpush1.msra.mxu0 %v1780
      %3413 = vmatprep.subr.mxu0 %v1787
      %3414 = vmatpush1.msra.mxu0 %v1786
      %3415 = vmatprep.subr.mxu0 %v1793
      %3416 = vmatpush1.msra.mxu0 %v1792
      %3417 = vmatprep.subr.mxu0 %v1799
      %3418 = vmatpush1.msra.mxu0 %v1798
      %3419 = vmatprep.subr.mxu0 %v1805
      %3420 = vmatpush1.msra.mxu0 %v1804
      %3421 = vmatprep.subr.mxu0 %v1811
      %3422 = vmatpush1.msra.mxu0 %v1810
      %3423 = vmatprep.subr.mxu0 %v1817
      %3424 = vmatpush1.msra.mxu0 %v1816
      %3425 = vmatprep.subr.mxu0 %v1823
      %3426 = vmatpush1.msra.mxu0 %v1822
      %3427 = vmatprep.subr.mxu0 %v1829
      %3428 = vmatpush1.msra.mxu0 %v1828
      %3429 = vmatprep.subr.mxu0 %v1835
      %3430 = vmatpush1.msra.mxu0 %v1834
      %3431 = vmatprep.subr.mxu0 %v1841
      %3432 = vmatpush1.msra.mxu0 %v1840
      %3433 = vmatprep.subr.mxu0 %v1847
      %3434 = vmatpush1.msra.mxu0 %v1846
      %3435 = vmatprep.subr.mxu0 %v1853
      %3436 = vmatpush1.msra.mxu0 %v1852
      %3437 = vmatprep.subr.mxu0 %v1859
      %3438 = vmatpush1.msra.mxu0 %v1858
      %3439 = vmatprep.subr.mxu0 %v1865
      %3440 = vmatpush1.msra.mxu0 %v1864
      %3441 = vmatprep.subr.mxu0 %v1871
      %3442 = vmatpush1.msra.mxu0 %v1870
      %3443 = vmatprep.subr.mxu0 %v1877
      %3444 = vmatpush1.msra.mxu0 %v1876
      %3445 = vmatprep.subr.mxu0 %v1883
      %3446 = vmatpush1.msra.mxu0 %v1882
      %3447 = vmatprep.subr.mxu0 %v1889
      %3448 = vmatpush1.msra.mxu0 %v1888
      %3449 = vmatprep.subr.mxu0 %v1895
      %3450 = vmatpush1.msra.mxu0 %v1894
      %3451 = vmatprep.subr.mxu0 %v1901
      %3452 = vmatpush1.msra.mxu0 %v1900
      %3453 = vmatprep.subr.mxu0 %v1907
      %3454 = vmatpush1.msra.mxu0 %v1906
      %3455 = vmatprep.mubr.f32.mxu0 %v550
      %3456 = vmatmul.mubr.f32.gmra.mrb[0].mxu0 %v542
      %v3457 = vpop.f32.mrb[0].mxu0
      %v3458 = vadd.f32 %v3387, %v3457
      %v3459 = vpop.f32.mrb[0].mxu0
      %v3460 = vadd.f32 %v3389, %v3459
      %3461 = vdwg.mxu0
      %3462 = vmatprep.subr.mxu0 %v1913
      %3463 = vmatpush1.msra.mxu0 %v1912
      %3464 = vmatprep.subr.mxu0 %v1919
      %3465 = vmatpush1.msra.mxu0 %v1918
      %3466 = vmatprep.subr.mxu0 %v1925
      %3467 = vmatpush1.msra.mxu0 %v1924
      %3468 = vmatprep.subr.mxu0 %v1931
      %3469 = vmatpush1.msra.mxu0 %v1930
      %3470 = vmatprep.subr.mxu0 %v1937
      %3471 = vmatpush1.msra.mxu0 %v1936
      %3472 = vmatprep.subr.mxu0 %v1943
      %3473 = vmatpush1.msra.mxu0 %v1942
      %3474 = vmatprep.subr.mxu0 %v1949
      %3475 = vmatpush1.msra.mxu0 %v1948
      %3476 = vmatprep.subr.mxu0 %v1955
      %3477 = vmatpush1.msra.mxu0 %v1954
      %3478 = vmatprep.subr.mxu0 %v1961
      %3479 = vmatpush1.msra.mxu0 %v1960
      %3480 = vmatprep.subr.mxu0 %v1967
      %3481 = vmatpush1.msra.mxu0 %v1966
      %3482 = vmatprep.subr.mxu0 %v1973
      %3483 = vmatpush1.msra.mxu0 %v1972
      %3484 = vmatprep.subr.mxu0 %v1979
      %3485 = vmatpush1.msra.mxu0 %v1978
      %3486 = vmatprep.subr.mxu0 %v1985
      %3487 = vmatpush1.msra.mxu0 %v1984
      %3488 = vmatprep.subr.mxu0 %v1991
      %3489 = vmatpush1.msra.mxu0 %v1990
      %3490 = vmatprep.subr.mxu0 %v1997
      %3491 = vmatpush1.msra.mxu0 %v1996
      %3492 = vmatprep.subr.mxu0 %v2003
      %3493 = vmatpush1.msra.mxu0 %v2002
      %3494 = vmatprep.subr.mxu0 %v2009
      %3495 = vmatpush1.msra.mxu0 %v2008
      %3496 = vmatprep.subr.mxu0 %v2015
      %3497 = vmatpush1.msra.mxu0 %v2014
      %3498 = vmatprep.subr.mxu0 %v2021
      %3499 = vmatpush1.msra.mxu0 %v2020
      %3500 = vmatprep.subr.mxu0 %v2027
      %3501 = vmatpush1.msra.mxu0 %v2026
      %3502 = vmatprep.subr.mxu0 %v2033
      %3503 = vmatpush1.msra.mxu0 %v2032
      %3504 = vmatprep.subr.mxu0 %v2039
      %3505 = vmatpush1.msra.mxu0 %v2038
      %3506 = vmatprep.subr.mxu0 %v2045
      %3507 = vmatpush1.msra.mxu0 %v2044
      %3508 = vmatprep.subr.mxu0 %v2051
      %3509 = vmatpush1.msra.mxu0 %v2050
      %3510 = vmatprep.subr.mxu0 %v2057
      %3511 = vmatpush1.msra.mxu0 %v2056
      %3512 = vmatprep.subr.mxu0 %v2063
      %3513 = vmatpush1.msra.mxu0 %v2062
      %3514 = vmatprep.subr.mxu0 %v2069
      %3515 = vmatpush1.msra.mxu0 %v2068
      %3516 = vmatprep.subr.mxu0 %v2075
      %3517 = vmatpush1.msra.mxu0 %v2074
      %3518 = vmatprep.subr.mxu0 %v2081
      %3519 = vmatpush1.msra.mxu0 %v2080
      %3520 = vmatprep.subr.mxu0 %v2087
      %3521 = vmatpush1.msra.mxu0 %v2086
      %3522 = vmatprep.subr.mxu0 %v2093
      %3523 = vmatpush1.msra.mxu0 %v2092
      %3524 = vmatprep.subr.mxu0 %v2099
      %3525 = vmatpush1.msra.mxu0 %v2098
      %3526 = vmatprep.mubr.f32.mxu0 %v551
      %3527 = vmatmul.mubr.f32.gmra.mrb[0].mxu0 %v549
      %v3528 = vpop.f32.mrb[0].mxu0
      %v3529 = vadd.f32 %v3458, %v3528
      %v3530 = vpop.f32.mrb[0].mxu0
      %v3531 = vadd.f32 %v3460, %v3530
      %3532 = vdwg.mxu0
      %3533 = vmatprep.subr.mxu0 %v2105
      %3534 = vmatpush1.msra.mxu0 %v2104
      %3535 = vmatprep.subr.mxu0 %v2111
      %3536 = vmatpush1.msra.mxu0 %v2110
      %3537 = vmatprep.subr.mxu0 %v2117
      %3538 = vmatpush1.msra.mxu0 %v2116
      %3539 = vmatprep.subr.mxu0 %v2123
      %3540 = vmatpush1.msra.mxu0 %v2122
      %3541 = vmatprep.subr.mxu0 %v2129
      %3542 = vmatpush1.msra.mxu0 %v2128
      %3543 = vmatprep.subr.mxu0 %v2135
      %3544 = vmatpush1.msra.mxu0 %v2134
      %3545 = vmatprep.subr.mxu0 %v2141
      %3546 = vmatpush1.msra.mxu0 %v2140
      %3547 = vmatprep.subr.mxu0 %v2147
      %3548 = vmatpush1.msra.mxu0 %v2146
      %3549 = vmatprep.subr.mxu0 %v2153
      %3550 = vmatpush1.msra.mxu0 %v2152
      %3551 = vmatprep.subr.mxu0 %v2159
      %3552 = vmatpush1.msra.mxu0 %v2158
      %3553 = vmatprep.subr.mxu0 %v2165
      %3554 = vmatpush1.msra.mxu0 %v2164
      %3555 = vmatprep.subr.mxu0 %v2171
      %3556 = vmatpush1.msra.mxu0 %v2170
      %3557 = vmatprep.subr.mxu0 %v2177
      %3558 = vmatpush1.msra.mxu0 %v2176
      %3559 = vmatprep.subr.mxu0 %v2183
      %3560 = vmatpush1.msra.mxu0 %v2182
      %3561 = vmatprep.subr.mxu0 %v2189
      %3562 = vmatpush1.msra.mxu0 %v2188
      %3563 = vmatprep.subr.mxu0 %v2195
      %3564 = vmatpush1.msra.mxu0 %v2194
      %3565 = vmatprep.subr.mxu0 %v2201
      %3566 = vmatpush1.msra.mxu0 %v2200
      %3567 = vmatprep.subr.mxu0 %v2207
      %3568 = vmatpush1.msra.mxu0 %v2206
      %3569 = vmatprep.subr.mxu0 %v2213
      %3570 = vmatpush1.msra.mxu0 %v2212
      %3571 = vmatprep.subr.mxu0 %v2219
      %3572 = vmatpush1.msra.mxu0 %v2218
      %3573 = vmatprep.subr.mxu0 %v2225
      %3574 = vmatpush1.msra.mxu0 %v2224
      %3575 = vmatprep.subr.mxu0 %v2231
      %3576 = vmatpush1.msra.mxu0 %v2230
      %3577 = vmatprep.subr.mxu0 %v2237
      %3578 = vmatpush1.msra.mxu0 %v2236
      %3579 = vmatprep.subr.mxu0 %v2243
      %3580 = vmatpush1.msra.mxu0 %v2242
      %3581 = vmatprep.subr.mxu0 %v2249
      %3582 = vmatpush1.msra.mxu0 %v2248
      %3583 = vmatprep.subr.mxu0 %v2255
      %3584 = vmatpush1.msra.mxu0 %v2254
      %3585 = vmatprep.subr.mxu0 %v2261
      %3586 = vmatpush1.msra.mxu0 %v2260
      %3587 = vmatprep.subr.mxu0 %v2267
      %3588 = vmatpush1.msra.mxu0 %v2266
      %3589 = vmatprep.subr.mxu0 %v2273
      %3590 = vmatpush1.msra.mxu0 %v2272
      %3591 = vmatprep.subr.mxu0 %v2279
      %3592 = vmatpush1.msra.mxu0 %v2278
      %3593 = vmatprep.subr.mxu0 %v2285
      %3594 = vmatpush1.msra.mxu0 %v2284
      %3595 = vmatprep.subr.mxu0 %v2291
      %3596 = vmatpush1.msra.mxu0 %v2290
      %3597 = vmatprep.mubr.f32.mxu0 %v559
      %3598 = vmatmul.mubr.f32.gmra.mrb[0].mxu0 %v558
      %v3599 = vpop.f32.mrb[0].mxu0
      %v3600 = vadd.f32 %v3529, %v3599
      %v3601 = vpop.f32.mrb[0].mxu0
      %v3602 = vadd.f32 %v3531, %v3601
      %3603 = vdwg.mxu0
      %3604 = vmatprep.subr.mxu0 %v571
      %3605 = vmatpush1.msra.mxu0 %v570
      %3606 = vmatprep.subr.mxu0 %v577
      %3607 = vmatpush1.msra.mxu0 %v576
      %3608 = vmatprep.subr.mxu0 %v583
      %3609 = vmatpush1.msra.mxu0 %v582
      %3610 = vmatprep.subr.mxu0 %v589
      %3611 = vmatpush1.msra.mxu0 %v588
      %3612 = vmatprep.subr.mxu0 %v595
      %3613 = vmatpush1.msra.mxu0 %v594
      %3614 = vmatprep.subr.mxu0 %v601
      %3615 = vmatpush1.msra.mxu0 %v600
      %3616 = vmatprep.subr.mxu0 %v607
      %3617 = vmatpush1.msra.mxu0 %v606
      %3618 = vmatprep.subr.mxu0 %v613
      %3619 = vmatpush1.msra.mxu0 %v612
      %3620 = vmatprep.subr.mxu0 %v619
      %3621 = vmatpush1.msra.mxu0 %v618
      %3622 = vmatprep.subr.mxu0 %v625
      %3623 = vmatpush1.msra.mxu0 %v624
      %3624 = vmatprep.subr.mxu0 %v631
      %3625 = vmatpush1.msra.mxu0 %v630
      %3626 = vmatprep.subr.mxu0 %v637
      %3627 = vmatpush1.msra.mxu0 %v636
      %3628 = vmatprep.subr.mxu0 %v643
      %3629 = vmatpush1.msra.mxu0 %v642
      %3630 = vmatprep.subr.mxu0 %v649
      %3631 = vmatpush1.msra.mxu0 %v648
      %3632 = vmatprep.subr.mxu0 %v655
      %3633 = vmatpush1.msra.mxu0 %v654
      %3634 = vmatprep.subr.mxu0 %v661
      %3635 = vmatpush1.msra.mxu0 %v660
      %3636 = vmatprep.subr.mxu0 %v667
      %3637 = vmatpush1.msra.mxu0 %v666
      %3638 = vmatprep.subr.mxu0 %v673
      %3639 = vmatpush1.msra.mxu0 %v672
      %3640 = vmatprep.subr.mxu0 %v679
      %3641 = vmatpush1.msra.mxu0 %v678
      %3642 = vmatprep.subr.mxu0 %v685
      %3643 = vmatpush1.msra.mxu0 %v684
      %3644 = vmatprep.subr.mxu0 %v691
      %3645 = vmatpush1.msra.mxu0 %v690
      %3646 = vmatprep.subr.mxu0 %v697
      %3647 = vmatpush1.msra.mxu0 %v696
      %3648 = vmatprep.subr.mxu0 %v703
      %3649 = vmatpush1.msra.mxu0 %v702
      %3650 = vmatprep.subr.mxu0 %v709
      %3651 = vmatpush1.msra.mxu0 %v708
      %3652 = vmatprep.subr.mxu0 %v715
      %3653 = vmatpush1.msra.mxu0 %v714
      %3654 = vmatprep.subr.mxu0 %v721
      %3655 = vmatpush1.msra.mxu0 %v720
      %3656 = vmatprep.subr.mxu0 %v727
      %3657 = vmatpush1.msra.mxu0 %v726
      %3658 = vmatprep.subr.mxu0 %v733
      %3659 = vmatpush1.msra.mxu0 %v732
      %3660 = vmatprep.subr.mxu0 %v739
      %3661 = vmatpush1.msra.mxu0 %v738
      %3662 = vmatprep.subr.mxu0 %v745
      %3663 = vmatpush1.msra.mxu0 %v744
      %3664 = vmatprep.subr.mxu0 %v751
      %3665 = vmatpush1.msra.mxu0 %v750
      %3666 = vmatprep.subr.mxu0 %v757
      %3667 = vmatpush1.msra.mxu0 %v756
      %3668 = vmatprep.mubr.f32.mxu0 %v484
      %3669 = vmatmul.mubr.f32.gmra.mrb[0].mxu0 %v476
      %v3670 = vpop.f32.mrb[0].mxu0
      %v3671 = vadd.f32 %v2315, %v3670
      %v3672 = vpop.f32.mrb[0].mxu0
      %v3673 = vadd.f32 %v2319, %v3672
      %3674 = vdwg.mxu0
      %3675 = vmatprep.subr.mxu0 %v763
      %3676 = vmatpush1.msra.mxu0 %v762
      %3677 = vmatprep.subr.mxu0 %v769
      %3678 = vmatpush1.msra.mxu0 %v768
      %3679 = vmatprep.subr.mxu0 %v775
      %3680 = vmatpush1.msra.mxu0 %v774
      %3681 = vmatprep.subr.mxu0 %v781
      %3682 = vmatpush1.msra.mxu0 %v780
      %3683 = vmatprep.subr.mxu0 %v787
      %3684 = vmatpush1.msra.mxu0 %v786
      %3685 = vmatprep.subr.mxu0 %v793
      %3686 = vmatpush1.msra.mxu0 %v792
      %3687 = vmatprep.subr.mxu0 %v799
      %3688 = vmatpush1.msra.mxu0 %v798
      %3689 = vmatprep.subr.mxu0 %v805
      %3690 = vmatpush1.msra.mxu0 %v804
      %3691 = vmatprep.subr.mxu0 %v811
      %3692 = vmatpush1.msra.mxu0 %v810
      %3693 = vmatprep.subr.mxu0 %v817
      %3694 = vmatpush1.msra.mxu0 %v816
      %3695 = vmatprep.subr.mxu0 %v823
      %3696 = vmatpush1.msra.mxu0 %v822
      %3697 = vmatprep.subr.mxu0 %v829
      %3698 = vmatpush1.msra.mxu0 %v828
      %3699 = vmatprep.subr.mxu0 %v835
      %3700 = vmatpush1.msra.mxu0 %v834
      %3701 = vmatprep.subr.mxu0 %v841
      %3702 = vmatpush1.msra.mxu0 %v840
      %3703 = vmatprep.subr.mxu0 %v847
      %3704 = vmatpush1.msra.mxu0 %v846
      %3705 = vmatprep.subr.mxu0 %v853
      %3706 = vmatpush1.msra.mxu0 %v852
      %3707 = vmatprep.subr.mxu0 %v859
      %3708 = vmatpush1.msra.mxu0 %v858
      %3709 = vmatprep.subr.mxu0 %v865
      %3710 = vmatpush1.msra.mxu0 %v864
      %3711 = vmatprep.subr.mxu0 %v871
      %3712 = vmatpush1.msra.mxu0 %v870
      %3713 = vmatprep.subr.mxu0 %v877
      %3714 = vmatpush1.msra.mxu0 %v876
      %3715 = vmatprep.subr.mxu0 %v883
      %3716 = vmatpush1.msra.mxu0 %v882
      %3717 = vmatprep.subr.mxu0 %v889
      %3718 = vmatpush1.msra.mxu0 %v888
      %3719 = vmatprep.subr.mxu0 %v895
      %3720 = vmatpush1.msra.mxu0 %v894
      %3721 = vmatprep.subr.mxu0 %v901
      %3722 = vmatpush1.msra.mxu0 %v900
      %3723 = vmatprep.subr.mxu0 %v907
      %3724 = vmatpush1.msra.mxu0 %v906
      %3725 = vmatprep.subr.mxu0 %v913
      %3726 = vmatpush1.msra.mxu0 %v912
      %3727 = vmatprep.subr.mxu0 %v919
      %3728 = vmatpush1.msra.mxu0 %v918
      %3729 = vmatprep.subr.mxu0 %v925
      %3730 = vmatpush1.msra.mxu0 %v924
      %3731 = vmatprep.subr.mxu0 %v931
      %3732 = vmatpush1.msra.mxu0 %v930
      %3733 = vmatprep.subr.mxu0 %v937
      %3734 = vmatpush1.msra.mxu0 %v936
      %3735 = vmatprep.subr.mxu0 %v943
      %3736 = vmatpush1.msra.mxu0 %v942
      %3737 = vmatprep.subr.mxu0 %v949
      %3738 = vmatpush1.msra.mxu0 %v948
      %3739 = vmatprep.mubr.f32.mxu0 %v485
      %3740 = vmatmul.mubr.f32.gmra.mrb[0].mxu0 %v483
      %v3741 = vpop.f32.mrb[0].mxu0
      %v3742 = vadd.f32 %v3671, %v3741
      %v3743 = vpop.f32.mrb[0].mxu0
      %v3744 = vadd.f32 %v3673, %v3743
      %3745 = vdwg.mxu0
      %3746 = vmatprep.subr.mxu0 %v955
      %3747 = vmatpush1.msra.mxu0 %v954
      %3748 = vmatprep.subr.mxu0 %v961
      %3749 = vmatpush1.msra.mxu0 %v960
      %3750 = vmatprep.subr.mxu0 %v967
      %3751 = vmatpush1.msra.mxu0 %v966
      %3752 = vmatprep.subr.mxu0 %v973
      %3753 = vmatpush1.msra.mxu0 %v972
      %3754 = vmatprep.subr.mxu0 %v979
      %3755 = vmatpush1.msra.mxu0 %v978
      %3756 = vmatprep.subr.mxu0 %v985
      %3757 = vmatpush1.msra.mxu0 %v984
      %3758 = vmatprep.subr.mxu0 %v991
      %3759 = vmatpush1.msra.mxu0 %v990
      %3760 = vmatprep.subr.mxu0 %v997
      %3761 = vmatpush1.msra.mxu0 %v996
      %3762 = vmatprep.subr.mxu0 %v1003
      %3763 = vmatpush1.msra.mxu0 %v1002
      %3764 = vmatprep.subr.mxu0 %v1009
      %3765 = vmatpush1.msra.mxu0 %v1008
      %3766 = vmatprep.subr.mxu0 %v1015
      %3767 = vmatpush1.msra.mxu0 %v1014
      %3768 = vmatprep.subr.mxu0 %v1021
      %3769 = vmatpush1.msra.mxu0 %v1020
      %3770 = vmatprep.subr.mxu0 %v1027
      %3771 = vmatpush1.msra.mxu0 %v1026
      %3772 = vmatprep.subr.mxu0 %v1033
      %3773 = vmatpush1.msra.mxu0 %v1032
      %3774 = vmatprep.subr.mxu0 %v1039
      %3775 = vmatpush1.msra.mxu0 %v1038
      %3776 = vmatprep.subr.mxu0 %v1045
      %3777 = vmatpush1.msra.mxu0 %v1044
      %3778 = vmatprep.subr.mxu0 %v1051
      %3779 = vmatpush1.msra.mxu0 %v1050
      %3780 = vmatprep.subr.mxu0 %v1057
      %3781 = vmatpush1.msra.mxu0 %v1056
      %3782 = vmatprep.subr.mxu0 %v1063
      %3783 = vmatpush1.msra.mxu0 %v1062
      %3784 = vmatprep.subr.mxu0 %v1069
      %3785 = vmatpush1.msra.mxu0 %v1068
      %3786 = vmatprep.subr.mxu0 %v1075
      %3787 = vmatpush1.msra.mxu0 %v1074
      %3788 = vmatprep.subr.mxu0 %v1081
      %3789 = vmatpush1.msra.mxu0 %v1080
      %3790 = vmatprep.subr.mxu0 %v1087
      %3791 = vmatpush1.msra.mxu0 %v1086
      %3792 = vmatprep.subr.mxu0 %v1093
      %3793 = vmatpush1.msra.mxu0 %v1092
      %3794 = vmatprep.subr.mxu0 %v1099
      %3795 = vmatpush1.msra.mxu0 %v1098
      %3796 = vmatprep.subr.mxu0 %v1105
      %3797 = vmatpush1.msra.mxu0 %v1104
      %3798 = vmatprep.subr.mxu0 %v1111
      %3799 = vmatpush1.msra.mxu0 %v1110
      %3800 = vmatprep.subr.mxu0 %v1117
      %3801 = vmatpush1.msra.mxu0 %v1116
      %3802 = vmatprep.subr.mxu0 %v1123
      %3803 = vmatpush1.msra.mxu0 %v1122
      %3804 = vmatprep.subr.mxu0 %v1129
      %3805 = vmatpush1.msra.mxu0 %v1128
      %3806 = vmatprep.subr.mxu0 %v1135
      %3807 = vmatpush1.msra.mxu0 %v1134
      %3808 = vmatprep.subr.mxu0 %v1141
      %3809 = vmatpush1.msra.mxu0 %v1140
      %3810 = vmatprep.mubr.f32.mxu0 %v493
      %3811 = vmatmul.mubr.f32.gmra.mrb[0].mxu0 %v492
      %v3812 = vpop.f32.mrb[0].mxu0
      %v3813 = vadd.f32 %v3742, %v3812
      %v3814 = vpop.f32.mrb[0].mxu0
      %v3815 = vadd.f32 %v3744, %v3814
      %3816 = vdwg.mxu0
      %3817 = vmatprep.subr.mxu0 %v1147
      %3818 = vmatpush1.msra.mxu0 %v1146
      %3819 = vmatprep.subr.mxu0 %v1153
      %3820 = vmatpush1.msra.mxu0 %v1152
      %3821 = vmatprep.subr.mxu0 %v1159
      %3822 = vmatpush1.msra.mxu0 %v1158
      %3823 = vmatprep.subr.mxu0 %v1165
      %3824 = vmatpush1.msra.mxu0 %v1164
      %3825 = vmatprep.subr.mxu0 %v1171
      %3826 = vmatpush1.msra.mxu0 %v1170
      %3827 = vmatprep.subr.mxu0 %v1177
      %3828 = vmatpush1.msra.mxu0 %v1176
      %3829 = vmatprep.subr.mxu0 %v1183
      %3830 = vmatpush1.msra.mxu0 %v1182
      %3831 = vmatprep.subr.mxu0 %v1189
      %3832 = vmatpush1.msra.mxu0 %v1188
      %3833 = vmatprep.subr.mxu0 %v1195
      %3834 = vmatpush1.msra.mxu0 %v1194
      %3835 = vmatprep.subr.mxu0 %v1201
      %3836 = vmatpush1.msra.mxu0 %v1200
      %3837 = vmatprep.subr.mxu0 %v1207
      %3838 = vmatpush1.msra.mxu0 %v1206
      %3839 = vmatprep.subr.mxu0 %v1213
      %3840 = vmatpush1.msra.mxu0 %v1212
      %3841 = vmatprep.subr.mxu0 %v1219
      %3842 = vmatpush1.msra.mxu0 %v1218
      %3843 = vmatprep.subr.mxu0 %v1225
      %3844 = vmatpush1.msra.mxu0 %v1224
      %3845 = vmatprep.subr.mxu0 %v1231
      %3846 = vmatpush1.msra.mxu0 %v1230
      %3847 = vmatprep.subr.mxu0 %v1237
      %3848 = vmatpush1.msra.mxu0 %v1236
      %3849 = vmatprep.subr.mxu0 %v1243
      %3850 = vmatpush1.msra.mxu0 %v1242
      %3851 = vmatprep.subr.mxu0 %v1249
      %3852 = vmatpush1.msra.mxu0 %v1248
      %3853 = vmatprep.subr.mxu0 %v1255
      %3854 = vmatpush1.msra.mxu0 %v1254
      %3855 = vmatprep.subr.mxu0 %v1261
      %3856 = vmatpush1.msra.mxu0 %v1260
      %3857 = vmatprep.subr.mxu0 %v1267
      %3858 = vmatpush1.msra.mxu0 %v1266
      %3859 = vmatprep.subr.mxu0 %v1273
      %3860 = vmatpush1.msra.mxu0 %v1272
      %3861 = vmatprep.subr.mxu0 %v1279
      %3862 = vmatpush1.msra.mxu0 %v1278
      %3863 = vmatprep.subr.mxu0 %v1285
      %3864 = vmatpush1.msra.mxu0 %v1284
      %3865 = vmatprep.subr.mxu0 %v1291
      %3866 = vmatpush1.msra.mxu0 %v1290
      %3867 = vmatprep.subr.mxu0 %v1297
      %3868 = vmatpush1.msra.mxu0 %v1296
      %3869 = vmatprep.subr.mxu0 %v1303
      %3870 = vmatpush1.msra.mxu0 %v1302
      %3871 = vmatprep.subr.mxu0 %v1309
      %3872 = vmatpush1.msra.mxu0 %v1308
      %3873 = vmatprep.subr.mxu0 %v1315
      %3874 = vmatpush1.msra.mxu0 %v1314
      %3875 = vmatprep.subr.mxu0 %v1321
      %3876 = vmatpush1.msra.mxu0 %v1320
      %3877 = vmatprep.subr.mxu0 %v1327
      %3878 = vmatpush1.msra.mxu0 %v1326
      %3879 = vmatprep.subr.mxu0 %v1333
      %3880 = vmatpush1.msra.mxu0 %v1332
      %3881 = vmatprep.mubr.f32.mxu0 %v517
      %3882 = vmatmul.mubr.f32.gmra.mrb[0].mxu0 %v509
      %v3883 = vpop.f32.mrb[0].mxu0
      %v3884 = vadd.f32 %v3813, %v3883
      %v3885 = vpop.f32.mrb[0].mxu0
      %v3886 = vadd.f32 %v3815, %v3885
      %3887 = vdwg.mxu0
      %3888 = vmatprep.subr.mxu0 %v1339
      %3889 = vmatpush1.msra.mxu0 %v1338
      %3890 = vmatprep.subr.mxu0 %v1345
      %3891 = vmatpush1.msra.mxu0 %v1344
      %3892 = vmatprep.subr.mxu0 %v1351
      %3893 = vmatpush1.msra.mxu0 %v1350
      %3894 = vmatprep.subr.mxu0 %v1357
      %3895 = vmatpush1.msra.mxu0 %v1356
      %3896 = vmatprep.subr.mxu0 %v1363
      %3897 = vmatpush1.msra.mxu0 %v1362
      %3898 = vmatprep.subr.mxu0 %v1369
      %3899 = vmatpush1.msra.mxu0 %v1368
      %3900 = vmatprep.subr.mxu0 %v1375
      %3901 = vmatpush1.msra.mxu0 %v1374
      %3902 = vmatprep.subr.mxu0 %v1381
      %3903 = vmatpush1.msra.mxu0 %v1380
      %3904 = vmatprep.subr.mxu0 %v1387
      %3905 = vmatpush1.msra.mxu0 %v1386
      %3906 = vmatprep.subr.mxu0 %v1393
      %3907 = vmatpush1.msra.mxu0 %v1392
      %3908 = vmatprep.subr.mxu0 %v1399
      %3909 = vmatpush1.msra.mxu0 %v1398
      %3910 = vmatprep.subr.mxu0 %v1405
      %3911 = vmatpush1.msra.mxu0 %v1404
      %3912 = vmatprep.subr.mxu0 %v1411
      %3913 = vmatpush1.msra.mxu0 %v1410
      %3914 = vmatprep.subr.mxu0 %v1417
      %3915 = vmatpush1.msra.mxu0 %v1416
      %3916 = vmatprep.subr.mxu0 %v1423
      %3917 = vmatpush1.msra.mxu0 %v1422
      %3918 = vmatprep.subr.mxu0 %v1429
      %3919 = vmatpush1.msra.mxu0 %v1428
      %3920 = vmatprep.subr.mxu0 %v1435
      %3921 = vmatpush1.msra.mxu0 %v1434
      %3922 = vmatprep.subr.mxu0 %v1441
      %3923 = vmatpush1.msra.mxu0 %v1440
      %3924 = vmatprep.subr.mxu0 %v1447
      %3925 = vmatpush1.msra.mxu0 %v1446
      %3926 = vmatprep.subr.mxu0 %v1453
      %3927 = vmatpush1.msra.mxu0 %v1452
      %3928 = vmatprep.subr.mxu0 %v1459
      %3929 = vmatpush1.msra.mxu0 %v1458
      %3930 = vmatprep.subr.mxu0 %v1465
      %3931 = vmatpush1.msra.mxu0 %v1464
      %3932 = vmatprep.subr.mxu0 %v1471
      %3933 = vmatpush1.msra.mxu0 %v1470
      %3934 = vmatprep.subr.mxu0 %v1477
      %3935 = vmatpush1.msra.mxu0 %v1476
      %3936 = vmatprep.subr.mxu0 %v1483
      %3937 = vmatpush1.msra.mxu0 %v1482
      %3938 = vmatprep.subr.mxu0 %v1489
      %3939 = vmatpush1.msra.mxu0 %v1488
      %3940 = vmatprep.subr.mxu0 %v1495
      %3941 = vmatpush1.msra.mxu0 %v1494
      %3942 = vmatprep.subr.mxu0 %v1501
      %3943 = vmatpush1.msra.mxu0 %v1500
      %3944 = vmatprep.subr.mxu0 %v1507
      %3945 = vmatpush1.msra.mxu0 %v1506
      %3946 = vmatprep.subr.mxu0 %v1513
      %3947 = vmatpush1.msra.mxu0 %v1512
      %3948 = vmatprep.subr.mxu0 %v1519
      %3949 = vmatpush1.msra.mxu0 %v1518
      %3950 = vmatprep.subr.mxu0 %v1525
      %3951 = vmatpush1.msra.mxu0 %v1524
      %3952 = vmatprep.mubr.f32.mxu0 %v518
      %3953 = vmatmul.mubr.f32.gmra.mrb[0].mxu0 %v516
      %v3954 = vpop.f32.mrb[0].mxu0
      %v3955 = vadd.f32 %v3884, %v3954
      %v3956 = vpop.f32.mrb[0].mxu0
      %v3957 = vadd.f32 %v3886, %v3956
      %3958 = vdwg.mxu0
      %3959 = vmatprep.subr.mxu0 %v1531
      %3960 = vmatpush1.msra.mxu0 %v1530
      %3961 = vmatprep.subr.mxu0 %v1537
      %3962 = vmatpush1.msra.mxu0 %v1536
      %3963 = vmatprep.subr.mxu0 %v1543
      %3964 = vmatpush1.msra.mxu0 %v1542
      %3965 = vmatprep.subr.mxu0 %v1549
      %3966 = vmatpush1.msra.mxu0 %v1548
      %3967 = vmatprep.subr.mxu0 %v1555
      %3968 = vmatpush1.msra.mxu0 %v1554
      %3969 = vmatprep.subr.mxu0 %v1561
      %3970 = vmatpush1.msra.mxu0 %v1560
      %3971 = vmatprep.subr.mxu0 %v1567
      %3972 = vmatpush1.msra.mxu0 %v1566
      %3973 = vmatprep.subr.mxu0 %v1573
      %3974 = vmatpush1.msra.mxu0 %v1572
      %3975 = vmatprep.subr.mxu0 %v1579
      %3976 = vmatpush1.msra.mxu0 %v1578
      %3977 = vmatprep.subr.mxu0 %v1585
      %3978 = vmatpush1.msra.mxu0 %v1584
      %3979 = vmatprep.subr.mxu0 %v1591
      %3980 = vmatpush1.msra.mxu0 %v1590
      %3981 = vmatprep.subr.mxu0 %v1597
      %3982 = vmatpush1.msra.mxu0 %v1596
      %3983 = vmatprep.subr.mxu0 %v1603
      %3984 = vmatpush1.msra.mxu0 %v1602
      %3985 = vmatprep.subr.mxu0 %v1609
      %3986 = vmatpush1.msra.mxu0 %v1608
      %3987 = vmatprep.subr.mxu0 %v1615
      %3988 = vmatpush1.msra.mxu0 %v1614
      %3989 = vmatprep.subr.mxu0 %v1621
      %3990 = vmatpush1.msra.mxu0 %v1620
      %3991 = vmatprep.subr.mxu0 %v1627
      %3992 = vmatpush1.msra.mxu0 %v1626
      %3993 = vmatprep.subr.mxu0 %v1633
      %3994 = vmatpush1.msra.mxu0 %v1632
      %3995 = vmatprep.subr.mxu0 %v1639
      %3996 = vmatpush1.msra.mxu0 %v1638
      %3997 = vmatprep.subr.mxu0 %v1645
      %3998 = vmatpush1.msra.mxu0 %v1644
      %3999 = vmatprep.subr.mxu0 %v1651
      %4000 = vmatpush1.msra.mxu0 %v1650
      %4001 = vmatprep.subr.mxu0 %v1657
      %4002 = vmatpush1.msra.mxu0 %v1656
      %4003 = vmatprep.subr.mxu0 %v1663
      %4004 = vmatpush1.msra.mxu0 %v1662
      %4005 = vmatprep.subr.mxu0 %v1669
      %4006 = vmatpush1.msra.mxu0 %v1668
      %4007 = vmatprep.subr.mxu0 %v1675
      %4008 = vmatpush1.msra.mxu0 %v1674
      %4009 = vmatprep.subr.mxu0 %v1681
      %4010 = vmatpush1.msra.mxu0 %v1680
      %4011 = vmatprep.subr.mxu0 %v1687
      %4012 = vmatpush1.msra.mxu0 %v1686
      %4013 = vmatprep.subr.mxu0 %v1693
      %4014 = vmatpush1.msra.mxu0 %v1692
      %4015 = vmatprep.subr.mxu0 %v1699
      %4016 = vmatpush1.msra.mxu0 %v1698
      %4017 = vmatprep.subr.mxu0 %v1705
      %4018 = vmatpush1.msra.mxu0 %v1704
      %4019 = vmatprep.subr.mxu0 %v1711
      %4020 = vmatpush1.msra.mxu0 %v1710
      %4021 = vmatprep.subr.mxu0 %v1717
      %4022 = vmatpush1.msra.mxu0 %v1716
      %4023 = vmatprep.mubr.f32.mxu0 %v526
      %4024 = vmatmul.mubr.f32.gmra.mrb[0].mxu0 %v525
      %v4025 = vpop.f32.mrb[0].mxu0
      %v4026 = vadd.f32 %v3955, %v4025
      %v4027 = vpop.f32.mrb[0].mxu0
      %v4028 = vadd.f32 %v3957, %v4027
      %4029 = vdwg.mxu0
      %4030 = vmatprep.subr.mxu0 %v1723
      %4031 = vmatpush1.msra.mxu0 %v1722
      %4032 = vmatprep.subr.mxu0 %v1729
      %4033 = vmatpush1.msra.mxu0 %v1728
      %4034 = vmatprep.subr.mxu0 %v1735
      %4035 = vmatpush1.msra.mxu0 %v1734
      %4036 = vmatprep.subr.mxu0 %v1741
      %4037 = vmatpush1.msra.mxu0 %v1740
      %4038 = vmatprep.subr.mxu0 %v1747
      %4039 = vmatpush1.msra.mxu0 %v1746
      %4040 = vmatprep.subr.mxu0 %v1753
      %4041 = vmatpush1.msra.mxu0 %v1752
      %4042 = vmatprep.subr.mxu0 %v1759
      %4043 = vmatpush1.msra.mxu0 %v1758
      %4044 = vmatprep.subr.mxu0 %v1765
      %4045 = vmatpush1.msra.mxu0 %v1764
      %4046 = vmatprep.subr.mxu0 %v1771
      %4047 = vmatpush1.msra.mxu0 %v1770
      %4048 = vmatprep.subr.mxu0 %v1777
      %4049 = vmatpush1.msra.mxu0 %v1776
      %4050 = vmatprep.subr.mxu0 %v1783
      %4051 = vmatpush1.msra.mxu0 %v1782
      %4052 = vmatprep.subr.mxu0 %v1789
      %4053 = vmatpush1.msra.mxu0 %v1788
      %4054 = vmatprep.subr.mxu0 %v1795
      %4055 = vmatpush1.msra.mxu0 %v1794
      %4056 = vmatprep.subr.mxu0 %v1801
      %4057 = vmatpush1.msra.mxu0 %v1800
      %4058 = vmatprep.subr.mxu0 %v1807
      %4059 = vmatpush1.msra.mxu0 %v1806
      %4060 = vmatprep.subr.mxu0 %v1813
      %4061 = vmatpush1.msra.mxu0 %v1812
      %4062 = vmatprep.subr.mxu0 %v1819
      %4063 = vmatpush1.msra.mxu0 %v1818
      %4064 = vmatprep.subr.mxu0 %v1825
      %4065 = vmatpush1.msra.mxu0 %v1824
      %4066 = vmatprep.subr.mxu0 %v1831
      %4067 = vmatpush1.msra.mxu0 %v1830
      %4068 = vmatprep.subr.mxu0 %v1837
      %4069 = vmatpush1.msra.mxu0 %v1836
      %4070 = vmatprep.subr.mxu0 %v1843
      %4071 = vmatpush1.msra.mxu0 %v1842
      %4072 = vmatprep.subr.mxu0 %v1849
      %4073 = vmatpush1.msra.mxu0 %v1848
      %4074 = vmatprep.subr.mxu0 %v1855
      %4075 = vmatpush1.msra.mxu0 %v1854
      %4076 = vmatprep.subr.mxu0 %v1861
      %4077 = vmatpush1.msra.mxu0 %v1860
      %4078 = vmatprep.subr.mxu0 %v1867
      %4079 = vmatpush1.msra.mxu0 %v1866
      %4080 = vmatprep.subr.mxu0 %v1873
      %4081 = vmatpush1.msra.mxu0 %v1872
      %4082 = vmatprep.subr.mxu0 %v1879
      %4083 = vmatpush1.msra.mxu0 %v1878
      %4084 = vmatprep.subr.mxu0 %v1885
      %4085 = vmatpush1.msra.mxu0 %v1884
      %4086 = vmatprep.subr.mxu0 %v1891
      %4087 = vmatpush1.msra.mxu0 %v1890
      %4088 = vmatprep.subr.mxu0 %v1897
      %4089 = vmatpush1.msra.mxu0 %v1896
      %4090 = vmatprep.subr.mxu0 %v1903
      %4091 = vmatpush1.msra.mxu0 %v1902
      %4092 = vmatprep.subr.mxu0 %v1909
      %4093 = vmatpush1.msra.mxu0 %v1908
      %4094 = vmatprep.mubr.f32.mxu0 %v550
      %4095 = vmatmul.mubr.f32.gmra.mrb[0].mxu0 %v542
      %v4096 = vpop.f32.mrb[0].mxu0
      %v4097 = vadd.f32 %v4026, %v4096
      %v4098 = vpop.f32.mrb[0].mxu0
      %v4099 = vadd.f32 %v4028, %v4098
      %4100 = vdwg.mxu0
      %4101 = vmatprep.subr.mxu0 %v1915
      %4102 = vmatpush1.msra.mxu0 %v1914
      %4103 = vmatprep.subr.mxu0 %v1921
      %4104 = vmatpush1.msra.mxu0 %v1920
      %4105 = vmatprep.subr.mxu0 %v1927
      %4106 = vmatpush1.msra.mxu0 %v1926
      %4107 = vmatprep.subr.mxu0 %v1933
      %4108 = vmatpush1.msra.mxu0 %v1932
      %4109 = vmatprep.subr.mxu0 %v1939
      %4110 = vmatpush1.msra.mxu0 %v1938
      %4111 = vmatprep.subr.mxu0 %v1945
      %4112 = vmatpush1.msra.mxu0 %v1944
      %4113 = vmatprep.subr.mxu0 %v1951
      %4114 = vmatpush1.msra.mxu0 %v1950
      %4115 = vmatprep.subr.mxu0 %v1957
      %4116 = vmatpush1.msra.mxu0 %v1956
      %4117 = vmatprep.subr.mxu0 %v1963
      %4118 = vmatpush1.msra.mxu0 %v1962
      %4119 = vmatprep.subr.mxu0 %v1969
      %4120 = vmatpush1.msra.mxu0 %v1968
      %4121 = vmatprep.subr.mxu0 %v1975
      %4122 = vmatpush1.msra.mxu0 %v1974
      %4123 = vmatprep.subr.mxu0 %v1981
      %4124 = vmatpush1.msra.mxu0 %v1980
      %4125 = vmatprep.subr.mxu0 %v1987
      %4126 = vmatpush1.msra.mxu0 %v1986
      %4127 = vmatprep.subr.mxu0 %v1993
      %4128 = vmatpush1.msra.mxu0 %v1992
      %4129 = vmatprep.subr.mxu0 %v1999
      %4130 = vmatpush1.msra.mxu0 %v1998
      %4131 = vmatprep.subr.mxu0 %v2005
      %4132 = vmatpush1.msra.mxu0 %v2004
      %4133 = vmatprep.subr.mxu0 %v2011
      %4134 = vmatpush1.msra.mxu0 %v2010
      %4135 = vmatprep.subr.mxu0 %v2017
      %4136 = vmatpush1.msra.mxu0 %v2016
      %4137 = vmatprep.subr.mxu0 %v2023
      %4138 = vmatpush1.msra.mxu0 %v2022
      %4139 = vmatprep.subr.mxu0 %v2029
      %4140 = vmatpush1.msra.mxu0 %v2028
      %4141 = vmatprep.subr.mxu0 %v2035
      %4142 = vmatpush1.msra.mxu0 %v2034
      %4143 = vmatprep.subr.mxu0 %v2041
      %4144 = vmatpush1.msra.mxu0 %v2040
      %4145 = vmatprep.subr.mxu0 %v2047
      %4146 = vmatpush1.msra.mxu0 %v2046
      %4147 = vmatprep.subr.mxu0 %v2053
      %4148 = vmatpush1.msra.mxu0 %v2052
      %4149 = vmatprep.subr.mxu0 %v2059
      %4150 = vmatpush1.msra.mxu0 %v2058
      %4151 = vmatprep.subr.mxu0 %v2065
      %4152 = vmatpush1.msra.mxu0 %v2064
      %4153 = vmatprep.subr.mxu0 %v2071
      %4154 = vmatpush1.msra.mxu0 %v2070
      %4155 = vmatprep.subr.mxu0 %v2077
      %4156 = vmatpush1.msra.mxu0 %v2076
      %4157 = vmatprep.subr.mxu0 %v2083
      %4158 = vmatpush1.msra.mxu0 %v2082
      %4159 = vmatprep.subr.mxu0 %v2089
      %4160 = vmatpush1.msra.mxu0 %v2088
      %4161 = vmatprep.subr.mxu0 %v2095
      %4162 = vmatpush1.msra.mxu0 %v2094
      %4163 = vmatprep.subr.mxu0 %v2101
      %4164 = vmatpush1.msra.mxu0 %v2100
      %4165 = vmatprep.mubr.f32.mxu0 %v551
      %4166 = vmatmul.mubr.f32.gmra.mrb[0].mxu0 %v549
      %v4167 = vpop.f32.mrb[0].mxu0
      %v4168 = vadd.f32 %v4097, %v4167
      %v4169 = vpop.f32.mrb[0].mxu0
      %v4170 = vadd.f32 %v4099, %v4169
      %4171 = vdwg.mxu0
      %4172 = vmatprep.subr.mxu0 %v2107
      %4173 = vmatpush1.msra.mxu0 %v2106
      %4174 = vmatprep.subr.mxu0 %v2113
      %4175 = vmatpush1.msra.mxu0 %v2112
      %4176 = vmatprep.subr.mxu0 %v2119
      %4177 = vmatpush1.msra.mxu0 %v2118
      %4178 = vmatprep.subr.mxu0 %v2125
      %4179 = vmatpush1.msra.mxu0 %v2124
      %4180 = vmatprep.subr.mxu0 %v2131
      %4181 = vmatpush1.msra.mxu0 %v2130
      %4182 = vmatprep.subr.mxu0 %v2137
      %4183 = vmatpush1.msra.mxu0 %v2136
      %4184 = vmatprep.subr.mxu0 %v2143
      %4185 = vmatpush1.msra.mxu0 %v2142
      %4186 = vmatprep.subr.mxu0 %v2149
      %4187 = vmatpush1.msra.mxu0 %v2148
      %4188 = vmatprep.subr.mxu0 %v2155
      %4189 = vmatpush1.msra.mxu0 %v2154
      %4190 = vmatprep.subr.mxu0 %v2161
      %4191 = vmatpush1.msra.mxu0 %v2160
      %4192 = vmatprep.subr.mxu0 %v2167
      %4193 = vmatpush1.msra.mxu0 %v2166
      %4194 = vmatprep.subr.mxu0 %v2173
      %4195 = vmatpush1.msra.mxu0 %v2172
      %4196 = vmatprep.subr.mxu0 %v2179
      %4197 = vmatpush1.msra.mxu0 %v2178
      %4198 = vmatprep.subr.mxu0 %v2185
      %4199 = vmatpush1.msra.mxu0 %v2184
      %4200 = vmatprep.subr.mxu0 %v2191
      %4201 = vmatpush1.msra.mxu0 %v2190
      %4202 = vmatprep.subr.mxu0 %v2197
      %4203 = vmatpush1.msra.mxu0 %v2196
      %4204 = vmatprep.subr.mxu0 %v2203
      %4205 = vmatpush1.msra.mxu0 %v2202
      %4206 = vmatprep.subr.mxu0 %v2209
      %4207 = vmatpush1.msra.mxu0 %v2208
      %4208 = vmatprep.subr.mxu0 %v2215
      %4209 = vmatpush1.msra.mxu0 %v2214
      %4210 = vmatprep.subr.mxu0 %v2221
      %4211 = vmatpush1.msra.mxu0 %v2220
      %4212 = vmatprep.subr.mxu0 %v2227
      %4213 = vmatpush1.msra.mxu0 %v2226
      %4214 = vmatprep.subr.mxu0 %v2233
      %4215 = vmatpush1.msra.mxu0 %v2232
      %4216 = vmatprep.subr.mxu0 %v2239
      %4217 = vmatpush1.msra.mxu0 %v2238
      %4218 = vmatprep.subr.mxu0 %v2245
      %4219 = vmatpush1.msra.mxu0 %v2244
      %4220 = vmatprep.subr.mxu0 %v2251
      %4221 = vmatpush1.msra.mxu0 %v2250
      %4222 = vmatprep.subr.mxu0 %v2257
      %4223 = vmatpush1.msra.mxu0 %v2256
      %4224 = vmatprep.subr.mxu0 %v2263
      %4225 = vmatpush1.msra.mxu0 %v2262
      %4226 = vmatprep.subr.mxu0 %v2269
      %4227 = vmatpush1.msra.mxu0 %v2268
      %4228 = vmatprep.subr.mxu0 %v2275
      %4229 = vmatpush1.msra.mxu0 %v2274
      %4230 = vmatprep.subr.mxu0 %v2281
      %4231 = vmatpush1.msra.mxu0 %v2280
      %4232 = vmatprep.subr.mxu0 %v2287
      %4233 = vmatpush1.msra.mxu0 %v2286
      %4234 = vmatprep.subr.mxu0 %v2293
      %4235 = vmatpush1.msra.mxu0 %v2292
      %4236 = vmatprep.mubr.f32.mxu0 %v559
      %4237 = vmatmul.mubr.f32.gmra.mrb[0].mxu0 %v558
      %v4238 = vpop.f32.mrb[0].mxu0
      %v4239 = vadd.f32 %v4168, %v4238
      %v4240 = vpop.f32.mrb[0].mxu0
      %v4241 = vadd.f32 %v4170, %v4240
      %4242 = vdwg.mxu0
      %v4243 = vtanh.pop %v2961
      %v4244 = vtanh.pop %v2963
      %v4245 = vtanh.pop %v3600
      %v4246 = vtanh.pop %v3602
      %v4247 = vtanh.pop %v4239
      %v4248 = vtanh.pop %v4241
      %v4249 = vld [vmem:[#allocation12] sm:$0xff]
      %v4250 = vld [vmem:[#allocation12 + $0x8] sm:$0xff]
      %v4251 = vld [vmem:[#allocation12 + $0x10] sm:$0xff]
      %v4252 = vld [vmem:[#allocation12 + $0x18] sm:$0xff]
      %v4253 = vld [vmem:[#allocation12 + $0x20] sm:$0xff]
      %v4254 = vld [vmem:[#allocation12 + $0x28] sm:$0xff]
      %v4255 = vld [vmem:[#allocation12 + $0x30] sm:$0xff]
      %v4256 = vld [vmem:[#allocation12 + $0x38] sm:$0xff]
      %v4257 = vld [vmem:[#allocation12 + $0x40] sm:$0xff]
      %v4258 = vld [vmem:[#allocation12 + $0x48] sm:$0xff]
      %v4259 = vld [vmem:[#allocation12 + $0x50] sm:$0xff]
      %v4260 = vld [vmem:[#allocation12 + $0x58] sm:$0xff]
      %v4261 = vld [vmem:[#allocation12 + $0x60] sm:$0xff]
      %v4262 = vld [vmem:[#allocation12 + $0x68] sm:$0xff]
      %v4263 = vld [vmem:[#allocation12 + $0x70] sm:$0xff]
      %v4264 = vld [vmem:[#allocation12 + $0x78] sm:$0xff]
      %v4265 = vld [vmem:[#allocation12 + $0x80] sm:$0xff]
      %v4266 = vld [vmem:[#allocation12 + $0x88] sm:$0xff]
      %v4267 = vld [vmem:[#allocation12 + $0x90] sm:$0xff]
      %v4268 = vld [vmem:[#allocation12 + $0x98] sm:$0xff]
      %v4269 = vld [vmem:[#allocation12 + $0xa0] sm:$0xff]
      %v4270 = vld [vmem:[#allocation12 + $0xa8] sm:$0xff]
      %v4271 = vld [vmem:[#allocation12 + $0xb0] sm:$0xff]
      %v4272 = vld [vmem:[#allocation12 + $0xb8] sm:$0xff]
      %v4273 = vld [vmem:[#allocation12 + $0xc0] sm:$0xff]
      %v4274 = vld [vmem:[#allocation12 + $0xc8] sm:$0xff]
      %v4275 = vld [vmem:[#allocation12 + $0xd0] sm:$0xff]
      %v4276 = vld [vmem:[#allocation12 + $0xd8] sm:$0xff]
      %v4277 = vld [vmem:[#allocation12 + $0xe0] sm:$0xff]
      %v4278 = vld [vmem:[#allocation12 + $0xe8] sm:$0xff]
      %v4279 = vld [vmem:[#allocation12 + $0xf0] sm:$0xff]
      %v4280 = vld [vmem:[#allocation12 + $0xf8] sm:$0xff]
      %v4281 = vld [vmem:[#allocation12 + $0x100] sm:$0xff]
      %v4282 = vld [vmem:[#allocation12 + $0x108] sm:$0xff]
      %v4283 = vld [vmem:[#allocation12 + $0x110] sm:$0xff]
      %v4284 = vld [vmem:[#allocation12 + $0x118] sm:$0xff]
      %v4285 = vld [vmem:[#allocation12 + $0x120] sm:$0xff]
      %v4286 = vld [vmem:[#allocation12 + $0x128] sm:$0xff]
      %v4287 = vld [vmem:[#allocation12 + $0x130] sm:$0xff]
      %v4288 = vld [vmem:[#allocation12 + $0x138] sm:$0xff]
      %v4289 = vld [vmem:[#allocation12 + $0x140] sm:$0xff]
      %v4290 = vld [vmem:[#allocation12 + $0x148] sm:$0xff]
      %v4291 = vld [vmem:[#allocation12 + $0x150] sm:$0xff]
      %v4292 = vld [vmem:[#allocation12 + $0x158] sm:$0xff]
      %v4293 = vld [vmem:[#allocation12 + $0x160] sm:$0xff]
      %v4294 = vld [vmem:[#allocation12 + $0x168] sm:$0xff]
      %v4295 = vld [vmem:[#allocation12 + $0x170] sm:$0xff]
      %v4296 = vld [vmem:[#allocation12 + $0x178] sm:$0xff]
      %v4297 = vld [vmem:[#allocation12 + $0x180] sm:$0xff]
      %v4298 = vld [vmem:[#allocation12 + $0x188] sm:$0xff]
      %v4299 = vld [vmem:[#allocation12 + $0x190] sm:$0xff]
      %v4300 = vld [vmem:[#allocation12 + $0x198] sm:$0xff]
      %v4301 = vld [vmem:[#allocation12 + $0x1a0] sm:$0xff]
      %v4302 = vld [vmem:[#allocation12 + $0x1a8] sm:$0xff]
      %v4303 = vld [vmem:[#allocation12 + $0x1b0] sm:$0xff]
      %v4304 = vld [vmem:[#allocation12 + $0x1b8] sm:$0xff]
      %v4305 = vld [vmem:[#allocation12 + $0x1c0] sm:$0xff]
      %v4306 = vld [vmem:[#allocation12 + $0x1c8] sm:$0xff]
      %v4307 = vld [vmem:[#allocation12 + $0x1d0] sm:$0xff]
      %v4308 = vld [vmem:[#allocation12 + $0x1d8] sm:$0xff]
      %v4309 = vld [vmem:[#allocation12 + $0x1e0] sm:$0xff]
      %v4310 = vld [vmem:[#allocation12 + $0x1e8] sm:$0xff]
      %v4311 = vld [vmem:[#allocation12 + $0x1f0] sm:$0xff]
      %v4312 = vld [vmem:[#allocation12 + $0x1f8] sm:$0xff]
      %v4313 = vld [vmem:[#allocation12 + $0x200] sm:$0xff]
      %v4314 = vld [vmem:[#allocation12 + $0x208] sm:$0xff]
      %v4315 = vld [vmem:[#allocation12 + $0x210] sm:$0xff]
      %v4316 = vld [vmem:[#allocation12 + $0x218] sm:$0xff]
      %v4317 = vld [vmem:[#allocation12 + $0x220] sm:$0xff]
      %v4318 = vld [vmem:[#allocation12 + $0x228] sm:$0xff]
      %v4319 = vld [vmem:[#allocation12 + $0x230] sm:$0xff]
      %v4320 = vld [vmem:[#allocation12 + $0x238] sm:$0xff]
      %v4321 = vld [vmem:[#allocation12 + $0x240] sm:$0xff]
      %v4322 = vld [vmem:[#allocation12 + $0x248] sm:$0xff]
      %v4323 = vld [vmem:[#allocation12 + $0x250] sm:$0xff]
      %v4324 = vld [vmem:[#allocation12 + $0x258] sm:$0xff]
      %v4325 = vld [vmem:[#allocation12 + $0x260] sm:$0xff]
      %v4326 = vld [vmem:[#allocation12 + $0x268] sm:$0xff]
      %v4327 = vld [vmem:[#allocation12 + $0x270] sm:$0xff]
      %v4328 = vld [vmem:[#allocation12 + $0x278] sm:$0xff]
      %v4329 = vld [vmem:[#allocation12 + $0x280] sm:$0xff]
      %v4330 = vld [vmem:[#allocation12 + $0x288] sm:$0xff]
      %v4331 = vld [vmem:[#allocation12 + $0x290] sm:$0xff]
      %v4332 = vld [vmem:[#allocation12 + $0x298] sm:$0xff]
      %v4333 = vld [vmem:[#allocation12 + $0x2a0] sm:$0xff]
      %v4334 = vld [vmem:[#allocation12 + $0x2a8] sm:$0xff]
      %v4335 = vld [vmem:[#allocation12 + $0x2b0] sm:$0xff]
      %v4336 = vld [vmem:[#allocation12 + $0x2b8] sm:$0xff]
      %v4337 = vld [vmem:[#allocation12 + $0x2c0] sm:$0xff]
      %v4338 = vld [vmem:[#allocation12 + $0x2c8] sm:$0xff]
      %v4339 = vld [vmem:[#allocation12 + $0x2d0] sm:$0xff]
      %v4340 = vld [vmem:[#allocation12 + $0x2d8] sm:$0xff]
      %v4341 = vld [vmem:[#allocation12 + $0x2e0] sm:$0xff]
      %v4342 = vld [vmem:[#allocation12 + $0x2e8] sm:$0xff]
      %v4343 = vld [vmem:[#allocation12 + $0x2f0] sm:$0xff]
      %v4344 = vld [vmem:[#allocation12 + $0x2f8] sm:$0xff]
      %v4345 = vld [vmem:[#allocation13] sm:$0x1]
      %v4347 = vlaneseq
      %v4348 = vshrl.u32 %v4347, 7
      %v4349 = vsub.s32 0, %v4348
      %v4350 = vrot.slane %v4345, %v4349
      %4352 = vmatprep.subr.mxu0 0.0
      %4353 = vmatpush1.msra.mxu0 %v4249
      %4354 = vmatprep.subr.mxu0 0.0
      %4355 = vmatpush1.msra.mxu0 %v4250
      %4356 = vmatprep.subr.mxu0 0.0
      %4357 = vmatpush1.msra.mxu0 %v4251
      %4358 = vmatprep.subr.mxu0 0.0
      %4359 = vmatpush1.msra.mxu0 %v4252
      %4360 = vmatprep.subr.mxu0 0.0
      %4361 = vmatpush1.msra.mxu0 %v4253
      %4362 = vmatprep.subr.mxu0 0.0
      %4363 = vmatpush1.msra.mxu0 %v4254
      %4364 = vmatprep.subr.mxu0 0.0
      %4365 = vmatpush1.msra.mxu0 %v4255
      %4366 = vmatprep.subr.mxu0 0.0
      %4367 = vmatpush1.msra.mxu0 %v4256
      %4368 = vmatprep.subr.mxu0 0.0
      %4369 = vmatpush1.msra.mxu0 %v4257
      %4370 = vmatprep.subr.mxu0 0.0
      %4371 = vmatpush1.msra.mxu0 %v4258
      %4372 = vmatprep.subr.mxu0 0.0
      %4373 = vmatpush1.msra.mxu0 %v4259
      %4374 = vmatprep.subr.mxu0 0.0
      %4375 = vmatpush1.msra.mxu0 %v4260
      %4376 = vmatprep.subr.mxu0 0.0
      %4377 = vmatpush1.msra.mxu0 %v4261
      %4378 = vmatprep.subr.mxu0 0.0
      %4379 = vmatpush1.msra.mxu0 %v4262
      %4380 = vmatprep.subr.mxu0 0.0
      %4381 = vmatpush1.msra.mxu0 %v4263
      %4382 = vmatprep.subr.mxu0 0.0
      %4383 = vmatpush1.msra.mxu0 %v4264
      %4384 = vmatprep.subr.mxu0 0.0
      %4385 = vmatpush1.msra.mxu0 %v4265
      %4386 = vmatprep.subr.mxu0 0.0
      %4387 = vmatpush1.msra.mxu0 %v4266
      %4388 = vmatprep.subr.mxu0 0.0
      %4389 = vmatpush1.msra.mxu0 %v4267
      %4390 = vmatprep.subr.mxu0 0.0
      %4391 = vmatpush1.msra.mxu0 %v4268
      %4392 = vmatprep.subr.mxu0 0.0
      %4393 = vmatpush1.msra.mxu0 %v4269
      %4394 = vmatprep.subr.mxu0 0.0
      %4395 = vmatpush1.msra.mxu0 %v4270
      %4396 = vmatprep.subr.mxu0 0.0
      %4397 = vmatpush1.msra.mxu0 %v4271
      %4398 = vmatprep.subr.mxu0 0.0
      %4399 = vmatpush1.msra.mxu0 %v4272
      %4400 = vmatprep.subr.mxu0 0.0
      %4401 = vmatpush1.msra.mxu0 %v4273
      %4402 = vmatprep.subr.mxu0 0.0
      %4403 = vmatpush1.msra.mxu0 %v4274
      %4404 = vmatprep.subr.mxu0 0.0
      %4405 = vmatpush1.msra.mxu0 %v4275
      %4406 = vmatprep.subr.mxu0 0.0
      %4407 = vmatpush1.msra.mxu0 %v4276
      %4408 = vmatprep.subr.mxu0 0.0
      %4409 = vmatpush1.msra.mxu0 %v4277
      %4410 = vmatprep.subr.mxu0 0.0
      %4411 = vmatpush1.msra.mxu0 %v4278
      %4412 = vmatprep.subr.mxu0 0.0
      %4413 = vmatpush1.msra.mxu0 %v4279
      %4414 = vmatprep.subr.mxu0 0.0
      %4415 = vmatpush1.msra.mxu0 %v4280
      %4416 = vmatprep.mubr.f32.mxu0 %v4244
      %4417 = vmatmul.mubr.f32.gmra.mrb[0].mxu0 %v4243
      %v4418 = vpop.f32.mrb[0].mxu0
      %v4419 = vadd.f32 %v4350, %v4418
      %v4420 = vpop.f32.mrb[0].mxu0
      %4421 = vdwg.mxu0
      %4422 = vmatprep.subr.mxu0 0.0
      %4423 = vmatpush1.msra.mxu0 %v4281
      %4424 = vmatprep.subr.mxu0 0.0
      %4425 = vmatpush1.msra.mxu0 %v4282
      %4426 = vmatprep.subr.mxu0 0.0
      %4427 = vmatpush1.msra.mxu0 %v4283
      %4428 = vmatprep.subr.mxu0 0.0
      %4429 = vmatpush1.msra.mxu0 %v4284
      %4430 = vmatprep.subr.mxu0 0.0
      %4431 = vmatpush1.msra.mxu0 %v4285
      %4432 = vmatprep.subr.mxu0 0.0
      %4433 = vmatpush1.msra.mxu0 %v4286
      %4434 = vmatprep.subr.mxu0 0.0
      %4435 = vmatpush1.msra.mxu0 %v4287
      %4436 = vmatprep.subr.mxu0 0.0
      %4437 = vmatpush1.msra.mxu0 %v4288
      %4438 = vmatprep.subr.mxu0 0.0
      %4439 = vmatpush1.msra.mxu0 %v4289
      %4440 = vmatprep.subr.mxu0 0.0
      %4441 = vmatpush1.msra.mxu0 %v4290
      %4442 = vmatprep.subr.mxu0 0.0
      %4443 = vmatpush1.msra.mxu0 %v4291
      %4444 = vmatprep.subr.mxu0 0.0
      %4445 = vmatpush1.msra.mxu0 %v4292
      %4446 = vmatprep.subr.mxu0 0.0
      %4447 = vmatpush1.msra.mxu0 %v4293
      %4448 = vmatprep.subr.mxu0 0.0
      %4449 = vmatpush1.msra.mxu0 %v4294
      %4450 = vmatprep.subr.mxu0 0.0
      %4451 = vmatpush1.msra.mxu0 %v4295
      %4452 = vmatprep.subr.mxu0 0.0
      %4453 = vmatpush1.msra.mxu0 %v4296
      %4454 = vmatprep.subr.mxu0 0.0
      %4455 = vmatpush1.msra.mxu0 %v4297
      %4456 = vmatprep.subr.mxu0 0.0
      %4457 = vmatpush1.msra.mxu0 %v4298
      %4458 = vmatprep.subr.mxu0 0.0
      %4459 = vmatpush1.msra.mxu0 %v4299
      %4460 = vmatprep.subr.mxu0 0.0
      %4461 = vmatpush1.msra.mxu0 %v4300
      %4462 = vmatprep.subr.mxu0 0.0
      %4463 = vmatpush1.msra.mxu0 %v4301
      %4464 = vmatprep.subr.mxu0 0.0
      %4465 = vmatpush1.msra.mxu0 %v4302
      %4466 = vmatprep.subr.mxu0 0.0
      %4467 = vmatpush1.msra.mxu0 %v4303
      %4468 = vmatprep.subr.mxu0 0.0
      %4469 = vmatpush1.msra.mxu0 %v4304
      %4470 = vmatprep.subr.mxu0 0.0
      %4471 = vmatpush1.msra.mxu0 %v4305
      %4472 = vmatprep.subr.mxu0 0.0
      %4473 = vmatpush1.msra.mxu0 %v4306
      %4474 = vmatprep.subr.mxu0 0.0
      %4475 = vmatpush1.msra.mxu0 %v4307
      %4476 = vmatprep.subr.mxu0 0.0
      %4477 = vmatpush1.msra.mxu0 %v4308
      %4478 = vmatprep.subr.mxu0 0.0
      %4479 = vmatpush1.msra.mxu0 %v4309
      %4480 = vmatprep.subr.mxu0 0.0
      %4481 = vmatpush1.msra.mxu0 %v4310
      %4482 = vmatprep.subr.mxu0 0.0
      %4483 = vmatpush1.msra.mxu0 %v4311
      %4484 = vmatprep.subr.mxu0 0.0
      %4485 = vmatpush1.msra.mxu0 %v4312
      %4486 = vmatprep.mubr.f32.mxu0 %v4246
      %4487 = vmatmul.mubr.f32.gmra.mrb[0].mxu0 %v4245
      %v4488 = vpop.f32.mrb[0].mxu0
      %v4489 = vadd.f32 %v4419, %v4488
      %v4490 = vpop.f32.mrb[0].mxu0
      %4491 = vdwg.mxu0
      %4492 = vmatprep.subr.mxu0 0.0
      %4493 = vmatpush1.msra.mxu0 %v4313
      %4494 = vmatprep.subr.mxu0 0.0
      %4495 = vmatpush1.msra.mxu0 %v4314
      %4496 = vmatprep.subr.mxu0 0.0
      %4497 = vmatpush1.msra.mxu0 %v4315
      %4498 = vmatprep.subr.mxu0 0.0
      %4499 = vmatpush1.msra.mxu0 %v4316
      %4500 = vmatprep.subr.mxu0 0.0
      %4501 = vmatpush1.msra.mxu0 %v4317
      %4502 = vmatprep.subr.mxu0 0.0
      %4503 = vmatpush1.msra.mxu0 %v4318
      %4504 = vmatprep.subr.mxu0 0.0
      %4505 = vmatpush1.msra.mxu0 %v4319
      %4506 = vmatprep.subr.mxu0 0.0
      %4507 = vmatpush1.msra.mxu0 %v4320
      %4508 = vmatprep.subr.mxu0 0.0
      %4509 = vmatpush1.msra.mxu0 %v4321
      %4510 = vmatprep.subr.mxu0 0.0
      %4511 = vmatpush1.msra.mxu0 %v4322
      %4512 = vmatprep.subr.mxu0 0.0
      %4513 = vmatpush1.msra.mxu0 %v4323
      %4514 = vmatprep.subr.mxu0 0.0
      %4515 = vmatpush1.msra.mxu0 %v4324
      %4516 = vmatprep.subr.mxu0 0.0
      %4517 = vmatpush1.msra.mxu0 %v4325
      %4518 = vmatprep.subr.mxu0 0.0
      %4519 = vmatpush1.msra.mxu0 %v4326
      %4520 = vmatprep.subr.mxu0 0.0
      %4521 = vmatpush1.msra.mxu0 %v4327
      %4522 = vmatprep.subr.mxu0 0.0
      %4523 = vmatpush1.msra.mxu0 %v4328
      %4524 = vmatprep.subr.mxu0 0.0
      %4525 = vmatpush1.msra.mxu0 %v4329
      %4526 = vmatprep.subr.mxu0 0.0
      %4527 = vmatpush1.msra.mxu0 %v4330
      %4528 = vmatprep.subr.mxu0 0.0
      %4529 = vmatpush1.msra.mxu0 %v4331
      %4530 = vmatprep.subr.mxu0 0.0
      %4531 = vmatpush1.msra.mxu0 %v4332
      %4532 = vmatprep.subr.mxu0 0.0
      %4533 = vmatpush1.msra.mxu0 %v4333
      %4534 = vmatprep.subr.mxu0 0.0
      %4535 = vmatpush1.msra.mxu0 %v4334
      %4536 = vmatprep.subr.mxu0 0.0
      %4537 = vmatpush1.msra.mxu0 %v4335
      %4538 = vmatprep.subr.mxu0 0.0
      %4539 = vmatpush1.msra.mxu0 %v4336
      %4540 = vmatprep.subr.mxu0 0.0
      %4541 = vmatpush1.msra.mxu0 %v4337
      %4542 = vmatprep.subr.mxu0 0.0
      %4543 = vmatpush1.msra.mxu0 %v4338
      %4544 = vmatprep.subr.mxu0 0.0
      %4545 = vmatpush1.msra.mxu0 %v4339
      %4546 = vmatprep.subr.mxu0 0.0
      %4547 = vmatpush1.msra.mxu0 %v4340
      %4548 = vmatprep.subr.mxu0 0.0
      %4549 = vmatpush1.msra.mxu0 %v4341
      %4550 = vmatprep.subr.mxu0 0.0
      %4551 = vmatpush1.msra.mxu0 %v4342
      %4552 = vmatprep.subr.mxu0 0.0
      %4553 = vmatpush1.msra.mxu0 %v4343
      %4554 = vmatprep.subr.mxu0 0.0
      %4555 = vmatpush1.msra.mxu0 %v4344
      %4556 = vmatprep.mubr.f32.mxu0 %v4248
      %4557 = vmatmul.mubr.f32.gmra.mrb[0].mxu0 %v4247
      %v4558 = vpop.f32.mrb[0].mxu0
      %v4559 = vadd.f32 %v4489, %v4558
      %v4560 = vpop.f32.mrb[0].mxu0
      %4561 = vdwg.mxu0
      %4562 = vst [vmem:[#allocation15] sm:$0x3] %v4559
    $region57: #{tpu_custom_call.1} parent=1 // pred_fallthru
      _
    // Predicated region
    $region58: #{tpu_custom_call.1} parent=1 // pred_check
      _
    $region59: #{tpu_custom_call.1} parent=1 // pred_check_branch
      %4564 = sbr.rel (0) target = $region61
    $region60: #{tpu_custom_call.1} parent=1 // pred_region
      %s4566 = ssub.s32 32, 32
      %4567 = vsyncadd [#allocation6], %s4566
      %s4569 = sshll.u32 [#allocation15], 4
      %s4570 = int_to_ptr.vmem [resolvable:$true] %s4569
      %4572 = dma.vmem_to_hbm [thread:$0]  %s4570, 32, %s6, [#allocation6]
    $region61: #{tpu_custom_call.1} parent=1 // pred_fallthru
      _
    // Predicated region
    $region62: #{tpu_custom_call.1} parent=1 // pred_check
      _
    $region63: #{tpu_custom_call.1} parent=1 // pred_check_branch
      %4574 = sbr.rel (0) target = $region65
    $region64: #{tpu_custom_call.1} parent=1 // pred_region
      %4575 = dma.done [#allocation6], 32
    $region65: #{tpu_custom_call.1} parent=1 // pred_fallthru
      _
    %4576 = vsyncpa [#allocation5], 1
    %4577 = vsyncpa [#allocation8], 1
    %4578 = vsyncpa [#allocation11], 1
    %4579 = vsyncpa [#allocation14], 1
    %4580 = vsyncpa [#allocation6], 1

// kernel: tpu_custom_call.1
$region0: #{tpu_custom_call.1}
  #allocation0 [shape = 'u32[]', space=smem, size = 0x4, offset = 0x4, fixed_abs, tag = 'smem constant byte address 0x4 - core index']
  #allocation1 [shape = 'u32[144,128]{1,0:T(1,128)}', space=vmem, size = 0x12000, scoped, tag = 'internal scratch']
  #allocation2 [shape = 'f32[2,768]{1,0:T(2,128)}', space=vmem, size = 0x1800, scoped, tag = 'scratch operand']
  #allocation3 [shape = 'f32[2,768]{1,0:T(2,128)}', space=vmem, size = 0x1800, scoped, tag = 'scratch operand']
  %s0 = inlined_call_operand.hbm [shape: f32[2,8,768], index: 0, kind: input, shape index: {}]
  %s1 = inlined_call_operand.hbm [shape: f32[2,8,768], index: 1, kind: input, shape index: {}]
  %s2 = inlined_call_operand.hbm [shape: f32[2304,768], index: 2, kind: input, shape index: {}]
  %s3 = inlined_call_operand.hbm [shape: f32[1,768], index: 3, kind: input, shape index: {}]
  %s4 = inlined_call_operand.hbm [shape: f32[768,128], index: 4, kind: input, shape index: {}]
  %s5 = inlined_call_operand.hbm [shape: f32[1,128], index: 5, kind: input, shape index: {}]
  %s6 = inlined_call_operand.hbm [shape: f32[2,128], index: 6, kind: output, shape index: {}]
  %s7 = sld [smem:[#allocation0]]
  $region66: #{tpu_custom_call.1} parent=0
    _
  %s9 = ssub.s32 1, %s7
  %s10 = scalar_select 0, %s9, %s7
  $region1: #{tpu_custom_call.1} parent=0
    #allocation4 [shape = 'u8[49152]{0}', space=vmem, size = 0xc000, scoped, tag = 'input window, operand 0, single buffered']
    #allocation5 [shape = 's32[1]{0}', space=sflag, size = 0x4, scoped, tag = 'scoped memory for tpu_custom_call.1']
    #allocation6 [shape = 's32[1]{0}', space=sflag, size = 0x4, scoped, tag = 'scoped memory for tpu_custom_call.1']
    #allocation7 [shape = 'u8[49152]{0}', space=vmem, size = 0xc000, scoped, tag = 'input window, operand 1, single buffered']
    #allocation8 [shape = 's32[1]{0}', space=sflag, size = 0x4, scoped, tag = 'scoped memory for tpu_custom_call.1']
    #allocation9 [shape = 'u8[7077888]{0}', space=vmem, size = 0x6c0000, scoped, tag = 'input window, operand 2, single buffered']
    #allocation10 [shape = 'u8[3072]{0}', space=vmem, size = 0xc00, scoped, tag = 'input window, operand 3, single buffered']
    #allocation11 [shape = 's32[1]{0}', space=sflag, size = 0x4, scoped, tag = 'scoped memory for tpu_custom_call.1']
    #allocation12 [shape = 'u8[393216]{0}', space=vmem, size = 0x60000, scoped, tag = 'input window, operand 4, single buffered']
    #allocation13 [shape = 'u8[512]{0}', space=vmem, size = 0x400, scoped, tag = 'input window, operand 5, single buffered']
    #allocation14 [shape = 's32[1]{0}', space=sflag, size = 0x4, scoped, tag = 'scoped memory for tpu_custom_call.1']
    #allocation15 [shape = 'u8[1024]{0}', space=vmem, size = 0x400, scoped, tag = 'output window, operand 0, single buffered']
    %11 = vsyncpa [#allocation5], 0
    %12 = vsyncpa [#allocation8], 0
    %13 = vsyncpa [#allocation11], 0
    %14 = vsyncpa [#allocation14], 0
    %15 = vsyncpa [#allocation6], 0
    // Predicated region
    $region2: #{tpu_custom_call.1} parent=1 // pred_check
      _
    $region3: #{tpu_custom_call.1} parent=1 // pred_check_branch
      %17 = sbr.rel (0) target = $region5
    $region4: #{tpu_custom_call.1} parent=1 // pred_region
      %s19 = ssub.s32 1536, 1536
      %20 = vsyncadd [#allocation5], %s19
      %s21 = sshll.u32 [#allocation4], 4
      %s22 = int_to_ptr.vmem [resolvable:$true] %s21
      %27 = dma.hbm_to_vmem [thread:$0]  %s0, 1536, %s22, [#allocation5], 768, 768, 48
    $region5: #{tpu_custom_call.1} parent=1 // pred_fallthru
      _
    // Predicated region
    $region6: #{tpu_custom_call.1} parent=1 // pred_check
      _
    $region7: #{tpu_custom_call.1} parent=1 // pred_check_branch
      %29 = sbr.rel (0) target = $region9
    $region8: #{tpu_custom_call.1} parent=1 // pred_region
      %s31 = ssub.s32 1536, 1536
      %32 = vsyncadd [#allocation8], %s31
      %s33 = sshll.u32 [#allocation7], 4
      %s34 = int_to_ptr.vmem [resolvable:$true] %s33
      %39 = dma.hbm_to_vmem [thread:$0]  %s1, 1536, %s34, [#allocation8], 768, 768, 48
    $region9: #{tpu_custom_call.1} parent=1 // pred_fallthru
      _
    // Predicated region
    $region10: #{tpu_custom_call.1} parent=1 // pred_check
      _
    $region11: #{tpu_custom_call.1} parent=1 // pred_check_branch
      %41 = sbr.rel (0) target = $region13
    $region12: #{tpu_custom_call.1} parent=1 // pred_region
      %s43 = ssub.s32 221184, 221184
      %44 = vsyncadd [#allocation8], %s43
      %s45 = sshll.u32 [#allocation9], 4
      %s46 = int_to_ptr.vmem [resolvable:$true] %s45
      %51 = dma.hbm_to_vmem [thread:$0]  %s2, 221184, %s46, [#allocation8], 768, 768, 48
    $region13: #{tpu_custom_call.1} parent=1 // pred_fallthru
      _
    // Predicated region
    $region14: #{tpu_custom_call.1} parent=1 // pred_check
      _
    $region15: #{tpu_custom_call.1} parent=1 // pred_check_branch
      %53 = sbr.rel (0) target = $region17
    $region16: #{tpu_custom_call.1} parent=1 // pred_region
      %s55 = ssub.s32 96, 96
      %56 = vsyncadd [#allocation11], %s55
      %s58 = sshll.u32 [#allocation10], 4
      %s59 = int_to_ptr.vmem [resolvable:$true] %s58
      %61 = dma.hbm_to_vmem [thread:$0]  %s3, 96, %s59, [#allocation11]
    $region17: #{tpu_custom_call.1} parent=1 // pred_fallthru
      _
    // Predicated region
    $region18: #{tpu_custom_call.1} parent=1 // pred_check
      _
    $region19: #{tpu_custom_call.1} parent=1 // pred_check_branch
      %63 = sbr.rel (0) target = $region21
    $region20: #{tpu_custom_call.1} parent=1 // pred_region
      %s65 = ssub.s32 12288, 12288
      %66 = vsyncadd [#allocation11], %s65
      %s67 = sshll.u32 [#allocation12], 4
      %s68 = int_to_ptr.vmem [resolvable:$true] %s67
      %73 = dma.hbm_to_vmem [thread:$0]  %s4, 12288, %s68, [#allocation11], 128, 128, 8
    $region21: #{tpu_custom_call.1} parent=1 // pred_fallthru
      _
    // Predicated region
    $region22: #{tpu_custom_call.1} parent=1 // pred_check
      _
    $region23: #{tpu_custom_call.1} parent=1 // pred_check_branch
      %75 = sbr.rel (0) target = $region25
    $region24: #{tpu_custom_call.1} parent=1 // pred_region
      %s77 = ssub.s32 16, 16
      %78 = vsyncadd [#allocation14], %s77
      %s80 = sshll.u32 [#allocation13], 4
      %s81 = int_to_ptr.vmem [resolvable:$true] %s80
      %83 = dma.hbm_to_vmem [thread:$0]  %s5, 16, %s81, [#allocation14]
    $region25: #{tpu_custom_call.1} parent=1 // pred_fallthru
      _
    // Predicated region
    $region26: #{tpu_custom_call.1} parent=1 // pred_check
      _
    $region27: #{tpu_custom_call.1} parent=1 // pred_check_branch
      %85 = sbr.rel (0) target = $region29
    $region28: #{tpu_custom_call.1} parent=1 // pred_region
      %86 = dma.done [#allocation5], 1536
    $region29: #{tpu_custom_call.1} parent=1 // pred_fallthru
      _
    // Predicated region
    $region30: #{tpu_custom_call.1} parent=1 // pred_check
      _
    $region31: #{tpu_custom_call.1} parent=1 // pred_check_branch
      %88 = sbr.rel (0) target = $region33
    $region32: #{tpu_custom_call.1} parent=1 // pred_region
      %89 = dma.done [#allocation8], 1536
    $region33: #{tpu_custom_call.1} parent=1 // pred_fallthru
      _
    // Predicated region
    $region34: #{tpu_custom_call.1} parent=1 // pred_check
      _
    $region35: #{tpu_custom_call.1} parent=1 // pred_check_branch
      %91 = sbr.rel (0) target = $region37
    $region36: #{tpu_custom_call.1} parent=1 // pred_region
      %92 = dma.done [#allocation8], 221184
    $region37: #{tpu_custom_call.1} parent=1 // pred_fallthru
      _
    // Predicated region
    $region38: #{tpu_custom_call.1} parent=1 // pred_check
      _
    $region39: #{tpu_custom_call.1} parent=1 // pred_check_branch
      %94 = sbr.rel (0) target = $region41
    $region40: #{tpu_custom_call.1} parent=1 // pred_region
      %95 = dma.done [#allocation11], 96
    $region41: #{tpu_custom_call.1} parent=1 // pred_fallthru
      _
    // Predicated region
    $region42: #{tpu_custom_call.1} parent=1 // pred_check
      _
    $region43: #{tpu_custom_call.1} parent=1 // pred_check_branch
      %97 = sbr.rel (0) target = $region45
    $region44: #{tpu_custom_call.1} parent=1 // pred_region
      %98 = dma.done [#allocation11], 12288
    $region45: #{tpu_custom_call.1} parent=1 // pred_fallthru
      _
    // Predicated region
    $region46: #{tpu_custom_call.1} parent=1 // pred_check
      _
    $region47: #{tpu_custom_call.1} parent=1 // pred_check_branch
      %100 = sbr.rel (0) target = $region49
    $region48: #{tpu_custom_call.1} parent=1 // pred_region
      %101 = dma.done [#allocation14], 16
    $region49: #{tpu_custom_call.1} parent=1 // pred_fallthru
      _
    %p102 = scmp.eq.s32.totalorder 0, 0
    // Predicated region
    $region50: #{tpu_custom_call.1} parent=1 // pred_check
      %p103 = pneg %p102
    $region51: #{tpu_custom_call.1} parent=1 // pred_check_branch
      %105 = sbr.rel (%p103) target = $region53
    $region52: #{tpu_custom_call.1} parent=1 // pred_region
      %106 = vst [vmem:[#allocation2] sm:$0xff] 0.0
      %107 = vst [vmem:[#allocation2 + $0x8] sm:$0xf] 0.0
      %108 = vst [vmem:[#allocation3] sm:$0xff] 0.0
      %109 = vst [vmem:[#allocation3 + $0x8] sm:$0xf] 0.0
    $region53: #{tpu_custom_call.1} parent=1 // pred_fallthru
      _
    %v110 = vld [vmem:[#allocation4] sm:$0xff]
    %v111 = vld [vmem:[#allocation4 + $0x8] sm:$0xff]
    %v112 = vld [vmem:[#allocation4 + $0x10] sm:$0xff]
    %v113 = vld [vmem:[#allocation4 + $0x18] sm:$0xff]
    %v114 = vld [vmem:[#allocation4 + $0x20] sm:$0xff]
    %v115 = vld [vmem:[#allocation4 + $0x28] sm:$0xff]
    %v116 = vld [vmem:[#allocation4 + $0x30] sm:$0xff]
    %v117 = vld [vmem:[#allocation4 + $0x38] sm:$0xff]
    %v118 = vld [vmem:[#allocation4 + $0x40] sm:$0xff]
    %v119 = vld [vmem:[#allocation4 + $0x48] sm:$0xff]
    %v120 = vld [vmem:[#allocation4 + $0x50] sm:$0xff]
    %v121 = vld [vmem:[#allocation4 + $0x58] sm:$0xff]
    %v122 = vld [vmem:[#allocation7] sm:$0xff]
    %v123 = vld [vmem:[#allocation7 + $0x8] sm:$0xff]
    %v124 = vld [vmem:[#allocation7 + $0x10] sm:$0xff]
    %v125 = vld [vmem:[#allocation7 + $0x18] sm:$0xff]
    %v126 = vld [vmem:[#allocation7 + $0x20] sm:$0xff]
    %v127 = vld [vmem:[#allocation7 + $0x28] sm:$0xff]
    %v128 = vld [vmem:[#allocation7 + $0x30] sm:$0xff]
    %v129 = vld [vmem:[#allocation7 + $0x38] sm:$0xff]
    %v130 = vld [vmem:[#allocation7 + $0x40] sm:$0xff]
    %v131 = vld [vmem:[#allocation7 + $0x48] sm:$0xff]
    %v132 = vld [vmem:[#allocation7 + $0x50] sm:$0xff]
    %v133 = vld [vmem:[#allocation7 + $0x58] sm:$0xff]
    %v134 = vld [vmem:[#allocation2] sm:$0xff]
    %v135 = vld [vmem:[#allocation2 + $0x8] sm:$0xf]
    %v136 = vrot.slane %v110, 4
    %v137 = vadd.f32 %v110, %v136
    %v138 = vrot.slane %v137, 2
    %v139 = vadd.f32 %v137, %v138
    %v140 = vrot.slane %v139, 1
    %v141 = vadd.f32 %v139, %v140
    %v142 = vrot.slane %v111, 4
    %v143 = vadd.f32 %v111, %v142
    %v144 = vrot.slane %v143, 2
    %v145 = vadd.f32 %v143, %v144
    %v146 = vrot.slane %v145, 1
    %v147 = vadd.f32 %v145, %v146
    %v148 = vrot.slane %v112, 4
    %v149 = vadd.f32 %v112, %v148
    %v150 = vrot.slane %v149, 2
    %v151 = vadd.f32 %v149, %v150
    %v152 = vrot.slane %v151, 1
    %v153 = vadd.f32 %v151, %v152
    %v154 = vrot.slane %v113, 4
    %v155 = vadd.f32 %v113, %v154
    %v156 = vrot.slane %v155, 2
    %v157 = vadd.f32 %v155, %v156
    %v158 = vrot.slane %v157, 1
    %v159 = vadd.f32 %v157, %v158
    %v160 = vrot.slane %v114, 4
    %v161 = vadd.f32 %v114, %v160
    %v162 = vrot.slane %v161, 2
    %v163 = vadd.f32 %v161, %v162
    %v164 = vrot.slane %v163, 1
    %v165 = vadd.f32 %v163, %v164
    %v166 = vrot.slane %v115, 4
    %v167 = vadd.f32 %v115, %v166
    %v168 = vrot.slane %v167, 2
    %v169 = vadd.f32 %v167, %v168
    %v170 = vrot.slane %v169, 1
    %v171 = vadd.f32 %v169, %v170
    %v172 = vrot.slane %v116, 4
    %v173 = vadd.f32 %v116, %v172
    %v174 = vrot.slane %v173, 2
    %v175 = vadd.f32 %v173, %v174
    %v176 = vrot.slane %v175, 1
    %v177 = vadd.f32 %v175, %v176
    %v178 = vrot.slane %v117, 4
    %v179 = vadd.f32 %v117, %v178
    %v180 = vrot.slane %v179, 2
    %v181 = vadd.f32 %v179, %v180
    %v182 = vrot.slane %v181, 1
    %v183 = vadd.f32 %v181, %v182
    %v184 = vrot.slane %v118, 4
    %v185 = vadd.f32 %v118, %v184
    %v186 = vrot.slane %v185, 2
    %v187 = vadd.f32 %v185, %v186
    %v188 = vrot.slane %v187, 1
    %v189 = vadd.f32 %v187, %v188
    %v190 = vrot.slane %v119, 4
    %v191 = vadd.f32 %v119, %v190
    %v192 = vrot.slane %v191, 2
    %v193 = vadd.f32 %v191, %v192
    %v194 = vrot.slane %v193, 1
    %v195 = vadd.f32 %v193, %v194
    %v196 = vrot.slane %v120, 4
    %v197 = vadd.f32 %v120, %v196
    %v198 = vrot.slane %v197, 2
    %v199 = vadd.f32 %v197, %v198
    %v200 = vrot.slane %v199, 1
    %v201 = vadd.f32 %v199, %v200
    %v202 = vrot.slane %v121, 4
    %v203 = vadd.f32 %v121, %v202
    %v204 = vrot.slane %v203, 2
    %v205 = vadd.f32 %v203, %v204
    %v206 = vrot.slane %v205, 1
    %v207 = vadd.f32 %v205, %v206
    %v220 = vcombine.low %v141, %v147
    %v221 = vcombine.low %v153, %v159
    %v223 = vunpack.c.l.s4 1983009808
    %v224 = vunpack.c.0.s8 %v223
    %v225 = vlaneseq
    %v226 = vshrl.u32 %v225, 7
    %v227 = vsub.s32 %v224, %v226
    %v228 = vrot.slane %v220, %v227
    %v230 = vunpack.c.l.s4 1983009808
    %v231 = vunpack.c.0.s8 %v230
    %v232 = vlaneseq
    %v233 = vshrl.u32 %v232, 7
    %v234 = vsub.s32 %v231, %v233
    %v235 = vrot.slane %v221, %v234
    %v236 = vcombine.low %v228, %v235
    %v237 = vcombine.low %v165, %v171
    %v239 = vunpack.c.l.s4 1983009808
    %v240 = vunpack.c.0.s8 %v239
    %v241 = vlaneseq
    %v242 = vshrl.u32 %v241, 7
    %v243 = vsub.s32 %v240, %v242
    %v244 = vrot.slane %v237, %v243
    %v245 = vcombine.low %v177, %v183
    %v246 = vcombine.low %v189, %v195
    %v248 = vunpack.c.l.s4 1983009808
    %v249 = vunpack.c.0.s8 %v248
    %v250 = vlaneseq
    %v251 = vshrl.u32 %v250, 7
    %v252 = vsub.s32 %v249, %v251
    %v253 = vrot.slane %v245, %v252
    %v255 = vunpack.c.l.s4 1983009808
    %v256 = vunpack.c.0.s8 %v255
    %v257 = vlaneseq
    %v258 = vshrl.u32 %v257, 7
    %v259 = vsub.s32 %v256, %v258
    %v260 = vrot.slane %v246, %v259
    %v261 = vcombine.low %v253, %v260
    %v262 = vcombine.low %v201, %v207
    %v264 = vunpack.c.l.s4 1983009808
    %v265 = vunpack.c.0.s8 %v264
    %v266 = vlaneseq
    %v267 = vshrl.u32 %v266, 7
    %v268 = vsub.s32 %v265, %v267
    %v269 = vrot.slane %v262, %v268
    %vm270 = vcmask 1044484
    %v271 = vsel %vm270, %v236, %v236
    %vm272 = vcmask 1046534
    %v273 = vsel %vm272, %v236, %v271
    %v274 = vrot.slane %v261, 7
    %vm275 = vcmask 1041409
    %v276 = vsel %vm275, %v274, %v273
    %vm277 = vcmask 1043459
    %v278 = vsel %vm277, %v274, %v276
    %vm279 = vcmask 1045509
    %v280 = vsel %vm279, %v274, %v278
    %vm281 = vcmask 1047559
    %v282 = vsel %vm281, %v274, %v280
    %v283 = vsel %vm270, %v244, %v244
    %v284 = vsel %vm272, %v244, %v283
    %v285 = vrot.slane %v269, 7
    %v286 = vsel %vm275, %v285, %v284
    %v287 = vsel %vm277, %v285, %v286
    %v288 = vsel %vm279, %v285, %v287
    %v289 = vsel %vm281, %v285, %v288
    %v292 = vadd.f32 %v134, %v282
    %v293 = vadd.f32 %v135, %v289
    %294 = vst [vmem:[#allocation2] sm:$0xff] %v292
    %295 = vst [vmem:[#allocation2 + $0x8] sm:$0xf] %v293
    %v296 = vld [vmem:[#allocation3] sm:$0xff]
    %v297 = vld [vmem:[#allocation3 + $0x8] sm:$0xf]
    %v298 = vrot.slane %v122, 4
    %v299 = vadd.f32 %v122, %v298
    %v300 = vrot.slane %v299, 2
    %v301 = vadd.f32 %v299, %v300
    %v302 = vrot.slane %v301, 1
    %v303 = vadd.f32 %v301, %v302
    %v304 = vrot.slane %v123, 4
    %v305 = vadd.f32 %v123, %v304
    %v306 = vrot.slane %v305, 2
    %v307 = vadd.f32 %v305, %v306
    %v308 = vrot.slane %v307, 1
    %v309 = vadd.f32 %v307, %v308
    %v310 = vrot.slane %v124, 4
    %v311 = vadd.f32 %v124, %v310
    %v312 = vrot.slane %v311, 2
    %v313 = vadd.f32 %v311, %v312
    %v314 = vrot.slane %v313, 1
    %v315 = vadd.f32 %v313, %v314
    %v316 = vrot.slane %v125, 4
    %v317 = vadd.f32 %v125, %v316
    %v318 = vrot.slane %v317, 2
    %v319 = vadd.f32 %v317, %v318
    %v320 = vrot.slane %v319, 1
    %v321 = vadd.f32 %v319, %v320
    %v322 = vrot.slane %v126, 4
    %v323 = vadd.f32 %v126, %v322
    %v324 = vrot.slane %v323, 2
    %v325 = vadd.f32 %v323, %v324
    %v326 = vrot.slane %v325, 1
    %v327 = vadd.f32 %v325, %v326
    %v328 = vrot.slane %v127, 4
    %v329 = vadd.f32 %v127, %v328
    %v330 = vrot.slane %v329, 2
    %v331 = vadd.f32 %v329, %v330
    %v332 = vrot.slane %v331, 1
    %v333 = vadd.f32 %v331, %v332
    %v334 = vrot.slane %v128, 4
    %v335 = vadd.f32 %v128, %v334
    %v336 = vrot.slane %v335, 2
    %v337 = vadd.f32 %v335, %v336
    %v338 = vrot.slane %v337, 1
    %v339 = vadd.f32 %v337, %v338
    %v340 = vrot.slane %v129, 4
    %v341 = vadd.f32 %v129, %v340
    %v342 = vrot.slane %v341, 2
    %v343 = vadd.f32 %v341, %v342
    %v344 = vrot.slane %v343, 1
    %v345 = vadd.f32 %v343, %v344
    %v346 = vrot.slane %v130, 4
    %v347 = vadd.f32 %v130, %v346
    %v348 = vrot.slane %v347, 2
    %v349 = vadd.f32 %v347, %v348
    %v350 = vrot.slane %v349, 1
    %v351 = vadd.f32 %v349, %v350
    %v352 = vrot.slane %v131, 4
    %v353 = vadd.f32 %v131, %v352
    %v354 = vrot.slane %v353, 2
    %v355 = vadd.f32 %v353, %v354
    %v356 = vrot.slane %v355, 1
    %v357 = vadd.f32 %v355, %v356
    %v358 = vrot.slane %v132, 4
    %v359 = vadd.f32 %v132, %v358
    %v360 = vrot.slane %v359, 2
    %v361 = vadd.f32 %v359, %v360
    %v362 = vrot.slane %v361, 1
    %v363 = vadd.f32 %v361, %v362
    %v364 = vrot.slane %v133, 4
    %v365 = vadd.f32 %v133, %v364
    %v366 = vrot.slane %v365, 2
    %v367 = vadd.f32 %v365, %v366
    %v368 = vrot.slane %v367, 1
    %v369 = vadd.f32 %v367, %v368
    %v382 = vcombine.low %v303, %v309
    %v383 = vcombine.low %v315, %v321
    %v385 = vunpack.c.l.s4 1983009808
    %v386 = vunpack.c.0.s8 %v385
    %v387 = vlaneseq
    %v388 = vshrl.u32 %v387, 7
    %v389 = vsub.s32 %v386, %v388
    %v390 = vrot.slane %v382, %v389
    %v392 = vunpack.c.l.s4 1983009808
    %v393 = vunpack.c.0.s8 %v392
    %v394 = vlaneseq
    %v395 = vshrl.u32 %v394, 7
    %v396 = vsub.s32 %v393, %v395
    %v397 = vrot.slane %v383, %v396
    %v398 = vcombine.low %v390, %v397
    %v399 = vcombine.low %v327, %v333
    %v401 = vunpack.c.l.s4 1983009808
    %v402 = vunpack.c.0.s8 %v401
    %v403 = vlaneseq
    %v404 = vshrl.u32 %v403, 7
    %v405 = vsub.s32 %v402, %v404
    %v406 = vrot.slane %v399, %v405
    %v407 = vcombine.low %v339, %v345
    %v408 = vcombine.low %v351, %v357
    %v410 = vunpack.c.l.s4 1983009808
    %v411 = vunpack.c.0.s8 %v410
    %v412 = vlaneseq
    %v413 = vshrl.u32 %v412, 7
    %v414 = vsub.s32 %v411, %v413
    %v415 = vrot.slane %v407, %v414
    %v417 = vunpack.c.l.s4 1983009808
    %v418 = vunpack.c.0.s8 %v417
    %v419 = vlaneseq
    %v420 = vshrl.u32 %v419, 7
    %v421 = vsub.s32 %v418, %v420
    %v422 = vrot.slane %v408, %v421
    %v423 = vcombine.low %v415, %v422
    %v424 = vcombine.low %v363, %v369
    %v426 = vunpack.c.l.s4 1983009808
    %v427 = vunpack.c.0.s8 %v426
    %v428 = vlaneseq
    %v429 = vshrl.u32 %v428, 7
    %v430 = vsub.s32 %v427, %v429
    %v431 = vrot.slane %v424, %v430
    %v432 = vsel %vm270, %v398, %v398
    %v433 = vsel %vm272, %v398, %v432
    %v434 = vrot.slane %v423, 7
    %v435 = vsel %vm275, %v434, %v433
    %v436 = vsel %vm277, %v434, %v435
    %v437 = vsel %vm279, %v434, %v436
    %v438 = vsel %vm281, %v434, %v437
    %v439 = vsel %vm270, %v406, %v406
    %v440 = vsel %vm272, %v406, %v439
    %v441 = vrot.slane %v431, 7
    %v442 = vsel %vm275, %v441, %v440
    %v443 = vsel %vm277, %v441, %v442
    %v444 = vsel %vm279, %v441, %v443
    %v445 = vsel %vm281, %v441, %v444
    %v448 = vadd.f32 %v296, %v438
    %v449 = vadd.f32 %v297, %v445
    %450 = vst [vmem:[#allocation3] sm:$0xff] %v448
    %451 = vst [vmem:[#allocation3 + $0x8] sm:$0xf] %v449
    // Predicated region
    $region54: #{tpu_custom_call.1} parent=1 // pred_check
      %p452 = pneg %p102
    $region55: #{tpu_custom_call.1} parent=1 // pred_check_branch
      %454 = sbr.rel (%p452) target = $region57
    $region56: #{tpu_custom_call.1} parent=1 // pred_region
      %v455 = vld [vmem:[#allocation2] sm:$0xff]
      %v456 = vld [vmem:[#allocation2 + $0x8] sm:$0xf]
      %v457 = vmul.f32 %v455, 0.125
      %v458 = vmul.f32 %v456, 0.125
      %v459 = vld [vmem:[#allocation3] sm:$0xff]
      %v460 = vld [vmem:[#allocation3 + $0x8] sm:$0xf]
      %v461 = vmul.f32 %v459, 0.125
      %v462 = vmul.f32 %v460, 0.125
      %v463 = vsub.f32 %v457, %v461
      %v464 = vsub.f32 %v458, %v462
      %v465 = vand.u32 2147483647, %v463
      %v466 = vand.u32 2147483647, %v464
      %v469 = vcombine.high %v457, %v457
      %v471 = vunpack.c.l.s4 1983009808
      %v472 = vunpack.c.0.s8 %v471
      %v473 = vlaneseq
      %v474 = vshrl.u32 %v473, 7
      %v475 = vsub.s32 %v472, %v474
      %v476 = vrot.slane %v457, %v475
      %v478 = vunpack.c.l.s4 1983009808
      %v479 = vunpack.c.0.s8 %v478
      %v480 = vlaneseq
      %v481 = vshrl.u32 %v480, 7
      %v482 = vsub.s32 %v479, %v481
      %v483 = vrot.slane %v469, %v482
      %v484 = vcombine.high %v476, %v476
      %v485 = vcombine.high %v483, %v483
      %v487 = vunpack.c.l.s4 1983009808
      %v488 = vunpack.c.0.s8 %v487
      %v489 = vlaneseq
      %v490 = vshrl.u32 %v489, 7
      %v491 = vsub.s32 %v488, %v490
      %v492 = vrot.slane %v458, %v491
      %v493 = vcombine.high %v492, %v492
      %v502 = vcombine.high %v461, %v461
      %v504 = vunpack.c.l.s4 1983009808
      %v505 = vunpack.c.0.s8 %v504
      %v506 = vlaneseq
      %v507 = vshrl.u32 %v506, 7
      %v508 = vsub.s32 %v505, %v507
      %v509 = vrot.slane %v461, %v508
      %v511 = vunpack.c.l.s4 1983009808
      %v512 = vunpack.c.0.s8 %v511
      %v513 = vlaneseq
      %v514 = vshrl.u32 %v513, 7
      %v515 = vsub.s32 %v512, %v514
      %v516 = vrot.slane %v502, %v515
      %v517 = vcombine.high %v509, %v509
      %v518 = vcombine.high %v516, %v516
      %v520 = vunpack.c.l.s4 1983009808
      %v521 = vunpack.c.0.s8 %v520
      %v522 = vlaneseq
      %v523 = vshrl.u32 %v522, 7
      %v524 = vsub.s32 %v521, %v523
      %v525 = vrot.slane %v462, %v524
      %v526 = vcombine.high %v525, %v525
      %v535 = vcombine.high %v465, %v465
      %v537 = vunpack.c.l.s4 1983009808
      %v538 = vunpack.c.0.s8 %v537
      %v539 = vlaneseq
      %v540 = vshrl.u32 %v539, 7
      %v541 = vsub.s32 %v538, %v540
      %v542 = vrot.slane %v465, %v541
      %v544 = vunpack.c.l.s4 1983009808
      %v545 = vunpack.c.0.s8 %v544
      %v546 = vlaneseq
      %v547 = vshrl.u32 %v546, 7
      %v548 = vsub.s32 %v545, %v547
      %v549 = vrot.slane %v535, %v548
      %v550 = vcombine.high %v542, %v542
      %v551 = vcombine.high %v549, %v549
      %v553 = vunpack.c.l.s4 1983009808
      %v554 = vunpack.c.0.s8 %v553
      %v555 = vlaneseq
      %v556 = vshrl.u32 %v555, 7
      %v557 = vsub.s32 %v554, %v556
      %v558 = vrot.slane %v466, %v557
      %v559 = vcombine.high %v558, %v558
      %v566 = vld [vmem:[#allocation9] sm:$0xff]
      %v567 = vld [vmem:[#allocation9 + $0x8] sm:$0xff]
      %v568 = vld [vmem:[#allocation9 + $0x10] sm:$0xff]
      %v569 = vld [vmem:[#allocation9 + $0x18] sm:$0xff]
      %v570 = vld [vmem:[#allocation9 + $0x20] sm:$0xff]
      %v571 = vld [vmem:[#allocation9 + $0x28] sm:$0xff]
      %v572 = vld [vmem:[#allocation9 + $0x30] sm:$0xff]
      %v573 = vld [vmem:[#allocation9 + $0x38] sm:$0xff]
      %v574 = vld [vmem:[#allocation9 + $0x40] sm:$0xff]
      %v575 = vld [vmem:[#allocation9 + $0x48] sm:$0xff]
      %v576 = vld [vmem:[#allocation9 + $0x50] sm:$0xff]
      %v577 = vld [vmem:[#allocation9 + $0x58] sm:$0xff]
      %v578 = vld [vmem:[#allocation9 + $0x60] sm:$0xff]
      %v579 = vld [vmem:[#allocation9 + $0x68] sm:$0xff]
      %v580 = vld [vmem:[#allocation9 + $0x70] sm:$0xff]
      %v581 = vld [vmem:[#allocation9 + $0x78] sm:$0xff]
      %v582 = vld [vmem:[#allocation9 + $0x80] sm:$0xff]
      %v583 = vld [vmem:[#allocation9 + $0x88] sm:$0xff]
      %v584 = vld [vmem:[#allocation9 + $0x90] sm:$0xff]
      %v585 = vld [vmem:[#allocation9 + $0x98] sm:$0xff]
      %v586 = vld [vmem:[#allocation9 + $0xa0] sm:$0xff]
      %v587 = vld [vmem:[#allocation9 + $0xa8] sm:$0xff]
      %v588 = vld [vmem:[#allocation9 + $0xb0] sm:$0xff]
      %v589 = vld [vmem:[#allocation9 + $0xb8] sm:$0xff]
      %v590 = vld [vmem:[#allocation9 + $0xc0] sm:$0xff]
      %v591 = vld [vmem:[#allocation9 + $0xc8] sm:$0xff]
      %v592 = vld [vmem:[#allocation9 + $0xd0] sm:$0xff]
      %v593 = vld [vmem:[#allocation9 + $0xd8] sm:$0xff]
      %v594 = vld [vmem:[#allocation9 + $0xe0] sm:$0xff]
      %v595 = vld [vmem:[#allocation9 + $0xe8] sm:$0xff]
      %v596 = vld [vmem:[#allocation9 + $0xf0] sm:$0xff]
      %v597 = vld [vmem:[#allocation9 + $0xf8] sm:$0xff]
      %v598 = vld [vmem:[#allocation9 + $0x100] sm:$0xff]
      %v599 = vld [vmem:[#allocation9 + $0x108] sm:$0xff]
      %v600 = vld [vmem:[#allocation9 + $0x110] sm:$0xff]
      %v601 = vld [vmem:[#allocation9 + $0x118] sm:$0xff]
      %v602 = vld [vmem:[#allocation9 + $0x120] sm:$0xff]
      %v603 = vld [vmem:[#allocation9 + $0x128] sm:$0xff]
      %v604 = vld [vmem:[#allocation9 + $0x130] sm:$0xff]
      %v605 = vld [vmem:[#allocation9 + $0x138] sm:$0xff]
      %v606 = vld [vmem:[#allocation9 + $0x140] sm:$0xff]
      %v607 = vld [vmem:[#allocation9 + $0x148] sm:$0xff]
      %v608 = vld [vmem:[#allocation9 + $0x150] sm:$0xff]
      %v609 = vld [vmem:[#allocation9 + $0x158] sm:$0xff]
      %v610 = vld [vmem:[#allocation9 + $0x160] sm:$0xff]
      %v611 = vld [vmem:[#allocation9 + $0x168] sm:$0xff]
      %v612 = vld [vmem:[#allocation9 + $0x170] sm:$0xff]
      %v613 = vld [vmem:[#allocation9 + $0x178] sm:$0xff]
      %v614 = vld [vmem:[#allocation9 + $0x180] sm:$0xff]
      %v615 = vld [vmem:[#allocation9 + $0x188] sm:$0xff]
      %v616 = vld [vmem:[#allocation9 + $0x190] sm:$0xff]
      %v617 = vld [vmem:[#allocation9 + $0x198] sm:$0xff]
      %v618 = vld [vmem:[#allocation9 + $0x1a0] sm:$0xff]
      %v619 = vld [vmem:[#allocation9 + $0x1a8] sm:$0xff]
      %v620 = vld [vmem:[#allocation9 + $0x1b0] sm:$0xff]
      %v621 = vld [vmem:[#allocation9 + $0x1b8] sm:$0xff]
      %v622 = vld [vmem:[#allocation9 + $0x1c0] sm:$0xff]
      %v623 = vld [vmem:[#allocation9 + $0x1c8] sm:$0xff]
      %v624 = vld [vmem:[#allocation9 + $0x1d0] sm:$0xff]
      %v625 = vld [vmem:[#allocation9 + $0x1d8] sm:$0xff]
      %v626 = vld [vmem:[#allocation9 + $0x1e0] sm:$0xff]
      %v627 = vld [vmem:[#allocation9 + $0x1e8] sm:$0xff]
      %v628 = vld [vmem:[#allocation9 + $0x1f0] sm:$0xff]
      %v629 = vld [vmem:[#allocation9 + $0x1f8] sm:$0xff]
      %v630 = vld [vmem:[#allocation9 + $0x200] sm:$0xff]
      %v631 = vld [vmem:[#allocation9 + $0x208] sm:$0xff]
      %v632 = vld [vmem:[#allocation9 + $0x210] sm:$0xff]
      %v633 = vld [vmem:[#allocation9 + $0x218] sm:$0xff]
      %v634 = vld [vmem:[#allocation9 + $0x220] sm:$0xff]
      %v635 = vld [vmem:[#allocation9 + $0x228] sm:$0xff]
      %v636 = vld [vmem:[#allocation9 + $0x230] sm:$0xff]
      %v637 = vld [vmem:[#allocation9 + $0x238] sm:$0xff]
      %v638 = vld [vmem:[#allocation9 + $0x240] sm:$0xff]
      %v639 = vld [vmem:[#allocation9 + $0x248] sm:$0xff]
      %v640 = vld [vmem:[#allocation9 + $0x250] sm:$0xff]
      %v641 = vld [vmem:[#allocation9 + $0x258] sm:$0xff]
      %v642 = vld [vmem:[#allocation9 + $0x260] sm:$0xff]
      %v643 = vld [vmem:[#allocation9 + $0x268] sm:$0xff]
      %v644 = vld [vmem:[#allocation9 + $0x270] sm:$0xff]
      %v645 = vld [vmem:[#allocation9 + $0x278] sm:$0xff]
      %v646 = vld [vmem:[#allocation9 + $0x280] sm:$0xff]
      %v647 = vld [vmem:[#allocation9 + $0x288] sm:$0xff]
      %v648 = vld [vmem:[#allocation9 + $0x290] sm:$0xff]
      %v649 = vld [vmem:[#allocation9 + $0x298] sm:$0xff]
      %v650 = vld [vmem:[#allocation9 + $0x2a0] sm:$0xff]
      %v651 = vld [vmem:[#allocation9 + $0x2a8] sm:$0xff]
      %v652 = vld [vmem:[#allocation9 + $0x2b0] sm:$0xff]
      %v653 = vld [vmem:[#allocation9 + $0x2b8] sm:$0xff]
      %v654 = vld [vmem:[#allocation9 + $0x2c0] sm:$0xff]
      %v655 = vld [vmem:[#allocation9 + $0x2c8] sm:$0xff]
      %v656 = vld [vmem:[#allocation9 + $0x2d0] sm:$0xff]
      %v657 = vld [vmem:[#allocation9 + $0x2d8] sm:$0xff]
      %v658 = vld [vmem:[#allocation9 + $0x2e0] sm:$0xff]
      %v659 = vld [vmem:[#allocation9 + $0x2e8] sm:$0xff]
      %v660 = vld [vmem:[#allocation9 + $0x2f0] sm:$0xff]
      %v661 = vld [vmem:[#allocation9 + $0x2f8] sm:$0xff]
      %v662 = vld [vmem:[#allocation9 + $0x300] sm:$0xff]
      %v663 = vld [vmem:[#allocation9 + $0x308] sm:$0xff]
      %v664 = vld [vmem:[#allocation9 + $0x310] sm:$0xff]
      %v665 = vld [vmem:[#allocation9 + $0x318] sm:$0xff]
      %v666 = vld [vmem:[#allocation9 + $0x320] sm:$0xff]
      %v667 = vld [vmem:[#allocation9 + $0x328] sm:$0xff]
      %v668 = vld [vmem:[#allocation9 + $0x330] sm:$0xff]
      %v669 = vld [vmem:[#allocation9 + $0x338] sm:$0xff]
      %v670 = vld [vmem:[#allocation9 + $0x340] sm:$0xff]
      %v671 = vld [vmem:[#allocation9 + $0x348] sm:$0xff]
      %v672 = vld [vmem:[#allocation9 + $0x350] sm:$0xff]
      %v673 = vld [vmem:[#allocation9 + $0x358] sm:$0xff]
      %v674 = vld [vmem:[#allocation9 + $0x360] sm:$0xff]
      %v675 = vld [vmem:[#allocation9 + $0x368] sm:$0xff]
      %v676 = vld [vmem:[#allocation9 + $0x370] sm:$0xff]
      %v677 = vld [vmem:[#allocation9 + $0x378] sm:$0xff]
      %v678 = vld [vmem:[#allocation9 + $0x380] sm:$0xff]
      %v679 = vld [vmem:[#allocation9 + $0x388] sm:$0xff]
      %v680 = vld [vmem:[#allocation9 + $0x390] sm:$0xff]
      %v681 = vld [vmem:[#allocation9 + $0x398] sm:$0xff]
      %v682 = vld [vmem:[#allocation9 + $0x3a0] sm:$0xff]
      %v683 = vld [vmem:[#allocation9 + $0x3a8] sm:$0xff]
      %v684 = vld [vmem:[#allocation9 + $0x3b0] sm:$0xff]
      %v685 = vld [vmem:[#allocation9 + $0x3b8] sm:$0xff]
      %v686 = vld [vmem:[#allocation9 + $0x3c0] sm:$0xff]
      %v687 = vld [vmem:[#allocation9 + $0x3c8] sm:$0xff]
      %v688 = vld [vmem:[#allocation9 + $0x3d0] sm:$0xff]
      %v689 = vld [vmem:[#allocation9 + $0x3d8] sm:$0xff]
      %v690 = vld [vmem:[#allocation9 + $0x3e0] sm:$0xff]
      %v691 = vld [vmem:[#allocation9 + $0x3e8] sm:$0xff]
      %v692 = vld [vmem:[#allocation9 + $0x3f0] sm:$0xff]
      %v693 = vld [vmem:[#allocation9 + $0x3f8] sm:$0xff]
      %v694 = vld [vmem:[#allocation9 + $0x400] sm:$0xff]
      %v695 = vld [vmem:[#allocation9 + $0x408] sm:$0xff]
      %v696 = vld [vmem:[#allocation9 + $0x410] sm:$0xff]
      %v697 = vld [vmem:[#allocation9 + $0x418] sm:$0xff]
      %v698 = vld [vmem:[#allocation9 + $0x420] sm:$0xff]
      %v699 = vld [vmem:[#allocation9 + $0x428] sm:$0xff]
      %v700 = vld [vmem:[#allocation9 + $0x430] sm:$0xff]
      %v701 = vld [vmem:[#allocation9 + $0x438] sm:$0xff]
      %v702 = vld [vmem:[#allocation9 + $0x440] sm:$0xff]
      %v703 = vld [vmem:[#allocation9 + $0x448] sm:$0xff]
      %v704 = vld [vmem:[#allocation9 + $0x450] sm:$0xff]
      %v705 = vld [vmem:[#allocation9 + $0x458] sm:$0xff]
      %v706 = vld [vmem:[#allocation9 + $0x460] sm:$0xff]
      %v707 = vld [vmem:[#allocation9 + $0x468] sm:$0xff]
      %v708 = vld [vmem:[#allocation9 + $0x470] sm:$0xff]
      %v709 = vld [vmem:[#allocation9 + $0x478] sm:$0xff]
      %v710 = vld [vmem:[#allocation9 + $0x480] sm:$0xff]
      %v711 = vld [vmem:[#allocation9 + $0x488] sm:$0xff]
      %v712 = vld [vmem:[#allocation9 + $0x490] sm:$0xff]
      %v713 = vld [vmem:[#allocation9 + $0x498] sm:$0xff]
      %v714 = vld [vmem:[#allocation9 + $0x4a0] sm:$0xff]
      %v715 = vld [vmem:[#allocation9 + $0x4a8] sm:$0xff]
      %v716 = vld [vmem:[#allocation9 + $0x4b0] sm:$0xff]
      %v717 = vld [vmem:[#allocation9 + $0x4b8] sm:$0xff]
      %v718 = vld [vmem:[#allocation9 + $0x4c0] sm:$0xff]
      %v719 = vld [vmem:[#allocation9 + $0x4c8] sm:$0xff]
      %v720 = vld [vmem:[#allocation9 + $0x4d0] sm:$0xff]
      %v721 = vld [vmem:[#allocation9 + $0x4d8] sm:$0xff]
      %v722 = vld [vmem:[#allocation9 + $0x4e0] sm:$0xff]
      %v723 = vld [vmem:[#allocation9 + $0x4e8] sm:$0xff]
      %v724 = vld [vmem:[#allocation9 + $0x4f0] sm:$0xff]
      %v725 = vld [vmem:[#allocation9 + $0x4f8] sm:$0xff]
      %v726 = vld [vmem:[#allocation9 + $0x500] sm:$0xff]
      %v727 = vld [vmem:[#allocation9 + $0x508] sm:$0xff]
      %v728 = vld [vmem:[#allocation9 + $0x510] sm:$0xff]
      %v729 = vld [vmem:[#allocation9 + $0x518] sm:$0xff]
      %v730 = vld [vmem:[#allocation9 + $0x520] sm:$0xff]
      %v731 = vld [vmem:[#allocation9 + $0x528] sm:$0xff]
      %v732 = vld [vmem:[#allocation9 + $0x530] sm:$0xff]
      %v733 = vld [vmem:[#allocation9 + $0x538] sm:$0xff]
      %v734 = vld [vmem:[#allocation9 + $0x540] sm:$0xff]
      %v735 = vld [vmem:[#allocation9 + $0x548] sm:$0xff]
      %v736 = vld [vmem:[#allocation9 + $0x550] sm:$0xff]
      %v737 = vld [vmem:[#allocation9 + $0x558] sm:$0xff]
      %v738 = vld [vmem:[#allocation9 + $0x560] sm:$0xff]
      %v739 = vld [vmem:[#allocation9 + $0x568] sm:$0xff]
      %v740 = vld [vmem:[#allocation9 + $0x570] sm:$0xff]
      %v741 = vld [vmem:[#allocation9 + $0x578] sm:$0xff]
      %v742 = vld [vmem:[#allocation9 + $0x580] sm:$0xff]
      %v743 = vld [vmem:[#allocation9 + $0x588] sm:$0xff]
      %v744 = vld [vmem:[#allocation9 + $0x590] sm:$0xff]
      %v745 = vld [vmem:[#allocation9 + $0x598] sm:$0xff]
      %v746 = vld [vmem:[#allocation9 + $0x5a0] sm:$0xff]
      %v747 = vld [vmem:[#allocation9 + $0x5a8] sm:$0xff]
      %v748 = vld [vmem:[#allocation9 + $0x5b0] sm:$0xff]
      %v749 = vld [vmem:[#allocation9 + $0x5b8] sm:$0xff]
      %v750 = vld [vmem:[#allocation9 + $0x5c0] sm:$0xff]
      %v751 = vld [vmem:[#allocation9 + $0x5c8] sm:$0xff]
      %v752 = vld [vmem:[#allocation9 + $0x5d0] sm:$0xff]
      %v753 = vld [vmem:[#allocation9 + $0x5d8] sm:$0xff]
      %v754 = vld [vmem:[#allocation9 + $0x5e0] sm:$0xff]
      %v755 = vld [vmem:[#allocation9 + $0x5e8] sm:$0xff]
      %v756 = vld [vmem:[#allocation9 + $0x5f0] sm:$0xff]
      %v757 = vld [vmem:[#allocation9 + $0x5f8] sm:$0xff]
      %v758 = vld [vmem:[#allocation9 + $0x600] sm:$0xff]
      %v759 = vld [vmem:[#allocation9 + $0x608] sm:$0xff]
      %v760 = vld [vmem:[#allocation9 + $0x610] sm:$0xff]
      %v761 = vld [vmem:[#allocation9 + $0x618] sm:$0xff]
      %v762 = vld [vmem:[#allocation9 + $0x620] sm:$0xff]
      %v763 = vld [vmem:[#allocation9 + $0x628] sm:$0xff]
      %v764 = vld [vmem:[#allocation9 + $0x630] sm:$0xff]
      %v765 = vld [vmem:[#allocation9 + $0x638] sm:$0xff]
      %v766 = vld [vmem:[#allocation9 + $0x640] sm:$0xff]
      %v767 = vld [vmem:[#allocation9 + $0x648] sm:$0xff]
      %v768 = vld [vmem:[#allocation9 + $0x650] sm:$0xff]
      %v769 = vld [vmem:[#allocation9 + $0x658] sm:$0xff]
      %v770 = vld [vmem:[#allocation9 + $0x660] sm:$0xff]
      %v771 = vld [vmem:[#allocation9 + $0x668] sm:$0xff]
      %v772 = vld [vmem:[#allocation9 + $0x670] sm:$0xff]
      %v773 = vld [vmem:[#allocation9 + $0x678] sm:$0xff]
      %v774 = vld [vmem:[#allocation9 + $0x680] sm:$0xff]
      %v775 = vld [vmem:[#allocation9 + $0x688] sm:$0xff]
      %v776 = vld [vmem:[#allocation9 + $0x690] sm:$0xff]
      %v777 = vld [vmem:[#allocation9 + $0x698] sm:$0xff]
      %v778 = vld [vmem:[#allocation9 + $0x6a0] sm:$0xff]
      %v779 = vld [vmem:[#allocation9 + $0x6a8] sm:$0xff]
      %v780 = vld [vmem:[#allocation9 + $0x6b0] sm:$0xff]
      %v781 = vld [vmem:[#allocation9 + $0x6b8] sm:$0xff]
      %v782 = vld [vmem:[#allocation9 + $0x6c0] sm:$0xff]
      %v783 = vld [vmem:[#allocation9 + $0x6c8] sm:$0xff]
      %v784 = vld [vmem:[#allocation9 + $0x6d0] sm:$0xff]
      %v785 = vld [vmem:[#allocation9 + $0x6d8] sm:$0xff]
      %v786 = vld [vmem:[#allocation9 + $0x6e0] sm:$0xff]
      %v787 = vld [vmem:[#allocation9 + $0x6e8] sm:$0xff]
      %v788 = vld [vmem:[#allocation9 + $0x6f0] sm:$0xff]
      %v789 = vld [vmem:[#allocation9 + $0x6f8] sm:$0xff]
      %v790 = vld [vmem:[#allocation9 + $0x700] sm:$0xff]
      %v791 = vld [vmem:[#allocation9 + $0x708] sm:$0xff]
      %v792 = vld [vmem:[#allocation9 + $0x710] sm:$0xff]
      %v793 = vld [vmem:[#allocation9 + $0x718] sm:$0xff]
      %v794 = vld [vmem:[#allocation9 + $0x720] sm:$0xff]
      %v795 = vld [vmem:[#allocation9 + $0x728] sm:$0xff]
      %v796 = vld [vmem:[#allocation9 + $0x730] sm:$0xff]
      %v797 = vld [vmem:[#allocation9 + $0x738] sm:$0xff]
      %v798 = vld [vmem:[#allocation9 + $0x740] sm:$0xff]
      %v799 = vld [vmem:[#allocation9 + $0x748] sm:$0xff]
      %v800 = vld [vmem:[#allocation9 + $0x750] sm:$0xff]
      %v801 = vld [vmem:[#allocation9 + $0x758] sm:$0xff]
      %v802 = vld [vmem:[#allocation9 + $0x760] sm:$0xff]
      %v803 = vld [vmem:[#allocation9 + $0x768] sm:$0xff]
      %v804 = vld [vmem:[#allocation9 + $0x770] sm:$0xff]
      %v805 = vld [vmem:[#allocation9 + $0x778] sm:$0xff]
      %v806 = vld [vmem:[#allocation9 + $0x780] sm:$0xff]
      %v807 = vld [vmem:[#allocation9 + $0x788] sm:$0xff]
      %v808 = vld [vmem:[#allocation9 + $0x790] sm:$0xff]
      %v809 = vld [vmem:[#allocation9 + $0x798] sm:$0xff]
      %v810 = vld [vmem:[#allocation9 + $0x7a0] sm:$0xff]
      %v811 = vld [vmem:[#allocation9 + $0x7a8] sm:$0xff]
      %v812 = vld [vmem:[#allocation9 + $0x7b0] sm:$0xff]
      %v813 = vld [vmem:[#allocation9 + $0x7b8] sm:$0xff]
      %v814 = vld [vmem:[#allocation9 + $0x7c0] sm:$0xff]
      %v815 = vld [vmem:[#allocation9 + $0x7c8] sm:$0xff]
      %v816 = vld [vmem:[#allocation9 + $0x7d0] sm:$0xff]
      %v817 = vld [vmem:[#allocation9 + $0x7d8] sm:$0xff]
      %v818 = vld [vmem:[#allocation9 + $0x7e0] sm:$0xff]
      %v819 = vld [vmem:[#allocation9 + $0x7e8] sm:$0xff]
      %v820 = vld [vmem:[#allocation9 + $0x7f0] sm:$0xff]
      %v821 = vld [vmem:[#allocation9 + $0x7f8] sm:$0xff]
      %v822 = vld [vmem:[#allocation9 + $0x800] sm:$0xff]
      %v823 = vld [vmem:[#allocation9 + $0x808] sm:$0xff]
      %v824 = vld [vmem:[#allocation9 + $0x810] sm:$0xff]
      %v825 = vld [vmem:[#allocation9 + $0x818] sm:$0xff]
      %v826 = vld [vmem:[#allocation9 + $0x820] sm:$0xff]
      %v827 = vld [vmem:[#allocation9 + $0x828] sm:$0xff]
      %v828 = vld [vmem:[#allocation9 + $0x830] sm:$0xff]
      %v829 = vld [vmem:[#allocation9 + $0x838] sm:$0xff]
      %v830 = vld [vmem:[#allocation9 + $0x840] sm:$0xff]
      %v831 = vld [vmem:[#allocation9 + $0x848] sm:$0xff]
      %v832 = vld [vmem:[#allocation9 + $0x850] sm:$0xff]
      %v833 = vld [vmem:[#allocation9 + $0x858] sm:$0xff]
      %v834 = vld [vmem:[#allocation9 + $0x860] sm:$0xff]
      %v835 = vld [vmem:[#allocation9 + $0x868] sm:$0xff]
      %v836 = vld [vmem:[#allocation9 + $0x870] sm:$0xff]
      %v837 = vld [vmem:[#allocation9 + $0x878] sm:$0xff]
      %v838 = vld [vmem:[#allocation9 + $0x880] sm:$0xff]
      %v839 = vld [vmem:[#allocation9 + $0x888] sm:$0xff]
      %v840 = vld [vmem:[#allocation9 + $0x890] sm:$0xff]
      %v841 = vld [vmem:[#allocation9 + $0x898] sm:$0xff]
      %v842 = vld [vmem:[#allocation9 + $0x8a0] sm:$0xff]
      %v843 = vld [vmem:[#allocation9 + $0x8a8] sm:$0xff]
      %v844 = vld [vmem:[#allocation9 + $0x8b0] sm:$0xff]
      %v845 = vld [vmem:[#allocation9 + $0x8b8] sm:$0xff]
      %v846 = vld [vmem:[#allocation9 + $0x8c0] sm:$0xff]
      %v847 = vld [vmem:[#allocation9 + $0x8c8] sm:$0xff]
      %v848 = vld [vmem:[#allocation9 + $0x8d0] sm:$0xff]
      %v849 = vld [vmem:[#allocation9 + $0x8d8] sm:$0xff]
      %v850 = vld [vmem:[#allocation9 + $0x8e0] sm:$0xff]
      %v851 = vld [vmem:[#allocation9 + $0x8e8] sm:$0xff]
      %v852 = vld [vmem:[#allocation9 + $0x8f0] sm:$0xff]
      %v853 = vld [vmem:[#allocation9 + $0x8f8] sm:$0xff]
      %v854 = vld [vmem:[#allocation9 + $0x900] sm:$0xff]
      %v855 = vld [vmem:[#allocation9 + $0x908] sm:$0xff]
      %v856 = vld [vmem:[#allocation9 + $0x910] sm:$0xff]
      %v857 = vld [vmem:[#allocation9 + $0x918] sm:$0xff]
      %v858 = vld [vmem:[#allocation9 + $0x920] sm:$0xff]
      %v859 = vld [vmem:[#allocation9 + $0x928] sm:$0xff]
      %v860 = vld [vmem:[#allocation9 + $0x930] sm:$0xff]
      %v861 = vld [vmem:[#allocation9 + $0x938] sm:$0xff]
      %v862 = vld [vmem:[#allocation9 + $0x940] sm:$0xff]
      %v863 = vld [vmem:[#allocation9 + $0x948] sm:$0xff]
      %v864 = vld [vmem:[#allocation9 + $0x950] sm:$0xff]
      %v865 = vld [vmem:[#allocation9 + $0x958] sm:$0xff]
      %v866 = vld [vmem:[#allocation9 + $0x960] sm:$0xff]
      %v867 = vld [vmem:[#allocation9 + $0x968] sm:$0xff]
      %v868 = vld [vmem:[#allocation9 + $0x970] sm:$0xff]
      %v869 = vld [vmem:[#allocation9 + $0x978] sm:$0xff]
      %v870 = vld [vmem:[#allocation9 + $0x980] sm:$0xff]
      %v871 = vld [vmem:[#allocation9 + $0x988] sm:$0xff]
      %v872 = vld [vmem:[#allocation9 + $0x990] sm:$0xff]
      %v873 = vld [vmem:[#allocation9 + $0x998] sm:$0xff]
      %v874 = vld [vmem:[#allocation9 + $0x9a0] sm:$0xff]
      %v875 = vld [vmem:[#allocation9 + $0x9a8] sm:$0xff]
      %v876 = vld [vmem:[#allocation9 + $0x9b0] sm:$0xff]
      %v877 = vld [vmem:[#allocation9 + $0x9b8] sm:$0xff]
      %v878 = vld [vmem:[#allocation9 + $0x9c0] sm:$0xff]
      %v879 = vld [vmem:[#allocation9 + $0x9c8] sm:$0xff]
      %v880 = vld [vmem:[#allocation9 + $0x9d0] sm:$0xff]
      %v881 = vld [vmem:[#allocation9 + $0x9d8] sm:$0xff]
      %v882 = vld [vmem:[#allocation9 + $0x9e0] sm:$0xff]
      %v883 = vld [vmem:[#allocation9 + $0x9e8] sm:$0xff]
      %v884 = vld [vmem:[#allocation9 + $0x9f0] sm:$0xff]
      %v885 = vld [vmem:[#allocation9 + $0x9f8] sm:$0xff]
      %v886 = vld [vmem:[#allocation9 + $0xa00] sm:$0xff]
      %v887 = vld [vmem:[#allocation9 + $0xa08] sm:$0xff]
      %v888 = vld [vmem:[#allocation9 + $0xa10] sm:$0xff]
      %v889 = vld [vmem:[#allocation9 + $0xa18] sm:$0xff]
      %v890 = vld [vmem:[#allocation9 + $0xa20] sm:$0xff]
      %v891 = vld [vmem:[#allocation9 + $0xa28] sm:$0xff]
      %v892 = vld [vmem:[#allocation9 + $0xa30] sm:$0xff]
      %v893 = vld [vmem:[#allocation9 + $0xa38] sm:$0xff]
      %v894 = vld [vmem:[#allocation9 + $0xa40] sm:$0xff]
      %v895 = vld [vmem:[#allocation9 + $0xa48] sm:$0xff]
      %v896 = vld [vmem:[#allocation9 + $0xa50] sm:$0xff]
      %v897 = vld [vmem:[#allocation9 + $0xa58] sm:$0xff]
      %v898 = vld [vmem:[#allocation9 + $0xa60] sm:$0xff]
      %v899 = vld [vmem:[#allocation9 + $0xa68] sm:$0xff]
      %v900 = vld [vmem:[#allocation9 + $0xa70] sm:$0xff]
      %v901 = vld [vmem:[#allocation9 + $0xa78] sm:$0xff]
      %v902 = vld [vmem:[#allocation9 + $0xa80] sm:$0xff]
      %v903 = vld [vmem:[#allocation9 + $0xa88] sm:$0xff]
      %v904 = vld [vmem:[#allocation9 + $0xa90] sm:$0xff]
      %v905 = vld [vmem:[#allocation9 + $0xa98] sm:$0xff]
      %v906 = vld [vmem:[#allocation9 + $0xaa0] sm:$0xff]
      %v907 = vld [vmem:[#allocation9 + $0xaa8] sm:$0xff]
      %v908 = vld [vmem:[#allocation9 + $0xab0] sm:$0xff]
      %v909 = vld [vmem:[#allocation9 + $0xab8] sm:$0xff]
      %v910 = vld [vmem:[#allocation9 + $0xac0] sm:$0xff]
      %v911 = vld [vmem:[#allocation9 + $0xac8] sm:$0xff]
      %v912 = vld [vmem:[#allocation9 + $0xad0] sm:$0xff]
      %v913 = vld [vmem:[#allocation9 + $0xad8] sm:$0xff]
      %v914 = vld [vmem:[#allocation9 + $0xae0] sm:$0xff]
      %v915 = vld [vmem:[#allocation9 + $0xae8] sm:$0xff]
      %v916 = vld [vmem:[#allocation9 + $0xaf0] sm:$0xff]
      %v917 = vld [vmem:[#allocation9 + $0xaf8] sm:$0xff]
      %v918 = vld [vmem:[#allocation9 + $0xb00] sm:$0xff]
      %v919 = vld [vmem:[#allocation9 + $0xb08] sm:$0xff]
      %v920 = vld [vmem:[#allocation9 + $0xb10] sm:$0xff]
      %v921 = vld [vmem:[#allocation9 + $0xb18] sm:$0xff]
      %v922 = vld [vmem:[#allocation9 + $0xb20] sm:$0xff]
      %v923 = vld [vmem:[#allocation9 + $0xb28] sm:$0xff]
      %v924 = vld [vmem:[#allocation9 + $0xb30] sm:$0xff]
      %v925 = vld [vmem:[#allocation9 + $0xb38] sm:$0xff]
      %v926 = vld [vmem:[#allocation9 + $0xb40] sm:$0xff]
      %v927 = vld [vmem:[#allocation9 + $0xb48] sm:$0xff]
      %v928 = vld [vmem:[#allocation9 + $0xb50] sm:$0xff]
      %v929 = vld [vmem:[#allocation9 + $0xb58] sm:$0xff]
      %v930 = vld [vmem:[#allocation9 + $0xb60] sm:$0xff]
      %v931 = vld [vmem:[#allocation9 + $0xb68] sm:$0xff]
      %v932 = vld [vmem:[#allocation9 + $0xb70] sm:$0xff]
      %v933 = vld [vmem:[#allocation9 + $0xb78] sm:$0xff]
      %v934 = vld [vmem:[#allocation9 + $0xb80] sm:$0xff]
      %v935 = vld [vmem:[#allocation9 + $0xb88] sm:$0xff]
      %v936 = vld [vmem:[#allocation9 + $0xb90] sm:$0xff]
      %v937 = vld [vmem:[#allocation9 + $0xb98] sm:$0xff]
      %v938 = vld [vmem:[#allocation9 + $0xba0] sm:$0xff]
      %v939 = vld [vmem:[#allocation9 + $0xba8] sm:$0xff]
      %v940 = vld [vmem:[#allocation9 + $0xbb0] sm:$0xff]
      %v941 = vld [vmem:[#allocation9 + $0xbb8] sm:$0xff]
      %v942 = vld [vmem:[#allocation9 + $0xbc0] sm:$0xff]
      %v943 = vld [vmem:[#allocation9 + $0xbc8] sm:$0xff]
      %v944 = vld [vmem:[#allocation9 + $0xbd0] sm:$0xff]
      %v945 = vld [vmem:[#allocation9 + $0xbd8] sm:$0xff]
      %v946 = vld [vmem:[#allocation9 + $0xbe0] sm:$0xff]
      %v947 = vld [vmem:[#allocation9 + $0xbe8] sm:$0xff]
      %v948 = vld [vmem:[#allocation9 + $0xbf0] sm:$0xff]
      %v949 = vld [vmem:[#allocation9 + $0xbf8] sm:$0xff]
      %v950 = vld [vmem:[#allocation9 + $0xc00] sm:$0xff]
      %v951 = vld [vmem:[#allocation9 + $0xc08] sm:$0xff]
      %v952 = vld [vmem:[#allocation9 + $0xc10] sm:$0xff]
      %v953 = vld [vmem:[#allocation9 + $0xc18] sm:$0xff]
      %v954 = vld [vmem:[#allocation9 + $0xc20] sm:$0xff]
      %v955 = vld [vmem:[#allocation9 + $0xc28] sm:$0xff]
      %v956 = vld [vmem:[#allocation9 + $0xc30] sm:$0xff]
      %v957 = vld [vmem:[#allocation9 + $0xc38] sm:$0xff]
      %v958 = vld [vmem:[#allocation9 + $0xc40] sm:$0xff]
      %v959 = vld [vmem:[#allocation9 + $0xc48] sm:$0xff]
      %v960 = vld [vmem:[#allocation9 + $0xc50] sm:$0xff]
      %v961 = vld [vmem:[#allocation9 + $0xc58] sm:$0xff]
      %v962 = vld [vmem:[#allocation9 + $0xc60] sm:$0xff]
      %v963 = vld [vmem:[#allocation9 + $0xc68] sm:$0xff]
      %v964 = vld [vmem:[#allocation9 + $0xc70] sm:$0xff]
      %v965 = vld [vmem:[#allocation9 + $0xc78] sm:$0xff]
      %v966 = vld [vmem:[#allocation9 + $0xc80] sm:$0xff]
      %v967 = vld [vmem:[#allocation9 + $0xc88] sm:$0xff]
      %v968 = vld [vmem:[#allocation9 + $0xc90] sm:$0xff]
      %v969 = vld [vmem:[#allocation9 + $0xc98] sm:$0xff]
      %v970 = vld [vmem:[#allocation9 + $0xca0] sm:$0xff]
      %v971 = vld [vmem:[#allocation9 + $0xca8] sm:$0xff]
      %v972 = vld [vmem:[#allocation9 + $0xcb0] sm:$0xff]
      %v973 = vld [vmem:[#allocation9 + $0xcb8] sm:$0xff]
      %v974 = vld [vmem:[#allocation9 + $0xcc0] sm:$0xff]
      %v975 = vld [vmem:[#allocation9 + $0xcc8] sm:$0xff]
      %v976 = vld [vmem:[#allocation9 + $0xcd0] sm:$0xff]
      %v977 = vld [vmem:[#allocation9 + $0xcd8] sm:$0xff]
      %v978 = vld [vmem:[#allocation9 + $0xce0] sm:$0xff]
      %v979 = vld [vmem:[#allocation9 + $0xce8] sm:$0xff]
      %v980 = vld [vmem:[#allocation9 + $0xcf0] sm:$0xff]
      %v981 = vld [vmem:[#allocation9 + $0xcf8] sm:$0xff]
      %v982 = vld [vmem:[#allocation9 + $0xd00] sm:$0xff]
      %v983 = vld [vmem:[#allocation9 + $0xd08] sm:$0xff]
      %v984 = vld [vmem:[#allocation9 + $0xd10] sm:$0xff]
      %v985 = vld [vmem:[#allocation9 + $0xd18] sm:$0xff]
      %v986 = vld [vmem:[#allocation9 + $0xd20] sm:$0xff]
      %v987 = vld [vmem:[#allocation9 + $0xd28] sm:$0xff]
      %v988 = vld [vmem:[#allocation9 + $0xd30] sm:$0xff]
      %v989 = vld [vmem:[#allocation9 + $0xd38] sm:$0xff]
      %v990 = vld [vmem:[#allocation9 + $0xd40] sm:$0xff]
      %v991 = vld [vmem:[#allocation9 + $0xd48] sm:$0xff]
      %v992 = vld [vmem:[#allocation9 + $0xd50] sm:$0xff]
      %v993 = vld [vmem:[#allocation9 + $0xd58] sm:$0xff]
      %v994 = vld [vmem:[#allocation9 + $0xd60] sm:$0xff]
      %v995 = vld [vmem:[#allocation9 + $0xd68] sm:$0xff]
      %v996 = vld [vmem:[#allocation9 + $0xd70] sm:$0xff]
      %v997 = vld [vmem:[#allocation9 + $0xd78] sm:$0xff]
      %v998 = vld [vmem:[#allocation9 + $0xd80] sm:$0xff]
      %v999 = vld [vmem:[#allocation9 + $0xd88] sm:$0xff]
      %v1000 = vld [vmem:[#allocation9 + $0xd90] sm:$0xff]
      %v1001 = vld [vmem:[#allocation9 + $0xd98] sm:$0xff]
      %v1002 = vld [vmem:[#allocation9 + $0xda0] sm:$0xff]
      %v1003 = vld [vmem:[#allocation9 + $0xda8] sm:$0xff]
      %v1004 = vld [vmem:[#allocation9 + $0xdb0] sm:$0xff]
      %v1005 = vld [vmem:[#allocation9 + $0xdb8] sm:$0xff]
      %v1006 = vld [vmem:[#allocation9 + $0xdc0] sm:$0xff]
      %v1007 = vld [vmem:[#allocation9 + $0xdc8] sm:$0xff]
      %v1008 = vld [vmem:[#allocation9 + $0xdd0] sm:$0xff]
      %v1009 = vld [vmem:[#allocation9 + $0xdd8] sm:$0xff]
      %v1010 = vld [vmem:[#allocation9 + $0xde0] sm:$0xff]
      %v1011 = vld [vmem:[#allocation9 + $0xde8] sm:$0xff]
      %v1012 = vld [vmem:[#allocation9 + $0xdf0] sm:$0xff]
      %v1013 = vld [vmem:[#allocation9 + $0xdf8] sm:$0xff]
      %v1014 = vld [vmem:[#allocation9 + $0xe00] sm:$0xff]
      %v1015 = vld [vmem:[#allocation9 + $0xe08] sm:$0xff]
      %v1016 = vld [vmem:[#allocation9 + $0xe10] sm:$0xff]
      %v1017 = vld [vmem:[#allocation9 + $0xe18] sm:$0xff]
      %v1018 = vld [vmem:[#allocation9 + $0xe20] sm:$0xff]
      %v1019 = vld [vmem:[#allocation9 + $0xe28] sm:$0xff]
      %v1020 = vld [vmem:[#allocation9 + $0xe30] sm:$0xff]
      %v1021 = vld [vmem:[#allocation9 + $0xe38] sm:$0xff]
      %v1022 = vld [vmem:[#allocation9 + $0xe40] sm:$0xff]
      %v1023 = vld [vmem:[#allocation9 + $0xe48] sm:$0xff]
      %v1024 = vld [vmem:[#allocation9 + $0xe50] sm:$0xff]
      %v1025 = vld [vmem:[#allocation9 + $0xe58] sm:$0xff]
      %v1026 = vld [vmem:[#allocation9 + $0xe60] sm:$0xff]
      %v1027 = vld [vmem:[#allocation9 + $0xe68] sm:$0xff]
      %v1028 = vld [vmem:[#allocation9 + $0xe70] sm:$0xff]
      %v1029 = vld [vmem:[#allocation9 + $0xe78] sm:$0xff]
      %v1030 = vld [vmem:[#allocation9 + $0xe80] sm:$0xff]
      %v1031 = vld [vmem:[#allocation9 + $0xe88] sm:$0xff]
      %v1032 = vld [vmem:[#allocation9 + $0xe90] sm:$0xff]
      %v1033 = vld [vmem:[#allocation9 + $0xe98] sm:$0xff]
      %v1034 = vld [vmem:[#allocation9 + $0xea0] sm:$0xff]
      %v1035 = vld [vmem:[#allocation9 + $0xea8] sm:$0xff]
      %v1036 = vld [vmem:[#allocation9 + $0xeb0] sm:$0xff]
      %v1037 = vld [vmem:[#allocation9 + $0xeb8] sm:$0xff]
      %v1038 = vld [vmem:[#allocation9 + $0xec0] sm:$0xff]
      %v1039 = vld [vmem:[#allocation9 + $0xec8] sm:$0xff]
      %v1040 = vld [vmem:[#allocation9 + $0xed0] sm:$0xff]
      %v1041 = vld [vmem:[#allocation9 + $0xed8] sm:$0xff]
      %v1042 = vld [vmem:[#allocation9 + $0xee0] sm:$0xff]
      %v1043 = vld [vmem:[#allocation9 + $0xee8] sm:$0xff]
      %v1044 = vld [vmem:[#allocation9 + $0xef0] sm:$0xff]
      %v1045 = vld [vmem:[#allocation9 + $0xef8] sm:$0xff]
      %v1046 = vld [vmem:[#allocation9 + $0xf00] sm:$0xff]
      %v1047 = vld [vmem:[#allocation9 + $0xf08] sm:$0xff]
      %v1048 = vld [vmem:[#allocation9 + $0xf10] sm:$0xff]
      %v1049 = vld [vmem:[#allocation9 + $0xf18] sm:$0xff]
      %v1050 = vld [vmem:[#allocation9 + $0xf20] sm:$0xff]
      %v1051 = vld [vmem:[#allocation9 + $0xf28] sm:$0xff]
      %v1052 = vld [vmem:[#allocation9 + $0xf30] sm:$0xff]
      %v1053 = vld [vmem:[#allocation9 + $0xf38] sm:$0xff]
      %v1054 = vld [vmem:[#allocation9 + $0xf40] sm:$0xff]
      %v1055 = vld [vmem:[#allocation9 + $0xf48] sm:$0xff]
      %v1056 = vld [vmem:[#allocation9 + $0xf50] sm:$0xff]
      %v1057 = vld [vmem:[#allocation9 + $0xf58] sm:$0xff]
      %v1058 = vld [vmem:[#allocation9 + $0xf60] sm:$0xff]
      %v1059 = vld [vmem:[#allocation9 + $0xf68] sm:$0xff]
      %v1060 = vld [vmem:[#allocation9 + $0xf70] sm:$0xff]
      %v1061 = vld [vmem:[#allocation9 + $0xf78] sm:$0xff]
      %v1062 = vld [vmem:[#allocation9 + $0xf80] sm:$0xff]
      %v1063 = vld [vmem:[#allocation9 + $0xf88] sm:$0xff]
      %v1064 = vld [vmem:[#allocation9 + $0xf90] sm:$0xff]
      %v1065 = vld [vmem:[#allocation9 + $0xf98] sm:$0xff]
      %v1066 = vld [vmem:[#allocation9 + $0xfa0] sm:$0xff]
      %v1067 = vld [vmem:[#allocation9 + $0xfa8] sm:$0xff]
      %v1068 = vld [vmem:[#allocation9 + $0xfb0] sm:$0xff]
      %v1069 = vld [vmem:[#allocation9 + $0xfb8] sm:$0xff]
      %v1070 = vld [vmem:[#allocation9 + $0xfc0] sm:$0xff]
      %v1071 = vld [vmem:[#allocation9 + $0xfc8] sm:$0xff]
      %v1072 = vld [vmem:[#allocation9 + $0xfd0] sm:$0xff]
      %v1073 = vld [vmem:[#allocation9 + $0xfd8] sm:$0xff]
      %v1074 = vld [vmem:[#allocation9 + $0xfe0] sm:$0xff]
      %v1075 = vld [vmem:[#allocation9 + $0xfe8] sm:$0xff]
      %v1076 = vld [vmem:[#allocation9 + $0xff0] sm:$0xff]
      %v1077 = vld [vmem:[#allocation9 + $0xff8] sm:$0xff]
      %v1078 = vld [vmem:[#allocation9 + $0x1000] sm:$0xff]
      %v1079 = vld [vmem:[#allocation9 + $0x1008] sm:$0xff]
      %v1080 = vld [vmem:[#allocation9 + $0x1010] sm:$0xff]
      %v1081 = vld [vmem:[#allocation9 + $0x1018] sm:$0xff]
      %v1082 = vld [vmem:[#allocation9 + $0x1020] sm:$0xff]
      %v1083 = vld [vmem:[#allocation9 + $0x1028] sm:$0xff]
      %v1084 = vld [vmem:[#allocation9 + $0x1030] sm:$0xff]
      %v1085 = vld [vmem:[#allocation9 + $0x1038] sm:$0xff]
      %v1086 = vld [vmem:[#allocation9 + $0x1040] sm:$0xff]
      %v1087 = vld [vmem:[#allocation9 + $0x1048] sm:$0xff]
      %v1088 = vld [vmem:[#allocation9 + $0x1050] sm:$0xff]
      %v1089 = vld [vmem:[#allocation9 + $0x1058] sm:$0xff]
      %v1090 = vld [vmem:[#allocation9 + $0x1060] sm:$0xff]
      %v1091 = vld [vmem:[#allocation9 + $0x1068] sm:$0xff]
      %v1092 = vld [vmem:[#allocation9 + $0x1070] sm:$0xff]
      %v1093 = vld [vmem:[#allocation9 + $0x1078] sm:$0xff]
      %v1094 = vld [vmem:[#allocation9 + $0x1080] sm:$0xff]
      %v1095 = vld [vmem:[#allocation9 + $0x1088] sm:$0xff]
      %v1096 = vld [vmem:[#allocation9 + $0x1090] sm:$0xff]
      %v1097 = vld [vmem:[#allocation9 + $0x1098] sm:$0xff]
      %v1098 = vld [vmem:[#allocation9 + $0x10a0] sm:$0xff]
      %v1099 = vld [vmem:[#allocation9 + $0x10a8] sm:$0xff]
      %v1100 = vld [vmem:[#allocation9 + $0x10b0] sm:$0xff]
      %v1101 = vld [vmem:[#allocation9 + $0x10b8] sm:$0xff]
      %v1102 = vld [vmem:[#allocation9 + $0x10c0] sm:$0xff]
      %v1103 = vld [vmem:[#allocation9 + $0x10c8] sm:$0xff]
      %v1104 = vld [vmem:[#allocation9 + $0x10d0] sm:$0xff]
      %v1105 = vld [vmem:[#allocation9 + $0x10d8] sm:$0xff]
      %v1106 = vld [vmem:[#allocation9 + $0x10e0] sm:$0xff]
      %v1107 = vld [vmem:[#allocation9 + $0x10e8] sm:$0xff]
      %v1108 = vld [vmem:[#allocation9 + $0x10f0] sm:$0xff]
      %v1109 = vld [vmem:[#allocation9 + $0x10f8] sm:$0xff]
      %v1110 = vld [vmem:[#allocation9 + $0x1100] sm:$0xff]
      %v1111 = vld [vmem:[#allocation9 + $0x1108] sm:$0xff]
      %v1112 = vld [vmem:[#allocation9 + $0x1110] sm:$0xff]
      %v1113 = vld [vmem:[#allocation9 + $0x1118] sm:$0xff]
      %v1114 = vld [vmem:[#allocation9 + $0x1120] sm:$0xff]
      %v1115 = vld [vmem:[#allocation9 + $0x1128] sm:$0xff]
      %v1116 = vld [vmem:[#allocation9 + $0x1130] sm:$0xff]
      %v1117 = vld [vmem:[#allocation9 + $0x1138] sm:$0xff]
      %v1118 = vld [vmem:[#allocation9 + $0x1140] sm:$0xff]
      %v1119 = vld [vmem:[#allocation9 + $0x1148] sm:$0xff]
      %v1120 = vld [vmem:[#allocation9 + $0x1150] sm:$0xff]
      %v1121 = vld [vmem:[#allocation9 + $0x1158] sm:$0xff]
      %v1122 = vld [vmem:[#allocation9 + $0x1160] sm:$0xff]
      %v1123 = vld [vmem:[#allocation9 + $0x1168] sm:$0xff]
      %v1124 = vld [vmem:[#allocation9 + $0x1170] sm:$0xff]
      %v1125 = vld [vmem:[#allocation9 + $0x1178] sm:$0xff]
      %v1126 = vld [vmem:[#allocation9 + $0x1180] sm:$0xff]
      %v1127 = vld [vmem:[#allocation9 + $0x1188] sm:$0xff]
      %v1128 = vld [vmem:[#allocation9 + $0x1190] sm:$0xff]
      %v1129 = vld [vmem:[#allocation9 + $0x1198] sm:$0xff]
      %v1130 = vld [vmem:[#allocation9 + $0x11a0] sm:$0xff]
      %v1131 = vld [vmem:[#allocation9 + $0x11a8] sm:$0xff]
      %v1132 = vld [vmem:[#allocation9 + $0x11b0] sm:$0xff]
      %v1133 = vld [vmem:[#allocation9 + $0x11b8] sm:$0xff]
      %v1134 = vld [vmem:[#allocation9 + $0x11c0] sm:$0xff]
      %v1135 = vld [vmem:[#allocation9 + $0x11c8] sm:$0xff]
      %v1136 = vld [vmem:[#allocation9 + $0x11d0] sm:$0xff]
      %v1137 = vld [vmem:[#allocation9 + $0x11d8] sm:$0xff]
      %v1138 = vld [vmem:[#allocation9 + $0x11e0] sm:$0xff]
      %v1139 = vld [vmem:[#allocation9 + $0x11e8] sm:$0xff]
      %v1140 = vld [vmem:[#allocation9 + $0x11f0] sm:$0xff]
      %v1141 = vld [vmem:[#allocation9 + $0x11f8] sm:$0xff]
      %v1142 = vld [vmem:[#allocation9 + $0x1200] sm:$0xff]
      %v1143 = vld [vmem:[#allocation9 + $0x1208] sm:$0xff]
      %v1144 = vld [vmem:[#allocation9 + $0x1210] sm:$0xff]
      %v1145 = vld [vmem:[#allocation9 + $0x1218] sm:$0xff]
      %v1146 = vld [vmem:[#allocation9 + $0x1220] sm:$0xff]
      %v1147 = vld [vmem:[#allocation9 + $0x1228] sm:$0xff]
      %v1148 = vld [vmem:[#allocation9 + $0x1230] sm:$0xff]
      %v1149 = vld [vmem:[#allocation9 + $0x1238] sm:$0xff]
      %v1150 = vld [vmem:[#allocation9 + $0x1240] sm:$0xff]
      %v1151 = vld [vmem:[#allocation9 + $0x1248] sm:$0xff]
      %v1152 = vld [vmem:[#allocation9 + $0x1250] sm:$0xff]
      %v1153 = vld [vmem:[#allocation9 + $0x1258] sm:$0xff]
      %v1154 = vld [vmem:[#allocation9 + $0x1260] sm:$0xff]
      %v1155 = vld [vmem:[#allocation9 + $0x1268] sm:$0xff]
      %v1156 = vld [vmem:[#allocation9 + $0x1270] sm:$0xff]
      %v1157 = vld [vmem:[#allocation9 + $0x1278] sm:$0xff]
      %v1158 = vld [vmem:[#allocation9 + $0x1280] sm:$0xff]
      %v1159 = vld [vmem:[#allocation9 + $0x1288] sm:$0xff]
      %v1160 = vld [vmem:[#allocation9 + $0x1290] sm:$0xff]
      %v1161 = vld [vmem:[#allocation9 + $0x1298] sm:$0xff]
      %v1162 = vld [vmem:[#allocation9 + $0x12a0] sm:$0xff]
      %v1163 = vld [vmem:[#allocation9 + $0x12a8] sm:$0xff]
      %v1164 = vld [vmem:[#allocation9 + $0x12b0] sm:$0xff]
      %v1165 = vld [vmem:[#allocation9 + $0x12b8] sm:$0xff]
      %v1166 = vld [vmem:[#allocation9 + $0x12c0] sm:$0xff]
      %v1167 = vld [vmem:[#allocation9 + $0x12c8] sm:$0xff]
      %v1168 = vld [vmem:[#allocation9 + $0x12d0] sm:$0xff]
      %v1169 = vld [vmem:[#allocation9 + $0x12d8] sm:$0xff]
      %v1170 = vld [vmem:[#allocation9 + $0x12e0] sm:$0xff]
      %v1171 = vld [vmem:[#allocation9 + $0x12e8] sm:$0xff]
      %v1172 = vld [vmem:[#allocation9 + $0x12f0] sm:$0xff]
      %v1173 = vld [vmem:[#allocation9 + $0x12f8] sm:$0xff]
      %v1174 = vld [vmem:[#allocation9 + $0x1300] sm:$0xff]
      %v1175 = vld [vmem:[#allocation9 + $0x1308] sm:$0xff]
      %v1176 = vld [vmem:[#allocation9 + $0x1310] sm:$0xff]
      %v1177 = vld [vmem:[#allocation9 + $0x1318] sm:$0xff]
      %v1178 = vld [vmem:[#allocation9 + $0x1320] sm:$0xff]
      %v1179 = vld [vmem:[#allocation9 + $0x1328] sm:$0xff]
      %v1180 = vld [vmem:[#allocation9 + $0x1330] sm:$0xff]
      %v1181 = vld [vmem:[#allocation9 + $0x1338] sm:$0xff]
      %v1182 = vld [vmem:[#allocation9 + $0x1340] sm:$0xff]
      %v1183 = vld [vmem:[#allocation9 + $0x1348] sm:$0xff]
      %v1184 = vld [vmem:[#allocation9 + $0x1350] sm:$0xff]
      %v1185 = vld [vmem:[#allocation9 + $0x1358] sm:$0xff]
      %v1186 = vld [vmem:[#allocation9 + $0x1360] sm:$0xff]
      %v1187 = vld [vmem:[#allocation9 + $0x1368] sm:$0xff]
      %v1188 = vld [vmem:[#allocation9 + $0x1370] sm:$0xff]
      %v1189 = vld [vmem:[#allocation9 + $0x1378] sm:$0xff]
      %v1190 = vld [vmem:[#allocation9 + $0x1380] sm:$0xff]
      %v1191 = vld [vmem:[#allocation9 + $0x1388] sm:$0xff]
      %v1192 = vld [vmem:[#allocation9 + $0x1390] sm:$0xff]
      %v1193 = vld [vmem:[#allocation9 + $0x1398] sm:$0xff]
      %v1194 = vld [vmem:[#allocation9 + $0x13a0] sm:$0xff]
      %v1195 = vld [vmem:[#allocation9 + $0x13a8] sm:$0xff]
      %v1196 = vld [vmem:[#allocation9 + $0x13b0] sm:$0xff]
      %v1197 = vld [vmem:[#allocation9 + $0x13b8] sm:$0xff]
      %v1198 = vld [vmem:[#allocation9 + $0x13c0] sm:$0xff]
      %v1199 = vld [vmem:[#allocation9 + $0x13c8] sm:$0xff]
      %v1200 = vld [vmem:[#allocation9 + $0x13d0] sm:$0xff]
      %v1201 = vld [vmem:[#allocation9 + $0x13d8] sm:$0xff]
      %v1202 = vld [vmem:[#allocation9 + $0x13e0] sm:$0xff]
      %v1203 = vld [vmem:[#allocation9 + $0x13e8] sm:$0xff]
      %v1204 = vld [vmem:[#allocation9 + $0x13f0] sm:$0xff]
      %v1205 = vld [vmem:[#allocation9 + $0x13f8] sm:$0xff]
      %v1206 = vld [vmem:[#allocation9 + $0x1400] sm:$0xff]
      %v1207 = vld [vmem:[#allocation9 + $0x1408] sm:$0xff]
      %v1208 = vld [vmem:[#allocation9 + $0x1410] sm:$0xff]
      %v1209 = vld [vmem:[#allocation9 + $0x1418] sm:$0xff]
      %v1210 = vld [vmem:[#allocation9 + $0x1420] sm:$0xff]
      %v1211 = vld [vmem:[#allocation9 + $0x1428] sm:$0xff]
      %v1212 = vld [vmem:[#allocation9 + $0x1430] sm:$0xff]
      %v1213 = vld [vmem:[#allocation9 + $0x1438] sm:$0xff]
      %v1214 = vld [vmem:[#allocation9 + $0x1440] sm:$0xff]
      %v1215 = vld [vmem:[#allocation9 + $0x1448] sm:$0xff]
      %v1216 = vld [vmem:[#allocation9 + $0x1450] sm:$0xff]
      %v1217 = vld [vmem:[#allocation9 + $0x1458] sm:$0xff]
      %v1218 = vld [vmem:[#allocation9 + $0x1460] sm:$0xff]
      %v1219 = vld [vmem:[#allocation9 + $0x1468] sm:$0xff]
      %v1220 = vld [vmem:[#allocation9 + $0x1470] sm:$0xff]
      %v1221 = vld [vmem:[#allocation9 + $0x1478] sm:$0xff]
      %v1222 = vld [vmem:[#allocation9 + $0x1480] sm:$0xff]
      %v1223 = vld [vmem:[#allocation9 + $0x1488] sm:$0xff]
      %v1224 = vld [vmem:[#allocation9 + $0x1490] sm:$0xff]
      %v1225 = vld [vmem:[#allocation9 + $0x1498] sm:$0xff]
      %v1226 = vld [vmem:[#allocation9 + $0x14a0] sm:$0xff]
      %v1227 = vld [vmem:[#allocation9 + $0x14a8] sm:$0xff]
      %v1228 = vld [vmem:[#allocation9 + $0x14b0] sm:$0xff]
      %v1229 = vld [vmem:[#allocation9 + $0x14b8] sm:$0xff]
      %v1230 = vld [vmem:[#allocation9 + $0x14c0] sm:$0xff]
      %v1231 = vld [vmem:[#allocation9 + $0x14c8] sm:$0xff]
      %v1232 = vld [vmem:[#allocation9 + $0x14d0] sm:$0xff]
      %v1233 = vld [vmem:[#allocation9 + $0x14d8] sm:$0xff]
      %v1234 = vld [vmem:[#allocation9 + $0x14e0] sm:$0xff]
      %v1235 = vld [vmem:[#allocation9 + $0x14e8] sm:$0xff]
      %v1236 = vld [vmem:[#allocation9 + $0x14f0] sm:$0xff]
      %v1237 = vld [vmem:[#allocation9 + $0x14f8] sm:$0xff]
      %v1238 = vld [vmem:[#allocation9 + $0x1500] sm:$0xff]
      %v1239 = vld [vmem:[#allocation9 + $0x1508] sm:$0xff]
      %v1240 = vld [vmem:[#allocation9 + $0x1510] sm:$0xff]
      %v1241 = vld [vmem:[#allocation9 + $0x1518] sm:$0xff]
      %v1242 = vld [vmem:[#allocation9 + $0x1520] sm:$0xff]
      %v1243 = vld [vmem:[#allocation9 + $0x1528] sm:$0xff]
      %v1244 = vld [vmem:[#allocation9 + $0x1530] sm:$0xff]
      %v1245 = vld [vmem:[#allocation9 + $0x1538] sm:$0xff]
      %v1246 = vld [vmem:[#allocation9 + $0x1540] sm:$0xff]
      %v1247 = vld [vmem:[#allocation9 + $0x1548] sm:$0xff]
      %v1248 = vld [vmem:[#allocation9 + $0x1550] sm:$0xff]
      %v1249 = vld [vmem:[#allocation9 + $0x1558] sm:$0xff]
      %v1250 = vld [vmem:[#allocation9 + $0x1560] sm:$0xff]
      %v1251 = vld [vmem:[#allocation9 + $0x1568] sm:$0xff]
      %v1252 = vld [vmem:[#allocation9 + $0x1570] sm:$0xff]
      %v1253 = vld [vmem:[#allocation9 + $0x1578] sm:$0xff]
      %v1254 = vld [vmem:[#allocation9 + $0x1580] sm:$0xff]
      %v1255 = vld [vmem:[#allocation9 + $0x1588] sm:$0xff]
      %v1256 = vld [vmem:[#allocation9 + $0x1590] sm:$0xff]
      %v1257 = vld [vmem:[#allocation9 + $0x1598] sm:$0xff]
      %v1258 = vld [vmem:[#allocation9 + $0x15a0] sm:$0xff]
      %v1259 = vld [vmem:[#allocation9 + $0x15a8] sm:$0xff]
      %v1260 = vld [vmem:[#allocation9 + $0x15b0] sm:$0xff]
      %v1261 = vld [vmem:[#allocation9 + $0x15b8] sm:$0xff]
      %v1262 = vld [vmem:[#allocation9 + $0x15c0] sm:$0xff]
      %v1263 = vld [vmem:[#allocation9 + $0x15c8] sm:$0xff]
      %v1264 = vld [vmem:[#allocation9 + $0x15d0] sm:$0xff]
      %v1265 = vld [vmem:[#allocation9 + $0x15d8] sm:$0xff]
      %v1266 = vld [vmem:[#allocation9 + $0x15e0] sm:$0xff]
      %v1267 = vld [vmem:[#allocation9 + $0x15e8] sm:$0xff]
      %v1268 = vld [vmem:[#allocation9 + $0x15f0] sm:$0xff]
      %v1269 = vld [vmem:[#allocation9 + $0x15f8] sm:$0xff]
      %v1270 = vld [vmem:[#allocation9 + $0x1600] sm:$0xff]
      %v1271 = vld [vmem:[#allocation9 + $0x1608] sm:$0xff]
      %v1272 = vld [vmem:[#allocation9 + $0x1610] sm:$0xff]
      %v1273 = vld [vmem:[#allocation9 + $0x1618] sm:$0xff]
      %v1274 = vld [vmem:[#allocation9 + $0x1620] sm:$0xff]
      %v1275 = vld [vmem:[#allocation9 + $0x1628] sm:$0xff]
      %v1276 = vld [vmem:[#allocation9 + $0x1630] sm:$0xff]
      %v1277 = vld [vmem:[#allocation9 + $0x1638] sm:$0xff]
      %v1278 = vld [vmem:[#allocation9 + $0x1640] sm:$0xff]
      %v1279 = vld [vmem:[#allocation9 + $0x1648] sm:$0xff]
      %v1280 = vld [vmem:[#allocation9 + $0x1650] sm:$0xff]
      %v1281 = vld [vmem:[#allocation9 + $0x1658] sm:$0xff]
      %v1282 = vld [vmem:[#allocation9 + $0x1660] sm:$0xff]
      %v1283 = vld [vmem:[#allocation9 + $0x1668] sm:$0xff]
      %v1284 = vld [vmem:[#allocation9 + $0x1670] sm:$0xff]
      %v1285 = vld [vmem:[#allocation9 + $0x1678] sm:$0xff]
      %v1286 = vld [vmem:[#allocation9 + $0x1680] sm:$0xff]
      %v1287 = vld [vmem:[#allocation9 + $0x1688] sm:$0xff]
      %v1288 = vld [vmem:[#allocation9 + $0x1690] sm:$0xff]
      %v1289 = vld [vmem:[#allocation9 + $0x1698] sm:$0xff]
      %v1290 = vld [vmem:[#allocation9 + $0x16a0] sm:$0xff]
      %v1291 = vld [vmem:[#allocation9 + $0x16a8] sm:$0xff]
      %v1292 = vld [vmem:[#allocation9 + $0x16b0] sm:$0xff]
      %v1293 = vld [vmem:[#allocation9 + $0x16b8] sm:$0xff]
      %v1294 = vld [vmem:[#allocation9 + $0x16c0] sm:$0xff]
      %v1295 = vld [vmem:[#allocation9 + $0x16c8] sm:$0xff]
      %v1296 = vld [vmem:[#allocation9 + $0x16d0] sm:$0xff]
      %v1297 = vld [vmem:[#allocation9 + $0x16d8] sm:$0xff]
      %v1298 = vld [vmem:[#allocation9 + $0x16e0] sm:$0xff]
      %v1299 = vld [vmem:[#allocation9 + $0x16e8] sm:$0xff]
      %v1300 = vld [vmem:[#allocation9 + $0x16f0] sm:$0xff]
      %v1301 = vld [vmem:[#allocation9 + $0x16f8] sm:$0xff]
      %v1302 = vld [vmem:[#allocation9 + $0x1700] sm:$0xff]
      %v1303 = vld [vmem:[#allocation9 + $0x1708] sm:$0xff]
      %v1304 = vld [vmem:[#allocation9 + $0x1710] sm:$0xff]
      %v1305 = vld [vmem:[#allocation9 + $0x1718] sm:$0xff]
      %v1306 = vld [vmem:[#allocation9 + $0x1720] sm:$0xff]
      %v1307 = vld [vmem:[#allocation9 + $0x1728] sm:$0xff]
      %v1308 = vld [vmem:[#allocation9 + $0x1730] sm:$0xff]
      %v1309 = vld [vmem:[#allocation9 + $0x1738] sm:$0xff]
      %v1310 = vld [vmem:[#allocation9 + $0x1740] sm:$0xff]
      %v1311 = vld [vmem:[#allocation9 + $0x1748] sm:$0xff]
      %v1312 = vld [vmem:[#allocation9 + $0x1750] sm:$0xff]
      %v1313 = vld [vmem:[#allocation9 + $0x1758] sm:$0xff]
      %v1314 = vld [vmem:[#allocation9 + $0x1760] sm:$0xff]
      %v1315 = vld [vmem:[#allocation9 + $0x1768] sm:$0xff]
      %v1316 = vld [vmem:[#allocation9 + $0x1770] sm:$0xff]
      %v1317 = vld [vmem:[#allocation9 + $0x1778] sm:$0xff]
      %v1318 = vld [vmem:[#allocation9 + $0x1780] sm:$0xff]
      %v1319 = vld [vmem:[#allocation9 + $0x1788] sm:$0xff]
      %v1320 = vld [vmem:[#allocation9 + $0x1790] sm:$0xff]
      %v1321 = vld [vmem:[#allocation9 + $0x1798] sm:$0xff]
      %v1322 = vld [vmem:[#allocation9 + $0x17a0] sm:$0xff]
      %v1323 = vld [vmem:[#allocation9 + $0x17a8] sm:$0xff]
      %v1324 = vld [vmem:[#allocation9 + $0x17b0] sm:$0xff]
      %v1325 = vld [vmem:[#allocation9 + $0x17b8] sm:$0xff]
      %v1326 = vld [vmem:[#allocation9 + $0x17c0] sm:$0xff]
      %v1327 = vld [vmem:[#allocation9 + $0x17c8] sm:$0xff]
      %v1328 = vld [vmem:[#allocation9 + $0x17d0] sm:$0xff]
      %v1329 = vld [vmem:[#allocation9 + $0x17d8] sm:$0xff]
      %v1330 = vld [vmem:[#allocation9 + $0x17e0] sm:$0xff]
      %v1331 = vld [vmem:[#allocation9 + $0x17e8] sm:$0xff]
      %v1332 = vld [vmem:[#allocation9 + $0x17f0] sm:$0xff]
      %v1333 = vld [vmem:[#allocation9 + $0x17f8] sm:$0xff]
      %v1334 = vld [vmem:[#allocation9 + $0x1800] sm:$0xff]
      %v1335 = vld [vmem:[#allocation9 + $0x1808] sm:$0xff]
      %v1336 = vld [vmem:[#allocation9 + $0x1810] sm:$0xff]
      %v1337 = vld [vmem:[#allocation9 + $0x1818] sm:$0xff]
      %v1338 = vld [vmem:[#allocation9 + $0x1820] sm:$0xff]
      %v1339 = vld [vmem:[#allocation9 + $0x1828] sm:$0xff]
      %v1340 = vld [vmem:[#allocation9 + $0x1830] sm:$0xff]
      %v1341 = vld [vmem:[#allocation9 + $0x1838] sm:$0xff]
      %v1342 = vld [vmem:[#allocation9 + $0x1840] sm:$0xff]
      %v1343 = vld [vmem:[#allocation9 + $0x1848] sm:$0xff]
      %v1344 = vld [vmem:[#allocation9 + $0x1850] sm:$0xff]
      %v1345 = vld [vmem:[#allocation9 + $0x1858] sm:$0xff]
      %v1346 = vld [vmem:[#allocation9 + $0x1860] sm:$0xff]
      %v1347 = vld [vmem:[#allocation9 + $0x1868] sm:$0xff]
      %v1348 = vld [vmem:[#allocation9 + $0x1870] sm:$0xff]
      %v1349 = vld [vmem:[#allocation9 + $0x1878] sm:$0xff]
      %v1350 = vld [vmem:[#allocation9 + $0x1880] sm:$0xff]
      %v1351 = vld [vmem:[#allocation9 + $0x1888] sm:$0xff]
      %v1352 = vld [vmem:[#allocation9 + $0x1890] sm:$0xff]
      %v1353 = vld [vmem:[#allocation9 + $0x1898] sm:$0xff]
      %v1354 = vld [vmem:[#allocation9 + $0x18a0] sm:$0xff]
      %v1355 = vld [vmem:[#allocation9 + $0x18a8] sm:$0xff]
      %v1356 = vld [vmem:[#allocation9 + $0x18b0] sm:$0xff]
      %v1357 = vld [vmem:[#allocation9 + $0x18b8] sm:$0xff]
      %v1358 = vld [vmem:[#allocation9 + $0x18c0] sm:$0xff]
      %v1359 = vld [vmem:[#allocation9 + $0x18c8] sm:$0xff]
      %v1360 = vld [vmem:[#allocation9 + $0x18d0] sm:$0xff]
      %v1361 = vld [vmem:[#allocation9 + $0x18d8] sm:$0xff]
      %v1362 = vld [vmem:[#allocation9 + $0x18e0] sm:$0xff]
      %v1363 = vld [vmem:[#allocation9 + $0x18e8] sm:$0xff]
      %v1364 = vld [vmem:[#allocation9 + $0x18f0] sm:$0xff]
      %v1365 = vld [vmem:[#allocation9 + $0x18f8] sm:$0xff]
      %v1366 = vld [vmem:[#allocation9 + $0x1900] sm:$0xff]
      %v1367 = vld [vmem:[#allocation9 + $0x1908] sm:$0xff]
      %v1368 = vld [vmem:[#allocation9 + $0x1910] sm:$0xff]
      %v1369 = vld [vmem:[#allocation9 + $0x1918] sm:$0xff]
      %v1370 = vld [vmem:[#allocation9 + $0x1920] sm:$0xff]
      %v1371 = vld [vmem:[#allocation9 + $0x1928] sm:$0xff]
      %v1372 = vld [vmem:[#allocation9 + $0x1930] sm:$0xff]
      %v1373 = vld [vmem:[#allocation9 + $0x1938] sm:$0xff]
      %v1374 = vld [vmem:[#allocation9 + $0x1940] sm:$0xff]
      %v1375 = vld [vmem:[#allocation9 + $0x1948] sm:$0xff]
      %v1376 = vld [vmem:[#allocation9 + $0x1950] sm:$0xff]
      %v1377 = vld [vmem:[#allocation9 + $0x1958] sm:$0xff]
      %v1378 = vld [vmem:[#allocation9 + $0x1960] sm:$0xff]
      %v1379 = vld [vmem:[#allocation9 + $0x1968] sm:$0xff]
      %v1380 = vld [vmem:[#allocation9 + $0x1970] sm:$0xff]
      %v1381 = vld [vmem:[#allocation9 + $0x1978] sm:$0xff]
      %v1382 = vld [vmem:[#allocation9 + $0x1980] sm:$0xff]
      %v1383 = vld [vmem:[#allocation9 + $0x1988] sm:$0xff]
      %v1384 = vld [vmem:[#allocation9 + $0x1990] sm:$0xff]
      %v1385 = vld [vmem:[#allocation9 + $0x1998] sm:$0xff]
      %v1386 = vld [vmem:[#allocation9 + $0x19a0] sm:$0xff]
      %v1387 = vld [vmem:[#allocation9 + $0x19a8] sm:$0xff]
      %v1388 = vld [vmem:[#allocation9 + $0x19b0] sm:$0xff]
      %v1389 = vld [vmem:[#allocation9 + $0x19b8] sm:$0xff]
      %v1390 = vld [vmem:[#allocation9 + $0x19c0] sm:$0xff]
      %v1391 = vld [vmem:[#allocation9 + $0x19c8] sm:$0xff]
      %v1392 = vld [vmem:[#allocation9 + $0x19d0] sm:$0xff]
      %v1393 = vld [vmem:[#allocation9 + $0x19d8] sm:$0xff]
      %v1394 = vld [vmem:[#allocation9 + $0x19e0] sm:$0xff]
      %v1395 = vld [vmem:[#allocation9 + $0x19e8] sm:$0xff]
      %v1396 = vld [vmem:[#allocation9 + $0x19f0] sm:$0xff]
      %v1397 = vld [vmem:[#allocation9 + $0x19f8] sm:$0xff]
      %v1398 = vld [vmem:[#allocation9 + $0x1a00] sm:$0xff]
      %v1399 = vld [vmem:[#allocation9 + $0x1a08] sm:$0xff]
      %v1400 = vld [vmem:[#allocation9 + $0x1a10] sm:$0xff]
      %v1401 = vld [vmem:[#allocation9 + $0x1a18] sm:$0xff]
      %v1402 = vld [vmem:[#allocation9 + $0x1a20] sm:$0xff]
      %v1403 = vld [vmem:[#allocation9 + $0x1a28] sm:$0xff]
      %v1404 = vld [vmem:[#allocation9 + $0x1a30] sm:$0xff]
      %v1405 = vld [vmem:[#allocation9 + $0x1a38] sm:$0xff]
      %v1406 = vld [vmem:[#allocation9 + $0x1a40] sm:$0xff]
      %v1407 = vld [vmem:[#allocation9 + $0x1a48] sm:$0xff]
      %v1408 = vld [vmem:[#allocation9 + $0x1a50] sm:$0xff]
      %v1409 = vld [vmem:[#allocation9 + $0x1a58] sm:$0xff]
      %v1410 = vld [vmem:[#allocation9 + $0x1a60] sm:$0xff]
      %v1411 = vld [vmem:[#allocation9 + $0x1a68] sm:$0xff]
      %v1412 = vld [vmem:[#allocation9 + $0x1a70] sm:$0xff]
      %v1413 = vld [vmem:[#allocation9 + $0x1a78] sm:$0xff]
      %v1414 = vld [vmem:[#allocation9 + $0x1a80] sm:$0xff]
      %v1415 = vld [vmem:[#allocation9 + $0x1a88] sm:$0xff]
      %v1416 = vld [vmem:[#allocation9 + $0x1a90] sm:$0xff]
      %v1417 = vld [vmem:[#allocation9 + $0x1a98] sm:$0xff]
      %v1418 = vld [vmem:[#allocation9 + $0x1aa0] sm:$0xff]
      %v1419 = vld [vmem:[#allocation9 + $0x1aa8] sm:$0xff]
      %v1420 = vld [vmem:[#allocation9 + $0x1ab0] sm:$0xff]
      %v1421 = vld [vmem:[#allocation9 + $0x1ab8] sm:$0xff]
      %v1422 = vld [vmem:[#allocation9 + $0x1ac0] sm:$0xff]
      %v1423 = vld [vmem:[#allocation9 + $0x1ac8] sm:$0xff]
      %v1424 = vld [vmem:[#allocation9 + $0x1ad0] sm:$0xff]
      %v1425 = vld [vmem:[#allocation9 + $0x1ad8] sm:$0xff]
      %v1426 = vld [vmem:[#allocation9 + $0x1ae0] sm:$0xff]
      %v1427 = vld [vmem:[#allocation9 + $0x1ae8] sm:$0xff]
      %v1428 = vld [vmem:[#allocation9 + $0x1af0] sm:$0xff]
      %v1429 = vld [vmem:[#allocation9 + $0x1af8] sm:$0xff]
      %v1430 = vld [vmem:[#allocation9 + $0x1b00] sm:$0xff]
      %v1431 = vld [vmem:[#allocation9 + $0x1b08] sm:$0xff]
      %v1432 = vld [vmem:[#allocation9 + $0x1b10] sm:$0xff]
      %v1433 = vld [vmem:[#allocation9 + $0x1b18] sm:$0xff]
      %v1434 = vld [vmem:[#allocation9 + $0x1b20] sm:$0xff]
      %v1435 = vld [vmem:[#allocation9 + $0x1b28] sm:$0xff]
      %v1436 = vld [vmem:[#allocation9 + $0x1b30] sm:$0xff]
      %v1437 = vld [vmem:[#allocation9 + $0x1b38] sm:$0xff]
      %v1438 = vld [vmem:[#allocation9 + $0x1b40] sm:$0xff]
      %v1439 = vld [vmem:[#allocation9 + $0x1b48] sm:$0xff]
      %v1440 = vld [vmem:[#allocation9 + $0x1b50] sm:$0xff]
      %v1441 = vld [vmem:[#allocation9 + $0x1b58] sm:$0xff]
      %v1442 = vld [vmem:[#allocation9 + $0x1b60] sm:$0xff]
      %v1443 = vld [vmem:[#allocation9 + $0x1b68] sm:$0xff]
      %v1444 = vld [vmem:[#allocation9 + $0x1b70] sm:$0xff]
      %v1445 = vld [vmem:[#allocation9 + $0x1b78] sm:$0xff]
      %v1446 = vld [vmem:[#allocation9 + $0x1b80] sm:$0xff]
      %v1447 = vld [vmem:[#allocation9 + $0x1b88] sm:$0xff]
      %v1448 = vld [vmem:[#allocation9 + $0x1b90] sm:$0xff]
      %v1449 = vld [vmem:[#allocation9 + $0x1b98] sm:$0xff]
      %v1450 = vld [vmem:[#allocation9 + $0x1ba0] sm:$0xff]
      %v1451 = vld [vmem:[#allocation9 + $0x1ba8] sm:$0xff]
      %v1452 = vld [vmem:[#allocation9 + $0x1bb0] sm:$0xff]
      %v1453 = vld [vmem:[#allocation9 + $0x1bb8] sm:$0xff]
      %v1454 = vld [vmem:[#allocation9 + $0x1bc0] sm:$0xff]
      %v1455 = vld [vmem:[#allocation9 + $0x1bc8] sm:$0xff]
      %v1456 = vld [vmem:[#allocation9 + $0x1bd0] sm:$0xff]
      %v1457 = vld [vmem:[#allocation9 + $0x1bd8] sm:$0xff]
      %v1458 = vld [vmem:[#allocation9 + $0x1be0] sm:$0xff]
      %v1459 = vld [vmem:[#allocation9 + $0x1be8] sm:$0xff]
      %v1460 = vld [vmem:[#allocation9 + $0x1bf0] sm:$0xff]
      %v1461 = vld [vmem:[#allocation9 + $0x1bf8] sm:$0xff]
      %v1462 = vld [vmem:[#allocation9 + $0x1c00] sm:$0xff]
      %v1463 = vld [vmem:[#allocation9 + $0x1c08] sm:$0xff]
      %v1464 = vld [vmem:[#allocation9 + $0x1c10] sm:$0xff]
      %v1465 = vld [vmem:[#allocation9 + $0x1c18] sm:$0xff]
      %v1466 = vld [vmem:[#allocation9 + $0x1c20] sm:$0xff]
      %v1467 = vld [vmem:[#allocation9 + $0x1c28] sm:$0xff]
      %v1468 = vld [vmem:[#allocation9 + $0x1c30] sm:$0xff]
      %v1469 = vld [vmem:[#allocation9 + $0x1c38] sm:$0xff]
      %v1470 = vld [vmem:[#allocation9 + $0x1c40] sm:$0xff]
      %v1471 = vld [vmem:[#allocation9 + $0x1c48] sm:$0xff]
      %v1472 = vld [vmem:[#allocation9 + $0x1c50] sm:$0xff]
      %v1473 = vld [vmem:[#allocation9 + $0x1c58] sm:$0xff]
      %v1474 = vld [vmem:[#allocation9 + $0x1c60] sm:$0xff]
      %v1475 = vld [vmem:[#allocation9 + $0x1c68] sm:$0xff]
      %v1476 = vld [vmem:[#allocation9 + $0x1c70] sm:$0xff]
      %v1477 = vld [vmem:[#allocation9 + $0x1c78] sm:$0xff]
      %v1478 = vld [vmem:[#allocation9 + $0x1c80] sm:$0xff]
      %v1479 = vld [vmem:[#allocation9 + $0x1c88] sm:$0xff]
      %v1480 = vld [vmem:[#allocation9 + $0x1c90] sm:$0xff]
      %v1481 = vld [vmem:[#allocation9 + $0x1c98] sm:$0xff]
      %v1482 = vld [vmem:[#allocation9 + $0x1ca0] sm:$0xff]
      %v1483 = vld [vmem:[#allocation9 + $0x1ca8] sm:$0xff]
      %v1484 = vld [vmem:[#allocation9 + $0x1cb0] sm:$0xff]
      %v1485 = vld [vmem:[#allocation9 + $0x1cb8] sm:$0xff]
      %v1486 = vld [vmem:[#allocation9 + $0x1cc0] sm:$0xff]
      %v1487 = vld [vmem:[#allocation9 + $0x1cc8] sm:$0xff]
      %v1488 = vld [vmem:[#allocation9 + $0x1cd0] sm:$0xff]
      %v1489 = vld [vmem:[#allocation9 + $0x1cd8] sm:$0xff]
      %v1490 = vld [vmem:[#allocation9 + $0x1ce0] sm:$0xff]
      %v1491 = vld [vmem:[#allocation9 + $0x1ce8] sm:$0xff]
      %v1492 = vld [vmem:[#allocation9 + $0x1cf0] sm:$0xff]
      %v1493 = vld [vmem:[#allocation9 + $0x1cf8] sm:$0xff]
      %v1494 = vld [vmem:[#allocation9 + $0x1d00] sm:$0xff]
      %v1495 = vld [vmem:[#allocation9 + $0x1d08] sm:$0xff]
      %v1496 = vld [vmem:[#allocation9 + $0x1d10] sm:$0xff]
      %v1497 = vld [vmem:[#allocation9 + $0x1d18] sm:$0xff]
      %v1498 = vld [vmem:[#allocation9 + $0x1d20] sm:$0xff]
      %v1499 = vld [vmem:[#allocation9 + $0x1d28] sm:$0xff]
      %v1500 = vld [vmem:[#allocation9 + $0x1d30] sm:$0xff]
      %v1501 = vld [vmem:[#allocation9 + $0x1d38] sm:$0xff]
      %v1502 = vld [vmem:[#allocation9 + $0x1d40] sm:$0xff]
      %v1503 = vld [vmem:[#allocation9 + $0x1d48] sm:$0xff]
      %v1504 = vld [vmem:[#allocation9 + $0x1d50] sm:$0xff]
      %v1505 = vld [vmem:[#allocation9 + $0x1d58] sm:$0xff]
      %v1506 = vld [vmem:[#allocation9 + $0x1d60] sm:$0xff]
      %v1507 = vld [vmem:[#allocation9 + $0x1d68] sm:$0xff]
      %v1508 = vld [vmem:[#allocation9 + $0x1d70] sm:$0xff]
      %v1509 = vld [vmem:[#allocation9 + $0x1d78] sm:$0xff]
      %v1510 = vld [vmem:[#allocation9 + $0x1d80] sm:$0xff]
      %v1511 = vld [vmem:[#allocation9 + $0x1d88] sm:$0xff]
      %v1512 = vld [vmem:[#allocation9 + $0x1d90] sm:$0xff]
      %v1513 = vld [vmem:[#allocation9 + $0x1d98] sm:$0xff]
      %v1514 = vld [vmem:[#allocation9 + $0x1da0] sm:$0xff]
      %v1515 = vld [vmem:[#allocation9 + $0x1da8] sm:$0xff]
      %v1516 = vld [vmem:[#allocation9 + $0x1db0] sm:$0xff]
      %v1517 = vld [vmem:[#allocation9 + $0x1db8] sm:$0xff]
      %v1518 = vld [vmem:[#allocation9 + $0x1dc0] sm:$0xff]
      %v1519 = vld [vmem:[#allocation9 + $0x1dc8] sm:$0xff]
      %v1520 = vld [vmem:[#allocation9 + $0x1dd0] sm:$0xff]
      %v1521 = vld [vmem:[#allocation9 + $0x1dd8] sm:$0xff]
      %v1522 = vld [vmem:[#allocation9 + $0x1de0] sm:$0xff]
      %v1523 = vld [vmem:[#allocation9 + $0x1de8] sm:$0xff]
      %v1524 = vld [vmem:[#allocation9 + $0x1df0] sm:$0xff]
      %v1525 = vld [vmem:[#allocation9 + $0x1df8] sm:$0xff]
      %v1526 = vld [vmem:[#allocation9 + $0x1e00] sm:$0xff]
      %v1527 = vld [vmem:[#allocation9 + $0x1e08] sm:$0xff]
      %v1528 = vld [vmem:[#allocation9 + $0x1e10] sm:$0xff]
      %v1529 = vld [vmem:[#allocation9 + $0x1e18] sm:$0xff]
      %v1530 = vld [vmem:[#allocation9 + $0x1e20] sm:$0xff]
      %v1531 = vld [vmem:[#allocation9 + $0x1e28] sm:$0xff]
      %v1532 = vld [vmem:[#allocation9 + $0x1e30] sm:$0xff]
      %v1533 = vld [vmem:[#allocation9 + $0x1e38] sm:$0xff]
      %v1534 = vld [vmem:[#allocation9 + $0x1e40] sm:$0xff]
      %v1535 = vld [vmem:[#allocation9 + $0x1e48] sm:$0xff]
      %v1536 = vld [vmem:[#allocation9 + $0x1e50] sm:$0xff]
      %v1537 = vld [vmem:[#allocation9 + $0x1e58] sm:$0xff]
      %v1538 = vld [vmem:[#allocation9 + $0x1e60] sm:$0xff]
      %v1539 = vld [vmem:[#allocation9 + $0x1e68] sm:$0xff]
      %v1540 = vld [vmem:[#allocation9 + $0x1e70] sm:$0xff]
      %v1541 = vld [vmem:[#allocation9 + $0x1e78] sm:$0xff]
      %v1542 = vld [vmem:[#allocation9 + $0x1e80] sm:$0xff]
      %v1543 = vld [vmem:[#allocation9 + $0x1e88] sm:$0xff]
      %v1544 = vld [vmem:[#allocation9 + $0x1e90] sm:$0xff]
      %v1545 = vld [vmem:[#allocation9 + $0x1e98] sm:$0xff]
      %v1546 = vld [vmem:[#allocation9 + $0x1ea0] sm:$0xff]
      %v1547 = vld [vmem:[#allocation9 + $0x1ea8] sm:$0xff]
      %v1548 = vld [vmem:[#allocation9 + $0x1eb0] sm:$0xff]
      %v1549 = vld [vmem:[#allocation9 + $0x1eb8] sm:$0xff]
      %v1550 = vld [vmem:[#allocation9 + $0x1ec0] sm:$0xff]
      %v1551 = vld [vmem:[#allocation9 + $0x1ec8] sm:$0xff]
      %v1552 = vld [vmem:[#allocation9 + $0x1ed0] sm:$0xff]
      %v1553 = vld [vmem:[#allocation9 + $0x1ed8] sm:$0xff]
      %v1554 = vld [vmem:[#allocation9 + $0x1ee0] sm:$0xff]
      %v1555 = vld [vmem:[#allocation9 + $0x1ee8] sm:$0xff]
      %v1556 = vld [vmem:[#allocation9 + $0x1ef0] sm:$0xff]
      %v1557 = vld [vmem:[#allocation9 + $0x1ef8] sm:$0xff]
      %v1558 = vld [vmem:[#allocation9 + $0x1f00] sm:$0xff]
      %v1559 = vld [vmem:[#allocation9 + $0x1f08] sm:$0xff]
      %v1560 = vld [vmem:[#allocation9 + $0x1f10] sm:$0xff]
      %v1561 = vld [vmem:[#allocation9 + $0x1f18] sm:$0xff]
      %v1562 = vld [vmem:[#allocation9 + $0x1f20] sm:$0xff]
      %v1563 = vld [vmem:[#allocation9 + $0x1f28] sm:$0xff]
      %v1564 = vld [vmem:[#allocation9 + $0x1f30] sm:$0xff]
      %v1565 = vld [vmem:[#allocation9 + $0x1f38] sm:$0xff]
      %v1566 = vld [vmem:[#allocation9 + $0x1f40] sm:$0xff]
      %v1567 = vld [vmem:[#allocation9 + $0x1f48] sm:$0xff]
      %v1568 = vld [vmem:[#allocation9 + $0x1f50] sm:$0xff]
      %v1569 = vld [vmem:[#allocation9 + $0x1f58] sm:$0xff]
      %v1570 = vld [vmem:[#allocation9 + $0x1f60] sm:$0xff]
      %v1571 = vld [vmem:[#allocation9 + $0x1f68] sm:$0xff]
      %v1572 = vld [vmem:[#allocation9 + $0x1f70] sm:$0xff]
      %v1573 = vld [vmem:[#allocation9 + $0x1f78] sm:$0xff]
      %v1574 = vld [vmem:[#allocation9 + $0x1f80] sm:$0xff]
      %v1575 = vld [vmem:[#allocation9 + $0x1f88] sm:$0xff]
      %v1576 = vld [vmem:[#allocation9 + $0x1f90] sm:$0xff]
      %v1577 = vld [vmem:[#allocation9 + $0x1f98] sm:$0xff]
      %v1578 = vld [vmem:[#allocation9 + $0x1fa0] sm:$0xff]
      %v1579 = vld [vmem:[#allocation9 + $0x1fa8] sm:$0xff]
      %v1580 = vld [vmem:[#allocation9 + $0x1fb0] sm:$0xff]
      %v1581 = vld [vmem:[#allocation9 + $0x1fb8] sm:$0xff]
      %v1582 = vld [vmem:[#allocation9 + $0x1fc0] sm:$0xff]
      %v1583 = vld [vmem:[#allocation9 + $0x1fc8] sm:$0xff]
      %v1584 = vld [vmem:[#allocation9 + $0x1fd0] sm:$0xff]
      %v1585 = vld [vmem:[#allocation9 + $0x1fd8] sm:$0xff]
      %v1586 = vld [vmem:[#allocation9 + $0x1fe0] sm:$0xff]
      %v1587 = vld [vmem:[#allocation9 + $0x1fe8] sm:$0xff]
      %v1588 = vld [vmem:[#allocation9 + $0x1ff0] sm:$0xff]
      %v1589 = vld [vmem:[#allocation9 + $0x1ff8] sm:$0xff]
      %v1590 = vld [vmem:[#allocation9 + $0x2000] sm:$0xff]
      %v1591 = vld [vmem:[#allocation9 + $0x2008] sm:$0xff]
      %v1592 = vld [vmem:[#allocation9 + $0x2010] sm:$0xff]
      %v1593 = vld [vmem:[#allocation9 + $0x2018] sm:$0xff]
      %v1594 = vld [vmem:[#allocation9 + $0x2020] sm:$0xff]
      %v1595 = vld [vmem:[#allocation9 + $0x2028] sm:$0xff]
      %v1596 = vld [vmem:[#allocation9 + $0x2030] sm:$0xff]
      %v1597 = vld [vmem:[#allocation9 + $0x2038] sm:$0xff]
      %v1598 = vld [vmem:[#allocation9 + $0x2040] sm:$0xff]
      %v1599 = vld [vmem:[#allocation9 + $0x2048] sm:$0xff]
      %v1600 = vld [vmem:[#allocation9 + $0x2050] sm:$0xff]
      %v1601 = vld [vmem:[#allocation9 + $0x2058] sm:$0xff]
      %v1602 = vld [vmem:[#allocation9 + $0x2060] sm:$0xff]
      %v1603 = vld [vmem:[#allocation9 + $0x2068] sm:$0xff]
      %v1604 = vld [vmem:[#allocation9 + $0x2070] sm:$0xff]
      %v1605 = vld [vmem:[#allocation9 + $0x2078] sm:$0xff]
      %v1606 = vld [vmem:[#allocation9 + $0x2080] sm:$0xff]
      %v1607 = vld [vmem:[#allocation9 + $0x2088] sm:$0xff]
      %v1608 = vld [vmem:[#allocation9 + $0x2090] sm:$0xff]
      %v1609 = vld [vmem:[#allocation9 + $0x2098] sm:$0xff]
      %v1610 = vld [vmem:[#allocation9 + $0x20a0] sm:$0xff]
      %v1611 = vld [vmem:[#allocation9 + $0x20a8] sm:$0xff]
      %v1612 = vld [vmem:[#allocation9 + $0x20b0] sm:$0xff]
      %v1613 = vld [vmem:[#allocation9 + $0x20b8] sm:$0xff]
      %v1614 = vld [vmem:[#allocation9 + $0x20c0] sm:$0xff]
      %v1615 = vld [vmem:[#allocation9 + $0x20c8] sm:$0xff]
      %v1616 = vld [vmem:[#allocation9 + $0x20d0] sm:$0xff]
      %v1617 = vld [vmem:[#allocation9 + $0x20d8] sm:$0xff]
      %v1618 = vld [vmem:[#allocation9 + $0x20e0] sm:$0xff]
      %v1619 = vld [vmem:[#allocation9 + $0x20e8] sm:$0xff]
      %v1620 = vld [vmem:[#allocation9 + $0x20f0] sm:$0xff]
      %v1621 = vld [vmem:[#allocation9 + $0x20f8] sm:$0xff]
      %v1622 = vld [vmem:[#allocation9 + $0x2100] sm:$0xff]
      %v1623 = vld [vmem:[#allocation9 + $0x2108] sm:$0xff]
      %v1624 = vld [vmem:[#allocation9 + $0x2110] sm:$0xff]
      %v1625 = vld [vmem:[#allocation9 + $0x2118] sm:$0xff]
      %v1626 = vld [vmem:[#allocation9 + $0x2120] sm:$0xff]
      %v1627 = vld [vmem:[#allocation9 + $0x2128] sm:$0xff]
      %v1628 = vld [vmem:[#allocation9 + $0x2130] sm:$0xff]
      %v1629 = vld [vmem:[#allocation9 + $0x2138] sm:$0xff]
      %v1630 = vld [vmem:[#allocation9 + $0x2140] sm:$0xff]
      %v1631 = vld [vmem:[#allocation9 + $0x2148] sm:$0xff]
      %v1632 = vld [vmem:[#allocation9 + $0x2150] sm:$0xff]
      %v1633 = vld [vmem:[#allocation9 + $0x2158] sm:$0xff]
      %v1634 = vld [vmem:[#allocation9 + $0x2160] sm:$0xff]
      %v1635 = vld [vmem:[#allocation9 + $0x2168] sm:$0xff]
      %v1636 = vld [vmem:[#allocation9 + $0x2170] sm:$0xff]
      %v1637 = vld [vmem:[#allocation9 + $0x2178] sm:$0xff]
      %v1638 = vld [vmem:[#allocation9 + $0x2180] sm:$0xff]
      %v1639 = vld [vmem:[#allocation9 + $0x2188] sm:$0xff]
      %v1640 = vld [vmem:[#allocation9 + $0x2190] sm:$0xff]
      %v1641 = vld [vmem:[#allocation9 + $0x2198] sm:$0xff]
      %v1642 = vld [vmem:[#allocation9 + $0x21a0] sm:$0xff]
      %v1643 = vld [vmem:[#allocation9 + $0x21a8] sm:$0xff]
      %v1644 = vld [vmem:[#allocation9 + $0x21b0] sm:$0xff]
      %v1645 = vld [vmem:[#allocation9 + $0x21b8] sm:$0xff]
      %v1646 = vld [vmem:[#allocation9 + $0x21c0] sm:$0xff]
      %v1647 = vld [vmem:[#allocation9 + $0x21c8] sm:$0xff]
      %v1648 = vld [vmem:[#allocation9 + $0x21d0] sm:$0xff]
      %v1649 = vld [vmem:[#allocation9 + $0x21d8] sm:$0xff]
      %v1650 = vld [vmem:[#allocation9 + $0x21e0] sm:$0xff]
      %v1651 = vld [vmem:[#allocation9 + $0x21e8] sm:$0xff]
      %v1652 = vld [vmem:[#allocation9 + $0x21f0] sm:$0xff]
      %v1653 = vld [vmem:[#allocation9 + $0x21f8] sm:$0xff]
      %v1654 = vld [vmem:[#allocation9 + $0x2200] sm:$0xff]
      %v1655 = vld [vmem:[#allocation9 + $0x2208] sm:$0xff]
      %v1656 = vld [vmem:[#allocation9 + $0x2210] sm:$0xff]
      %v1657 = vld [vmem:[#allocation9 + $0x2218] sm:$0xff]
      %v1658 = vld [vmem:[#allocation9 + $0x2220] sm:$0xff]
      %v1659 = vld [vmem:[#allocation9 + $0x2228] sm:$0xff]
      %v1660 = vld [vmem:[#allocation9 + $0x2230] sm:$0xff]
      %v1661 = vld [vmem:[#allocation9 + $0x2238] sm:$0xff]
      %v1662 = vld [vmem:[#allocation9 + $0x2240] sm:$0xff]
      %v1663 = vld [vmem:[#allocation9 + $0x2248] sm:$0xff]
      %v1664 = vld [vmem:[#allocation9 + $0x2250] sm:$0xff]
      %v1665 = vld [vmem:[#allocation9 + $0x2258] sm:$0xff]
      %v1666 = vld [vmem:[#allocation9 + $0x2260] sm:$0xff]
      %v1667 = vld [vmem:[#allocation9 + $0x2268] sm:$0xff]
      %v1668 = vld [vmem:[#allocation9 + $0x2270] sm:$0xff]
      %v1669 = vld [vmem:[#allocation9 + $0x2278] sm:$0xff]
      %v1670 = vld [vmem:[#allocation9 + $0x2280] sm:$0xff]
      %v1671 = vld [vmem:[#allocation9 + $0x2288] sm:$0xff]
      %v1672 = vld [vmem:[#allocation9 + $0x2290] sm:$0xff]
      %v1673 = vld [vmem:[#allocation9 + $0x2298] sm:$0xff]
      %v1674 = vld [vmem:[#allocation9 + $0x22a0] sm:$0xff]
      %v1675 = vld [vmem:[#allocation9 + $0x22a8] sm:$0xff]
      %v1676 = vld [vmem:[#allocation9 + $0x22b0] sm:$0xff]
      %v1677 = vld [vmem:[#allocation9 + $0x22b8] sm:$0xff]
      %v1678 = vld [vmem:[#allocation9 + $0x22c0] sm:$0xff]
      %v1679 = vld [vmem:[#allocation9 + $0x22c8] sm:$0xff]
      %v1680 = vld [vmem:[#allocation9 + $0x22d0] sm:$0xff]
      %v1681 = vld [vmem:[#allocation9 + $0x22d8] sm:$0xff]
      %v1682 = vld [vmem:[#allocation9 + $0x22e0] sm:$0xff]
      %v1683 = vld [vmem:[#allocation9 + $0x22e8] sm:$0xff]
      %v1684 = vld [vmem:[#allocation9 + $0x22f0] sm:$0xff]
      %v1685 = vld [vmem:[#allocation9 + $0x22f8] sm:$0xff]
      %v1686 = vld [vmem:[#allocation9 + $0x2300] sm:$0xff]
      %v1687 = vld [vmem:[#allocation9 + $0x2308] sm:$0xff]
      %v1688 = vld [vmem:[#allocation9 + $0x2310] sm:$0xff]
      %v1689 = vld [vmem:[#allocation9 + $0x2318] sm:$0xff]
      %v1690 = vld [vmem:[#allocation9 + $0x2320] sm:$0xff]
      %v1691 = vld [vmem:[#allocation9 + $0x2328] sm:$0xff]
      %v1692 = vld [vmem:[#allocation9 + $0x2330] sm:$0xff]
      %v1693 = vld [vmem:[#allocation9 + $0x2338] sm:$0xff]
      %v1694 = vld [vmem:[#allocation9 + $0x2340] sm:$0xff]
      %v1695 = vld [vmem:[#allocation9 + $0x2348] sm:$0xff]
      %v1696 = vld [vmem:[#allocation9 + $0x2350] sm:$0xff]
      %v1697 = vld [vmem:[#allocation9 + $0x2358] sm:$0xff]
      %v1698 = vld [vmem:[#allocation9 + $0x2360] sm:$0xff]
      %v1699 = vld [vmem:[#allocation9 + $0x2368] sm:$0xff]
      %v1700 = vld [vmem:[#allocation9 + $0x2370] sm:$0xff]
      %v1701 = vld [vmem:[#allocation9 + $0x2378] sm:$0xff]
      %v1702 = vld [vmem:[#allocation9 + $0x2380] sm:$0xff]
      %v1703 = vld [vmem:[#allocation9 + $0x2388] sm:$0xff]
      %v1704 = vld [vmem:[#allocation9 + $0x2390] sm:$0xff]
      %v1705 = vld [vmem:[#allocation9 + $0x2398] sm:$0xff]
      %v1706 = vld [vmem:[#allocation9 + $0x23a0] sm:$0xff]
      %v1707 = vld [vmem:[#allocation9 + $0x23a8] sm:$0xff]
      %v1708 = vld [vmem:[#allocation9 + $0x23b0] sm:$0xff]
      %v1709 = vld [vmem:[#allocation9 + $0x23b8] sm:$0xff]
      %v1710 = vld [vmem:[#allocation9 + $0x23c0] sm:$0xff]
      %v1711 = vld [vmem:[#allocation9 + $0x23c8] sm:$0xff]
      %v1712 = vld [vmem:[#allocation9 + $0x23d0] sm:$0xff]
      %v1713 = vld [vmem:[#allocation9 + $0x23d8] sm:$0xff]
      %v1714 = vld [vmem:[#allocation9 + $0x23e0] sm:$0xff]
      %v1715 = vld [vmem:[#allocation9 + $0x23e8] sm:$0xff]
      %v1716 = vld [vmem:[#allocation9 + $0x23f0] sm:$0xff]
      %v1717 = vld [vmem:[#allocation9 + $0x23f8] sm:$0xff]
      %v1718 = vld [vmem:[#allocation9 + $0x2400] sm:$0xff]
      %v1719 = vld [vmem:[#allocation9 + $0x2408] sm:$0xff]
      %v1720 = vld [vmem:[#allocation9 + $0x2410] sm:$0xff]
      %v1721 = vld [vmem:[#allocation9 + $0x2418] sm:$0xff]
      %v1722 = vld [vmem:[#allocation9 + $0x2420] sm:$0xff]
      %v1723 = vld [vmem:[#allocation9 + $0x2428] sm:$0xff]
      %v1724 = vld [vmem:[#allocation9 + $0x2430] sm:$0xff]
      %v1725 = vld [vmem:[#allocation9 + $0x2438] sm:$0xff]
      %v1726 = vld [vmem:[#allocation9 + $0x2440] sm:$0xff]
      %v1727 = vld [vmem:[#allocation9 + $0x2448] sm:$0xff]
      %v1728 = vld [vmem:[#allocation9 + $0x2450] sm:$0xff]
      %v1729 = vld [vmem:[#allocation9 + $0x2458] sm:$0xff]
      %v1730 = vld [vmem:[#allocation9 + $0x2460] sm:$0xff]
      %v1731 = vld [vmem:[#allocation9 + $0x2468] sm:$0xff]
      %v1732 = vld [vmem:[#allocation9 + $0x2470] sm:$0xff]
      %v1733 = vld [vmem:[#allocation9 + $0x2478] sm:$0xff]
      %v1734 = vld [vmem:[#allocation9 + $0x2480] sm:$0xff]
      %v1735 = vld [vmem:[#allocation9 + $0x2488] sm:$0xff]
      %v1736 = vld [vmem:[#allocation9 + $0x2490] sm:$0xff]
      %v1737 = vld [vmem:[#allocation9 + $0x2498] sm:$0xff]
      %v1738 = vld [vmem:[#allocation9 + $0x24a0] sm:$0xff]
      %v1739 = vld [vmem:[#allocation9 + $0x24a8] sm:$0xff]
      %v1740 = vld [vmem:[#allocation9 + $0x24b0] sm:$0xff]
      %v1741 = vld [vmem:[#allocation9 + $0x24b8] sm:$0xff]
      %v1742 = vld [vmem:[#allocation9 + $0x24c0] sm:$0xff]
      %v1743 = vld [vmem:[#allocation9 + $0x24c8] sm:$0xff]
      %v1744 = vld [vmem:[#allocation9 + $0x24d0] sm:$0xff]
      %v1745 = vld [vmem:[#allocation9 + $0x24d8] sm:$0xff]
      %v1746 = vld [vmem:[#allocation9 + $0x24e0] sm:$0xff]
      %v1747 = vld [vmem:[#allocation9 + $0x24e8] sm:$0xff]
      %v1748 = vld [vmem:[#allocation9 + $0x24f0] sm:$0xff]
      %v1749 = vld [vmem:[#allocation9 + $0x24f8] sm:$0xff]
      %v1750 = vld [vmem:[#allocation9 + $0x2500] sm:$0xff]
      %v1751 = vld [vmem:[#allocation9 + $0x2508] sm:$0xff]
      %v1752 = vld [vmem:[#allocation9 + $0x2510] sm:$0xff]
      %v1753 = vld [vmem:[#allocation9 + $0x2518] sm:$0xff]
      %v1754 = vld [vmem:[#allocation9 + $0x2520] sm:$0xff]
      %v1755 = vld [vmem:[#allocation9 + $0x2528] sm:$0xff]
      %v1756 = vld [vmem:[#allocation9 + $0x2530] sm:$0xff]
      %v1757 = vld [vmem:[#allocation9 + $0x2538] sm:$0xff]
      %v1758 = vld [vmem:[#allocation9 + $0x2540] sm:$0xff]
      %v1759 = vld [vmem:[#allocation9 + $0x2548] sm:$0xff]
      %v1760 = vld [vmem:[#allocation9 + $0x2550] sm:$0xff]
      %v1761 = vld [vmem:[#allocation9 + $0x2558] sm:$0xff]
      %v1762 = vld [vmem:[#allocation9 + $0x2560] sm:$0xff]
      %v1763 = vld [vmem:[#allocation9 + $0x2568] sm:$0xff]
      %v1764 = vld [vmem:[#allocation9 + $0x2570] sm:$0xff]
      %v1765 = vld [vmem:[#allocation9 + $0x2578] sm:$0xff]
      %v1766 = vld [vmem:[#allocation9 + $0x2580] sm:$0xff]
      %v1767 = vld [vmem:[#allocation9 + $0x2588] sm:$0xff]
      %v1768 = vld [vmem:[#allocation9 + $0x2590] sm:$0xff]
      %v1769 = vld [vmem:[#allocation9 + $0x2598] sm:$0xff]
      %v1770 = vld [vmem:[#allocation9 + $0x25a0] sm:$0xff]
      %v1771 = vld [vmem:[#allocation9 + $0x25a8] sm:$0xff]
      %v1772 = vld [vmem:[#allocation9 + $0x25b0] sm:$0xff]
      %v1773 = vld [vmem:[#allocation9 + $0x25b8] sm:$0xff]
      %v1774 = vld [vmem:[#allocation9 + $0x25c0] sm:$0xff]
      %v1775 = vld [vmem:[#allocation9 + $0x25c8] sm:$0xff]
      %v1776 = vld [vmem:[#allocation9 + $0x25d0] sm:$0xff]
      %v1777 = vld [vmem:[#allocation9 + $0x25d8] sm:$0xff]
      %v1778 = vld [vmem:[#allocation9 + $0x25e0] sm:$0xff]
      %v1779 = vld [vmem:[#allocation9 + $0x25e8] sm:$0xff]
      %v1780 = vld [vmem:[#allocation9 + $0x25f0] sm:$0xff]
      %v1781 = vld [vmem:[#allocation9 + $0x25f8] sm:$0xff]
      %v1782 = vld [vmem:[#allocation9 + $0x2600] sm:$0xff]
      %v1783 = vld [vmem:[#allocation9 + $0x2608] sm:$0xff]
      %v1784 = vld [vmem:[#allocation9 + $0x2610] sm:$0xff]
      %v1785 = vld [vmem:[#allocation9 + $0x2618] sm:$0xff]
      %v1786 = vld [vmem:[#allocation9 + $0x2620] sm:$0xff]
      %v1787 = vld [vmem:[#allocation9 + $0x2628] sm:$0xff]
      %v1788 = vld [vmem:[#allocation9 + $0x2630] sm:$0xff]
      %v1789 = vld [vmem:[#allocation9 + $0x2638] sm:$0xff]
      %v1790 = vld [vmem:[#allocation9 + $0x2640] sm:$0xff]
      %v1791 = vld [vmem:[#allocation9 + $0x2648] sm:$0xff]
      %v1792 = vld [vmem:[#allocation9 + $0x2650] sm:$0xff]
      %v1793 = vld [vmem:[#allocation9 + $0x2658] sm:$0xff]
      %v1794 = vld [vmem:[#allocation9 + $0x2660] sm:$0xff]
      %v1795 = vld [vmem:[#allocation9 + $0x2668] sm:$0xff]
      %v1796 = vld [vmem:[#allocation9 + $0x2670] sm:$0xff]
      %v1797 = vld [vmem:[#allocation9 + $0x2678] sm:$0xff]
      %v1798 = vld [vmem:[#allocation9 + $0x2680] sm:$0xff]
      %v1799 = vld [vmem:[#allocation9 + $0x2688] sm:$0xff]
      %v1800 = vld [vmem:[#allocation9 + $0x2690] sm:$0xff]
      %v1801 = vld [vmem:[#allocation9 + $0x2698] sm:$0xff]
      %v1802 = vld [vmem:[#allocation9 + $0x26a0] sm:$0xff]
      %v1803 = vld [vmem:[#allocation9 + $0x26a8] sm:$0xff]
      %v1804 = vld [vmem:[#allocation9 + $0x26b0] sm:$0xff]
      %v1805 = vld [vmem:[#allocation9 + $0x26b8] sm:$0xff]
      %v1806 = vld [vmem:[#allocation9 + $0x26c0] sm:$0xff]
      %v1807 = vld [vmem:[#allocation9 + $0x26c8] sm:$0xff]
      %v1808 = vld [vmem:[#allocation9 + $0x26d0] sm:$0xff]
      %v1809 = vld [vmem:[#allocation9 + $0x26d8] sm:$0xff]
      %v1810 = vld [vmem:[#allocation9 + $0x26e0] sm:$0xff]
      %v1811 = vld [vmem:[#allocation9 + $0x26e8] sm:$0xff]
      %v1812 = vld [vmem:[#allocation9 + $0x26f0] sm:$0xff]
      %v1813 = vld [vmem:[#allocation9 + $0x26f8] sm:$0xff]
      %v1814 = vld [vmem:[#allocation9 + $0x2700] sm:$0xff]
      %v1815 = vld [vmem:[#allocation9 + $0x2708] sm:$0xff]
      %v1816 = vld [vmem:[#allocation9 + $0x2710] sm:$0xff]
      %v1817 = vld [vmem:[#allocation9 + $0x2718] sm:$0xff]
      %v1818 = vld [vmem:[#allocation9 + $0x2720] sm:$0xff]
      %v1819 = vld [vmem:[#allocation9 + $0x2728] sm:$0xff]
      %v1820 = vld [vmem:[#allocation9 + $0x2730] sm:$0xff]
      %v1821 = vld [vmem:[#allocation9 + $0x2738] sm:$0xff]
      %v1822 = vld [vmem:[#allocation9 + $0x2740] sm:$0xff]
      %v1823 = vld [vmem:[#allocation9 + $0x2748] sm:$0xff]
      %v1824 = vld [vmem:[#allocation9 + $0x2750] sm:$0xff]
      %v1825 = vld [vmem:[#allocation9 + $0x2758] sm:$0xff]
      %v1826 = vld [vmem:[#allocation9 + $0x2760] sm:$0xff]
      %v1827 = vld [vmem:[#allocation9 + $0x2768] sm:$0xff]
      %v1828 = vld [vmem:[#allocation9 + $0x2770] sm:$0xff]
      %v1829 = vld [vmem:[#allocation9 + $0x2778] sm:$0xff]
      %v1830 = vld [vmem:[#allocation9 + $0x2780] sm:$0xff]
      %v1831 = vld [vmem:[#allocation9 + $0x2788] sm:$0xff]
      %v1832 = vld [vmem:[#allocation9 + $0x2790] sm:$0xff]
      %v1833 = vld [vmem:[#allocation9 + $0x2798] sm:$0xff]
      %v1834 = vld [vmem:[#allocation9 + $0x27a0] sm:$0xff]
      %v1835 = vld [vmem:[#allocation9 + $0x27a8] sm:$0xff]
      %v1836 = vld [vmem:[#allocation9 + $0x27b0] sm:$0xff]
      %v1837 = vld [vmem:[#allocation9 + $0x27b8] sm:$0xff]
      %v1838 = vld [vmem:[#allocation9 + $0x27c0] sm:$0xff]
      %v1839 = vld [vmem:[#allocation9 + $0x27c8] sm:$0xff]
      %v1840 = vld [vmem:[#allocation9 + $0x27d0] sm:$0xff]
      %v1841 = vld [vmem:[#allocation9 + $0x27d8] sm:$0xff]
      %v1842 = vld [vmem:[#allocation9 + $0x27e0] sm:$0xff]
      %v1843 = vld [vmem:[#allocation9 + $0x27e8] sm:$0xff]
      %v1844 = vld [vmem:[#allocation9 + $0x27f0] sm:$0xff]
      %v1845 = vld [vmem:[#allocation9 + $0x27f8] sm:$0xff]
      %v1846 = vld [vmem:[#allocation9 + $0x2800] sm:$0xff]
      %v1847 = vld [vmem:[#allocation9 + $0x2808] sm:$0xff]
      %v1848 = vld [vmem:[#allocation9 + $0x2810] sm:$0xff]
      %v1849 = vld [vmem:[#allocation9 + $0x2818] sm:$0xff]
      %v1850 = vld [vmem:[#allocation9 + $0x2820] sm:$0xff]
      %v1851 = vld [vmem:[#allocation9 + $0x2828] sm:$0xff]
      %v1852 = vld [vmem:[#allocation9 + $0x2830] sm:$0xff]
      %v1853 = vld [vmem:[#allocation9 + $0x2838] sm:$0xff]
      %v1854 = vld [vmem:[#allocation9 + $0x2840] sm:$0xff]
      %v1855 = vld [vmem:[#allocation9 + $0x2848] sm:$0xff]
      %v1856 = vld [vmem:[#allocation9 + $0x2850] sm:$0xff]
      %v1857 = vld [vmem:[#allocation9 + $0x2858] sm:$0xff]
      %v1858 = vld [vmem:[#allocation9 + $0x2860] sm:$0xff]
      %v1859 = vld [vmem:[#allocation9 + $0x2868] sm:$0xff]
      %v1860 = vld [vmem:[#allocation9 + $0x2870] sm:$0xff]
      %v1861 = vld [vmem:[#allocation9 + $0x2878] sm:$0xff]
      %v1862 = vld [vmem:[#allocation9 + $0x2880] sm:$0xff]
      %v1863 = vld [vmem:[#allocation9 + $0x2888] sm:$0xff]
      %v1864 = vld [vmem:[#allocation9 + $0x2890] sm:$0xff]
      %v1865 = vld [vmem:[#allocation9 + $0x2898] sm:$0xff]
      %v1866 = vld [vmem:[#allocation9 + $0x28a0] sm:$0xff]
      %v1867 = vld [vmem:[#allocation9 + $0x28a8] sm:$0xff]
      %v1868 = vld [vmem:[#allocation9 + $0x28b0] sm:$0xff]
      %v1869 = vld [vmem:[#allocation9 + $0x28b8] sm:$0xff]
      %v1870 = vld [vmem:[#allocation9 + $0x28c0] sm:$0xff]
      %v1871 = vld [vmem:[#allocation9 + $0x28c8] sm:$0xff]
      %v1872 = vld [vmem:[#allocation9 + $0x28d0] sm:$0xff]
      %v1873 = vld [vmem:[#allocation9 + $0x28d8] sm:$0xff]
      %v1874 = vld [vmem:[#allocation9 + $0x28e0] sm:$0xff]
      %v1875 = vld [vmem:[#allocation9 + $0x28e8] sm:$0xff]
      %v1876 = vld [vmem:[#allocation9 + $0x28f0] sm:$0xff]
      %v1877 = vld [vmem:[#allocation9 + $0x28f8] sm:$0xff]
      %v1878 = vld [vmem:[#allocation9 + $0x2900] sm:$0xff]
      %v1879 = vld [vmem:[#allocation9 + $0x2908] sm:$0xff]
      %v1880 = vld [vmem:[#allocation9 + $0x2910] sm:$0xff]
      %v1881 = vld [vmem:[#allocation9 + $0x2918] sm:$0xff]
      %v1882 = vld [vmem:[#allocation9 + $0x2920] sm:$0xff]
      %v1883 = vld [vmem:[#allocation9 + $0x2928] sm:$0xff]
      %v1884 = vld [vmem:[#allocation9 + $0x2930] sm:$0xff]
      %v1885 = vld [vmem:[#allocation9 + $0x2938] sm:$0xff]
      %v1886 = vld [vmem:[#allocation9 + $0x2940] sm:$0xff]
      %v1887 = vld [vmem:[#allocation9 + $0x2948] sm:$0xff]
      %v1888 = vld [vmem:[#allocation9 + $0x2950] sm:$0xff]
      %v1889 = vld [vmem:[#allocation9 + $0x2958] sm:$0xff]
      %v1890 = vld [vmem:[#allocation9 + $0x2960] sm:$0xff]
      %v1891 = vld [vmem:[#allocation9 + $0x2968] sm:$0xff]
      %v1892 = vld [vmem:[#allocation9 + $0x2970] sm:$0xff]
      %v1893 = vld [vmem:[#allocation9 + $0x2978] sm:$0xff]
      %v1894 = vld [vmem:[#allocation9 + $0x2980] sm:$0xff]
      %v1895 = vld [vmem:[#allocation9 + $0x2988] sm:$0xff]
      %v1896 = vld [vmem:[#allocation9 + $0x2990] sm:$0xff]
      %v1897 = vld [vmem:[#allocation9 + $0x2998] sm:$0xff]
      %v1898 = vld [vmem:[#allocation9 + $0x29a0] sm:$0xff]
      %v1899 = vld [vmem:[#allocation9 + $0x29a8] sm:$0xff]
      %v1900 = vld [vmem:[#allocation9 + $0x29b0] sm:$0xff]
      %v1901 = vld [vmem:[#allocation9 + $0x29b8] sm:$0xff]
      %v1902 = vld [vmem:[#allocation9 + $0x29c0] sm:$0xff]
      %v1903 = vld [vmem:[#allocation9 + $0x29c8] sm:$0xff]
      %v1904 = vld [vmem:[#allocation9 + $0x29d0] sm:$0xff]
      %v1905 = vld [vmem:[#allocation9 + $0x29d8] sm:$0xff]
      %v1906 = vld [vmem:[#allocation9 + $0x29e0] sm:$0xff]
      %v1907 = vld [vmem:[#allocation9 + $0x29e8] sm:$0xff]
      %v1908 = vld [vmem:[#allocation9 + $0x29f0] sm:$0xff]
      %v1909 = vld [vmem:[#allocation9 + $0x29f8] sm:$0xff]
      %v1910 = vld [vmem:[#allocation9 + $0x2a00] sm:$0xff]
      %v1911 = vld [vmem:[#allocation9 + $0x2a08] sm:$0xff]
      %v1912 = vld [vmem:[#allocation9 + $0x2a10] sm:$0xff]
      %v1913 = vld [vmem:[#allocation9 + $0x2a18] sm:$0xff]
      %v1914 = vld [vmem:[#allocation9 + $0x2a20] sm:$0xff]
      %v1915 = vld [vmem:[#allocation9 + $0x2a28] sm:$0xff]
      %v1916 = vld [vmem:[#allocation9 + $0x2a30] sm:$0xff]
      %v1917 = vld [vmem:[#allocation9 + $0x2a38] sm:$0xff]
      %v1918 = vld [vmem:[#allocation9 + $0x2a40] sm:$0xff]
      %v1919 = vld [vmem:[#allocation9 + $0x2a48] sm:$0xff]
      %v1920 = vld [vmem:[#allocation9 + $0x2a50] sm:$0xff]
      %v1921 = vld [vmem:[#allocation9 + $0x2a58] sm:$0xff]
      %v1922 = vld [vmem:[#allocation9 + $0x2a60] sm:$0xff]
      %v1923 = vld [vmem:[#allocation9 + $0x2a68] sm:$0xff]
      %v1924 = vld [vmem:[#allocation9 + $0x2a70] sm:$0xff]
      %v1925 = vld [vmem:[#allocation9 + $0x2a78] sm:$0xff]
      %v1926 = vld [vmem:[#allocation9 + $0x2a80] sm:$0xff]
      %v1927 = vld [vmem:[#allocation9 + $0x2a88] sm:$0xff]
      %v1928 = vld [vmem:[#allocation9 + $0x2a90] sm:$0xff]
      %v1929 = vld [vmem:[#allocation9 + $0x2a98] sm:$0xff]
      %v1930 = vld [vmem:[#allocation9 + $0x2aa0] sm:$0xff]
      %v1931 = vld [vmem:[#allocation9 + $0x2aa8] sm:$0xff]
      %v1932 = vld [vmem:[#allocation9 + $0x2ab0] sm:$0xff]
      %v1933 = vld [vmem:[#allocation9 + $0x2ab8] sm:$0xff]
      %v1934 = vld [vmem:[#allocation9 + $0x2ac0] sm:$0xff]
      %v1935 = vld [vmem:[#allocation9 + $0x2ac8] sm:$0xff]
      %v1936 = vld [vmem:[#allocation9 + $0x2ad0] sm:$0xff]
      %v1937 = vld [vmem:[#allocation9 + $0x2ad8] sm:$0xff]
      %v1938 = vld [vmem:[#allocation9 + $0x2ae0] sm:$0xff]
      %v1939 = vld [vmem:[#allocation9 + $0x2ae8] sm:$0xff]
      %v1940 = vld [vmem:[#allocation9 + $0x2af0] sm:$0xff]
      %v1941 = vld [vmem:[#allocation9 + $0x2af8] sm:$0xff]
      %v1942 = vld [vmem:[#allocation9 + $0x2b00] sm:$0xff]
      %v1943 = vld [vmem:[#allocation9 + $0x2b08] sm:$0xff]
      %v1944 = vld [vmem:[#allocation9 + $0x2b10] sm:$0xff]
      %v1945 = vld [vmem:[#allocation9 + $0x2b18] sm:$0xff]
      %v1946 = vld [vmem:[#allocation9 + $0x2b20] sm:$0xff]
      %v1947 = vld [vmem:[#allocation9 + $0x2b28] sm:$0xff]
      %v1948 = vld [vmem:[#allocation9 + $0x2b30] sm:$0xff]
      %v1949 = vld [vmem:[#allocation9 + $0x2b38] sm:$0xff]
      %v1950 = vld [vmem:[#allocation9 + $0x2b40] sm:$0xff]
      %v1951 = vld [vmem:[#allocation9 + $0x2b48] sm:$0xff]
      %v1952 = vld [vmem:[#allocation9 + $0x2b50] sm:$0xff]
      %v1953 = vld [vmem:[#allocation9 + $0x2b58] sm:$0xff]
      %v1954 = vld [vmem:[#allocation9 + $0x2b60] sm:$0xff]
      %v1955 = vld [vmem:[#allocation9 + $0x2b68] sm:$0xff]
      %v1956 = vld [vmem:[#allocation9 + $0x2b70] sm:$0xff]
      %v1957 = vld [vmem:[#allocation9 + $0x2b78] sm:$0xff]
      %v1958 = vld [vmem:[#allocation9 + $0x2b80] sm:$0xff]
      %v1959 = vld [vmem:[#allocation9 + $0x2b88] sm:$0xff]
      %v1960 = vld [vmem:[#allocation9 + $0x2b90] sm:$0xff]
      %v1961 = vld [vmem:[#allocation9 + $0x2b98] sm:$0xff]
      %v1962 = vld [vmem:[#allocation9 + $0x2ba0] sm:$0xff]
      %v1963 = vld [vmem:[#allocation9 + $0x2ba8] sm:$0xff]
      %v1964 = vld [vmem:[#allocation9 + $0x2bb0] sm:$0xff]
      %v1965 = vld [vmem:[#allocation9 + $0x2bb8] sm:$0xff]
      %v1966 = vld [vmem:[#allocation9 + $0x2bc0] sm:$0xff]
      %v1967 = vld [vmem:[#allocation9 + $0x2bc8] sm:$0xff]
      %v1968 = vld [vmem:[#allocation9 + $0x2bd0] sm:$0xff]
      %v1969 = vld [vmem:[#allocation9 + $0x2bd8] sm:$0xff]
      %v1970 = vld [vmem:[#allocation9 + $0x2be0] sm:$0xff]
      %v1971 = vld [vmem:[#allocation9 + $0x2be8] sm:$0xff]
      %v1972 = vld [vmem:[#allocation9 + $0x2bf0] sm:$0xff]
      %v1973 = vld [vmem:[#allocation9 + $0x2bf8] sm:$0xff]
      %v1974 = vld [vmem:[#allocation9 + $0x2c00] sm:$0xff]
      %v1975 = vld [vmem:[#allocation9 + $0x2c08] sm:$0xff]
      %v1976 = vld [vmem:[#allocation9 + $0x2c10] sm:$0xff]
      %v1977 = vld [vmem:[#allocation9 + $0x2c18] sm:$0xff]
      %v1978 = vld [vmem:[#allocation9 + $0x2c20] sm:$0xff]
      %v1979 = vld [vmem:[#allocation9 + $0x2c28] sm:$0xff]
      %v1980 = vld [vmem:[#allocation9 + $0x2c30] sm:$0xff]
      %v1981 = vld [vmem:[#allocation9 + $0x2c38] sm:$0xff]
      %v1982 = vld [vmem:[#allocation9 + $0x2c40] sm:$0xff]
      %v1983 = vld [vmem:[#allocation9 + $0x2c48] sm:$0xff]
      %v1984 = vld [vmem:[#allocation9 + $0x2c50] sm:$0xff]
      %v1985 = vld [vmem:[#allocation9 + $0x2c58] sm:$0xff]
      %v1986 = vld [vmem:[#allocation9 + $0x2c60] sm:$0xff]
      %v1987 = vld [vmem:[#allocation9 + $0x2c68] sm:$0xff]
      %v1988 = vld [vmem:[#allocation9 + $0x2c70] sm:$0xff]
      %v1989 = vld [vmem:[#allocation9 + $0x2c78] sm:$0xff]
      %v1990 = vld [vmem:[#allocation9 + $0x2c80] sm:$0xff]
      %v1991 = vld [vmem:[#allocation9 + $0x2c88] sm:$0xff]
      %v1992 = vld [vmem:[#allocation9 + $0x2c90] sm:$0xff]
      %v1993 = vld [vmem:[#allocation9 + $0x2c98] sm:$0xff]
      %v1994 = vld [vmem:[#allocation9 + $0x2ca0] sm:$0xff]
      %v1995 = vld [vmem:[#allocation9 + $0x2ca8] sm:$0xff]
      %v1996 = vld [vmem:[#allocation9 + $0x2cb0] sm:$0xff]
      %v1997 = vld [vmem:[#allocation9 + $0x2cb8] sm:$0xff]
      %v1998 = vld [vmem:[#allocation9 + $0x2cc0] sm:$0xff]
      %v1999 = vld [vmem:[#allocation9 + $0x2cc8] sm:$0xff]
      %v2000 = vld [vmem:[#allocation9 + $0x2cd0] sm:$0xff]
      %v2001 = vld [vmem:[#allocation9 + $0x2cd8] sm:$0xff]
      %v2002 = vld [vmem:[#allocation9 + $0x2ce0] sm:$0xff]
      %v2003 = vld [vmem:[#allocation9 + $0x2ce8] sm:$0xff]
      %v2004 = vld [vmem:[#allocation9 + $0x2cf0] sm:$0xff]
      %v2005 = vld [vmem:[#allocation9 + $0x2cf8] sm:$0xff]
      %v2006 = vld [vmem:[#allocation9 + $0x2d00] sm:$0xff]
      %v2007 = vld [vmem:[#allocation9 + $0x2d08] sm:$0xff]
      %v2008 = vld [vmem:[#allocation9 + $0x2d10] sm:$0xff]
      %v2009 = vld [vmem:[#allocation9 + $0x2d18] sm:$0xff]
      %v2010 = vld [vmem:[#allocation9 + $0x2d20] sm:$0xff]
      %v2011 = vld [vmem:[#allocation9 + $0x2d28] sm:$0xff]
      %v2012 = vld [vmem:[#allocation9 + $0x2d30] sm:$0xff]
      %v2013 = vld [vmem:[#allocation9 + $0x2d38] sm:$0xff]
      %v2014 = vld [vmem:[#allocation9 + $0x2d40] sm:$0xff]
      %v2015 = vld [vmem:[#allocation9 + $0x2d48] sm:$0xff]
      %v2016 = vld [vmem:[#allocation9 + $0x2d50] sm:$0xff]
      %v2017 = vld [vmem:[#allocation9 + $0x2d58] sm:$0xff]
      %v2018 = vld [vmem:[#allocation9 + $0x2d60] sm:$0xff]
      %v2019 = vld [vmem:[#allocation9 + $0x2d68] sm:$0xff]
      %v2020 = vld [vmem:[#allocation9 + $0x2d70] sm:$0xff]
      %v2021 = vld [vmem:[#allocation9 + $0x2d78] sm:$0xff]
      %v2022 = vld [vmem:[#allocation9 + $0x2d80] sm:$0xff]
      %v2023 = vld [vmem:[#allocation9 + $0x2d88] sm:$0xff]
      %v2024 = vld [vmem:[#allocation9 + $0x2d90] sm:$0xff]
      %v2025 = vld [vmem:[#allocation9 + $0x2d98] sm:$0xff]
      %v2026 = vld [vmem:[#allocation9 + $0x2da0] sm:$0xff]
      %v2027 = vld [vmem:[#allocation9 + $0x2da8] sm:$0xff]
      %v2028 = vld [vmem:[#allocation9 + $0x2db0] sm:$0xff]
      %v2029 = vld [vmem:[#allocation9 + $0x2db8] sm:$0xff]
      %v2030 = vld [vmem:[#allocation9 + $0x2dc0] sm:$0xff]
      %v2031 = vld [vmem:[#allocation9 + $0x2dc8] sm:$0xff]
      %v2032 = vld [vmem:[#allocation9 + $0x2dd0] sm:$0xff]
      %v2033 = vld [vmem:[#allocation9 + $0x2dd8] sm:$0xff]
      %v2034 = vld [vmem:[#allocation9 + $0x2de0] sm:$0xff]
      %v2035 = vld [vmem:[#allocation9 + $0x2de8] sm:$0xff]
      %v2036 = vld [vmem:[#allocation9 + $0x2df0] sm:$0xff]
      %v2037 = vld [vmem:[#allocation9 + $0x2df8] sm:$0xff]
      %v2038 = vld [vmem:[#allocation9 + $0x2e00] sm:$0xff]
      %v2039 = vld [vmem:[#allocation9 + $0x2e08] sm:$0xff]
      %v2040 = vld [vmem:[#allocation9 + $0x2e10] sm:$0xff]
      %v2041 = vld [vmem:[#allocation9 + $0x2e18] sm:$0xff]
      %v2042 = vld [vmem:[#allocation9 + $0x2e20] sm:$0xff]
      %v2043 = vld [vmem:[#allocation9 + $0x2e28] sm:$0xff]
      %v2044 = vld [vmem:[#allocation9 + $0x2e30] sm:$0xff]
      %v2045 = vld [vmem:[#allocation9 + $0x2e38] sm:$0xff]
      %v2046 = vld [vmem:[#allocation9 + $0x2e40] sm:$0xff]
      %v2047 = vld [vmem:[#allocation9 + $0x2e48] sm:$0xff]
      %v2048 = vld [vmem:[#allocation9 + $0x2e50] sm:$0xff]
      %v2049 = vld [vmem:[#allocation9 + $0x2e58] sm:$0xff]
      %v2050 = vld [vmem:[#allocation9 + $0x2e60] sm:$0xff]
      %v2051 = vld [vmem:[#allocation9 + $0x2e68] sm:$0xff]
      %v2052 = vld [vmem:[#allocation9 + $0x2e70] sm:$0xff]
      %v2053 = vld [vmem:[#allocation9 + $0x2e78] sm:$0xff]
      %v2054 = vld [vmem:[#allocation9 + $0x2e80] sm:$0xff]
      %v2055 = vld [vmem:[#allocation9 + $0x2e88] sm:$0xff]
      %v2056 = vld [vmem:[#allocation9 + $0x2e90] sm:$0xff]
      %v2057 = vld [vmem:[#allocation9 + $0x2e98] sm:$0xff]
      %v2058 = vld [vmem:[#allocation9 + $0x2ea0] sm:$0xff]
      %v2059 = vld [vmem:[#allocation9 + $0x2ea8] sm:$0xff]
      %v2060 = vld [vmem:[#allocation9 + $0x2eb0] sm:$0xff]
      %v2061 = vld [vmem:[#allocation9 + $0x2eb8] sm:$0xff]
      %v2062 = vld [vmem:[#allocation9 + $0x2ec0] sm:$0xff]
      %v2063 = vld [vmem:[#allocation9 + $0x2ec8] sm:$0xff]
      %v2064 = vld [vmem:[#allocation9 + $0x2ed0] sm:$0xff]
      %v2065 = vld [vmem:[#allocation9 + $0x2ed8] sm:$0xff]
      %v2066 = vld [vmem:[#allocation9 + $0x2ee0] sm:$0xff]
      %v2067 = vld [vmem:[#allocation9 + $0x2ee8] sm:$0xff]
      %v2068 = vld [vmem:[#allocation9 + $0x2ef0] sm:$0xff]
      %v2069 = vld [vmem:[#allocation9 + $0x2ef8] sm:$0xff]
      %v2070 = vld [vmem:[#allocation9 + $0x2f00] sm:$0xff]
      %v2071 = vld [vmem:[#allocation9 + $0x2f08] sm:$0xff]
      %v2072 = vld [vmem:[#allocation9 + $0x2f10] sm:$0xff]
      %v2073 = vld [vmem:[#allocation9 + $0x2f18] sm:$0xff]
      %v2074 = vld [vmem:[#allocation9 + $0x2f20] sm:$0xff]
      %v2075 = vld [vmem:[#allocation9 + $0x2f28] sm:$0xff]
      %v2076 = vld [vmem:[#allocation9 + $0x2f30] sm:$0xff]
      %v2077 = vld [vmem:[#allocation9 + $0x2f38] sm:$0xff]
      %v2078 = vld [vmem:[#allocation9 + $0x2f40] sm:$0xff]
      %v2079 = vld [vmem:[#allocation9 + $0x2f48] sm:$0xff]
      %v2080 = vld [vmem:[#allocation9 + $0x2f50] sm:$0xff]
      %v2081 = vld [vmem:[#allocation9 + $0x2f58] sm:$0xff]
      %v2082 = vld [vmem:[#allocation9 + $0x2f60] sm:$0xff]
      %v2083 = vld [vmem:[#allocation9 + $0x2f68] sm:$0xff]
      %v2084 = vld [vmem:[#allocation9 + $0x2f70] sm:$0xff]
      %v2085 = vld [vmem:[#allocation9 + $0x2f78] sm:$0xff]
      %v2086 = vld [vmem:[#allocation9 + $0x2f80] sm:$0xff]
      %v2087 = vld [vmem:[#allocation9 + $0x2f88] sm:$0xff]
      %v2088 = vld [vmem:[#allocation9 + $0x2f90] sm:$0xff]
      %v2089 = vld [vmem:[#allocation9 + $0x2f98] sm:$0xff]
      %v2090 = vld [vmem:[#allocation9 + $0x2fa0] sm:$0xff]
      %v2091 = vld [vmem:[#allocation9 + $0x2fa8] sm:$0xff]
      %v2092 = vld [vmem:[#allocation9 + $0x2fb0] sm:$0xff]
      %v2093 = vld [vmem:[#allocation9 + $0x2fb8] sm:$0xff]
      %v2094 = vld [vmem:[#allocation9 + $0x2fc0] sm:$0xff]
      %v2095 = vld [vmem:[#allocation9 + $0x2fc8] sm:$0xff]
      %v2096 = vld [vmem:[#allocation9 + $0x2fd0] sm:$0xff]
      %v2097 = vld [vmem:[#allocation9 + $0x2fd8] sm:$0xff]
      %v2098 = vld [vmem:[#allocation9 + $0x2fe0] sm:$0xff]
      %v2099 = vld [vmem:[#allocation9 + $0x2fe8] sm:$0xff]
      %v2100 = vld [vmem:[#allocation9 + $0x2ff0] sm:$0xff]
      %v2101 = vld [vmem:[#allocation9 + $0x2ff8] sm:$0xff]
      %v2102 = vld [vmem:[#allocation9 + $0x3000] sm:$0xff]
      %v2103 = vld [vmem:[#allocation9 + $0x3008] sm:$0xff]
      %v2104 = vld [vmem:[#allocation9 + $0x3010] sm:$0xff]
      %v2105 = vld [vmem:[#allocation9 + $0x3018] sm:$0xff]
      %v2106 = vld [vmem:[#allocation9 + $0x3020] sm:$0xff]
      %v2107 = vld [vmem:[#allocation9 + $0x3028] sm:$0xff]
      %v2108 = vld [vmem:[#allocation9 + $0x3030] sm:$0xff]
      %v2109 = vld [vmem:[#allocation9 + $0x3038] sm:$0xff]
      %v2110 = vld [vmem:[#allocation9 + $0x3040] sm:$0xff]
      %v2111 = vld [vmem:[#allocation9 + $0x3048] sm:$0xff]
      %v2112 = vld [vmem:[#allocation9 + $0x3050] sm:$0xff]
      %v2113 = vld [vmem:[#allocation9 + $0x3058] sm:$0xff]
      %v2114 = vld [vmem:[#allocation9 + $0x3060] sm:$0xff]
      %v2115 = vld [vmem:[#allocation9 + $0x3068] sm:$0xff]
      %v2116 = vld [vmem:[#allocation9 + $0x3070] sm:$0xff]
      %v2117 = vld [vmem:[#allocation9 + $0x3078] sm:$0xff]
      %v2118 = vld [vmem:[#allocation9 + $0x3080] sm:$0xff]
      %v2119 = vld [vmem:[#allocation9 + $0x3088] sm:$0xff]
      %v2120 = vld [vmem:[#allocation9 + $0x3090] sm:$0xff]
      %v2121 = vld [vmem:[#allocation9 + $0x3098] sm:$0xff]
      %v2122 = vld [vmem:[#allocation9 + $0x30a0] sm:$0xff]
      %v2123 = vld [vmem:[#allocation9 + $0x30a8] sm:$0xff]
      %v2124 = vld [vmem:[#allocation9 + $0x30b0] sm:$0xff]
      %v2125 = vld [vmem:[#allocation9 + $0x30b8] sm:$0xff]
      %v2126 = vld [vmem:[#allocation9 + $0x30c0] sm:$0xff]
      %v2127 = vld [vmem:[#allocation9 + $0x30c8] sm:$0xff]
      %v2128 = vld [vmem:[#allocation9 + $0x30d0] sm:$0xff]
      %v2129 = vld [vmem:[#allocation9 + $0x30d8] sm:$0xff]
      %v2130 = vld [vmem:[#allocation9 + $0x30e0] sm:$0xff]
      %v2131 = vld [vmem:[#allocation9 + $0x30e8] sm:$0xff]
      %v2132 = vld [vmem:[#allocation9 + $0x30f0] sm:$0xff]
      %v2133 = vld [vmem:[#allocation9 + $0x30f8] sm:$0xff]
      %v2134 = vld [vmem:[#allocation9 + $0x3100] sm:$0xff]
      %v2135 = vld [vmem:[#allocation9 + $0x3108] sm:$0xff]
      %v2136 = vld [vmem:[#allocation9 + $0x3110] sm:$0xff]
      %v2137 = vld [vmem:[#allocation9 + $0x3118] sm:$0xff]
      %v2138 = vld [vmem:[#allocation9 + $0x3120] sm:$0xff]
      %v2139 = vld [vmem:[#allocation9 + $0x3128] sm:$0xff]
      %v2140 = vld [vmem:[#allocation9 + $0x3130] sm:$0xff]
      %v2141 = vld [vmem:[#allocation9 + $0x3138] sm:$0xff]
      %v2142 = vld [vmem:[#allocation9 + $0x3140] sm:$0xff]
      %v2143 = vld [vmem:[#allocation9 + $0x3148] sm:$0xff]
      %v2144 = vld [vmem:[#allocation9 + $0x3150] sm:$0xff]
      %v2145 = vld [vmem:[#allocation9 + $0x3158] sm:$0xff]
      %v2146 = vld [vmem:[#allocation9 + $0x3160] sm:$0xff]
      %v2147 = vld [vmem:[#allocation9 + $0x3168] sm:$0xff]
      %v2148 = vld [vmem:[#allocation9 + $0x3170] sm:$0xff]
      %v2149 = vld [vmem:[#allocation9 + $0x3178] sm:$0xff]
      %v2150 = vld [vmem:[#allocation9 + $0x3180] sm:$0xff]
      %v2151 = vld [vmem:[#allocation9 + $0x3188] sm:$0xff]
      %v2152 = vld [vmem:[#allocation9 + $0x3190] sm:$0xff]
      %v2153 = vld [vmem:[#allocation9 + $0x3198] sm:$0xff]
      %v2154 = vld [vmem:[#allocation9 + $0x31a0] sm:$0xff]
      %v2155 = vld [vmem:[#allocation9 + $0x31a8] sm:$0xff]
      %v2156 = vld [vmem:[#allocation9 + $0x31b0] sm:$0xff]
      %v2157 = vld [vmem:[#allocation9 + $0x31b8] sm:$0xff]
      %v2158 = vld [vmem:[#allocation9 + $0x31c0] sm:$0xff]
      %v2159 = vld [vmem:[#allocation9 + $0x31c8] sm:$0xff]
      %v2160 = vld [vmem:[#allocation9 + $0x31d0] sm:$0xff]
      %v2161 = vld [vmem:[#allocation9 + $0x31d8] sm:$0xff]
      %v2162 = vld [vmem:[#allocation9 + $0x31e0] sm:$0xff]
      %v2163 = vld [vmem:[#allocation9 + $0x31e8] sm:$0xff]
      %v2164 = vld [vmem:[#allocation9 + $0x31f0] sm:$0xff]
      %v2165 = vld [vmem:[#allocation9 + $0x31f8] sm:$0xff]
      %v2166 = vld [vmem:[#allocation9 + $0x3200] sm:$0xff]
      %v2167 = vld [vmem:[#allocation9 + $0x3208] sm:$0xff]
      %v2168 = vld [vmem:[#allocation9 + $0x3210] sm:$0xff]
      %v2169 = vld [vmem:[#allocation9 + $0x3218] sm:$0xff]
      %v2170 = vld [vmem:[#allocation9 + $0x3220] sm:$0xff]
      %v2171 = vld [vmem:[#allocation9 + $0x3228] sm:$0xff]
      %v2172 = vld [vmem:[#allocation9 + $0x3230] sm:$0xff]
      %v2173 = vld [vmem:[#allocation9 + $0x3238] sm:$0xff]
      %v2174 = vld [vmem:[#allocation9 + $0x3240] sm:$0xff]
      %v2175 = vld [vmem:[#allocation9 + $0x3248] sm:$0xff]
      %v2176 = vld [vmem:[#allocation9 + $0x3250] sm:$0xff]
      %v2177 = vld [vmem:[#allocation9 + $0x3258] sm:$0xff]
      %v2178 = vld [vmem:[#allocation9 + $0x3260] sm:$0xff]
      %v2179 = vld [vmem:[#allocation9 + $0x3268] sm:$0xff]
      %v2180 = vld [vmem:[#allocation9 + $0x3270] sm:$0xff]
      %v2181 = vld [vmem:[#allocation9 + $0x3278] sm:$0xff]
      %v2182 = vld [vmem:[#allocation9 + $0x3280] sm:$0xff]
      %v2183 = vld [vmem:[#allocation9 + $0x3288] sm:$0xff]
      %v2184 = vld [vmem:[#allocation9 + $0x3290] sm:$0xff]
      %v2185 = vld [vmem:[#allocation9 + $0x3298] sm:$0xff]
      %v2186 = vld [vmem:[#allocation9 + $0x32a0] sm:$0xff]
      %v2187 = vld [vmem:[#allocation9 + $0x32a8] sm:$0xff]
      %v2188 = vld [vmem:[#allocation9 + $0x32b0] sm:$0xff]
      %v2189 = vld [vmem:[#allocation9 + $0x32b8] sm:$0xff]
      %v2190 = vld [vmem:[#allocation9 + $0x32c0] sm:$0xff]
      %v2191 = vld [vmem:[#allocation9 + $0x32c8] sm:$0xff]
      %v2192 = vld [vmem:[#allocation9 + $0x32d0] sm:$0xff]
      %v2193 = vld [vmem:[#allocation9 + $0x32d8] sm:$0xff]
      %v2194 = vld [vmem:[#allocation9 + $0x32e0] sm:$0xff]
      %v2195 = vld [vmem:[#allocation9 + $0x32e8] sm:$0xff]
      %v2196 = vld [vmem:[#allocation9 + $0x32f0] sm:$0xff]
      %v2197 = vld [vmem:[#allocation9 + $0x32f8] sm:$0xff]
      %v2198 = vld [vmem:[#allocation9 + $0x3300] sm:$0xff]
      %v2199 = vld [vmem:[#allocation9 + $0x3308] sm:$0xff]
      %v2200 = vld [vmem:[#allocation9 + $0x3310] sm:$0xff]
      %v2201 = vld [vmem:[#allocation9 + $0x3318] sm:$0xff]
      %v2202 = vld [vmem:[#allocation9 + $0x3320] sm:$0xff]
      %v2203 = vld [vmem:[#allocation9 + $0x3328] sm:$0xff]
      %v2204 = vld [vmem:[#allocation9 + $0x3330] sm:$0xff]
      %v2205 = vld [vmem:[#allocation9 + $0x3338] sm:$0xff]
      %v2206 = vld [vmem:[#allocation9 + $0x3340] sm:$0xff]
      %v2207 = vld [vmem:[#allocation9 + $0x3348] sm:$0xff]
      %v2208 = vld [vmem:[#allocation9 + $0x3350] sm:$0xff]
      %v2209 = vld [vmem:[#allocation9 + $0x3358] sm:$0xff]
      %v2210 = vld [vmem:[#allocation9 + $0x3360] sm:$0xff]
      %v2211 = vld [vmem:[#allocation9 + $0x3368] sm:$0xff]
      %v2212 = vld [vmem:[#allocation9 + $0x3370] sm:$0xff]
      %v2213 = vld [vmem:[#allocation9 + $0x3378] sm:$0xff]
      %v2214 = vld [vmem:[#allocation9 + $0x3380] sm:$0xff]
      %v2215 = vld [vmem:[#allocation9 + $0x3388] sm:$0xff]
      %v2216 = vld [vmem:[#allocation9 + $0x3390] sm:$0xff]
      %v2217 = vld [vmem:[#allocation9 + $0x3398] sm:$0xff]
      %v2218 = vld [vmem:[#allocation9 + $0x33a0] sm:$0xff]
      %v2219 = vld [vmem:[#allocation9 + $0x33a8] sm:$0xff]
      %v2220 = vld [vmem:[#allocation9 + $0x33b0] sm:$0xff]
      %v2221 = vld [vmem:[#allocation9 + $0x33b8] sm:$0xff]
      %v2222 = vld [vmem:[#allocation9 + $0x33c0] sm:$0xff]
      %v2223 = vld [vmem:[#allocation9 + $0x33c8] sm:$0xff]
      %v2224 = vld [vmem:[#allocation9 + $0x33d0] sm:$0xff]
      %v2225 = vld [vmem:[#allocation9 + $0x33d8] sm:$0xff]
      %v2226 = vld [vmem:[#allocation9 + $0x33e0] sm:$0xff]
      %v2227 = vld [vmem:[#allocation9 + $0x33e8] sm:$0xff]
      %v2228 = vld [vmem:[#allocation9 + $0x33f0] sm:$0xff]
      %v2229 = vld [vmem:[#allocation9 + $0x33f8] sm:$0xff]
      %v2230 = vld [vmem:[#allocation9 + $0x3400] sm:$0xff]
      %v2231 = vld [vmem:[#allocation9 + $0x3408] sm:$0xff]
      %v2232 = vld [vmem:[#allocation9 + $0x3410] sm:$0xff]
      %v2233 = vld [vmem:[#allocation9 + $0x3418] sm:$0xff]
      %v2234 = vld [vmem:[#allocation9 + $0x3420] sm:$0xff]
      %v2235 = vld [vmem:[#allocation9 + $0x3428] sm:$0xff]
      %v2236 = vld [vmem:[#allocation9 + $0x3430] sm:$0xff]
      %v2237 = vld [vmem:[#allocation9 + $0x3438] sm:$0xff]
      %v2238 = vld [vmem:[#allocation9 + $0x3440] sm:$0xff]
      %v2239 = vld [vmem:[#allocation9 + $0x3448] sm:$0xff]
      %v2240 = vld [vmem:[#allocation9 + $0x3450] sm:$0xff]
      %v2241 = vld [vmem:[#allocation9 + $0x3458] sm:$0xff]
      %v2242 = vld [vmem:[#allocation9 + $0x3460] sm:$0xff]
      %v2243 = vld [vmem:[#allocation9 + $0x3468] sm:$0xff]
      %v2244 = vld [vmem:[#allocation9 + $0x3470] sm:$0xff]
      %v2245 = vld [vmem:[#allocation9 + $0x3478] sm:$0xff]
      %v2246 = vld [vmem:[#allocation9 + $0x3480] sm:$0xff]
      %v2247 = vld [vmem:[#allocation9 + $0x3488] sm:$0xff]
      %v2248 = vld [vmem:[#allocation9 + $0x3490] sm:$0xff]
      %v2249 = vld [vmem:[#allocation9 + $0x3498] sm:$0xff]
      %v2250 = vld [vmem:[#allocation9 + $0x34a0] sm:$0xff]
      %v2251 = vld [vmem:[#allocation9 + $0x34a8] sm:$0xff]
      %v2252 = vld [vmem:[#allocation9 + $0x34b0] sm:$0xff]
      %v2253 = vld [vmem:[#allocation9 + $0x34b8] sm:$0xff]
      %v2254 = vld [vmem:[#allocation9 + $0x34c0] sm:$0xff]
      %v2255 = vld [vmem:[#allocation9 + $0x34c8] sm:$0xff]
      %v2256 = vld [vmem:[#allocation9 + $0x34d0] sm:$0xff]
      %v2257 = vld [vmem:[#allocation9 + $0x34d8] sm:$0xff]
      %v2258 = vld [vmem:[#allocation9 + $0x34e0] sm:$0xff]
      %v2259 = vld [vmem:[#allocation9 + $0x34e8] sm:$0xff]
      %v2260 = vld [vmem:[#allocation9 + $0x34f0] sm:$0xff]
      %v2261 = vld [vmem:[#allocation9 + $0x34f8] sm:$0xff]
      %v2262 = vld [vmem:[#allocation9 + $0x3500] sm:$0xff]
      %v2263 = vld [vmem:[#allocation9 + $0x3508] sm:$0xff]
      %v2264 = vld [vmem:[#allocation9 + $0x3510] sm:$0xff]
      %v2265 = vld [vmem:[#allocation9 + $0x3518] sm:$0xff]
      %v2266 = vld [vmem:[#allocation9 + $0x3520] sm:$0xff]
      %v2267 = vld [vmem:[#allocation9 + $0x3528] sm:$0xff]
      %v2268 = vld [vmem:[#allocation9 + $0x3530] sm:$0xff]
      %v2269 = vld [vmem:[#allocation9 + $0x3538] sm:$0xff]
      %v2270 = vld [vmem:[#allocation9 + $0x3540] sm:$0xff]
      %v2271 = vld [vmem:[#allocation9 + $0x3548] sm:$0xff]
      %v2272 = vld [vmem:[#allocation9 + $0x3550] sm:$0xff]
      %v2273 = vld [vmem:[#allocation9 + $0x3558] sm:$0xff]
      %v2274 = vld [vmem:[#allocation9 + $0x3560] sm:$0xff]
      %v2275 = vld [vmem:[#allocation9 + $0x3568] sm:$0xff]
      %v2276 = vld [vmem:[#allocation9 + $0x3570] sm:$0xff]
      %v2277 = vld [vmem:[#allocation9 + $0x3578] sm:$0xff]
      %v2278 = vld [vmem:[#allocation9 + $0x3580] sm:$0xff]
      %v2279 = vld [vmem:[#allocation9 + $0x3588] sm:$0xff]
      %v2280 = vld [vmem:[#allocation9 + $0x3590] sm:$0xff]
      %v2281 = vld [vmem:[#allocation9 + $0x3598] sm:$0xff]
      %v2282 = vld [vmem:[#allocation9 + $0x35a0] sm:$0xff]
      %v2283 = vld [vmem:[#allocation9 + $0x35a8] sm:$0xff]
      %v2284 = vld [vmem:[#allocation9 + $0x35b0] sm:$0xff]
      %v2285 = vld [vmem:[#allocation9 + $0x35b8] sm:$0xff]
      %v2286 = vld [vmem:[#allocation9 + $0x35c0] sm:$0xff]
      %v2287 = vld [vmem:[#allocation9 + $0x35c8] sm:$0xff]
      %v2288 = vld [vmem:[#allocation9 + $0x35d0] sm:$0xff]
      %v2289 = vld [vmem:[#allocation9 + $0x35d8] sm:$0xff]
      %v2290 = vld [vmem:[#allocation9 + $0x35e0] sm:$0xff]
      %v2291 = vld [vmem:[#allocation9 + $0x35e8] sm:$0xff]
      %v2292 = vld [vmem:[#allocation9 + $0x35f0] sm:$0xff]
      %v2293 = vld [vmem:[#allocation9 + $0x35f8] sm:$0xff]
      %v2294 = vld [vmem:[#allocation10] sm:$0x3f]
      %v2296 = vlaneseq
      %v2297 = vshrl.u32 %v2296, 7
      %v2298 = vsub.s32 0, %v2297
      %v2299 = vrot.slane %v2294, %v2298
      %v2300 = vlaneseq
      %v2301 = vshrl.u32 %v2300, 7
      %v2302 = vsub.s32 1, %v2301
      %v2303 = vrot.slane %v2294, %v2302
      %v2304 = vlaneseq
      %v2305 = vshrl.u32 %v2304, 7
      %v2306 = vsub.s32 2, %v2305
      %v2307 = vrot.slane %v2294, %v2306
      %v2308 = vlaneseq
      %v2309 = vshrl.u32 %v2308, 7
      %v2310 = vsub.s32 3, %v2309
      %v2311 = vrot.slane %v2294, %v2310
      %v2312 = vlaneseq
      %v2313 = vshrl.u32 %v2312, 7
      %v2314 = vsub.s32 4, %v2313
      %v2315 = vrot.slane %v2294, %v2314
      %v2316 = vlaneseq
      %v2317 = vshrl.u32 %v2316, 7
      %v2318 = vsub.s32 5, %v2317
      %v2319 = vrot.slane %v2294, %v2318
      %2326 = vmatprep.subr.mxu0 %v567
      %2327 = vmatpush1.msra.mxu0 %v566
      %2328 = vmatprep.subr.mxu0 %v573
      %2329 = vmatpush1.msra.mxu0 %v572
      %2330 = vmatprep.subr.mxu0 %v579
      %2331 = vmatpush1.msra.mxu0 %v578
      %2332 = vmatprep.subr.mxu0 %v585
      %2333 = vmatpush1.msra.mxu0 %v584
      %2334 = vmatprep.subr.mxu0 %v591
      %2335 = vmatpush1.msra.mxu0 %v590
      %2336 = vmatprep.subr.mxu0 %v597
      %2337 = vmatpush1.msra.mxu0 %v596
      %2338 = vmatprep.subr.mxu0 %v603
      %2339 = vmatpush1.msra.mxu0 %v602
      %2340 = vmatprep.subr.mxu0 %v609
      %2341 = vmatpush1.msra.mxu0 %v608
      %2342 = vmatprep.subr.mxu0 %v615
      %2343 = vmatpush1.msra.mxu0 %v614
      %2344 = vmatprep.subr.mxu0 %v621
      %2345 = vmatpush1.msra.mxu0 %v620
      %2346 = vmatprep.subr.mxu0 %v627
      %2347 = vmatpush1.msra.mxu0 %v626
      %2348 = vmatprep.subr.mxu0 %v633
      %2349 = vmatpush1.msra.mxu0 %v632
      %2350 = vmatprep.subr.mxu0 %v639
      %2351 = vmatpush1.msra.mxu0 %v638
      %2352 = vmatprep.subr.mxu0 %v645
      %2353 = vmatpush1.msra.mxu0 %v644
      %2354 = vmatprep.subr.mxu0 %v651
      %2355 = vmatpush1.msra.mxu0 %v650
      %2356 = vmatprep.subr.mxu0 %v657
      %2357 = vmatpush1.msra.mxu0 %v656
      %2358 = vmatprep.subr.mxu0 %v663
      %2359 = vmatpush1.msra.mxu0 %v662
      %2360 = vmatprep.subr.mxu0 %v669
      %2361 = vmatpush1.msra.mxu0 %v668
      %2362 = vmatprep.subr.mxu0 %v675
      %2363 = vmatpush1.msra.mxu0 %v674
      %2364 = vmatprep.subr.mxu0 %v681
      %2365 = vmatpush1.msra.mxu0 %v680
      %2366 = vmatprep.subr.mxu0 %v687
      %2367 = vmatpush1.msra.mxu0 %v686
      %2368 = vmatprep.subr.mxu0 %v693
      %2369 = vmatpush1.msra.mxu0 %v692
      %2370 = vmatprep.subr.mxu0 %v699
      %2371 = vmatpush1.msra.mxu0 %v698
      %2372 = vmatprep.subr.mxu0 %v705
      %2373 = vmatpush1.msra.mxu0 %v704
      %2374 = vmatprep.subr.mxu0 %v711
      %2375 = vmatpush1.msra.mxu0 %v710
      %2376 = vmatprep.subr.mxu0 %v717
      %2377 = vmatpush1.msra.mxu0 %v716
      %2378 = vmatprep.subr.mxu0 %v723
      %2379 = vmatpush1.msra.mxu0 %v722
      %2380 = vmatprep.subr.mxu0 %v729
      %2381 = vmatpush1.msra.mxu0 %v728
      %2382 = vmatprep.subr.mxu0 %v735
      %2383 = vmatpush1.msra.mxu0 %v734
      %2384 = vmatprep.subr.mxu0 %v741
      %2385 = vmatpush1.msra.mxu0 %v740
      %2386 = vmatprep.subr.mxu0 %v747
      %2387 = vmatpush1.msra.mxu0 %v746
      %2388 = vmatprep.subr.mxu0 %v753
      %2389 = vmatpush1.msra.mxu0 %v752
      %2390 = vmatprep.mubr.f32.mxu0 %v484
      %2391 = vmatmul.mubr.f32.gmra.mrb[0].mxu0 %v476
      %v2392 = vpop.f32.mrb[0].mxu0
      %v2393 = vadd.f32 %v2299, %v2392
      %v2394 = vpop.f32.mrb[0].mxu0
      %v2395 = vadd.f32 %v2303, %v2394
      %2396 = vdwg.mxu0
      %2397 = vmatprep.subr.mxu0 %v759
      %2398 = vmatpush1.msra.mxu0 %v758
      %2399 = vmatprep.subr.mxu0 %v765
      %2400 = vmatpush1.msra.mxu0 %v764
      %2401 = vmatprep.subr.mxu0 %v771
      %2402 = vmatpush1.msra.mxu0 %v770
      %2403 = vmatprep.subr.mxu0 %v777
      %2404 = vmatpush1.msra.mxu0 %v776
      %2405 = vmatprep.subr.mxu0 %v783
      %2406 = vmatpush1.msra.mxu0 %v782
      %2407 = vmatprep.subr.mxu0 %v789
      %2408 = vmatpush1.msra.mxu0 %v788
      %2409 = vmatprep.subr.mxu0 %v795
      %2410 = vmatpush1.msra.mxu0 %v794
      %2411 = vmatprep.subr.mxu0 %v801
      %2412 = vmatpush1.msra.mxu0 %v800
      %2413 = vmatprep.subr.mxu0 %v807
      %2414 = vmatpush1.msra.mxu0 %v806
      %2415 = vmatprep.subr.mxu0 %v813
      %2416 = vmatpush1.msra.mxu0 %v812
      %2417 = vmatprep.subr.mxu0 %v819
      %2418 = vmatpush1.msra.mxu0 %v818
      %2419 = vmatprep.subr.mxu0 %v825
      %2420 = vmatpush1.msra.mxu0 %v824
      %2421 = vmatprep.subr.mxu0 %v831
      %2422 = vmatpush1.msra.mxu0 %v830
      %2423 = vmatprep.subr.mxu0 %v837
      %2424 = vmatpush1.msra.mxu0 %v836
      %2425 = vmatprep.subr.mxu0 %v843
      %2426 = vmatpush1.msra.mxu0 %v842
      %2427 = vmatprep.subr.mxu0 %v849
      %2428 = vmatpush1.msra.mxu0 %v848
      %2429 = vmatprep.subr.mxu0 %v855
      %2430 = vmatpush1.msra.mxu0 %v854
      %2431 = vmatprep.subr.mxu0 %v861
      %2432 = vmatpush1.msra.mxu0 %v860
      %2433 = vmatprep.subr.mxu0 %v867
      %2434 = vmatpush1.msra.mxu0 %v866
      %2435 = vmatprep.subr.mxu0 %v873
      %2436 = vmatpush1.msra.mxu0 %v872
      %2437 = vmatprep.subr.mxu0 %v879
      %2438 = vmatpush1.msra.mxu0 %v878
      %2439 = vmatprep.subr.mxu0 %v885
      %2440 = vmatpush1.msra.mxu0 %v884
      %2441 = vmatprep.subr.mxu0 %v891
      %2442 = vmatpush1.msra.mxu0 %v890
      %2443 = vmatprep.subr.mxu0 %v897
      %2444 = vmatpush1.msra.mxu0 %v896
      %2445 = vmatprep.subr.mxu0 %v903
      %2446 = vmatpush1.msra.mxu0 %v902
      %2447 = vmatprep.subr.mxu0 %v909
      %2448 = vmatpush1.msra.mxu0 %v908
      %2449 = vmatprep.subr.mxu0 %v915
      %2450 = vmatpush1.msra.mxu0 %v914
      %2451 = vmatprep.subr.mxu0 %v921
      %2452 = vmatpush1.msra.mxu0 %v920
      %2453 = vmatprep.subr.mxu0 %v927
      %2454 = vmatpush1.msra.mxu0 %v926
      %2455 = vmatprep.subr.mxu0 %v933
      %2456 = vmatpush1.msra.mxu0 %v932
      %2457 = vmatprep.subr.mxu0 %v939
      %2458 = vmatpush1.msra.mxu0 %v938
      %2459 = vmatprep.subr.mxu0 %v945
      %2460 = vmatpush1.msra.mxu0 %v944
      %2461 = vmatprep.mubr.f32.mxu0 %v485
      %2462 = vmatmul.mubr.f32.gmra.mrb[0].mxu0 %v483
      %v2463 = vpop.f32.mrb[0].mxu0
      %v2464 = vadd.f32 %v2393, %v2463
      %v2465 = vpop.f32.mrb[0].mxu0
      %v2466 = vadd.f32 %v2395, %v2465
      %2467 = vdwg.mxu0
      %2468 = vmatprep.subr.mxu0 %v951
      %2469 = vmatpush1.msra.mxu0 %v950
      %2470 = vmatprep.subr.mxu0 %v957
      %2471 = vmatpush1.msra.mxu0 %v956
      %2472 = vmatprep.subr.mxu0 %v963
      %2473 = vmatpush1.msra.mxu0 %v962
      %2474 = vmatprep.subr.mxu0 %v969
      %2475 = vmatpush1.msra.mxu0 %v968
      %2476 = vmatprep.subr.mxu0 %v975
      %2477 = vmatpush1.msra.mxu0 %v974
      %2478 = vmatprep.subr.mxu0 %v981
      %2479 = vmatpush1.msra.mxu0 %v980
      %2480 = vmatprep.subr.mxu0 %v987
      %2481 = vmatpush1.msra.mxu0 %v986
      %2482 = vmatprep.subr.mxu0 %v993
      %2483 = vmatpush1.msra.mxu0 %v992
      %2484 = vmatprep.subr.mxu0 %v999
      %2485 = vmatpush1.msra.mxu0 %v998
      %2486 = vmatprep.subr.mxu0 %v1005
      %2487 = vmatpush1.msra.mxu0 %v1004
      %2488 = vmatprep.subr.mxu0 %v1011
      %2489 = vmatpush1.msra.mxu0 %v1010
      %2490 = vmatprep.subr.mxu0 %v1017
      %2491 = vmatpush1.msra.mxu0 %v1016
      %2492 = vmatprep.subr.mxu0 %v1023
      %2493 = vmatpush1.msra.mxu0 %v1022
      %2494 = vmatprep.subr.mxu0 %v1029
      %2495 = vmatpush1.msra.mxu0 %v1028
      %2496 = vmatprep.subr.mxu0 %v1035
      %2497 = vmatpush1.msra.mxu0 %v1034
      %2498 = vmatprep.subr.mxu0 %v1041
      %2499 = vmatpush1.msra.mxu0 %v1040
      %2500 = vmatprep.subr.mxu0 %v1047
      %2501 = vmatpush1.msra.mxu0 %v1046
      %2502 = vmatprep.subr.mxu0 %v1053
      %2503 = vmatpush1.msra.mxu0 %v1052
      %2504 = vmatprep.subr.mxu0 %v1059
      %2505 = vmatpush1.msra.mxu0 %v1058
      %2506 = vmatprep.subr.mxu0 %v1065
      %2507 = vmatpush1.msra.mxu0 %v1064
      %2508 = vmatprep.subr.mxu0 %v1071
      %2509 = vmatpush1.msra.mxu0 %v1070
      %2510 = vmatprep.subr.mxu0 %v1077
      %2511 = vmatpush1.msra.mxu0 %v1076
      %2512 = vmatprep.subr.mxu0 %v1083
      %2513 = vmatpush1.msra.mxu0 %v1082
      %2514 = vmatprep.subr.mxu0 %v1089
      %2515 = vmatpush1.msra.mxu0 %v1088
      %2516 = vmatprep.subr.mxu0 %v1095
      %2517 = vmatpush1.msra.mxu0 %v1094
      %2518 = vmatprep.subr.mxu0 %v1101
      %2519 = vmatpush1.msra.mxu0 %v1100
      %2520 = vmatprep.subr.mxu0 %v1107
      %2521 = vmatpush1.msra.mxu0 %v1106
      %2522 = vmatprep.subr.mxu0 %v1113
      %2523 = vmatpush1.msra.mxu0 %v1112
      %2524 = vmatprep.subr.mxu0 %v1119
      %2525 = vmatpush1.msra.mxu0 %v1118
      %2526 = vmatprep.subr.mxu0 %v1125
      %2527 = vmatpush1.msra.mxu0 %v1124
      %2528 = vmatprep.subr.mxu0 %v1131
      %2529 = vmatpush1.msra.mxu0 %v1130
      %2530 = vmatprep.subr.mxu0 %v1137
      %2531 = vmatpush1.msra.mxu0 %v1136
      %2532 = vmatprep.mubr.f32.mxu0 %v493
      %2533 = vmatmul.mubr.f32.gmra.mrb[0].mxu0 %v492
      %v2534 = vpop.f32.mrb[0].mxu0
      %v2535 = vadd.f32 %v2464, %v2534
      %v2536 = vpop.f32.mrb[0].mxu0
      %v2537 = vadd.f32 %v2466, %v2536
      %2538 = vdwg.mxu0
      %2539 = vmatprep.subr.mxu0 %v1143
      %2540 = vmatpush1.msra.mxu0 %v1142
      %2541 = vmatprep.subr.mxu0 %v1149
      %2542 = vmatpush1.msra.mxu0 %v1148
      %2543 = vmatprep.subr.mxu0 %v1155
      %2544 = vmatpush1.msra.mxu0 %v1154
      %2545 = vmatprep.subr.mxu0 %v1161
      %2546 = vmatpush1.msra.mxu0 %v1160
      %2547 = vmatprep.subr.mxu0 %v1167
      %2548 = vmatpush1.msra.mxu0 %v1166
      %2549 = vmatprep.subr.mxu0 %v1173
      %2550 = vmatpush1.msra.mxu0 %v1172
      %2551 = vmatprep.subr.mxu0 %v1179
      %2552 = vmatpush1.msra.mxu0 %v1178
      %2553 = vmatprep.subr.mxu0 %v1185
      %2554 = vmatpush1.msra.mxu0 %v1184
      %2555 = vmatprep.subr.mxu0 %v1191
      %2556 = vmatpush1.msra.mxu0 %v1190
      %2557 = vmatprep.subr.mxu0 %v1197
      %2558 = vmatpush1.msra.mxu0 %v1196
      %2559 = vmatprep.subr.mxu0 %v1203
      %2560 = vmatpush1.msra.mxu0 %v1202
      %2561 = vmatprep.subr.mxu0 %v1209
      %2562 = vmatpush1.msra.mxu0 %v1208
      %2563 = vmatprep.subr.mxu0 %v1215
      %2564 = vmatpush1.msra.mxu0 %v1214
      %2565 = vmatprep.subr.mxu0 %v1221
      %2566 = vmatpush1.msra.mxu0 %v1220
      %2567 = vmatprep.subr.mxu0 %v1227
      %2568 = vmatpush1.msra.mxu0 %v1226
      %2569 = vmatprep.subr.mxu0 %v1233
      %2570 = vmatpush1.msra.mxu0 %v1232
      %2571 = vmatprep.subr.mxu0 %v1239
      %2572 = vmatpush1.msra.mxu0 %v1238
      %2573 = vmatprep.subr.mxu0 %v1245
      %2574 = vmatpush1.msra.mxu0 %v1244
      %2575 = vmatprep.subr.mxu0 %v1251
      %2576 = vmatpush1.msra.mxu0 %v1250
      %2577 = vmatprep.subr.mxu0 %v1257
      %2578 = vmatpush1.msra.mxu0 %v1256
      %2579 = vmatprep.subr.mxu0 %v1263
      %2580 = vmatpush1.msra.mxu0 %v1262
      %2581 = vmatprep.subr.mxu0 %v1269
      %2582 = vmatpush1.msra.mxu0 %v1268
      %2583 = vmatprep.subr.mxu0 %v1275
      %2584 = vmatpush1.msra.mxu0 %v1274
      %2585 = vmatprep.subr.mxu0 %v1281
      %2586 = vmatpush1.msra.mxu0 %v1280
      %2587 = vmatprep.subr.mxu0 %v1287
      %2588 = vmatpush1.msra.mxu0 %v1286
      %2589 = vmatprep.subr.mxu0 %v1293
      %2590 = vmatpush1.msra.mxu0 %v1292
      %2591 = vmatprep.subr.mxu0 %v1299
      %2592 = vmatpush1.msra.mxu0 %v1298
      %2593 = vmatprep.subr.mxu0 %v1305
      %2594 = vmatpush1.msra.mxu0 %v1304
      %2595 = vmatprep.subr.mxu0 %v1311
      %2596 = vmatpush1.msra.mxu0 %v1310
      %2597 = vmatprep.subr.mxu0 %v1317
      %2598 = vmatpush1.msra.mxu0 %v1316
      %2599 = vmatprep.subr.mxu0 %v1323
      %2600 = vmatpush1.msra.mxu0 %v1322
      %2601 = vmatprep.subr.mxu0 %v1329
      %2602 = vmatpush1.msra.mxu0 %v1328
      %2603 = vmatprep.mubr.f32.mxu0 %v517
      %2604 = vmatmul.mubr.f32.gmra.mrb[0].mxu0 %v509
      %v2605 = vpop.f32.mrb[0].mxu0
      %v2606 = vadd.f32 %v2535, %v2605
      %v2607 = vpop.f32.mrb[0].mxu0
      %v2608 = vadd.f32 %v2537, %v2607
      %2609 = vdwg.mxu0
      %2610 = vmatprep.subr.mxu0 %v1335
      %2611 = vmatpush1.msra.mxu0 %v1334
      %2612 = vmatprep.subr.mxu0 %v1341
      %2613 = vmatpush1.msra.mxu0 %v1340
      %2614 = vmatprep.subr.mxu0 %v1347
      %2615 = vmatpush1.msra.mxu0 %v1346
      %2616 = vmatprep.subr.mxu0 %v1353
      %2617 = vmatpush1.msra.mxu0 %v1352
      %2618 = vmatprep.subr.mxu0 %v1359
      %2619 = vmatpush1.msra.mxu0 %v1358
      %2620 = vmatprep.subr.mxu0 %v1365
      %2621 = vmatpush1.msra.mxu0 %v1364
      %2622 = vmatprep.subr.mxu0 %v1371
      %2623 = vmatpush1.msra.mxu0 %v1370
      %2624 = vmatprep.subr.mxu0 %v1377
      %2625 = vmatpush1.msra.mxu0 %v1376
      %2626 = vmatprep.subr.mxu0 %v1383
      %2627 = vmatpush1.msra.mxu0 %v1382
      %2628 = vmatprep.subr.mxu0 %v1389
      %2629 = vmatpush1.msra.mxu0 %v1388
      %2630 = vmatprep.subr.mxu0 %v1395
      %2631 = vmatpush1.msra.mxu0 %v1394
      %2632 = vmatprep.subr.mxu0 %v1401
      %2633 = vmatpush1.msra.mxu0 %v1400
      %2634 = vmatprep.subr.mxu0 %v1407
      %2635 = vmatpush1.msra.mxu0 %v1406
      %2636 = vmatprep.subr.mxu0 %v1413
      %2637 = vmatpush1.msra.mxu0 %v1412
      %2638 = vmatprep.subr.mxu0 %v1419
      %2639 = vmatpush1.msra.mxu0 %v1418
      %2640 = vmatprep.subr.mxu0 %v1425
      %2641 = vmatpush1.msra.mxu0 %v1424
      %2642 = vmatprep.subr.mxu0 %v1431
      %2643 = vmatpush1.msra.mxu0 %v1430
      %2644 = vmatprep.subr.mxu0 %v1437
      %2645 = vmatpush1.msra.mxu0 %v1436
      %2646 = vmatprep.subr.mxu0 %v1443
      %2647 = vmatpush1.msra.mxu0 %v1442
      %2648 = vmatprep.subr.mxu0 %v1449
      %2649 = vmatpush1.msra.mxu0 %v1448
      %2650 = vmatprep.subr.mxu0 %v1455
      %2651 = vmatpush1.msra.mxu0 %v1454
      %2652 = vmatprep.subr.mxu0 %v1461
      %2653 = vmatpush1.msra.mxu0 %v1460
      %2654 = vmatprep.subr.mxu0 %v1467
      %2655 = vmatpush1.msra.mxu0 %v1466
      %2656 = vmatprep.subr.mxu0 %v1473
      %2657 = vmatpush1.msra.mxu0 %v1472
      %2658 = vmatprep.subr.mxu0 %v1479
      %2659 = vmatpush1.msra.mxu0 %v1478
      %2660 = vmatprep.subr.mxu0 %v1485
      %2661 = vmatpush1.msra.mxu0 %v1484
      %2662 = vmatprep.subr.mxu0 %v1491
      %2663 = vmatpush1.msra.mxu0 %v1490
      %2664 = vmatprep.subr.mxu0 %v1497
      %2665 = vmatpush1.msra.mxu0 %v1496
      %2666 = vmatprep.subr.mxu0 %v1503
      %2667 = vmatpush1.msra.mxu0 %v1502
      %2668 = vmatprep.subr.mxu0 %v1509
      %2669 = vmatpush1.msra.mxu0 %v1508
      %2670 = vmatprep.subr.mxu0 %v1515
      %2671 = vmatpush1.msra.mxu0 %v1514
      %2672 = vmatprep.subr.mxu0 %v1521
      %2673 = vmatpush1.msra.mxu0 %v1520
      %2674 = vmatprep.mubr.f32.mxu0 %v518
      %2675 = vmatmul.mubr.f32.gmra.mrb[0].mxu0 %v516
      %v2676 = vpop.f32.mrb[0].mxu0
      %v2677 = vadd.f32 %v2606, %v2676
      %v2678 = vpop.f32.mrb[0].mxu0
      %v2679 = vadd.f32 %v2608, %v2678
      %2680 = vdwg.mxu0
      %2681 = vmatprep.subr.mxu0 %v1527
      %2682 = vmatpush1.msra.mxu0 %v1526
      %2683 = vmatprep.subr.mxu0 %v1533
      %2684 = vmatpush1.msra.mxu0 %v1532
      %2685 = vmatprep.subr.mxu0 %v1539
      %2686 = vmatpush1.msra.mxu0 %v1538
      %2687 = vmatprep.subr.mxu0 %v1545
      %2688 = vmatpush1.msra.mxu0 %v1544
      %2689 = vmatprep.subr.mxu0 %v1551
      %2690 = vmatpush1.msra.mxu0 %v1550
      %2691 = vmatprep.subr.mxu0 %v1557
      %2692 = vmatpush1.msra.mxu0 %v1556
      %2693 = vmatprep.subr.mxu0 %v1563
      %2694 = vmatpush1.msra.mxu0 %v1562
      %2695 = vmatprep.subr.mxu0 %v1569
      %2696 = vmatpush1.msra.mxu0 %v1568
      %2697 = vmatprep.subr.mxu0 %v1575
      %2698 = vmatpush1.msra.mxu0 %v1574
      %2699 = vmatprep.subr.mxu0 %v1581
      %2700 = vmatpush1.msra.mxu0 %v1580
      %2701 = vmatprep.subr.mxu0 %v1587
      %2702 = vmatpush1.msra.mxu0 %v1586
      %2703 = vmatprep.subr.mxu0 %v1593
      %2704 = vmatpush1.msra.mxu0 %v1592
      %2705 = vmatprep.subr.mxu0 %v1599
      %2706 = vmatpush1.msra.mxu0 %v1598
      %2707 = vmatprep.subr.mxu0 %v1605
      %2708 = vmatpush1.msra.mxu0 %v1604
      %2709 = vmatprep.subr.mxu0 %v1611
      %2710 = vmatpush1.msra.mxu0 %v1610
      %2711 = vmatprep.subr.mxu0 %v1617
      %2712 = vmatpush1.msra.mxu0 %v1616
      %2713 = vmatprep.subr.mxu0 %v1623
      %2714 = vmatpush1.msra.mxu0 %v1622
      %2715 = vmatprep.subr.mxu0 %v1629
      %2716 = vmatpush1.msra.mxu0 %v1628
      %2717 = vmatprep.subr.mxu0 %v1635
      %2718 = vmatpush1.msra.mxu0 %v1634
      %2719 = vmatprep.subr.mxu0 %v1641
      %2720 = vmatpush1.msra.mxu0 %v1640
      %2721 = vmatprep.subr.mxu0 %v1647
      %2722 = vmatpush1.msra.mxu0 %v1646
      %2723 = vmatprep.subr.mxu0 %v1653
      %2724 = vmatpush1.msra.mxu0 %v1652
      %2725 = vmatprep.subr.mxu0 %v1659
      %2726 = vmatpush1.msra.mxu0 %v1658
      %2727 = vmatprep.subr.mxu0 %v1665
      %2728 = vmatpush1.msra.mxu0 %v1664
      %2729 = vmatprep.subr.mxu0 %v1671
      %2730 = vmatpush1.msra.mxu0 %v1670
      %2731 = vmatprep.subr.mxu0 %v1677
      %2732 = vmatpush1.msra.mxu0 %v1676
      %2733 = vmatprep.subr.mxu0 %v1683
      %2734 = vmatpush1.msra.mxu0 %v1682
      %2735 = vmatprep.subr.mxu0 %v1689
      %2736 = vmatpush1.msra.mxu0 %v1688
      %2737 = vmatprep.subr.mxu0 %v1695
      %2738 = vmatpush1.msra.mxu0 %v1694
      %2739 = vmatprep.subr.mxu0 %v1701
      %2740 = vmatpush1.msra.mxu0 %v1700
      %2741 = vmatprep.subr.mxu0 %v1707
      %2742 = vmatpush1.msra.mxu0 %v1706
      %2743 = vmatprep.subr.mxu0 %v1713
      %2744 = vmatpush1.msra.mxu0 %v1712
      %2745 = vmatprep.mubr.f32.mxu0 %v526
      %2746 = vmatmul.mubr.f32.gmra.mrb[0].mxu0 %v525
      %v2747 = vpop.f32.mrb[0].mxu0
      %v2748 = vadd.f32 %v2677, %v2747
      %v2749 = vpop.f32.mrb[0].mxu0
      %v2750 = vadd.f32 %v2679, %v2749
      %2751 = vdwg.mxu0
      %2752 = vmatprep.subr.mxu0 %v1719
      %2753 = vmatpush1.msra.mxu0 %v1718
      %2754 = vmatprep.subr.mxu0 %v1725
      %2755 = vmatpush1.msra.mxu0 %v1724
      %2756 = vmatprep.subr.mxu0 %v1731
      %2757 = vmatpush1.msra.mxu0 %v1730
      %2758 = vmatprep.subr.mxu0 %v1737
      %2759 = vmatpush1.msra.mxu0 %v1736
      %2760 = vmatprep.subr.mxu0 %v1743
      %2761 = vmatpush1.msra.mxu0 %v1742
      %2762 = vmatprep.subr.mxu0 %v1749
      %2763 = vmatpush1.msra.mxu0 %v1748
      %2764 = vmatprep.subr.mxu0 %v1755
      %2765 = vmatpush1.msra.mxu0 %v1754
      %2766 = vmatprep.subr.mxu0 %v1761
      %2767 = vmatpush1.msra.mxu0 %v1760
      %2768 = vmatprep.subr.mxu0 %v1767
      %2769 = vmatpush1.msra.mxu0 %v1766
      %2770 = vmatprep.subr.mxu0 %v1773
      %2771 = vmatpush1.msra.mxu0 %v1772
      %2772 = vmatprep.subr.mxu0 %v1779
      %2773 = vmatpush1.msra.mxu0 %v1778
      %2774 = vmatprep.subr.mxu0 %v1785
      %2775 = vmatpush1.msra.mxu0 %v1784
      %2776 = vmatprep.subr.mxu0 %v1791
      %2777 = vmatpush1.msra.mxu0 %v1790
      %2778 = vmatprep.subr.mxu0 %v1797
      %2779 = vmatpush1.msra.mxu0 %v1796
      %2780 = vmatprep.subr.mxu0 %v1803
      %2781 = vmatpush1.msra.mxu0 %v1802
      %2782 = vmatprep.subr.mxu0 %v1809
      %2783 = vmatpush1.msra.mxu0 %v1808
      %2784 = vmatprep.subr.mxu0 %v1815
      %2785 = vmatpush1.msra.mxu0 %v1814
      %2786 = vmatprep.subr.mxu0 %v1821
      %2787 = vmatpush1.msra.mxu0 %v1820
      %2788 = vmatprep.subr.mxu0 %v1827
      %2789 = vmatpush1.msra.mxu0 %v1826
      %2790 = vmatprep.subr.mxu0 %v1833
      %2791 = vmatpush1.msra.mxu0 %v1832
      %2792 = vmatprep.subr.mxu0 %v1839
      %2793 = vmatpush1.msra.mxu0 %v1838
      %2794 = vmatprep.subr.mxu0 %v1845
      %2795 = vmatpush1.msra.mxu0 %v1844
      %2796 = vmatprep.subr.mxu0 %v1851
      %2797 = vmatpush1.msra.mxu0 %v1850
      %2798 = vmatprep.subr.mxu0 %v1857
      %2799 = vmatpush1.msra.mxu0 %v1856
      %2800 = vmatprep.subr.mxu0 %v1863
      %2801 = vmatpush1.msra.mxu0 %v1862
      %2802 = vmatprep.subr.mxu0 %v1869
      %2803 = vmatpush1.msra.mxu0 %v1868
      %2804 = vmatprep.subr.mxu0 %v1875
      %2805 = vmatpush1.msra.mxu0 %v1874
      %2806 = vmatprep.subr.mxu0 %v1881
      %2807 = vmatpush1.msra.mxu0 %v1880
      %2808 = vmatprep.subr.mxu0 %v1887
      %2809 = vmatpush1.msra.mxu0 %v1886
      %2810 = vmatprep.subr.mxu0 %v1893
      %2811 = vmatpush1.msra.mxu0 %v1892
      %2812 = vmatprep.subr.mxu0 %v1899
      %2813 = vmatpush1.msra.mxu0 %v1898
      %2814 = vmatprep.subr.mxu0 %v1905
      %2815 = vmatpush1.msra.mxu0 %v1904
      %2816 = vmatprep.mubr.f32.mxu0 %v550
      %2817 = vmatmul.mubr.f32.gmra.mrb[0].mxu0 %v542
      %v2818 = vpop.f32.mrb[0].mxu0
      %v2819 = vadd.f32 %v2748, %v2818
      %v2820 = vpop.f32.mrb[0].mxu0
      %v2821 = vadd.f32 %v2750, %v2820
      %2822 = vdwg.mxu0
      %2823 = vmatprep.subr.mxu0 %v1911
      %2824 = vmatpush1.msra.mxu0 %v1910
      %2825 = vmatprep.subr.mxu0 %v1917
      %2826 = vmatpush1.msra.mxu0 %v1916
      %2827 = vmatprep.subr.mxu0 %v1923
      %2828 = vmatpush1.msra.mxu0 %v1922
      %2829 = vmatprep.subr.mxu0 %v1929
      %2830 = vmatpush1.msra.mxu0 %v1928
      %2831 = vmatprep.subr.mxu0 %v1935
      %2832 = vmatpush1.msra.mxu0 %v1934
      %2833 = vmatprep.subr.mxu0 %v1941
      %2834 = vmatpush1.msra.mxu0 %v1940
      %2835 = vmatprep.subr.mxu0 %v1947
      %2836 = vmatpush1.msra.mxu0 %v1946
      %2837 = vmatprep.subr.mxu0 %v1953
      %2838 = vmatpush1.msra.mxu0 %v1952
      %2839 = vmatprep.subr.mxu0 %v1959
      %2840 = vmatpush1.msra.mxu0 %v1958
      %2841 = vmatprep.subr.mxu0 %v1965
      %2842 = vmatpush1.msra.mxu0 %v1964
      %2843 = vmatprep.subr.mxu0 %v1971
      %2844 = vmatpush1.msra.mxu0 %v1970
      %2845 = vmatprep.subr.mxu0 %v1977
      %2846 = vmatpush1.msra.mxu0 %v1976
      %2847 = vmatprep.subr.mxu0 %v1983
      %2848 = vmatpush1.msra.mxu0 %v1982
      %2849 = vmatprep.subr.mxu0 %v1989
      %2850 = vmatpush1.msra.mxu0 %v1988
      %2851 = vmatprep.subr.mxu0 %v1995
      %2852 = vmatpush1.msra.mxu0 %v1994
      %2853 = vmatprep.subr.mxu0 %v2001
      %2854 = vmatpush1.msra.mxu0 %v2000
      %2855 = vmatprep.subr.mxu0 %v2007
      %2856 = vmatpush1.msra.mxu0 %v2006
      %2857 = vmatprep.subr.mxu0 %v2013
      %2858 = vmatpush1.msra.mxu0 %v2012
      %2859 = vmatprep.subr.mxu0 %v2019
      %2860 = vmatpush1.msra.mxu0 %v2018
      %2861 = vmatprep.subr.mxu0 %v2025
      %2862 = vmatpush1.msra.mxu0 %v2024
      %2863 = vmatprep.subr.mxu0 %v2031
      %2864 = vmatpush1.msra.mxu0 %v2030
      %2865 = vmatprep.subr.mxu0 %v2037
      %2866 = vmatpush1.msra.mxu0 %v2036
      %2867 = vmatprep.subr.mxu0 %v2043
      %2868 = vmatpush1.msra.mxu0 %v2042
      %2869 = vmatprep.subr.mxu0 %v2049
      %2870 = vmatpush1.msra.mxu0 %v2048
      %2871 = vmatprep.subr.mxu0 %v2055
      %2872 = vmatpush1.msra.mxu0 %v2054
      %2873 = vmatprep.subr.mxu0 %v2061
      %2874 = vmatpush1.msra.mxu0 %v2060
      %2875 = vmatprep.subr.mxu0 %v2067
      %2876 = vmatpush1.msra.mxu0 %v2066
      %2877 = vmatprep.subr.mxu0 %v2073
      %2878 = vmatpush1.msra.mxu0 %v2072
      %2879 = vmatprep.subr.mxu0 %v2079
      %2880 = vmatpush1.msra.mxu0 %v2078
      %2881 = vmatprep.subr.mxu0 %v2085
      %2882 = vmatpush1.msra.mxu0 %v2084
      %2883 = vmatprep.subr.mxu0 %v2091
      %2884 = vmatpush1.msra.mxu0 %v2090
      %2885 = vmatprep.subr.mxu0 %v2097
      %2886 = vmatpush1.msra.mxu0 %v2096
      %2887 = vmatprep.mubr.f32.mxu0 %v551
      %2888 = vmatmul.mubr.f32.gmra.mrb[0].mxu0 %v549
      %v2889 = vpop.f32.mrb[0].mxu0
      %v2890 = vadd.f32 %v2819, %v2889
      %v2891 = vpop.f32.mrb[0].mxu0
      %v2892 = vadd.f32 %v2821, %v2891
      %2893 = vdwg.mxu0
      %2894 = vmatprep.subr.mxu0 %v2103
      %2895 = vmatpush1.msra.mxu0 %v2102
      %2896 = vmatprep.subr.mxu0 %v2109
      %2897 = vmatpush1.msra.mxu0 %v2108
      %2898 = vmatprep.subr.mxu0 %v2115
      %2899 = vmatpush1.msra.mxu0 %v2114
      %2900 = vmatprep.subr.mxu0 %v2121
      %2901 = vmatpush1.msra.mxu0 %v2120
      %2902 = vmatprep.subr.mxu0 %v2127
      %2903 = vmatpush1.msra.mxu0 %v2126
      %2904 = vmatprep.subr.mxu0 %v2133
      %2905 = vmatpush1.msra.mxu0 %v2132
      %2906 = vmatprep.subr.mxu0 %v2139
      %2907 = vmatpush1.msra.mxu0 %v2138
      %2908 = vmatprep.subr.mxu0 %v2145
      %2909 = vmatpush1.msra.mxu0 %v2144
      %2910 = vmatprep.subr.mxu0 %v2151
      %2911 = vmatpush1.msra.mxu0 %v2150
      %2912 = vmatprep.subr.mxu0 %v2157
      %2913 = vmatpush1.msra.mxu0 %v2156
      %2914 = vmatprep.subr.mxu0 %v2163
      %2915 = vmatpush1.msra.mxu0 %v2162
      %2916 = vmatprep.subr.mxu0 %v2169
      %2917 = vmatpush1.msra.mxu0 %v2168
      %2918 = vmatprep.subr.mxu0 %v2175
      %2919 = vmatpush1.msra.mxu0 %v2174
      %2920 = vmatprep.subr.mxu0 %v2181
      %2921 = vmatpush1.msra.mxu0 %v2180
      %2922 = vmatprep.subr.mxu0 %v2187
      %2923 = vmatpush1.msra.mxu0 %v2186
      %2924 = vmatprep.subr.mxu0 %v2193
      %2925 = vmatpush1.msra.mxu0 %v2192
      %2926 = vmatprep.subr.mxu0 %v2199
      %2927 = vmatpush1.msra.mxu0 %v2198
      %2928 = vmatprep.subr.mxu0 %v2205
      %2929 = vmatpush1.msra.mxu0 %v2204
      %2930 = vmatprep.subr.mxu0 %v2211
      %2931 = vmatpush1.msra.mxu0 %v2210
      %2932 = vmatprep.subr.mxu0 %v2217
      %2933 = vmatpush1.msra.mxu0 %v2216
      %2934 = vmatprep.subr.mxu0 %v2223
      %2935 = vmatpush1.msra.mxu0 %v2222
      %2936 = vmatprep.subr.mxu0 %v2229
      %2937 = vmatpush1.msra.mxu0 %v2228
      %2938 = vmatprep.subr.mxu0 %v2235
      %2939 = vmatpush1.msra.mxu0 %v2234
      %2940 = vmatprep.subr.mxu0 %v2241
      %2941 = vmatpush1.msra.mxu0 %v2240
      %2942 = vmatprep.subr.mxu0 %v2247
      %2943 = vmatpush1.msra.mxu0 %v2246
      %2944 = vmatprep.subr.mxu0 %v2253
      %2945 = vmatpush1.msra.mxu0 %v2252
      %2946 = vmatprep.subr.mxu0 %v2259
      %2947 = vmatpush1.msra.mxu0 %v2258
      %2948 = vmatprep.subr.mxu0 %v2265
      %2949 = vmatpush1.msra.mxu0 %v2264
      %2950 = vmatprep.subr.mxu0 %v2271
      %2951 = vmatpush1.msra.mxu0 %v2270
      %2952 = vmatprep.subr.mxu0 %v2277
      %2953 = vmatpush1.msra.mxu0 %v2276
      %2954 = vmatprep.subr.mxu0 %v2283
      %2955 = vmatpush1.msra.mxu0 %v2282
      %2956 = vmatprep.subr.mxu0 %v2289
      %2957 = vmatpush1.msra.mxu0 %v2288
      %2958 = vmatprep.mubr.f32.mxu0 %v559
      %2959 = vmatmul.mubr.f32.gmra.mrb[0].mxu0 %v558
      %v2960 = vpop.f32.mrb[0].mxu0
      %v2961 = vadd.f32 %v2890, %v2960
      %v2962 = vpop.f32.mrb[0].mxu0
      %v2963 = vadd.f32 %v2892, %v2962
      %2964 = vdwg.mxu0
      %2965 = vmatprep.subr.mxu0 %v569
      %2966 = vmatpush1.msra.mxu0 %v568
      %2967 = vmatprep.subr.mxu0 %v575
      %2968 = vmatpush1.msra.mxu0 %v574
      %2969 = vmatprep.subr.mxu0 %v581
      %2970 = vmatpush1.msra.mxu0 %v580
      %2971 = vmatprep.subr.mxu0 %v587
      %2972 = vmatpush1.msra.mxu0 %v586
      %2973 = vmatprep.subr.mxu0 %v593
      %2974 = vmatpush1.msra.mxu0 %v592
      %2975 = vmatprep.subr.mxu0 %v599
      %2976 = vmatpush1.msra.mxu0 %v598
      %2977 = vmatprep.subr.mxu0 %v605
      %2978 = vmatpush1.msra.mxu0 %v604
      %2979 = vmatprep.subr.mxu0 %v611
      %2980 = vmatpush1.msra.mxu0 %v610
      %2981 = vmatprep.subr.mxu0 %v617
      %2982 = vmatpush1.msra.mxu0 %v616
      %2983 = vmatprep.subr.mxu0 %v623
      %2984 = vmatpush1.msra.mxu0 %v622
      %2985 = vmatprep.subr.mxu0 %v629
      %2986 = vmatpush1.msra.mxu0 %v628
      %2987 = vmatprep.subr.mxu0 %v635
      %2988 = vmatpush1.msra.mxu0 %v634
      %2989 = vmatprep.subr.mxu0 %v641
      %2990 = vmatpush1.msra.mxu0 %v640
      %2991 = vmatprep.subr.mxu0 %v647
      %2992 = vmatpush1.msra.mxu0 %v646
      %2993 = vmatprep.subr.mxu0 %v653
      %2994 = vmatpush1.msra.mxu0 %v652
      %2995 = vmatprep.subr.mxu0 %v659
      %2996 = vmatpush1.msra.mxu0 %v658
      %2997 = vmatprep.subr.mxu0 %v665
      %2998 = vmatpush1.msra.mxu0 %v664
      %2999 = vmatprep.subr.mxu0 %v671
      %3000 = vmatpush1.msra.mxu0 %v670
      %3001 = vmatprep.subr.mxu0 %v677
      %3002 = vmatpush1.msra.mxu0 %v676
      %3003 = vmatprep.subr.mxu0 %v683
      %3004 = vmatpush1.msra.mxu0 %v682
      %3005 = vmatprep.subr.mxu0 %v689
      %3006 = vmatpush1.msra.mxu0 %v688
      %3007 = vmatprep.subr.mxu0 %v695
      %3008 = vmatpush1.msra.mxu0 %v694
      %3009 = vmatprep.subr.mxu0 %v701
      %3010 = vmatpush1.msra.mxu0 %v700
      %3011 = vmatprep.subr.mxu0 %v707
      %3012 = vmatpush1.msra.mxu0 %v706
      %3013 = vmatprep.subr.mxu0 %v713
      %3014 = vmatpush1.msra.mxu0 %v712
      %3015 = vmatprep.subr.mxu0 %v719
      %3016 = vmatpush1.msra.mxu0 %v718
      %3017 = vmatprep.subr.mxu0 %v725
      %3018 = vmatpush1.msra.mxu0 %v724
      %3019 = vmatprep.subr.mxu0 %v731
      %3020 = vmatpush1.msra.mxu0 %v730
      %3021 = vmatprep.subr.mxu0 %v737
      %3022 = vmatpush1.msra.mxu0 %v736
      %3023 = vmatprep.subr.mxu0 %v743
      %3024 = vmatpush1.msra.mxu0 %v742
      %3025 = vmatprep.subr.mxu0 %v749
      %3026 = vmatpush1.msra.mxu0 %v748
      %3027 = vmatprep.subr.mxu0 %v755
      %3028 = vmatpush1.msra.mxu0 %v754
      %3029 = vmatprep.mubr.f32.mxu0 %v484
      %3030 = vmatmul.mubr.f32.gmra.mrb[0].mxu0 %v476
      %v3031 = vpop.f32.mrb[0].mxu0
      %v3032 = vadd.f32 %v2307, %v3031
      %v3033 = vpop.f32.mrb[0].mxu0
      %v3034 = vadd.f32 %v2311, %v3033
      %3035 = vdwg.mxu0
      %3036 = vmatprep.subr.mxu0 %v761
      %3037 = vmatpush1.msra.mxu0 %v760
      %3038 = vmatprep.subr.mxu0 %v767
      %3039 = vmatpush1.msra.mxu0 %v766
      %3040 = vmatprep.subr.mxu0 %v773
      %3041 = vmatpush1.msra.mxu0 %v772
      %3042 = vmatprep.subr.mxu0 %v779
      %3043 = vmatpush1.msra.mxu0 %v778
      %3044 = vmatprep.subr.mxu0 %v785
      %3045 = vmatpush1.msra.mxu0 %v784
      %3046 = vmatprep.subr.mxu0 %v791
      %3047 = vmatpush1.msra.mxu0 %v790
      %3048 = vmatprep.subr.mxu0 %v797
      %3049 = vmatpush1.msra.mxu0 %v796
      %3050 = vmatprep.subr.mxu0 %v803
      %3051 = vmatpush1.msra.mxu0 %v802
      %3052 = vmatprep.subr.mxu0 %v809
      %3053 = vmatpush1.msra.mxu0 %v808
      %3054 = vmatprep.subr.mxu0 %v815
      %3055 = vmatpush1.msra.mxu0 %v814
      %3056 = vmatprep.subr.mxu0 %v821
      %3057 = vmatpush1.msra.mxu0 %v820
      %3058 = vmatprep.subr.mxu0 %v827
      %3059 = vmatpush1.msra.mxu0 %v826
      %3060 = vmatprep.subr.mxu0 %v833
      %3061 = vmatpush1.msra.mxu0 %v832
      %3062 = vmatprep.subr.mxu0 %v839
      %3063 = vmatpush1.msra.mxu0 %v838
      %3064 = vmatprep.subr.mxu0 %v845
      %3065 = vmatpush1.msra.mxu0 %v844
      %3066 = vmatprep.subr.mxu0 %v851
      %3067 = vmatpush1.msra.mxu0 %v850
      %3068 = vmatprep.subr.mxu0 %v857
      %3069 = vmatpush1.msra.mxu0 %v856
      %3070 = vmatprep.subr.mxu0 %v863
      %3071 = vmatpush1.msra.mxu0 %v862
      %3072 = vmatprep.subr.mxu0 %v869
      %3073 = vmatpush1.msra.mxu0 %v868
      %3074 = vmatprep.subr.mxu0 %v875
      %3075 = vmatpush1.msra.mxu0 %v874
      %3076 = vmatprep.subr.mxu0 %v881
      %3077 = vmatpush1.msra.mxu0 %v880
      %3078 = vmatprep.subr.mxu0 %v887
      %3079 = vmatpush1.msra.mxu0 %v886
      %3080 = vmatprep.subr.mxu0 %v893
      %3081 = vmatpush1.msra.mxu0 %v892
      %3082 = vmatprep.subr.mxu0 %v899
      %3083 = vmatpush1.msra.mxu0 %v898
      %3084 = vmatprep.subr.mxu0 %v905
      %3085 = vmatpush1.msra.mxu0 %v904
      %3086 = vmatprep.subr.mxu0 %v911
      %3087 = vmatpush1.msra.mxu0 %v910
      %3088 = vmatprep.subr.mxu0 %v917
      %3089 = vmatpush1.msra.mxu0 %v916
      %3090 = vmatprep.subr.mxu0 %v923
      %3091 = vmatpush1.msra.mxu0 %v922
      %3092 = vmatprep.subr.mxu0 %v929
      %3093 = vmatpush1.msra.mxu0 %v928
      %3094 = vmatprep.subr.mxu0 %v935
      %3095 = vmatpush1.msra.mxu0 %v934
      %3096 = vmatprep.subr.mxu0 %v941
      %3097 = vmatpush1.msra.mxu0 %v940
      %3098 = vmatprep.subr.mxu0 %v947
      %3099 = vmatpush1.msra.mxu0 %v946
      %3100 = vmatprep.mubr.f32.mxu0 %v485
      %3101 = vmatmul.mubr.f32.gmra.mrb[0].mxu0 %v483
      %v3102 = vpop.f32.mrb[0].mxu0
      %v3103 = vadd.f32 %v3032, %v3102
      %v3104 = vpop.f32.mrb[0].mxu0
      %v3105 = vadd.f32 %v3034, %v3104
      %3106 = vdwg.mxu0
      %3107 = vmatprep.subr.mxu0 %v953
      %3108 = vmatpush1.msra.mxu0 %v952
      %3109 = vmatprep.subr.mxu0 %v959
      %3110 = vmatpush1.msra.mxu0 %v958
      %3111 = vmatprep.subr.mxu0 %v965
      %3112 = vmatpush1.msra.mxu0 %v964
      %3113 = vmatprep.subr.mxu0 %v971
      %3114 = vmatpush1.msra.mxu0 %v970
      %3115 = vmatprep.subr.mxu0 %v977
      %3116 = vmatpush1.msra.mxu0 %v976
      %3117 = vmatprep.subr.mxu0 %v983
      %3118 = vmatpush1.msra.mxu0 %v982
      %3119 = vmatprep.subr.mxu0 %v989
      %3120 = vmatpush1.msra.mxu0 %v988
      %3121 = vmatprep.subr.mxu0 %v995
      %3122 = vmatpush1.msra.mxu0 %v994
      %3123 = vmatprep.subr.mxu0 %v1001
      %3124 = vmatpush1.msra.mxu0 %v1000
      %3125 = vmatprep.subr.mxu0 %v1007
      %3126 = vmatpush1.msra.mxu0 %v1006
      %3127 = vmatprep.subr.mxu0 %v1013
      %3128 = vmatpush1.msra.mxu0 %v1012
      %3129 = vmatprep.subr.mxu0 %v1019
      %3130 = vmatpush1.msra.mxu0 %v1018
      %3131 = vmatprep.subr.mxu0 %v1025
      %3132 = vmatpush1.msra.mxu0 %v1024
      %3133 = vmatprep.subr.mxu0 %v1031
      %3134 = vmatpush1.msra.mxu0 %v1030
      %3135 = vmatprep.subr.mxu0 %v1037
      %3136 = vmatpush1.msra.mxu0 %v1036
      %3137 = vmatprep.subr.mxu0 %v1043
      %3138 = vmatpush1.msra.mxu0 %v1042
      %3139 = vmatprep.subr.mxu0 %v1049
      %3140 = vmatpush1.msra.mxu0 %v1048
      %3141 = vmatprep.subr.mxu0 %v1055
      %3142 = vmatpush1.msra.mxu0 %v1054
      %3143 = vmatprep.subr.mxu0 %v1061
      %3144 = vmatpush1.msra.mxu0 %v1060
      %3145 = vmatprep.subr.mxu0 %v1067
      %3146 = vmatpush1.msra.mxu0 %v1066
      %3147 = vmatprep.subr.mxu0 %v1073
      %3148 = vmatpush1.msra.mxu0 %v1072
      %3149 = vmatprep.subr.mxu0 %v1079
      %3150 = vmatpush1.msra.mxu0 %v1078
      %3151 = vmatprep.subr.mxu0 %v1085
      %3152 = vmatpush1.msra.mxu0 %v1084
      %3153 = vmatprep.subr.mxu0 %v1091
      %3154 = vmatpush1.msra.mxu0 %v1090
      %3155 = vmatprep.subr.mxu0 %v1097
      %3156 = vmatpush1.msra.mxu0 %v1096
      %3157 = vmatprep.subr.mxu0 %v1103
      %3158 = vmatpush1.msra.mxu0 %v1102
      %3159 = vmatprep.subr.mxu0 %v1109
      %3160 = vmatpush1.msra.mxu0 %v1108
      %3161 = vmatprep.subr.mxu0 %v1115
      %3162 = vmatpush1.msra.mxu0 %v1114
      %3163 = vmatprep.subr.mxu0 %v1121
      %3164 = vmatpush1.msra.mxu0 %v1120
      %3165 = vmatprep.subr.mxu0 %v1127
      %3166 = vmatpush1.msra.mxu0 %v1126
      %3167 = vmatprep.subr.mxu0 %v1133
      %3168 = vmatpush1.msra.mxu0 %v1132
      %3169 = vmatprep.subr.mxu0 %v1139
      %3170 = vmatpush1.msra.mxu0 %v1138
      %3171 = vmatprep.mubr.f32.mxu0 %v493
      %3172 = vmatmul.mubr.f32.gmra.mrb[0].mxu0 %v492
      %v3173 = vpop.f32.mrb[0].mxu0
      %v3174 = vadd.f32 %v3103, %v3173
      %v3175 = vpop.f32.mrb[0].mxu0
      %v3176 = vadd.f32 %v3105, %v3175
      %3177 = vdwg.mxu0
      %3178 = vmatprep.subr.mxu0 %v1145
      %3179 = vmatpush1.msra.mxu0 %v1144
      %3180 = vmatprep.subr.mxu0 %v1151
      %3181 = vmatpush1.msra.mxu0 %v1150
      %3182 = vmatprep.subr.mxu0 %v1157
      %3183 = vmatpush1.msra.mxu0 %v1156
      %3184 = vmatprep.subr.mxu0 %v1163
      %3185 = vmatpush1.msra.mxu0 %v1162
      %3186 = vmatprep.subr.mxu0 %v1169
      %3187 = vmatpush1.msra.mxu0 %v1168
      %3188 = vmatprep.subr.mxu0 %v1175
      %3189 = vmatpush1.msra.mxu0 %v1174
      %3190 = vmatprep.subr.mxu0 %v1181
      %3191 = vmatpush1.msra.mxu0 %v1180
      %3192 = vmatprep.subr.mxu0 %v1187
      %3193 = vmatpush1.msra.mxu0 %v1186
      %3194 = vmatprep.subr.mxu0 %v1193
      %3195 = vmatpush1.msra.mxu0 %v1192
      %3196 = vmatprep.subr.mxu0 %v1199
      %3197 = vmatpush1.msra.mxu0 %v1198
      %3198 = vmatprep.subr.mxu0 %v1205
      %3199 = vmatpush1.msra.mxu0 %v1204
      %3200 = vmatprep.subr.mxu0 %v1211
      %3201 = vmatpush1.msra.mxu0 %v1210
      %3202 = vmatprep.subr.mxu0 %v1217
      %3203 = vmatpush1.msra.mxu0 %v1216
      %3204 = vmatprep.subr.mxu0 %v1223
      %3205 = vmatpush1.msra.mxu0 %v1222
      %3206 = vmatprep.subr.mxu0 %v1229
      %3207 = vmatpush1.msra.mxu0 %v1228
      %3208 = vmatprep.subr.mxu0 %v1235
      %3209 = vmatpush1.msra.mxu0 %v1234
      %3210 = vmatprep.subr.mxu0 %v1241
      %3211 = vmatpush1.msra.mxu0 %v1240
      %3212 = vmatprep.subr.mxu0 %v1247
      %3213 = vmatpush1.msra.mxu0 %v1246
      %3214 = vmatprep.subr.mxu0 %v1253
      %3215 = vmatpush1.msra.mxu0 %v1252
      %3216 = vmatprep.subr.mxu0 %v1259
      %3217 = vmatpush1.msra.mxu0 %v1258
      %3218 = vmatprep.subr.mxu0 %v1265
      %3219 = vmatpush1.msra.mxu0 %v1264
      %3220 = vmatprep.subr.mxu0 %v1271
      %3221 = vmatpush1.msra.mxu0 %v1270
      %3222 = vmatprep.subr.mxu0 %v1277
      %3223 = vmatpush1.msra.mxu0 %v1276
      %3224 = vmatprep.subr.mxu0 %v1283
      %3225 = vmatpush1.msra.mxu0 %v1282
      %3226 = vmatprep.subr.mxu0 %v1289
      %3227 = vmatpush1.msra.mxu0 %v1288
      %3228 = vmatprep.subr.mxu0 %v1295
      %3229 = vmatpush1.msra.mxu0 %v1294
      %3230 = vmatprep.subr.mxu0 %v1301
      %3231 = vmatpush1.msra.mxu0 %v1300
      %3232 = vmatprep.subr.mxu0 %v1307
      %3233 = vmatpush1.msra.mxu0 %v1306
      %3234 = vmatprep.subr.mxu0 %v1313
      %3235 = vmatpush1.msra.mxu0 %v1312
      %3236 = vmatprep.subr.mxu0 %v1319
      %3237 = vmatpush1.msra.mxu0 %v1318
      %3238 = vmatprep.subr.mxu0 %v1325
      %3239 = vmatpush1.msra.mxu0 %v1324
      %3240 = vmatprep.subr.mxu0 %v1331
      %3241 = vmatpush1.msra.mxu0 %v1330
      %3242 = vmatprep.mubr.f32.mxu0 %v517
      %3243 = vmatmul.mubr.f32.gmra.mrb[0].mxu0 %v509
      %v3244 = vpop.f32.mrb[0].mxu0
      %v3245 = vadd.f32 %v3174, %v3244
      %v3246 = vpop.f32.mrb[0].mxu0
      %v3247 = vadd.f32 %v3176, %v3246
      %3248 = vdwg.mxu0
      %3249 = vmatprep.subr.mxu0 %v1337
      %3250 = vmatpush1.msra.mxu0 %v1336
      %3251 = vmatprep.subr.mxu0 %v1343
      %3252 = vmatpush1.msra.mxu0 %v1342
      %3253 = vmatprep.subr.mxu0 %v1349
      %3254 = vmatpush1.msra.mxu0 %v1348
      %3255 = vmatprep.subr.mxu0 %v1355
      %3256 = vmatpush1.msra.mxu0 %v1354
      %3257 = vmatprep.subr.mxu0 %v1361
      %3258 = vmatpush1.msra.mxu0 %v1360
      %3259 = vmatprep.subr.mxu0 %v1367
      %3260 = vmatpush1.msra.mxu0 %v1366
      %3261 = vmatprep.subr.mxu0 %v1373
      %3262 = vmatpush1.msra.mxu0 %v1372
      %3263 = vmatprep.subr.mxu0 %v1379
      %3264 = vmatpush1.msra.mxu0 %v1378
      %3265 = vmatprep.subr.mxu0 %v1385
      %3266 = vmatpush1.msra.mxu0 %v1384
      %3267 = vmatprep.subr.mxu0 %v1391
      %3268 = vmatpush1.msra.mxu0 %v1390
      %3269 = vmatprep.subr.mxu0 %v1397
      %3270 = vmatpush1.msra.mxu0 %v1396
      %3271 = vmatprep.subr.mxu0 %v1403
      %3272 = vmatpush1.msra.mxu0 %v1402
      %3273 = vmatprep.subr.mxu0 %v1409
      %3274 = vmatpush1.msra.mxu0 %v1408
      %3275 = vmatprep.subr.mxu0 %v1415
      %3276 = vmatpush1.msra.mxu0 %v1414
      %3277 = vmatprep.subr.mxu0 %v1421
      %3278 = vmatpush1.msra.mxu0 %v1420
      %3279 = vmatprep.subr.mxu0 %v1427
      %3280 = vmatpush1.msra.mxu0 %v1426
      %3281 = vmatprep.subr.mxu0 %v1433
      %3282 = vmatpush1.msra.mxu0 %v1432
      %3283 = vmatprep.subr.mxu0 %v1439
      %3284 = vmatpush1.msra.mxu0 %v1438
      %3285 = vmatprep.subr.mxu0 %v1445
      %3286 = vmatpush1.msra.mxu0 %v1444
      %3287 = vmatprep.subr.mxu0 %v1451
      %3288 = vmatpush1.msra.mxu0 %v1450
      %3289 = vmatprep.subr.mxu0 %v1457
      %3290 = vmatpush1.msra.mxu0 %v1456
      %3291 = vmatprep.subr.mxu0 %v1463
      %3292 = vmatpush1.msra.mxu0 %v1462
      %3293 = vmatprep.subr.mxu0 %v1469
      %3294 = vmatpush1.msra.mxu0 %v1468
      %3295 = vmatprep.subr.mxu0 %v1475
      %3296 = vmatpush1.msra.mxu0 %v1474
      %3297 = vmatprep.subr.mxu0 %v1481
      %3298 = vmatpush1.msra.mxu0 %v1480
      %3299 = vmatprep.subr.mxu0 %v1487
      %3300 = vmatpush1.msra.mxu0 %v1486
      %3301 = vmatprep.subr.mxu0 %v1493
      %3302 = vmatpush1.msra.mxu0 %v1492
      %3303 = vmatprep.subr.mxu0 %v1499
      %3304 = vmatpush1.msra.mxu0 %v1498
      %3305 = vmatprep.subr.mxu0 %v1505
      %3306 = vmatpush1.msra.mxu0 %v1504
      %3307 = vmatprep.subr.mxu0 %v1511
      %3308 = vmatpush1.msra.mxu0 %v1510
      %3309 = vmatprep.subr.mxu0 %v1517
      %3310 = vmatpush1.msra.mxu0 %v1516
      %3311 = vmatprep.subr.mxu0 %v1523
      %3312 = vmatpush1.msra.mxu0 %v1522
      %3313 = vmatprep.mubr.f32.mxu0 %v518
      %3314 = vmatmul.mubr.f32.gmra.mrb[0].mxu0 %v516
      %v3315 = vpop.f32.mrb[0].mxu0
      %v3316 = vadd.f32 %v3245, %v3315
      %v3317 = vpop.f32.mrb[0].mxu0
      %v3318 = vadd.f32 %v3247, %v3317
      %3319 = vdwg.mxu0
      %3320 = vmatprep.subr.mxu0 %v1529
      %3321 = vmatpush1.msra.mxu0 %v1528
      %3322 = vmatprep.subr.mxu0 %v1535
      %3323 = vmatpush1.msra.mxu0 %v1534
      %3324 = vmatprep.subr.mxu0 %v1541
      %3325 = vmatpush1.msra.mxu0 %v1540
      %3326 = vmatprep.subr.mxu0 %v1547
      %3327 = vmatpush1.msra.mxu0 %v1546
      %3328 = vmatprep.subr.mxu0 %v1553
      %3329 = vmatpush1.msra.mxu0 %v1552
      %3330 = vmatprep.subr.mxu0 %v1559
      %3331 = vmatpush1.msra.mxu0 %v1558
      %3332 = vmatprep.subr.mxu0 %v1565
      %3333 = vmatpush1.msra.mxu0 %v1564
      %3334 = vmatprep.subr.mxu0 %v1571
      %3335 = vmatpush1.msra.mxu0 %v1570
      %3336 = vmatprep.subr.mxu0 %v1577
      %3337 = vmatpush1.msra.mxu0 %v1576
      %3338 = vmatprep.subr.mxu0 %v1583
      %3339 = vmatpush1.msra.mxu0 %v1582
      %3340 = vmatprep.subr.mxu0 %v1589
      %3341 = vmatpush1.msra.mxu0 %v1588
      %3342 = vmatprep.subr.mxu0 %v1595
      %3343 = vmatpush1.msra.mxu0 %v1594
      %3344 = vmatprep.subr.mxu0 %v1601
      %3345 = vmatpush1.msra.mxu0 %v1600
      %3346 = vmatprep.subr.mxu0 %v1607
      %3347 = vmatpush1.msra.mxu0 %v1606
      %3348 = vmatprep.subr.mxu0 %v1613
      %3349 = vmatpush1.msra.mxu0 %v1612
      %3350 = vmatprep.subr.mxu0 %v1619
      %3351 = vmatpush1.msra.mxu0 %v1618
      %3352 = vmatprep.subr.mxu0 %v1625
      %3353 = vmatpush1.msra.mxu0 %v1624
      %3354 = vmatprep.subr.mxu0 %v1631
      %3355 = vmatpush1.msra.mxu0 %v1630
      %3356 = vmatprep.subr.mxu0 %v1637
      %3357 = vmatpush1.msra.mxu0 %v1636
      %3358 = vmatprep.subr.mxu0 %v1643
      %3359 = vmatpush1.msra.mxu0 %v1642
      %3360 = vmatprep.subr.mxu0 %v1649
      %3361 = vmatpush1.msra.mxu0 %v1648
      %3362 = vmatprep.subr.mxu0 %v1655
      %3363 = vmatpush1.msra.mxu0 %v1654
      %3364 = vmatprep.subr.mxu0 %v1661
      %3365 = vmatpush1.msra.mxu0 %v1660
      %3366 = vmatprep.subr.mxu0 %v1667
      %3367 = vmatpush1.msra.mxu0 %v1666
      %3368 = vmatprep.subr.mxu0 %v1673
      %3369 = vmatpush1.msra.mxu0 %v1672
      %3370 = vmatprep.subr.mxu0 %v1679
      %3371 = vmatpush1.msra.mxu0 %v1678
      %3372 = vmatprep.subr.mxu0 %v1685
      %3373 = vmatpush1.msra.mxu0 %v1684
      %3374 = vmatprep.subr.mxu0 %v1691
      %3375 = vmatpush1.msra.mxu0 %v1690
      %3376 = vmatprep.subr.mxu0 %v1697
      %3377 = vmatpush1.msra.mxu0 %v1696
      %3378 = vmatprep.subr.mxu0 %v1703
      %3379 = vmatpush1.msra.mxu0 %v1702
      %3380 = vmatprep.subr.mxu0 %v1709
      %3381 = vmatpush1.msra.mxu0 %v1708
      %3382 = vmatprep.subr.mxu0 %v1715
      %3383 = vmatpush1.msra.mxu0 %v1714
      %3384 = vmatprep.mubr.f32.mxu0 %v526
      %3385 = vmatmul.mubr.f32.gmra.mrb[0].mxu0 %v525
      %v3386 = vpop.f32.mrb[0].mxu0
      %v3387 = vadd.f32 %v3316, %v3386
      %v3388 = vpop.f32.mrb[0].mxu0
      %v3389 = vadd.f32 %v3318, %v3388
      %3390 = vdwg.mxu0
      %3391 = vmatprep.subr.mxu0 %v1721
      %3392 = vmatpush1.msra.mxu0 %v1720
      %3393 = vmatprep.subr.mxu0 %v1727
      %3394 = vmatpush1.msra.mxu0 %v1726
      %3395 = vmatprep.subr.mxu0 %v1733
      %3396 = vmatpush1.msra.mxu0 %v1732
      %3397 = vmatprep.subr.mxu0 %v1739
      %3398 = vmatpush1.msra.mxu0 %v1738
      %3399 = vmatprep.subr.mxu0 %v1745
      %3400 = vmatpush1.msra.mxu0 %v1744
      %3401 = vmatprep.subr.mxu0 %v1751
      %3402 = vmatpush1.msra.mxu0 %v1750
      %3403 = vmatprep.subr.mxu0 %v1757
      %3404 = vmatpush1.msra.mxu0 %v1756
      %3405 = vmatprep.subr.mxu0 %v1763
      %3406 = vmatpush1.msra.mxu0 %v1762
      %3407 = vmatprep.subr.mxu0 %v1769
      %3408 = vmatpush1.msra.mxu0 %v1768
      %3409 = vmatprep.subr.mxu0 %v1775
      %3410 = vmatpush1.msra.mxu0 %v1774
      %3411 = vmatprep.subr.mxu0 %v1781
      %3412 = vmatpush1.msra.mxu0 %v1780
      %3413 = vmatprep.subr.mxu0 %v1787
      %3414 = vmatpush1.msra.mxu0 %v1786
      %3415 = vmatprep.subr.mxu0 %v1793
      %3416 = vmatpush1.msra.mxu0 %v1792
      %3417 = vmatprep.subr.mxu0 %v1799
      %3418 = vmatpush1.msra.mxu0 %v1798
      %3419 = vmatprep.subr.mxu0 %v1805
      %3420 = vmatpush1.msra.mxu0 %v1804
      %3421 = vmatprep.subr.mxu0 %v1811
      %3422 = vmatpush1.msra.mxu0 %v1810
      %3423 = vmatprep.subr.mxu0 %v1817
      %3424 = vmatpush1.msra.mxu0 %v1816
      %3425 = vmatprep.subr.mxu0 %v1823
      %3426 = vmatpush1.msra.mxu0 %v1822
      %3427 = vmatprep.subr.mxu0 %v1829
      %3428 = vmatpush1.msra.mxu0 %v1828
      %3429 = vmatprep.subr.mxu0 %v1835
      %3430 = vmatpush1.msra.mxu0 %v1834
      %3431 = vmatprep.subr.mxu0 %v1841
      %3432 = vmatpush1.msra.mxu0 %v1840
      %3433 = vmatprep.subr.mxu0 %v1847
      %3434 = vmatpush1.msra.mxu0 %v1846
      %3435 = vmatprep.subr.mxu0 %v1853
      %3436 = vmatpush1.msra.mxu0 %v1852
      %3437 = vmatprep.subr.mxu0 %v1859
      %3438 = vmatpush1.msra.mxu0 %v1858
      %3439 = vmatprep.subr.mxu0 %v1865
      %3440 = vmatpush1.msra.mxu0 %v1864
      %3441 = vmatprep.subr.mxu0 %v1871
      %3442 = vmatpush1.msra.mxu0 %v1870
      %3443 = vmatprep.subr.mxu0 %v1877
      %3444 = vmatpush1.msra.mxu0 %v1876
      %3445 = vmatprep.subr.mxu0 %v1883
      %3446 = vmatpush1.msra.mxu0 %v1882
      %3447 = vmatprep.subr.mxu0 %v1889
      %3448 = vmatpush1.msra.mxu0 %v1888
      %3449 = vmatprep.subr.mxu0 %v1895
      %3450 = vmatpush1.msra.mxu0 %v1894
      %3451 = vmatprep.subr.mxu0 %v1901
      %3452 = vmatpush1.msra.mxu0 %v1900
      %3453 = vmatprep.subr.mxu0 %v1907
      %3454 = vmatpush1.msra.mxu0 %v1906
      %3455 = vmatprep.mubr.f32.mxu0 %v550
      %3456 = vmatmul.mubr.f32.gmra.mrb[0].mxu0 %v542
      %v3457 = vpop.f32.mrb[0].mxu0
      %v3458 = vadd.f32 %v3387, %v3457
      %v3459 = vpop.f32.mrb[0].mxu0
      %v3460 = vadd.f32 %v3389, %v3459
      %3461 = vdwg.mxu0
      %3462 = vmatprep.subr.mxu0 %v1913
      %3463 = vmatpush1.msra.mxu0 %v1912
      %3464 = vmatprep.subr.mxu0 %v1919
      %3465 = vmatpush1.msra.mxu0 %v1918
      %3466 = vmatprep.subr.mxu0 %v1925
      %3467 = vmatpush1.msra.mxu0 %v1924
      %3468 = vmatprep.subr.mxu0 %v1931
      %3469 = vmatpush1.msra.mxu0 %v1930
      %3470 = vmatprep.subr.mxu0 %v1937
      %3471 = vmatpush1.msra.mxu0 %v1936
      %3472 = vmatprep.subr.mxu0 %v1943
      %3473 = vmatpush1.msra.mxu0 %v1942
      %3474 = vmatprep.subr.mxu0 %v1949
      %3475 = vmatpush1.msra.mxu0 %v1948
      %3476 = vmatprep.subr.mxu0 %v1955
      %3477 = vmatpush1.msra.mxu0 %v1954
      %3478 = vmatprep.subr.mxu0 %v1961
      %3479 = vmatpush1.msra.mxu0 %v1960
      %3480 = vmatprep.subr.mxu0 %v1967
      %3481 = vmatpush1.msra.mxu0 %v1966
      %3482 = vmatprep.subr.mxu0 %v1973
      %3483 = vmatpush1.msra.mxu0 %v1972
      %3484 = vmatprep.subr.mxu0 %v1979
      %3485 = vmatpush1.msra.mxu0 %v1978
      %3486 = vmatprep.subr.mxu0 %v1985
      %3487 = vmatpush1.msra.mxu0 %v1984
      %3488 = vmatprep.subr.mxu0 %v1991
      %3489 = vmatpush1.msra.mxu0 %v1990
      %3490 = vmatprep.subr.mxu0 %v1997
      %3491 = vmatpush1.msra.mxu0 %v1996
      %3492 = vmatprep.subr.mxu0 %v2003
      %3493 = vmatpush1.msra.mxu0 %v2002
      %3494 = vmatprep.subr.mxu0 %v2009
      %3495 = vmatpush1.msra.mxu0 %v2008
      %3496 = vmatprep.subr.mxu0 %v2015
      %3497 = vmatpush1.msra.mxu0 %v2014
      %3498 = vmatprep.subr.mxu0 %v2021
      %3499 = vmatpush1.msra.mxu0 %v2020
      %3500 = vmatprep.subr.mxu0 %v2027
      %3501 = vmatpush1.msra.mxu0 %v2026
      %3502 = vmatprep.subr.mxu0 %v2033
      %3503 = vmatpush1.msra.mxu0 %v2032
      %3504 = vmatprep.subr.mxu0 %v2039
      %3505 = vmatpush1.msra.mxu0 %v2038
      %3506 = vmatprep.subr.mxu0 %v2045
      %3507 = vmatpush1.msra.mxu0 %v2044
      %3508 = vmatprep.subr.mxu0 %v2051
      %3509 = vmatpush1.msra.mxu0 %v2050
      %3510 = vmatprep.subr.mxu0 %v2057
      %3511 = vmatpush1.msra.mxu0 %v2056
      %3512 = vmatprep.subr.mxu0 %v2063
      %3513 = vmatpush1.msra.mxu0 %v2062
      %3514 = vmatprep.subr.mxu0 %v2069
      %3515 = vmatpush1.msra.mxu0 %v2068
      %3516 = vmatprep.subr.mxu0 %v2075
      %3517 = vmatpush1.msra.mxu0 %v2074
      %3518 = vmatprep.subr.mxu0 %v2081
      %3519 = vmatpush1.msra.mxu0 %v2080
      %3520 = vmatprep.subr.mxu0 %v2087
      %3521 = vmatpush1.msra.mxu0 %v2086
      %3522 = vmatprep.subr.mxu0 %v2093
      %3523 = vmatpush1.msra.mxu0 %v2092
      %3524 = vmatprep.subr.mxu0 %v2099
      %3525 = vmatpush1.msra.mxu0 %v2098
      %3526 = vmatprep.mubr.f32.mxu0 %v551
      %3527 = vmatmul.mubr.f32.gmra.mrb[0].mxu0 %v549
      %v3528 = vpop.f32.mrb[0].mxu0
      %v3529 = vadd.f32 %v3458, %v3528
      %v3530 = vpop.f32.mrb[0].mxu0
      %v3531 = vadd.f32 %v3460, %v3530
      %3532 = vdwg.mxu0
      %3533 = vmatprep.subr.mxu0 %v2105
      %3534 = vmatpush1.msra.mxu0 %v2104
      %3535 = vmatprep.subr.mxu0 %v2111
      %3536 = vmatpush1.msra.mxu0 %v2110
      %3537 = vmatprep.subr.mxu0 %v2117
      %3538 = vmatpush1.msra.mxu0 %v2116
      %3539 = vmatprep.subr.mxu0 %v2123
      %3540 = vmatpush1.msra.mxu0 %v2122
      %3541 = vmatprep.subr.mxu0 %v2129
      %3542 = vmatpush1.msra.mxu0 %v2128
      %3543 = vmatprep.subr.mxu0 %v2135
      %3544 = vmatpush1.msra.mxu0 %v2134
      %3545 = vmatprep.subr.mxu0 %v2141
      %3546 = vmatpush1.msra.mxu0 %v2140
      %3547 = vmatprep.subr.mxu0 %v2147
      %3548 = vmatpush1.msra.mxu0 %v2146
      %3549 = vmatprep.subr.mxu0 %v2153
      %3550 = vmatpush1.msra.mxu0 %v2152
      %3551 = vmatprep.subr.mxu0 %v2159
      %3552 = vmatpush1.msra.mxu0 %v2158
      %3553 = vmatprep.subr.mxu0 %v2165
      %3554 = vmatpush1.msra.mxu0 %v2164
      %3555 = vmatprep.subr.mxu0 %v2171
      %3556 = vmatpush1.msra.mxu0 %v2170
      %3557 = vmatprep.subr.mxu0 %v2177
      %3558 = vmatpush1.msra.mxu0 %v2176
      %3559 = vmatprep.subr.mxu0 %v2183
      %3560 = vmatpush1.msra.mxu0 %v2182
      %3561 = vmatprep.subr.mxu0 %v2189
      %3562 = vmatpush1.msra.mxu0 %v2188
      %3563 = vmatprep.subr.mxu0 %v2195
      %3564 = vmatpush1.msra.mxu0 %v2194
      %3565 = vmatprep.subr.mxu0 %v2201
      %3566 = vmatpush1.msra.mxu0 %v2200
      %3567 = vmatprep.subr.mxu0 %v2207
      %3568 = vmatpush1.msra.mxu0 %v2206
      %3569 = vmatprep.subr.mxu0 %v2213
      %3570 = vmatpush1.msra.mxu0 %v2212
      %3571 = vmatprep.subr.mxu0 %v2219
      %3572 = vmatpush1.msra.mxu0 %v2218
      %3573 = vmatprep.subr.mxu0 %v2225
      %3574 = vmatpush1.msra.mxu0 %v2224
      %3575 = vmatprep.subr.mxu0 %v2231
      %3576 = vmatpush1.msra.mxu0 %v2230
      %3577 = vmatprep.subr.mxu0 %v2237
      %3578 = vmatpush1.msra.mxu0 %v2236
      %3579 = vmatprep.subr.mxu0 %v2243
      %3580 = vmatpush1.msra.mxu0 %v2242
      %3581 = vmatprep.subr.mxu0 %v2249
      %3582 = vmatpush1.msra.mxu0 %v2248
      %3583 = vmatprep.subr.mxu0 %v2255
      %3584 = vmatpush1.msra.mxu0 %v2254
      %3585 = vmatprep.subr.mxu0 %v2261
      %3586 = vmatpush1.msra.mxu0 %v2260
      %3587 = vmatprep.subr.mxu0 %v2267
      %3588 = vmatpush1.msra.mxu0 %v2266
      %3589 = vmatprep.subr.mxu0 %v2273
      %3590 = vmatpush1.msra.mxu0 %v2272
      %3591 = vmatprep.subr.mxu0 %v2279
      %3592 = vmatpush1.msra.mxu0 %v2278
      %3593 = vmatprep.subr.mxu0 %v2285
      %3594 = vmatpush1.msra.mxu0 %v2284
      %3595 = vmatprep.subr.mxu0 %v2291
      %3596 = vmatpush1.msra.mxu0 %v2290
      %3597 = vmatprep.mubr.f32.mxu0 %v559
      %3598 = vmatmul.mubr.f32.gmra.mrb[0].mxu0 %v558
      %v3599 = vpop.f32.mrb[0].mxu0
      %v3600 = vadd.f32 %v3529, %v3599
      %v3601 = vpop.f32.mrb[0].mxu0
      %v3602 = vadd.f32 %v3531, %v3601
      %3603 = vdwg.mxu0
      %3604 = vmatprep.subr.mxu0 %v571
      %3605 = vmatpush1.msra.mxu0 %v570
      %3606 = vmatprep.subr.mxu0 %v577
      %3607 = vmatpush1.msra.mxu0 %v576
      %3608 = vmatprep.subr.mxu0 %v583
      %3609 = vmatpush1.msra.mxu0 %v582
      %3610 = vmatprep.subr.mxu0 %v589
      %3611 = vmatpush1.msra.mxu0 %v588
      %3612 = vmatprep.subr.mxu0 %v595
      %3613 = vmatpush1.msra.mxu0 %v594
      %3614 = vmatprep.subr.mxu0 %v601
      %3615 = vmatpush1.msra.mxu0 %v600
      %3616 = vmatprep.subr.mxu0 %v607
      %3617 = vmatpush1.msra.mxu0 %v606
      %3618 = vmatprep.subr.mxu0 %v613
      %3619 = vmatpush1.msra.mxu0 %v612
      %3620 = vmatprep.subr.mxu0 %v619
      %3621 = vmatpush1.msra.mxu0 %v618
      %3622 = vmatprep.subr.mxu0 %v625
      %3623 = vmatpush1.msra.mxu0 %v624
      %3624 = vmatprep.subr.mxu0 %v631
      %3625 = vmatpush1.msra.mxu0 %v630
      %3626 = vmatprep.subr.mxu0 %v637
      %3627 = vmatpush1.msra.mxu0 %v636
      %3628 = vmatprep.subr.mxu0 %v643
      %3629 = vmatpush1.msra.mxu0 %v642
      %3630 = vmatprep.subr.mxu0 %v649
      %3631 = vmatpush1.msra.mxu0 %v648
      %3632 = vmatprep.subr.mxu0 %v655
      %3633 = vmatpush1.msra.mxu0 %v654
      %3634 = vmatprep.subr.mxu0 %v661
      %3635 = vmatpush1.msra.mxu0 %v660
      %3636 = vmatprep.subr.mxu0 %v667
      %3637 = vmatpush1.msra.mxu0 %v666
      %3638 = vmatprep.subr.mxu0 %v673
      %3639 = vmatpush1.msra.mxu0 %v672
      %3640 = vmatprep.subr.mxu0 %v679
      %3641 = vmatpush1.msra.mxu0 %v678
      %3642 = vmatprep.subr.mxu0 %v685
      %3643 = vmatpush1.msra.mxu0 %v684
      %3644 = vmatprep.subr.mxu0 %v691
      %3645 = vmatpush1.msra.mxu0 %v690
      %3646 = vmatprep.subr.mxu0 %v697
      %3647 = vmatpush1.msra.mxu0 %v696
      %3648 = vmatprep.subr.mxu0 %v703
      %3649 = vmatpush1.msra.mxu0 %v702
      %3650 = vmatprep.subr.mxu0 %v709
      %3651 = vmatpush1.msra.mxu0 %v708
      %3652 = vmatprep.subr.mxu0 %v715
      %3653 = vmatpush1.msra.mxu0 %v714
      %3654 = vmatprep.subr.mxu0 %v721
      %3655 = vmatpush1.msra.mxu0 %v720
      %3656 = vmatprep.subr.mxu0 %v727
      %3657 = vmatpush1.msra.mxu0 %v726
      %3658 = vmatprep.subr.mxu0 %v733
      %3659 = vmatpush1.msra.mxu0 %v732
      %3660 = vmatprep.subr.mxu0 %v739
      %3661 = vmatpush1.msra.mxu0 %v738
      %3662 = vmatprep.subr.mxu0 %v745
      %3663 = vmatpush1.msra.mxu0 %v744
      %3664 = vmatprep.subr.mxu0 %v751
      %3665 = vmatpush1.msra.mxu0 %v750
      %3666 = vmatprep.subr.mxu0 %v757
      %3667 = vmatpush1.msra.mxu0 %v756
      %3668 = vmatprep.mubr.f32.mxu0 %v484
      %3669 = vmatmul.mubr.f32.gmra.mrb[0].mxu0 %v476
      %v3670 = vpop.f32.mrb[0].mxu0
      %v3671 = vadd.f32 %v2315, %v3670
      %v3672 = vpop.f32.mrb[0].mxu0
      %v3673 = vadd.f32 %v2319, %v3672
      %3674 = vdwg.mxu0
      %3675 = vmatprep.subr.mxu0 %v763
      %3676 = vmatpush1.msra.mxu0 %v762
      %3677 = vmatprep.subr.mxu0 %v769
      %3678 = vmatpush1.msra.mxu0 %v768
      %3679 = vmatprep.subr.mxu0 %v775
      %3680 = vmatpush1.msra.mxu0 %v774
      %3681 = vmatprep.subr.mxu0 %v781
      %3682 = vmatpush1.msra.mxu0 %v780
      %3683 = vmatprep.subr.mxu0 %v787
      %3684 = vmatpush1.msra.mxu0 %v786
      %3685 = vmatprep.subr.mxu0 %v793
      %3686 = vmatpush1.msra.mxu0 %v792
      %3687 = vmatprep.subr.mxu0 %v799
      %3688 = vmatpush1.msra.mxu0 %v798
      %3689 = vmatprep.subr.mxu0 %v805
      %3690 = vmatpush1.msra.mxu0 %v804
      %3691 = vmatprep.subr.mxu0 %v811
      %3692 = vmatpush1.msra.mxu0 %v810
      %3693 = vmatprep.subr.mxu0 %v817
      %3694 = vmatpush1.msra.mxu0 %v816
      %3695 = vmatprep.subr.mxu0 %v823
      %3696 = vmatpush1.msra.mxu0 %v822
      %3697 = vmatprep.subr.mxu0 %v829
      %3698 = vmatpush1.msra.mxu0 %v828
      %3699 = vmatprep.subr.mxu0 %v835
      %3700 = vmatpush1.msra.mxu0 %v834
      %3701 = vmatprep.subr.mxu0 %v841
      %3702 = vmatpush1.msra.mxu0 %v840
      %3703 = vmatprep.subr.mxu0 %v847
      %3704 = vmatpush1.msra.mxu0 %v846
      %3705 = vmatprep.subr.mxu0 %v853
      %3706 = vmatpush1.msra.mxu0 %v852
      %3707 = vmatprep.subr.mxu0 %v859
      %3708 = vmatpush1.msra.mxu0 %v858
      %3709 = vmatprep.subr.mxu0 %v865
      %3710 = vmatpush1.msra.mxu0 %v864
      %3711 = vmatprep.subr.mxu0 %v871
      %3712 = vmatpush1.msra.mxu0 %v870
      %3713 = vmatprep.subr.mxu0 %v877
      %3714 = vmatpush1.msra.mxu0 %v876
      %3715 = vmatprep.subr.mxu0 %v883
      %3716 = vmatpush1.msra.mxu0 %v882
      %3717 = vmatprep.subr.mxu0 %v889
      %3718 = vmatpush1.msra.mxu0 %v888
      %3719 = vmatprep.subr.mxu0 %v895
      %3720 = vmatpush1.msra.mxu0 %v894
      %3721 = vmatprep.subr.mxu0 %v901
      %3722 = vmatpush1.msra.mxu0 %v900
      %3723 = vmatprep.subr.mxu0 %v907
      %3724 = vmatpush1.msra.mxu0 %v906
      %3725 = vmatprep.subr.mxu0 %v913
      %3726 = vmatpush1.msra.mxu0 %v912
      %3727 = vmatprep.subr.mxu0 %v919
      %3728 = vmatpush1.msra.mxu0 %v918
      %3729 = vmatprep.subr.mxu0 %v925
      %3730 = vmatpush1.msra.mxu0 %v924
      %3731 = vmatprep.subr.mxu0 %v931
      %3732 = vmatpush1.msra.mxu0 %v930
      %3733 = vmatprep.subr.mxu0 %v937
      %3734 = vmatpush1.msra.mxu0 %v936
      %3735 = vmatprep.subr.mxu0 %v943
      %3736 = vmatpush1.msra.mxu0 %v942
      %3737 = vmatprep.subr.mxu0 %v949
      %3738 = vmatpush1.msra.mxu0 %v948
      %3739 = vmatprep.mubr.f32.mxu0 %v485
      %3740 = vmatmul.mubr.f32.gmra.mrb[0].mxu0 %v483
      %v3741 = vpop.f32.mrb[0].mxu0
      %v3742 = vadd.f32 %v3671, %v3741
      %v3743 = vpop.f32.mrb[0].mxu0
      %v3744 = vadd.f32 %v3673, %v3743
      %3745 = vdwg.mxu0
      %3746 = vmatprep.subr.mxu0 %v955
      %3747 = vmatpush1.msra.mxu0 %v954
      %3748 = vmatprep.subr.mxu0 %v961
      %3749 = vmatpush1.msra.mxu0 %v960
      %3750 = vmatprep.subr.mxu0 %v967
      %3751 = vmatpush1.msra.mxu0 %v966
      %3752 = vmatprep.subr.mxu0 %v973
      %3753 = vmatpush1.msra.mxu0 %v972
      %3754 = vmatprep.subr.mxu0 %v979
      %3755 = vmatpush1.msra.mxu0 %v978
      %3756 = vmatprep.subr.mxu0 %v985
      %3757 = vmatpush1.msra.mxu0 %v984
      %3758 = vmatprep.subr.mxu0 %v991
      %3759 = vmatpush1.msra.mxu0 %v990
      %3760 = vmatprep.subr.mxu0 %v997
      %3761 = vmatpush1.msra.mxu0 %v996
      %3762 = vmatprep.subr.mxu0 %v1003
      %3763 = vmatpush1.msra.mxu0 %v1002
      %3764 = vmatprep.subr.mxu0 %v1009
      %3765 = vmatpush1.msra.mxu0 %v1008
      %3766 = vmatprep.subr.mxu0 %v1015
      %3767 = vmatpush1.msra.mxu0 %v1014
      %3768 = vmatprep.subr.mxu0 %v1021
      %3769 = vmatpush1.msra.mxu0 %v1020
      %3770 = vmatprep.subr.mxu0 %v1027
      %3771 = vmatpush1.msra.mxu0 %v1026
      %3772 = vmatprep.subr.mxu0 %v1033
      %3773 = vmatpush1.msra.mxu0 %v1032
      %3774 = vmatprep.subr.mxu0 %v1039
      %3775 = vmatpush1.msra.mxu0 %v1038
      %3776 = vmatprep.subr.mxu0 %v1045
      %3777 = vmatpush1.msra.mxu0 %v1044
      %3778 = vmatprep.subr.mxu0 %v1051
      %3779 = vmatpush1.msra.mxu0 %v1050
      %3780 = vmatprep.subr.mxu0 %v1057
      %3781 = vmatpush1.msra.mxu0 %v1056
      %3782 = vmatprep.subr.mxu0 %v1063
      %3783 = vmatpush1.msra.mxu0 %v1062
      %3784 = vmatprep.subr.mxu0 %v1069
      %3785 = vmatpush1.msra.mxu0 %v1068
      %3786 = vmatprep.subr.mxu0 %v1075
      %3787 = vmatpush1.msra.mxu0 %v1074
      %3788 = vmatprep.subr.mxu0 %v1081
      %3789 = vmatpush1.msra.mxu0 %v1080
      %3790 = vmatprep.subr.mxu0 %v1087
      %3791 = vmatpush1.msra.mxu0 %v1086
      %3792 = vmatprep.subr.mxu0 %v1093
      %3793 = vmatpush1.msra.mxu0 %v1092
      %3794 = vmatprep.subr.mxu0 %v1099
      %3795 = vmatpush1.msra.mxu0 %v1098
      %3796 = vmatprep.subr.mxu0 %v1105
      %3797 = vmatpush1.msra.mxu0 %v1104
      %3798 = vmatprep.subr.mxu0 %v1111
      %3799 = vmatpush1.msra.mxu0 %v1110
      %3800 = vmatprep.subr.mxu0 %v1117
      %3801 = vmatpush1.msra.mxu0 %v1116
      %3802 = vmatprep.subr.mxu0 %v1123
      %3803 = vmatpush1.msra.mxu0 %v1122
      %3804 = vmatprep.subr.mxu0 %v1129
      %3805 = vmatpush1.msra.mxu0 %v1128
      %3806 = vmatprep.subr.mxu0 %v1135
      %3807 = vmatpush1.msra.mxu0 %v1134
      %3808 = vmatprep.subr.mxu0 %v1141
      %3809 = vmatpush1.msra.mxu0 %v1140
      %3810 = vmatprep.mubr.f32.mxu0 %v493
      %3811 = vmatmul.mubr.f32.gmra.mrb[0].mxu0 %v492
      %v3812 = vpop.f32.mrb[0].mxu0
      %v3813 = vadd.f32 %v3742, %v3812
      %v3814 = vpop.f32.mrb[0].mxu0
      %v3815 = vadd.f32 %v3744, %v3814
      %3816 = vdwg.mxu0
      %3817 = vmatprep.subr.mxu0 %v1147
      %3818 = vmatpush1.msra.mxu0 %v1146
      %3819 = vmatprep.subr.mxu0 %v1153
      %3820 = vmatpush1.msra.mxu0 %v1152
      %3821 = vmatprep.subr.mxu0 %v1159
      %3822 = vmatpush1.msra.mxu0 %v1158
      %3823 = vmatprep.subr.mxu0 %v1165
      %3824 = vmatpush1.msra.mxu0 %v1164
      %3825 = vmatprep.subr.mxu0 %v1171
      %3826 = vmatpush1.msra.mxu0 %v1170
      %3827 = vmatprep.subr.mxu0 %v1177
      %3828 = vmatpush1.msra.mxu0 %v1176
      %3829 = vmatprep.subr.mxu0 %v1183
      %3830 = vmatpush1.msra.mxu0 %v1182
      %3831 = vmatprep.subr.mxu0 %v1189
      %3832 = vmatpush1.msra.mxu0 %v1188
      %3833 = vmatprep.subr.mxu0 %v1195
      %3834 = vmatpush1.msra.mxu0 %v1194
      %3835 = vmatprep.subr.mxu0 %v1201
      %3836 = vmatpush1.msra.mxu0 %v1200
      %3837 = vmatprep.subr.mxu0 %v1207
      %3838 = vmatpush1.msra.mxu0 %v1206
      %3839 = vmatprep.subr.mxu0 %v1213
      %3840 = vmatpush1.msra.mxu0 %v1212
      %3841 = vmatprep.subr.mxu0 %v1219
      %3842 = vmatpush1.msra.mxu0 %v1218
      %3843 = vmatprep.subr.mxu0 %v1225
      %3844 = vmatpush1.msra.mxu0 %v1224
      %3845 = vmatprep.subr.mxu0 %v1231
      %3846 = vmatpush1.msra.mxu0 %v1230
      %3847 = vmatprep.subr.mxu0 %v1237
      %3848 = vmatpush1.msra.mxu0 %v1236
      %3849 = vmatprep.subr.mxu0 %v1243
      %3850 = vmatpush1.msra.mxu0 %v1242
      %3851 = vmatprep.subr.mxu0 %v1249
      %3852 = vmatpush1.msra.mxu0 %v1248
      %3853 = vmatprep.subr.mxu0 %v1255
      %3854 = vmatpush1.msra.mxu0 %v1254
      %3855 = vmatprep.subr.mxu0 %v1261
      %3856 = vmatpush1.msra.mxu0 %v1260
      %3857 = vmatprep.subr.mxu0 %v1267
      %3858 = vmatpush1.msra.mxu0 %v1266
      %3859 = vmatprep.subr.mxu0 %v1273
      %3860 = vmatpush1.msra.mxu0 %v1272
      %3861 = vmatprep.subr.mxu0 %v1279
      %3862 = vmatpush1.msra.mxu0 %v1278
      %3863 = vmatprep.subr.mxu0 %v1285
      %3864 = vmatpush1.msra.mxu0 %v1284
      %3865 = vmatprep.subr.mxu0 %v1291
      %3866 = vmatpush1.msra.mxu0 %v1290
      %3867 = vmatprep.subr.mxu0 %v1297
      %3868 = vmatpush1.msra.mxu0 %v1296
      %3869 = vmatprep.subr.mxu0 %v1303
      %3870 = vmatpush1.msra.mxu0 %v1302
      %3871 = vmatprep.subr.mxu0 %v1309
      %3872 = vmatpush1.msra.mxu0 %v1308
      %3873 = vmatprep.subr.mxu0 %v1315
      %3874 = vmatpush1.msra.mxu0 %v1314
      %3875 = vmatprep.subr.mxu0 %v1321
      %3876 = vmatpush1.msra.mxu0 %v1320
      %3877 = vmatprep.subr.mxu0 %v1327
      %3878 = vmatpush1.msra.mxu0 %v1326
      %3879 = vmatprep.subr.mxu0 %v1333
      %3880 = vmatpush1.msra.mxu0 %v1332
      %3881 = vmatprep.mubr.f32.mxu0 %v517
      %3882 = vmatmul.mubr.f32.gmra.mrb[0].mxu0 %v509
      %v3883 = vpop.f32.mrb[0].mxu0
      %v3884 = vadd.f32 %v3813, %v3883
      %v3885 = vpop.f32.mrb[0].mxu0
      %v3886 = vadd.f32 %v3815, %v3885
      %3887 = vdwg.mxu0
      %3888 = vmatprep.subr.mxu0 %v1339
      %3889 = vmatpush1.msra.mxu0 %v1338
      %3890 = vmatprep.subr.mxu0 %v1345
      %3891 = vmatpush1.msra.mxu0 %v1344
      %3892 = vmatprep.subr.mxu0 %v1351
      %3893 = vmatpush1.msra.mxu0 %v1350
      %3894 = vmatprep.subr.mxu0 %v1357
      %3895 = vmatpush1.msra.mxu0 %v1356
      %3896 = vmatprep.subr.mxu0 %v1363
      %3897 = vmatpush1.msra.mxu0 %v1362
      %3898 = vmatprep.subr.mxu0 %v1369
      %3899 = vmatpush1.msra.mxu0 %v1368
      %3900 = vmatprep.subr.mxu0 %v1375
      %3901 = vmatpush1.msra.mxu0 %v1374
      %3902 = vmatprep.subr.mxu0 %v1381
      %3903 = vmatpush1.msra.mxu0 %v1380
      %3904 = vmatprep.subr.mxu0 %v1387
      %3905 = vmatpush1.msra.mxu0 %v1386
      %3906 = vmatprep.subr.mxu0 %v1393
      %3907 = vmatpush1.msra.mxu0 %v1392
      %3908 = vmatprep.subr.mxu0 %v1399
      %3909 = vmatpush1.msra.mxu0 %v1398
      %3910 = vmatprep.subr.mxu0 %v1405
      %3911 = vmatpush1.msra.mxu0 %v1404
      %3912 = vmatprep.subr.mxu0 %v1411
      %3913 = vmatpush1.msra.mxu0 %v1410
      %3914 = vmatprep.subr.mxu0 %v1417
      %3915 = vmatpush1.msra.mxu0 %v1416
      %3916 = vmatprep.subr.mxu0 %v1423
      %3917 = vmatpush1.msra.mxu0 %v1422
      %3918 = vmatprep.subr.mxu0 %v1429
      %3919 = vmatpush1.msra.mxu0 %v1428
      %3920 = vmatprep.subr.mxu0 %v1435
      %3921 = vmatpush1.msra.mxu0 %v1434
      %3922 = vmatprep.subr.mxu0 %v1441
      %3923 = vmatpush1.msra.mxu0 %v1440
      %3924 = vmatprep.subr.mxu0 %v1447
      %3925 = vmatpush1.msra.mxu0 %v1446
      %3926 = vmatprep.subr.mxu0 %v1453
      %3927 = vmatpush1.msra.mxu0 %v1452
      %3928 = vmatprep.subr.mxu0 %v1459
      %3929 = vmatpush1.msra.mxu0 %v1458
      %3930 = vmatprep.subr.mxu0 %v1465
      %3931 = vmatpush1.msra.mxu0 %v1464
      %3932 = vmatprep.subr.mxu0 %v1471
      %3933 = vmatpush1.msra.mxu0 %v1470
      %3934 = vmatprep.subr.mxu0 %v1477
      %3935 = vmatpush1.msra.mxu0 %v1476
      %3936 = vmatprep.subr.mxu0 %v1483
      %3937 = vmatpush1.msra.mxu0 %v1482
      %3938 = vmatprep.subr.mxu0 %v1489
      %3939 = vmatpush1.msra.mxu0 %v1488
      %3940 = vmatprep.subr.mxu0 %v1495
      %3941 = vmatpush1.msra.mxu0 %v1494
      %3942 = vmatprep.subr.mxu0 %v1501
      %3943 = vmatpush1.msra.mxu0 %v1500
      %3944 = vmatprep.subr.mxu0 %v1507
      %3945 = vmatpush1.msra.mxu0 %v1506
      %3946 = vmatprep.subr.mxu0 %v1513
      %3947 = vmatpush1.msra.mxu0 %v1512
      %3948 = vmatprep.subr.mxu0 %v1519
      %3949 = vmatpush1.msra.mxu0 %v1518
      %3950 = vmatprep.subr.mxu0 %v1525
      %3951 = vmatpush1.msra.mxu0 %v1524
      %3952 = vmatprep.mubr.f32.mxu0 %v518
      %3953 = vmatmul.mubr.f32.gmra.mrb[0].mxu0 %v516
      %v3954 = vpop.f32.mrb[0].mxu0
      %v3955 = vadd.f32 %v3884, %v3954
      %v3956 = vpop.f32.mrb[0].mxu0
      %v3957 = vadd.f32 %v3886, %v3956
      %3958 = vdwg.mxu0
      %3959 = vmatprep.subr.mxu0 %v1531
      %3960 = vmatpush1.msra.mxu0 %v1530
      %3961 = vmatprep.subr.mxu0 %v1537
      %3962 = vmatpush1.msra.mxu0 %v1536
      %3963 = vmatprep.subr.mxu0 %v1543
      %3964 = vmatpush1.msra.mxu0 %v1542
      %3965 = vmatprep.subr.mxu0 %v1549
      %3966 = vmatpush1.msra.mxu0 %v1548
      %3967 = vmatprep.subr.mxu0 %v1555
      %3968 = vmatpush1.msra.mxu0 %v1554
      %3969 = vmatprep.subr.mxu0 %v1561
      %3970 = vmatpush1.msra.mxu0 %v1560
      %3971 = vmatprep.subr.mxu0 %v1567
      %3972 = vmatpush1.msra.mxu0 %v1566
      %3973 = vmatprep.subr.mxu0 %v1573
      %3974 = vmatpush1.msra.mxu0 %v1572
      %3975 = vmatprep.subr.mxu0 %v1579
      %3976 = vmatpush1.msra.mxu0 %v1578
      %3977 = vmatprep.subr.mxu0 %v1585
      %3978 = vmatpush1.msra.mxu0 %v1584
      %3979 = vmatprep.subr.mxu0 %v1591
      %3980 = vmatpush1.msra.mxu0 %v1590
      %3981 = vmatprep.subr.mxu0 %v1597
      %3982 = vmatpush1.msra.mxu0 %v1596
      %3983 = vmatprep.subr.mxu0 %v1603
      %3984 = vmatpush1.msra.mxu0 %v1602
      %3985 = vmatprep.subr.mxu0 %v1609
      %3986 = vmatpush1.msra.mxu0 %v1608
      %3987 = vmatprep.subr.mxu0 %v1615
      %3988 = vmatpush1.msra.mxu0 %v1614
      %3989 = vmatprep.subr.mxu0 %v1621
      %3990 = vmatpush1.msra.mxu0 %v1620
      %3991 = vmatprep.subr.mxu0 %v1627
      %3992 = vmatpush1.msra.mxu0 %v1626
      %3993 = vmatprep.subr.mxu0 %v1633
      %3994 = vmatpush1.msra.mxu0 %v1632
      %3995 = vmatprep.subr.mxu0 %v1639
      %3996 = vmatpush1.msra.mxu0 %v1638
      %3997 = vmatprep.subr.mxu0 %v1645
      %3998 = vmatpush1.msra.mxu0 %v1644
      %3999 = vmatprep.subr.mxu0 %v1651
      %4000 = vmatpush1.msra.mxu0 %v1650
      %4001 = vmatprep.subr.mxu0 %v1657
      %4002 = vmatpush1.msra.mxu0 %v1656
      %4003 = vmatprep.subr.mxu0 %v1663
      %4004 = vmatpush1.msra.mxu0 %v1662
      %4005 = vmatprep.subr.mxu0 %v1669
      %4006 = vmatpush1.msra.mxu0 %v1668
      %4007 = vmatprep.subr.mxu0 %v1675
      %4008 = vmatpush1.msra.mxu0 %v1674
      %4009 = vmatprep.subr.mxu0 %v1681
      %4010 = vmatpush1.msra.mxu0 %v1680
      %4011 = vmatprep.subr.mxu0 %v1687
      %4012 = vmatpush1.msra.mxu0 %v1686
      %4013 = vmatprep.subr.mxu0 %v1693
      %4014 = vmatpush1.msra.mxu0 %v1692
      %4015 = vmatprep.subr.mxu0 %v1699
      %4016 = vmatpush1.msra.mxu0 %v1698
      %4017 = vmatprep.subr.mxu0 %v1705
      %4018 = vmatpush1.msra.mxu0 %v1704
      %4019 = vmatprep.subr.mxu0 %v1711
      %4020 = vmatpush1.msra.mxu0 %v1710
      %4021 = vmatprep.subr.mxu0 %v1717
      %4022 = vmatpush1.msra.mxu0 %v1716
      %4023 = vmatprep.mubr.f32.mxu0 %v526
      %4024 = vmatmul.mubr.f32.gmra.mrb[0].mxu0 %v525
      %v4025 = vpop.f32.mrb[0].mxu0
      %v4026 = vadd.f32 %v3955, %v4025
      %v4027 = vpop.f32.mrb[0].mxu0
      %v4028 = vadd.f32 %v3957, %v4027
      %4029 = vdwg.mxu0
      %4030 = vmatprep.subr.mxu0 %v1723
      %4031 = vmatpush1.msra.mxu0 %v1722
      %4032 = vmatprep.subr.mxu0 %v1729
      %4033 = vmatpush1.msra.mxu0 %v1728
      %4034 = vmatprep.subr.mxu0 %v1735
      %4035 = vmatpush1.msra.mxu0 %v1734
      %4036 = vmatprep.subr.mxu0 %v1741
      %4037 = vmatpush1.msra.mxu0 %v1740
      %4038 = vmatprep.subr.mxu0 %v1747
      %4039 = vmatpush1.msra.mxu0 %v1746
      %4040 = vmatprep.subr.mxu0 %v1753
      %4041 = vmatpush1.msra.mxu0 %v1752
      %4042 = vmatprep.subr.mxu0 %v1759
      %4043 = vmatpush1.msra.mxu0 %v1758
      %4044 = vmatprep.subr.mxu0 %v1765
      %4045 = vmatpush1.msra.mxu0 %v1764
      %4046 = vmatprep.subr.mxu0 %v1771
      %4047 = vmatpush1.msra.mxu0 %v1770
      %4048 = vmatprep.subr.mxu0 %v1777
      %4049 = vmatpush1.msra.mxu0 %v1776
      %4050 = vmatprep.subr.mxu0 %v1783
      %4051 = vmatpush1.msra.mxu0 %v1782
      %4052 = vmatprep.subr.mxu0 %v1789
      %4053 = vmatpush1.msra.mxu0 %v1788
      %4054 = vmatprep.subr.mxu0 %v1795
      %4055 = vmatpush1.msra.mxu0 %v1794
      %4056 = vmatprep.subr.mxu0 %v1801
      %4057 = vmatpush1.msra.mxu0 %v1800
      %4058 = vmatprep.subr.mxu0 %v1807
      %4059 = vmatpush1.msra.mxu0 %v1806
      %4060 = vmatprep.subr.mxu0 %v1813
      %4061 = vmatpush1.msra.mxu0 %v1812
      %4062 = vmatprep.subr.mxu0 %v1819
      %4063 = vmatpush1.msra.mxu0 %v1818
      %4064 = vmatprep.subr.mxu0 %v1825
      %4065 = vmatpush1.msra.mxu0 %v1824
      %4066 = vmatprep.subr.mxu0 %v1831
      %4067 = vmatpush1.msra.mxu0 %v1830
      %4068 = vmatprep.subr.mxu0 %v1837
      %4069 = vmatpush1.msra.mxu0 %v1836
      %4070 = vmatprep.subr.mxu0 %v1843
      %4071 = vmatpush1.msra.mxu0 %v1842
      %4072 = vmatprep.subr.mxu0 %v1849
      %4073 = vmatpush1.msra.mxu0 %v1848
      %4074 = vmatprep.subr.mxu0 %v1855
      %4075 = vmatpush1.msra.mxu0 %v1854
      %4076 = vmatprep.subr.mxu0 %v1861
      %4077 = vmatpush1.msra.mxu0 %v1860
      %4078 = vmatprep.subr.mxu0 %v1867
      %4079 = vmatpush1.msra.mxu0 %v1866
      %4080 = vmatprep.subr.mxu0 %v1873
      %4081 = vmatpush1.msra.mxu0 %v1872
      %4082 = vmatprep.subr.mxu0 %v1879
      %4083 = vmatpush1.msra.mxu0 %v1878
      %4084 = vmatprep.subr.mxu0 %v1885
      %4085 = vmatpush1.msra.mxu0 %v1884
      %4086 = vmatprep.subr.mxu0 %v1891
      %4087 = vmatpush1.msra.mxu0 %v1890
      %4088 = vmatprep.subr.mxu0 %v1897
      %4089 = vmatpush1.msra.mxu0 %v1896
      %4090 = vmatprep.subr.mxu0 %v1903
      %4091 = vmatpush1.msra.mxu0 %v1902
      %4092 = vmatprep.subr.mxu0 %v1909
      %4093 = vmatpush1.msra.mxu0 %v1908
      %4094 = vmatprep.mubr.f32.mxu0 %v550
      %4095 = vmatmul.mubr.f32.gmra.mrb[0].mxu0 %v542
      %v4096 = vpop.f32.mrb[0].mxu0
      %v4097 = vadd.f32 %v4026, %v4096
      %v4098 = vpop.f32.mrb[0].mxu0
      %v4099 = vadd.f32 %v4028, %v4098
      %4100 = vdwg.mxu0
      %4101 = vmatprep.subr.mxu0 %v1915
      %4102 = vmatpush1.msra.mxu0 %v1914
      %4103 = vmatprep.subr.mxu0 %v1921
      %4104 = vmatpush1.msra.mxu0 %v1920
      %4105 = vmatprep.subr.mxu0 %v1927
      %4106 = vmatpush1.msra.mxu0 %v1926
      %4107 = vmatprep.subr.mxu0 %v1933
      %4108 = vmatpush1.msra.mxu0 %v1932
      %4109 = vmatprep.subr.mxu0 %v1939
      %4110 = vmatpush1.msra.mxu0 %v1938
      %4111 = vmatprep.subr.mxu0 %v1945
      %4112 = vmatpush1.msra.mxu0 %v1944
      %4113 = vmatprep.subr.mxu0 %v1951
      %4114 = vmatpush1.msra.mxu0 %v1950
      %4115 = vmatprep.subr.mxu0 %v1957
      %4116 = vmatpush1.msra.mxu0 %v1956
      %4117 = vmatprep.subr.mxu0 %v1963
      %4118 = vmatpush1.msra.mxu0 %v1962
      %4119 = vmatprep.subr.mxu0 %v1969
      %4120 = vmatpush1.msra.mxu0 %v1968
      %4121 = vmatprep.subr.mxu0 %v1975
      %4122 = vmatpush1.msra.mxu0 %v1974
      %4123 = vmatprep.subr.mxu0 %v1981
      %4124 = vmatpush1.msra.mxu0 %v1980
      %4125 = vmatprep.subr.mxu0 %v1987
      %4126 = vmatpush1.msra.mxu0 %v1986
      %4127 = vmatprep.subr.mxu0 %v1993
      %4128 = vmatpush1.msra.mxu0 %v1992
      %4129 = vmatprep.subr.mxu0 %v1999
      %4130 = vmatpush1.msra.mxu0 %v1998
      %4131 = vmatprep.subr.mxu0 %v2005
      %4132 = vmatpush1.msra.mxu0 %v2004
      %4133 = vmatprep.subr.mxu0 %v2011
      %4134 = vmatpush1.msra.mxu0 %v2010
      %4135 = vmatprep.subr.mxu0 %v2017
      %4136 = vmatpush1.msra.mxu0 %v2016
      %4137 = vmatprep.subr.mxu0 %v2023
      %4138 = vmatpush1.msra.mxu0 %v2022
      %4139 = vmatprep.subr.mxu0 %v2029
      %4140 = vmatpush1.msra.mxu0 %v2028
      %4141 = vmatprep.subr.mxu0 %v2035
      %4142 = vmatpush1.msra.mxu0 %v2034
      %4143 = vmatprep.subr.mxu0 %v2041
      %4144 = vmatpush1.msra.mxu0 %v2040
      %4145 = vmatprep.subr.mxu0 %v2047
      %4146 = vmatpush1.msra.mxu0 %v2046
      %4147 = vmatprep.subr.mxu0 %v2053
      %4148 = vmatpush1.msra.mxu0 %v2052
      %4149 = vmatprep.subr.mxu0 %v2059
      %4150 = vmatpush1.msra.mxu0 %v2058
      %4151 = vmatprep.subr.mxu0 %v2065
      %4152 = vmatpush1.msra.mxu0 %v2064
      %4153 = vmatprep.subr.mxu0 %v2071
      %4154 = vmatpush1.msra.mxu0 %v2070
      %4155 = vmatprep.subr.mxu0 %v2077
      %4156 = vmatpush1.msra.mxu0 %v2076
      %4157 = vmatprep.subr.mxu0 %v2083
      %4158 = vmatpush1.msra.mxu0 %v2082
      %4159 = vmatprep.subr.mxu0 %v2089
      %4160 = vmatpush1.msra.mxu0 %v2088
      %4161 = vmatprep.subr.mxu0 %v2095
      %4162 = vmatpush1.msra.mxu0 %v2094
      %4163 = vmatprep.subr.mxu0 %v2101
      %4164 = vmatpush1.msra.mxu0 %v2100
      %4165 = vmatprep.mubr.f32.mxu0 %v551
      %4166 = vmatmul.mubr.f32.gmra.mrb[0].mxu0 %v549
      %v4167 = vpop.f32.mrb[0].mxu0
      %v4168 = vadd.f32 %v4097, %v4167
      %v4169 = vpop.f32.mrb[0].mxu0
      %v4170 = vadd.f32 %v4099, %v4169
      %4171 = vdwg.mxu0
      %4172 = vmatprep.subr.mxu0 %v2107
      %4173 = vmatpush1.msra.mxu0 %v2106
      %4174 = vmatprep.subr.mxu0 %v2113
      %4175 = vmatpush1.msra.mxu0 %v2112
      %4176 = vmatprep.subr.mxu0 %v2119
      %4177 = vmatpush1.msra.mxu0 %v2118
      %4178 = vmatprep.subr.mxu0 %v2125
      %4179 = vmatpush1.msra.mxu0 %v2124
      %4180 = vmatprep.subr.mxu0 %v2131
      %4181 = vmatpush1.msra.mxu0 %v2130
      %4182 = vmatprep.subr.mxu0 %v2137
      %4183 = vmatpush1.msra.mxu0 %v2136
      %4184 = vmatprep.subr.mxu0 %v2143
      %4185 = vmatpush1.msra.mxu0 %v2142
      %4186 = vmatprep.subr.mxu0 %v2149
      %4187 = vmatpush1.msra.mxu0 %v2148
      %4188 = vmatprep.subr.mxu0 %v2155
      %4189 = vmatpush1.msra.mxu0 %v2154
      %4190 = vmatprep.subr.mxu0 %v2161
      %4191 = vmatpush1.msra.mxu0 %v2160
      %4192 = vmatprep.subr.mxu0 %v2167
      %4193 = vmatpush1.msra.mxu0 %v2166
      %4194 = vmatprep.subr.mxu0 %v2173
      %4195 = vmatpush1.msra.mxu0 %v2172
      %4196 = vmatprep.subr.mxu0 %v2179
      %4197 = vmatpush1.msra.mxu0 %v2178
      %4198 = vmatprep.subr.mxu0 %v2185
      %4199 = vmatpush1.msra.mxu0 %v2184
      %4200 = vmatprep.subr.mxu0 %v2191
      %4201 = vmatpush1.msra.mxu0 %v2190
      %4202 = vmatprep.subr.mxu0 %v2197
      %4203 = vmatpush1.msra.mxu0 %v2196
      %4204 = vmatprep.subr.mxu0 %v2203
      %4205 = vmatpush1.msra.mxu0 %v2202
      %4206 = vmatprep.subr.mxu0 %v2209
      %4207 = vmatpush1.msra.mxu0 %v2208
      %4208 = vmatprep.subr.mxu0 %v2215
      %4209 = vmatpush1.msra.mxu0 %v2214
      %4210 = vmatprep.subr.mxu0 %v2221
      %4211 = vmatpush1.msra.mxu0 %v2220
      %4212 = vmatprep.subr.mxu0 %v2227
      %4213 = vmatpush1.msra.mxu0 %v2226
      %4214 = vmatprep.subr.mxu0 %v2233
      %4215 = vmatpush1.msra.mxu0 %v2232
      %4216 = vmatprep.subr.mxu0 %v2239
      %4217 = vmatpush1.msra.mxu0 %v2238
      %4218 = vmatprep.subr.mxu0 %v2245
      %4219 = vmatpush1.msra.mxu0 %v2244
      %4220 = vmatprep.subr.mxu0 %v2251
      %4221 = vmatpush1.msra.mxu0 %v2250
      %4222 = vmatprep.subr.mxu0 %v2257
      %4223 = vmatpush1.msra.mxu0 %v2256
      %4224 = vmatprep.subr.mxu0 %v2263
      %4225 = vmatpush1.msra.mxu0 %v2262
      %4226 = vmatprep.subr.mxu0 %v2269
      %4227 = vmatpush1.msra.mxu0 %v2268
      %4228 = vmatprep.subr.mxu0 %v2275
      %4229 = vmatpush1.msra.mxu0 %v2274
      %4230 = vmatprep.subr.mxu0 %v2281
      %4231 = vmatpush1.msra.mxu0 %v2280
      %4232 = vmatprep.subr.mxu0 %v2287
      %4233 = vmatpush1.msra.mxu0 %v2286
      %4234 = vmatprep.subr.mxu0 %v2293
      %4235 = vmatpush1.msra.mxu0 %v2292
      %4236 = vmatprep.mubr.f32.mxu0 %v559
      %4237 = vmatmul.mubr.f32.gmra.mrb[0].mxu0 %v558
      %v4238 = vpop.f32.mrb[0].mxu0
      %v4239 = vadd.f32 %v4168, %v4238
      %v4240 = vpop.f32.mrb[0].mxu0
      %v4241 = vadd.f32 %v4170, %v4240
      %4242 = vdwg.mxu0
      %v4243 = vtanh.pop %v2961
      %v4244 = vtanh.pop %v2963
      %v4245 = vtanh.pop %v3600
      %v4246 = vtanh.pop %v3602
      %v4247 = vtanh.pop %v4239
      %v4248 = vtanh.pop %v4241
      %v4249 = vld [vmem:[#allocation12] sm:$0xff]
      %v4250 = vld [vmem:[#allocation12 + $0x8] sm:$0xff]
      %v4251 = vld [vmem:[#allocation12 + $0x10] sm:$0xff]
      %v4252 = vld [vmem:[#allocation12 + $0x18] sm:$0xff]
      %v4253 = vld [vmem:[#allocation12 + $0x20] sm:$0xff]
      %v4254 = vld [vmem:[#allocation12 + $0x28] sm:$0xff]
      %v4255 = vld [vmem:[#allocation12 + $0x30] sm:$0xff]
      %v4256 = vld [vmem:[#allocation12 + $0x38] sm:$0xff]
      %v4257 = vld [vmem:[#allocation12 + $0x40] sm:$0xff]
      %v4258 = vld [vmem:[#allocation12 + $0x48] sm:$0xff]
      %v4259 = vld [vmem:[#allocation12 + $0x50] sm:$0xff]
      %v4260 = vld [vmem:[#allocation12 + $0x58] sm:$0xff]
      %v4261 = vld [vmem:[#allocation12 + $0x60] sm:$0xff]
      %v4262 = vld [vmem:[#allocation12 + $0x68] sm:$0xff]
      %v4263 = vld [vmem:[#allocation12 + $0x70] sm:$0xff]
      %v4264 = vld [vmem:[#allocation12 + $0x78] sm:$0xff]
      %v4265 = vld [vmem:[#allocation12 + $0x80] sm:$0xff]
      %v4266 = vld [vmem:[#allocation12 + $0x88] sm:$0xff]
      %v4267 = vld [vmem:[#allocation12 + $0x90] sm:$0xff]
      %v4268 = vld [vmem:[#allocation12 + $0x98] sm:$0xff]
      %v4269 = vld [vmem:[#allocation12 + $0xa0] sm:$0xff]
      %v4270 = vld [vmem:[#allocation12 + $0xa8] sm:$0xff]
      %v4271 = vld [vmem:[#allocation12 + $0xb0] sm:$0xff]
      %v4272 = vld [vmem:[#allocation12 + $0xb8] sm:$0xff]
      %v4273 = vld [vmem:[#allocation12 + $0xc0] sm:$0xff]
      %v4274 = vld [vmem:[#allocation12 + $0xc8] sm:$0xff]
      %v4275 = vld [vmem:[#allocation12 + $0xd0] sm:$0xff]
      %v4276 = vld [vmem:[#allocation12 + $0xd8] sm:$0xff]
      %v4277 = vld [vmem:[#allocation12 + $0xe0] sm:$0xff]
      %v4278 = vld [vmem:[#allocation12 + $0xe8] sm:$0xff]
      %v4279 = vld [vmem:[#allocation12 + $0xf0] sm:$0xff]
      %v4280 = vld [vmem:[#allocation12 + $0xf8] sm:$0xff]
      %v4281 = vld [vmem:[#allocation12 + $0x100] sm:$0xff]
      %v4282 = vld [vmem:[#allocation12 + $0x108] sm:$0xff]
      %v4283 = vld [vmem:[#allocation12 + $0x110] sm:$0xff]
      %v4284 = vld [vmem:[#allocation12 + $0x118] sm:$0xff]
      %v4285 = vld [vmem:[#allocation12 + $0x120] sm:$0xff]
      %v4286 = vld [vmem:[#allocation12 + $0x128] sm:$0xff]
      %v4287 = vld [vmem:[#allocation12 + $0x130] sm:$0xff]
      %v4288 = vld [vmem:[#allocation12 + $0x138] sm:$0xff]
      %v4289 = vld [vmem:[#allocation12 + $0x140] sm:$0xff]
      %v4290 = vld [vmem:[#allocation12 + $0x148] sm:$0xff]
      %v4291 = vld [vmem:[#allocation12 + $0x150] sm:$0xff]
      %v4292 = vld [vmem:[#allocation12 + $0x158] sm:$0xff]
      %v4293 = vld [vmem:[#allocation12 + $0x160] sm:$0xff]
      %v4294 = vld [vmem:[#allocation12 + $0x168] sm:$0xff]
      %v4295 = vld [vmem:[#allocation12 + $0x170] sm:$0xff]
      %v4296 = vld [vmem:[#allocation12 + $0x178] sm:$0xff]
      %v4297 = vld [vmem:[#allocation12 + $0x180] sm:$0xff]
      %v4298 = vld [vmem:[#allocation12 + $0x188] sm:$0xff]
      %v4299 = vld [vmem:[#allocation12 + $0x190] sm:$0xff]
      %v4300 = vld [vmem:[#allocation12 + $0x198] sm:$0xff]
      %v4301 = vld [vmem:[#allocation12 + $0x1a0] sm:$0xff]
      %v4302 = vld [vmem:[#allocation12 + $0x1a8] sm:$0xff]
      %v4303 = vld [vmem:[#allocation12 + $0x1b0] sm:$0xff]
      %v4304 = vld [vmem:[#allocation12 + $0x1b8] sm:$0xff]
      %v4305 = vld [vmem:[#allocation12 + $0x1c0] sm:$0xff]
      %v4306 = vld [vmem:[#allocation12 + $0x1c8] sm:$0xff]
      %v4307 = vld [vmem:[#allocation12 + $0x1d0] sm:$0xff]
      %v4308 = vld [vmem:[#allocation12 + $0x1d8] sm:$0xff]
      %v4309 = vld [vmem:[#allocation12 + $0x1e0] sm:$0xff]
      %v4310 = vld [vmem:[#allocation12 + $0x1e8] sm:$0xff]
      %v4311 = vld [vmem:[#allocation12 + $0x1f0] sm:$0xff]
      %v4312 = vld [vmem:[#allocation12 + $0x1f8] sm:$0xff]
      %v4313 = vld [vmem:[#allocation12 + $0x200] sm:$0xff]
      %v4314 = vld [vmem:[#allocation12 + $0x208] sm:$0xff]
      %v4315 = vld [vmem:[#allocation12 + $0x210] sm:$0xff]
      %v4316 = vld [vmem:[#allocation12 + $0x218] sm:$0xff]
      %v4317 = vld [vmem:[#allocation12 + $0x220] sm:$0xff]
      %v4318 = vld [vmem:[#allocation12 + $0x228] sm:$0xff]
      %v4319 = vld [vmem:[#allocation12 + $0x230] sm:$0xff]
      %v4320 = vld [vmem:[#allocation12 + $0x238] sm:$0xff]
      %v4321 = vld [vmem:[#allocation12 + $0x240] sm:$0xff]
      %v4322 = vld [vmem:[#allocation12 + $0x248] sm:$0xff]
      %v4323 = vld [vmem:[#allocation12 + $0x250] sm:$0xff]
      %v4324 = vld [vmem:[#allocation12 + $0x258] sm:$0xff]
      %v4325 = vld [vmem:[#allocation12 + $0x260] sm:$0xff]
      %v4326 = vld [vmem:[#allocation12 + $0x268] sm:$0xff]
      %v4327 = vld [vmem:[#allocation12 + $0x270] sm:$0xff]
      %v4328 = vld [vmem:[#allocation12 + $0x278] sm:$0xff]
      %v4329 = vld [vmem:[#allocation12 + $0x280] sm:$0xff]
      %v4330 = vld [vmem:[#allocation12 + $0x288] sm:$0xff]
      %v4331 = vld [vmem:[#allocation12 + $0x290] sm:$0xff]
      %v4332 = vld [vmem:[#allocation12 + $0x298] sm:$0xff]
      %v4333 = vld [vmem:[#allocation12 + $0x2a0] sm:$0xff]
      %v4334 = vld [vmem:[#allocation12 + $0x2a8] sm:$0xff]
      %v4335 = vld [vmem:[#allocation12 + $0x2b0] sm:$0xff]
      %v4336 = vld [vmem:[#allocation12 + $0x2b8] sm:$0xff]
      %v4337 = vld [vmem:[#allocation12 + $0x2c0] sm:$0xff]
      %v4338 = vld [vmem:[#allocation12 + $0x2c8] sm:$0xff]
      %v4339 = vld [vmem:[#allocation12 + $0x2d0] sm:$0xff]
      %v4340 = vld [vmem:[#allocation12 + $0x2d8] sm:$0xff]
      %v4341 = vld [vmem:[#allocation12 + $0x2e0] sm:$0xff]
      %v4342 = vld [vmem:[#allocation12 + $0x2e8] sm:$0xff]
      %v4343 = vld [vmem:[#allocation12 + $0x2f0] sm:$0xff]
      %v4344 = vld [vmem:[#allocation12 + $0x2f8] sm:$0xff]
      %v4345 = vld [vmem:[#allocation13] sm:$0x1]
      %v4347 = vlaneseq
      %v4348 = vshrl.u32 %v4347, 7
      %v4349 = vsub.s32 0, %v4348
      %v4350 = vrot.slane %v4345, %v4349
      %4352 = vmatprep.subr.mxu0 0.0
      %4353 = vmatpush1.msra.mxu0 %v4249
      %4354 = vmatprep.subr.mxu0 0.0
      %4355 = vmatpush1.msra.mxu0 %v4250
      %4356 = vmatprep.subr.mxu0 0.0
      %4357 = vmatpush1.msra.mxu0 %v4251
      %4358 = vmatprep.subr.mxu0 0.0
      %4359 = vmatpush1.msra.mxu0 %v4252
      %4360 = vmatprep.subr.mxu0 0.0
      %4361 = vmatpush1.msra.mxu0 %v4253
      %4362 = vmatprep.subr.mxu0 0.0
      %4363 = vmatpush1.msra.mxu0 %v4254
      %4364 = vmatprep.subr.mxu0 0.0
      %4365 = vmatpush1.msra.mxu0 %v4255
      %4366 = vmatprep.subr.mxu0 0.0
      %4367 = vmatpush1.msra.mxu0 %v4256
      %4368 = vmatprep.subr.mxu0 0.0
      %4369 = vmatpush1.msra.mxu0 %v4257
      %4370 = vmatprep.subr.mxu0 0.0
      %4371 = vmatpush1.msra.mxu0 %v4258
      %4372 = vmatprep.subr.mxu0 0.0
      %4373 = vmatpush1.msra.mxu0 %v4259
      %4374 = vmatprep.subr.mxu0 0.0
      %4375 = vmatpush1.msra.mxu0 %v4260
      %4376 = vmatprep.subr.mxu0 0.0
      %4377 = vmatpush1.msra.mxu0 %v4261
      %4378 = vmatprep.subr.mxu0 0.0
      %4379 = vmatpush1.msra.mxu0 %v4262
      %4380 = vmatprep.subr.mxu0 0.0
      %4381 = vmatpush1.msra.mxu0 %v4263
      %4382 = vmatprep.subr.mxu0 0.0
      %4383 = vmatpush1.msra.mxu0 %v4264
      %4384 = vmatprep.subr.mxu0 0.0
      %4385 = vmatpush1.msra.mxu0 %v4265
      %4386 = vmatprep.subr.mxu0 0.0
      %4387 = vmatpush1.msra.mxu0 %v4266
      %4388 = vmatprep.subr.mxu0 0.0
      %4389 = vmatpush1.msra.mxu0 %v4267
      %4390 = vmatprep.subr.mxu0 0.0
      %4391 = vmatpush1.msra.mxu0 %v4268
      %4392 = vmatprep.subr.mxu0 0.0
      %4393 = vmatpush1.msra.mxu0 %v4269
      %4394 = vmatprep.subr.mxu0 0.0
      %4395 = vmatpush1.msra.mxu0 %v4270
      %4396 = vmatprep.subr.mxu0 0.0
      %4397 = vmatpush1.msra.mxu0 %v4271
      %4398 = vmatprep.subr.mxu0 0.0
      %4399 = vmatpush1.msra.mxu0 %v4272
      %4400 = vmatprep.subr.mxu0 0.0
      %4401 = vmatpush1.msra.mxu0 %v4273
      %4402 = vmatprep.subr.mxu0 0.0
      %4403 = vmatpush1.msra.mxu0 %v4274
      %4404 = vmatprep.subr.mxu0 0.0
      %4405 = vmatpush1.msra.mxu0 %v4275
      %4406 = vmatprep.subr.mxu0 0.0
      %4407 = vmatpush1.msra.mxu0 %v4276
      %4408 = vmatprep.subr.mxu0 0.0
      %4409 = vmatpush1.msra.mxu0 %v4277
      %4410 = vmatprep.subr.mxu0 0.0
      %4411 = vmatpush1.msra.mxu0 %v4278
      %4412 = vmatprep.subr.mxu0 0.0
      %4413 = vmatpush1.msra.mxu0 %v4279
      %4414 = vmatprep.subr.mxu0 0.0
      %4415 = vmatpush1.msra.mxu0 %v4280
      %4416 = vmatprep.mubr.f32.mxu0 %v4244
      %4417 = vmatmul.mubr.f32.gmra.mrb[0].mxu0 %v4243
      %v4418 = vpop.f32.mrb[0].mxu0
      %v4419 = vadd.f32 %v4350, %v4418
      %v4420 = vpop.f32.mrb[0].mxu0
      %4421 = vdwg.mxu0
      %4422 = vmatprep.subr.mxu0 0.0
      %4423 = vmatpush1.msra.mxu0 %v4281
      %4424 = vmatprep.subr.mxu0 0.0
      %4425 = vmatpush1.msra.mxu0 %v4282
      %4426 = vmatprep.subr.mxu0 0.0
      %4427 = vmatpush1.msra.mxu0 %v4283
      %4428 = vmatprep.subr.mxu0 0.0
      %4429 = vmatpush1.msra.mxu0 %v4284
      %4430 = vmatprep.subr.mxu0 0.0
      %4431 = vmatpush1.msra.mxu0 %v4285
      %4432 = vmatprep.subr.mxu0 0.0
      %4433 = vmatpush1.msra.mxu0 %v4286
      %4434 = vmatprep.subr.mxu0 0.0
      %4435 = vmatpush1.msra.mxu0 %v4287
      %4436 = vmatprep.subr.mxu0 0.0
      %4437 = vmatpush1.msra.mxu0 %v4288
      %4438 = vmatprep.subr.mxu0 0.0
      %4439 = vmatpush1.msra.mxu0 %v4289
      %4440 = vmatprep.subr.mxu0 0.0
      %4441 = vmatpush1.msra.mxu0 %v4290
      %4442 = vmatprep.subr.mxu0 0.0
      %4443 = vmatpush1.msra.mxu0 %v4291
      %4444 = vmatprep.subr.mxu0 0.0
      %4445 = vmatpush1.msra.mxu0 %v4292
      %4446 = vmatprep.subr.mxu0 0.0
      %4447 = vmatpush1.msra.mxu0 %v4293
      %4448 = vmatprep.subr.mxu0 0.0
      %4449 = vmatpush1.msra.mxu0 %v4294
      %4450 = vmatprep.subr.mxu0 0.0
      %4451 = vmatpush1.msra.mxu0 %v4295
      %4452 = vmatprep.subr.mxu0 0.0
      %4453 = vmatpush1.msra.mxu0 %v4296
      %4454 = vmatprep.subr.mxu0 0.0
      %4455 = vmatpush1.msra.mxu0 %v4297
      %4456 = vmatprep.subr.mxu0 0.0
      %4457 = vmatpush1.msra.mxu0 %v4298
      %4458 = vmatprep.subr.mxu0 0.0
      %4459 = vmatpush1.msra.mxu0 %v4299
      %4460 = vmatprep.subr.mxu0 0.0
      %4461 = vmatpush1.msra.mxu0 %v4300
      %4462 = vmatprep.subr.mxu0 0.0
      %4463 = vmatpush1.msra.mxu0 %v4301
      %4464 = vmatprep.subr.mxu0 0.0
      %4465 = vmatpush1.msra.mxu0 %v4302
      %4466 = vmatprep.subr.mxu0 0.0
      %4467 = vmatpush1.msra.mxu0 %v4303
      %4468 = vmatprep.subr.mxu0 0.0
      %4469 = vmatpush1.msra.mxu0 %v4304
      %4470 = vmatprep.subr.mxu0 0.0
      %4471 = vmatpush1.msra.mxu0 %v4305
      %4472 = vmatprep.subr.mxu0 0.0
      %4473 = vmatpush1.msra.mxu0 %v4306
      %4474 = vmatprep.subr.mxu0 0.0
      %4475 = vmatpush1.msra.mxu0 %v4307
      %4476 = vmatprep.subr.mxu0 0.0
      %4477 = vmatpush1.msra.mxu0 %v4308
      %4478 = vmatprep.subr.mxu0 0.0
      %4479 = vmatpush1.msra.mxu0 %v4309
      %4480 = vmatprep.subr.mxu0 0.0
      %4481 = vmatpush1.msra.mxu0 %v4310
      %4482 = vmatprep.subr.mxu0 0.0
      %4483 = vmatpush1.msra.mxu0 %v4311
      %4484 = vmatprep.subr.mxu0 0.0
      %4485 = vmatpush1.msra.mxu0 %v4312
      %4486 = vmatprep.mubr.f32.mxu0 %v4246
      %4487 = vmatmul.mubr.f32.gmra.mrb[0].mxu0 %v4245
      %v4488 = vpop.f32.mrb[0].mxu0
      %v4489 = vadd.f32 %v4419, %v4488
      %v4490 = vpop.f32.mrb[0].mxu0
      %4491 = vdwg.mxu0
      %4492 = vmatprep.subr.mxu0 0.0
      %4493 = vmatpush1.msra.mxu0 %v4313
      %4494 = vmatprep.subr.mxu0 0.0
      %4495 = vmatpush1.msra.mxu0 %v4314
      %4496 = vmatprep.subr.mxu0 0.0
      %4497 = vmatpush1.msra.mxu0 %v4315
      %4498 = vmatprep.subr.mxu0 0.0
      %4499 = vmatpush1.msra.mxu0 %v4316
      %4500 = vmatprep.subr.mxu0 0.0
      %4501 = vmatpush1.msra.mxu0 %v4317
      %4502 = vmatprep.subr.mxu0 0.0
      %4503 = vmatpush1.msra.mxu0 %v4318
      %4504 = vmatprep.subr.mxu0 0.0
      %4505 = vmatpush1.msra.mxu0 %v4319
      %4506 = vmatprep.subr.mxu0 0.0
      %4507 = vmatpush1.msra.mxu0 %v4320
      %4508 = vmatprep.subr.mxu0 0.0
      %4509 = vmatpush1.msra.mxu0 %v4321
      %4510 = vmatprep.subr.mxu0 0.0
      %4511 = vmatpush1.msra.mxu0 %v4322
      %4512 = vmatprep.subr.mxu0 0.0
      %4513 = vmatpush1.msra.mxu0 %v4323
      %4514 = vmatprep.subr.mxu0 0.0
      %4515 = vmatpush1.msra.mxu0 %v4324
      %4516 = vmatprep.subr.mxu0 0.0
      %4517 = vmatpush1.msra.mxu0 %v4325
      %4518 = vmatprep.subr.mxu0 0.0
      %4519 = vmatpush1.msra.mxu0 %v4326
      %4520 = vmatprep.subr.mxu0 0.0
      %4521 = vmatpush1.msra.mxu0 %v4327
      %4522 = vmatprep.subr.mxu0 0.0
      %4523 = vmatpush1.msra.mxu0 %v4328
      %4524 = vmatprep.subr.mxu0 0.0
      %4525 = vmatpush1.msra.mxu0 %v4329
      %4526 = vmatprep.subr.mxu0 0.0
      %4527 = vmatpush1.msra.mxu0 %v4330
      %4528 = vmatprep.subr.mxu0 0.0
      %4529 = vmatpush1.msra.mxu0 %v4331
      %4530 = vmatprep.subr.mxu0 0.0
      %4531 = vmatpush1.msra.mxu0 %v4332
      %4532 = vmatprep.subr.mxu0 0.0
      %4533 = vmatpush1.msra.mxu0 %v4333
      %4534 = vmatprep.subr.mxu0 0.0
      %4535 = vmatpush1.msra.mxu0 %v4334
      %4536 = vmatprep.subr.mxu0 0.0
      %4537 = vmatpush1.msra.mxu0 %v4335
      %4538 = vmatprep.subr.mxu0 0.0
      %4539 = vmatpush1.msra.mxu0 %v4336
      %4540 = vmatprep.subr.mxu0 0.0
      %4541 = vmatpush1.msra.mxu0 %v4337
      %4542 = vmatprep.subr.mxu0 0.0
      %4543 = vmatpush1.msra.mxu0 %v4338
      %4544 = vmatprep.subr.mxu0 0.0
      %4545 = vmatpush1.msra.mxu0 %v4339
      %4546 = vmatprep.subr.mxu0 0.0
      %4547 = vmatpush1.msra.mxu0 %v4340
      %4548 = vmatprep.subr.mxu0 0.0
      %4549 = vmatpush1.msra.mxu0 %v4341
      %4550 = vmatprep.subr.mxu0 0.0
      %4551 = vmatpush1.msra.mxu0 %v4342
      %4552 = vmatprep.subr.mxu0 0.0
      %4553 = vmatpush1.msra.mxu0 %v4343
      %4554 = vmatprep.subr.mxu0 0.0
      %4555 = vmatpush1.msra.mxu0 %v4344
      %4556 = vmatprep.mubr.f32.mxu0 %v4248
      %4557 = vmatmul.mubr.f32.gmra.mrb[0].mxu0 %v4247
      %v4558 = vpop.f32.mrb[0].mxu0
      %v4559 = vadd.f32 %v4489, %v4558
      %v4560 = vpop.f32.mrb[0].mxu0
      %4561 = vdwg.mxu0
      %4562 = vst [vmem:[#allocation15] sm:$0x3] %v4559
    $region57: #{tpu_custom_call.1} parent=1 // pred_fallthru
      _
    // Predicated region
    $region58: #{tpu_custom_call.1} parent=1 // pred_check
      _
    $region59: #{tpu_custom_call.1} parent=1 // pred_check_branch
      %4564 = sbr.rel (0) target = $region61
    $region60: #{tpu_custom_call.1} parent=1 // pred_region
      %s4566 = ssub.s32 32, 32
      %4567 = vsyncadd [#allocation6], %s4566
      %s4569 = sshll.u32 [#allocation15], 4
      %s4570 = int_to_ptr.vmem [resolvable:$true] %s4569
      %4572 = dma.vmem_to_hbm [thread:$0]  %s4570, 32, %s6, [#allocation6]
    $region61: #{tpu_custom_call.1} parent=1 // pred_fallthru
      _
    // Predicated region
    $region62: #{tpu_custom_call.1} parent=1 // pred_check
      _
    $region63: #{tpu_custom_call.1} parent=1 // pred_check_branch
      %4574 = sbr.rel (0) target = $region65
    $region64: #{tpu_custom_call.1} parent=1 // pred_region
      %4575 = dma.done [#allocation6], 32
    $region65: #{tpu_custom_call.1} parent=1 // pred_fallthru
      _
    %4576 = vsyncpa [#allocation5], 1
    %4577 = vsyncpa [#allocation8], 1
    %4578 = vsyncpa [#allocation11], 1
    %4579 = vsyncpa [#allocation14], 1
    %4580 = vsyncpa [#allocation6], 1

</llo_original>
